<compile_context>
chip_gen: v7x
topology: tpu7x:2x2x1
jax: 0.10.0
libtpu: 0.0.40
codegen_flags: <defaults>
</compile_context>

<pallas_src>
import functools

import jax
import jax.numpy as jnp
from jax.experimental import pallas as pl
from jax.experimental.pallas import tpu as pltpu

# Module constants (from the PyTorch source).
INPUT_DIM = 2000
ENC_H1 = 500
ENC_H2 = 500
ENC_H3 = 2000
LATENT_DIM = 5
NUM_COMPONENTS = 4
HEAD_DIM = LATENT_DIM * NUM_COMPONENTS      # 20
FUSED_HEAD = 2 * HEAD_DIM                   # 40 = [mu | log_var]

# Lane-aligned padded dims (matmul N always a multiple of 128; head output
# padded to a full 128-lane slab so stores are unmasked).  The first layer's
# K stays at 2000 (block == full array dim) so x needs no feature padding.
H1_PAD = 512
H2_PAD = 512
H3_PAD = 2048
HEAD_PAD = 128


def _round_up(n, m):
    return (n + m - 1) // m * m


def _generation_caps():
    """(max_batch_tile, vmem_limit_bytes) per TPU generation.

    v7x has only 64 MiB VMEM per TensorCore -> cap the batch tile at 512 and
    keep a 48 MiB scoped-VMEM limit.  v4/v5e/v6e have 128 MiB -> allow a 1024
    tile and a 96 MiB limit.  Unknown devices fall back to the conservative
    (v7x-safe) settings.
    """
    try:
        kind = jax.devices()[0].device_kind.lower()
    except Exception:  # pragma: no cover - defensive, never expected on TPU
        kind = ""
    if ("v4" in kind) or ("v5" in kind) or ("v6" in kind):
        return 1024, 96 << 20
    return 512, 48 << 20


def _encoder_kernel(x_ref,
                    w1_ref, b1_ref,
                    w2_ref, b2_ref,
                    w3_ref, b3_ref,
                    wh_ref, bh_ref,
                    out_ref):
    """Whole forward pass for one batch tile, fused in a single kernel.

    x arrives as f32 and is cast to bf16 here (hidden under the first matmul);
    all matmuls are bf16 x bf16 -> f32 accumulation on the MXU; bias-add and
    ReLU run in f32 on the VPU, then the activation is re-cast to bf16 for the
    next matmul.  The fused (mu|log_var) head writes one lane-dense f32 tile.
    """
    x = x_ref[...].astype(jnp.bfloat16)

    h = jnp.dot(x, w1_ref[...], preferred_element_type=jnp.float32)
    h = jnp.maximum(h + b1_ref[...], 0.0).astype(jnp.bfloat16)

    h = jnp.dot(h, w2_ref[...], preferred_element_type=jnp.float32)
    h = jnp.maximum(h + b2_ref[...], 0.0).astype(jnp.bfloat16)

    h = jnp.dot(h, w3_ref[...], preferred_element_type=jnp.float32)
    h = jnp.maximum(h + b3_ref[...], 0.0).astype(jnp.bfloat16)

    out_ref[...] = (jnp.dot(h, wh_ref[...], preferred_element_type=jnp.float32)
                    + bh_ref[...])


def prepare_params(params):
    """Fuse the two heads, zero-pad every weight to lane-aligned shapes and
    cast weights to bf16 (biases stay f32). Do this once, outside the jit."""
    (w1, b1), (w2, b2), (w3, b3), (wmu, bmu), (wlv, blv) = params

    def pad_w(w, rows, cols):
        w = jnp.pad(w, ((0, rows - w.shape[0]), (0, cols - w.shape[1])))
        return w.astype(jnp.bfloat16)

    def pad_b(b, cols):
        return jnp.pad(b, ((0, 0), (0, cols - b.shape[1]))).astype(jnp.float32)

    wh = jnp.concatenate([wmu, wlv], axis=1)   # (2000, 40)
    bh = jnp.concatenate([bmu, blv], axis=1)   # (1, 40)

    return {
        # Layer 1 keeps its natural 2000-row K (matches the unpadded x block).
        "w1": pad_w(w1, INPUT_DIM, H1_PAD), "b1": pad_b(b1, H1_PAD),
        "w2": pad_w(w2, H1_PAD, H2_PAD), "b2": pad_b(b2, H2_PAD),
        "w3": pad_w(w3, H2_PAD, H3_PAD), "b3": pad_b(b3, H3_PAD),
        "wh": pad_w(wh, H3_PAD, HEAD_PAD), "bh": pad_b(bh, HEAD_PAD),
    }


@functools.partial(jax.jit, static_argnames=("batch_tile",))
def encoder_forward(x, prepared, *, batch_tile=None):
    """Runs the fused encoder kernel. x: (B, INPUT_DIM) float32.

    Returns (mu_k, log_var_k) with shape (B, NUM_COMPONENTS, LATENT_DIM),
    matching the PyTorch module's forward().
    """
    B, D = x.shape
    assert D == INPUT_DIM

    max_tile, vmem_limit = _generation_caps()
    if batch_tile is None:
        batch_tile = max_tile

    # Batch tile selection.
    tile = min(batch_tile, _round_up(B, 8))
    if B > 8:
        # Guarantee >= 2 grid steps so the "parallel" batch axis can shard
        # across v7x's two TensorCores.  Harmless on 1-TC chips (weights are
        # grid-invariant, so the extra step only adds ~0.35 us of overhead).
        tile = min(tile, max(8, _round_up((B + 1) // 2, 8)))
    B_pad = _round_up(B, tile)

    # x stays f32 with its natural feature width (the block's last dim equals
    # the full array dim, so no 128-alignment padding is needed).  The batch
    # is only zero-padded when it does not divide the tile.
    x_in = x if B_pad == B else jnp.pad(x, ((0, B_pad - B), (0, 0)))

    def const2d(r, c):
        # Grid-invariant weight/bias tile: constant block index, so the
        # pipeline only DMAs it once (bf16 keeps total weight VMEM ~5 MiB).
        return pl.BlockSpec((r, c), lambda i: (0, 0))

    in_specs = [
        pl.BlockSpec((tile, INPUT_DIM), lambda i: (i, 0)),
        const2d(INPUT_DIM, H1_PAD), const2d(1, H1_PAD),
        const2d(H1_PAD, H2_PAD), const2d(1, H2_PAD),
        const2d(H2_PAD, H3_PAD), const2d(1, H3_PAD),
        const2d(H3_PAD, HEAD_PAD), const2d(1, HEAD_PAD),
    ]
    out_spec = pl.BlockSpec((tile, HEAD_PAD), lambda i: (i, 0))

    out = pl.pallas_call(
        _encoder_kernel,
        out_shape=jax.ShapeDtypeStruct((B_pad, HEAD_PAD), jnp.float32),
        grid_spec=pltpu.PrefetchScalarGridSpec(
            num_scalar_prefetch=0,
            grid=(B_pad // tile,),
            in_specs=in_specs,
            out_specs=out_spec,
        ),
        compiler_params=pltpu.CompilerParams(
            dimension_semantics=("parallel",),
            vmem_limit_bytes=vmem_limit,
        ),
    )(x_in,
      prepared["w1"], prepared["b1"],
      prepared["w2"], prepared["b2"],
      prepared["w3"], prepared["b3"],
      prepared["wh"], prepared["bh"])

    # Glue: drop batch/lane padding, split fused head, then the
    # `.view(-1, num_components, latent_dim)` of the PyTorch module.
    heads = out[:B, :FUSED_HEAD]
    mu_k = heads[:, :HEAD_DIM].reshape(-1, NUM_COMPONENTS, LATENT_DIM)
    log_var_k = heads[:, HEAD_DIM:].reshape(-1, NUM_COMPONENTS, LATENT_DIM)
    return mu_k, log_var_k


def init_params(key):
    """Deterministic init mimicking nn.Linear's default U(-1/sqrt(fan_in), .).

    Weights stored (in_features, out_features); biases as (1, out)."""
    dims = [
        (INPUT_DIM, ENC_H1),
        (ENC_H1, ENC_H2),
        (ENC_H2, ENC_H3),
        (ENC_H3, HEAD_DIM),
        (ENC_H3, HEAD_DIM),
    ]
    params = []
    for (fan_in, fan_out) in dims:
        key, kw, kb = jax.random.split(key, 3)
        bound = 1.0 / (fan_in ** 0.5)
        w = jax.random.uniform(kw, (fan_in, fan_out), jnp.float32, -bound, bound)
        b = jax.random.uniform(kb, (1, fan_out), jnp.float32, -bound, bound)
        params.append((w, b))
    return params


def _reference_forward(x, params, dtype=jnp.float32):
    """Plain-JAX reference. dtype=bfloat16 mirrors the kernel's quantization
    (bf16 matmul inputs, f32 accumulation); dtype=float32 is the original
    PyTorch-module math."""
    (w1, b1), (w2, b2), (w3, b3), (wmu, bmu), (wlv, blv) = params

    def lin(h, w, b):
        return jnp.dot(h.astype(dtype), w.astype(dtype),
                       preferred_element_type=jnp.float32) + b

    h = jnp.maximum(lin(x, w1, b1), 0.0)
    h = jnp.maximum(lin(h, w2, b2), 0.0)
    h = jnp.maximum(lin(h, w3, b3), 0.0)
    mu = lin(h, wmu, bmu).reshape(-1, NUM_COMPONENTS, LATENT_DIM)
    lv = lin(h, wlv, blv).reshape(-1, NUM_COMPONENTS, LATENT_DIM)
    return mu, lv


if __name__ == "__main__":
    key = jax.random.PRNGKey(0)
    key, kx = jax.random.split(key)

    batch = 6   # deliberately not a multiple of 8: exercises batch padding
    x = jax.random.normal(kx, (batch, INPUT_DIM), dtype=jnp.float32)
    params = init_params(key)
    prepared = prepare_params(params)

    mu_k, log_var_k = encoder_forward(x, prepared)
    jax.block_until_ready((mu_k, log_var_k))

    assert mu_k.shape == (batch, NUM_COMPONENTS, LATENT_DIM)
    assert log_var_k.shape == (batch, NUM_COMPONENTS, LATENT_DIM)

    # 1) Exact-math check against a plain-JAX reference using the same bf16
    #    weights/activations (only accumulation-order differences remain).
    mu_bf, lv_bf = _reference_forward(x, params, dtype=jnp.bfloat16)
    assert jnp.allclose(mu_k, mu_bf, atol=1e-2, rtol=1e-2)
    assert jnp.allclose(log_var_k, lv_bf, atol=1e-2, rtol=1e-2)

    # 2) Fidelity check against the original f32 module math (looser tolerance
    #    to absorb bf16 quantization of weights/activations).
    mu_f32, lv_f32 = _reference_forward(x, params, dtype=jnp.float32)
    assert jnp.allclose(mu_k, mu_f32, atol=5e-2, rtol=5e-2)
    assert jnp.allclose(log_var_k, lv_f32, atol=5e-2, rtol=5e-2)

    print("KERNEL_OK")
</pallas_src>

<mosaic_0001>
module attributes {stable_mosaic.version = 11 : i64} {
  func.func @_encoder_kernel(%arg0: i32, %arg1: memref<8x2000xf32, #tpu.memory_space<vmem>>, %arg2: memref<2000x512xbf16, #tpu.memory_space<vmem>>, %arg3: memref<1x512xf32, #tpu.memory_space<vmem>>, %arg4: memref<512x512xbf16, #tpu.memory_space<vmem>>, %arg5: memref<1x512xf32, #tpu.memory_space<vmem>>, %arg6: memref<512x2048xbf16, #tpu.memory_space<vmem>>, %arg7: memref<1x2048xf32, #tpu.memory_space<vmem>>, %arg8: memref<2048x128xbf16, #tpu.memory_space<vmem>>, %arg9: memref<1x128xf32, #tpu.memory_space<vmem>>, %arg10: memref<8x128xf32, #tpu.memory_space<vmem>>) attributes {dimension_semantics = [#tpu.dimension_semantics<parallel>], iteration_bounds = array<i64: 1>, scalar_prefetch = 0 : i64, scratch_operands = 0 : i64, tpu.core_type = #tpu.core_type<tc>, window_params = [{transform_indices = @transform_0, window_bounds = array<i64: 8, 2000>}, {pipeline_mode = #tpu.pipeline_mode<synchronous>, transform_indices = @transform_1, window_bounds = array<i64: 2000, 512>}, {pipeline_mode = #tpu.pipeline_mode<synchronous>, transform_indices = @transform_2, window_bounds = array<i64: 1, 512>}, {pipeline_mode = #tpu.pipeline_mode<synchronous>, transform_indices = @transform_3, window_bounds = array<i64: 512, 512>}, {pipeline_mode = #tpu.pipeline_mode<synchronous>, transform_indices = @transform_4, window_bounds = array<i64: 1, 512>}, {pipeline_mode = #tpu.pipeline_mode<synchronous>, transform_indices = @transform_5, window_bounds = array<i64: 512, 2048>}, {pipeline_mode = #tpu.pipeline_mode<synchronous>, transform_indices = @transform_6, window_bounds = array<i64: 1, 2048>}, {pipeline_mode = #tpu.pipeline_mode<synchronous>, transform_indices = @transform_7, window_bounds = array<i64: 2048, 128>}, {pipeline_mode = #tpu.pipeline_mode<synchronous>, transform_indices = @transform_8, window_bounds = array<i64: 1, 128>}, {transform_indices = @transform_9, window_bounds = array<i64: 8, 128>}]} {
    %c0 = arith.constant 0 : index
    %c0_0 = arith.constant 0 : index
    %0 = vector.load %arg1[%c0, %c0_0] : memref<8x2000xf32, #tpu.memory_space<vmem>>, vector<8x2000xf32>
    %1 = arith.truncf %0 : vector<8x2000xf32> to vector<8x2000xbf16>
    %c0_1 = arith.constant 0 : index
    %c0_2 = arith.constant 0 : index
    %2 = vector.load %arg2[%c0_1, %c0_2] : memref<2000x512xbf16, #tpu.memory_space<vmem>>, vector<2000x512xbf16>
    %cst = arith.constant dense<0.000000e+00> : vector<8x512xf32>
    %3 = tpu.matmul %1, %2, %cst {dimension_numbers = #tpu.dot_dimension_numbers<[1], [0], [0], [1], [0, 0, 1, 1], [], []>} : vector<8x2000xbf16>, vector<2000x512xbf16>, vector<8x512xf32> -> vector<8x512xf32>
    %c0_3 = arith.constant 0 : index
    %c0_4 = arith.constant 0 : index
    %4 = vector.load %arg3[%c0_3, %c0_4] : memref<1x512xf32, #tpu.memory_space<vmem>>, vector<1x512xf32>
    %5 = vector.broadcast %4 : vector<1x512xf32> to vector<8x512xf32>
    %6 = arith.addf %3, %5 : vector<8x512xf32>
    %cst_5 = arith.constant 0.000000e+00 : f32
    %7 = vector.broadcast %cst_5 : f32 to vector<8x512xf32>
    %8 = arith.maximumf %6, %7 : vector<8x512xf32>
    %9 = arith.truncf %8 : vector<8x512xf32> to vector<8x512xbf16>
    %c0_6 = arith.constant 0 : index
    %c0_7 = arith.constant 0 : index
    %10 = vector.load %arg4[%c0_6, %c0_7] : memref<512x512xbf16, #tpu.memory_space<vmem>>, vector<512x512xbf16>
    %cst_8 = arith.constant dense<0.000000e+00> : vector<8x512xf32>
    %11 = tpu.matmul %9, %10, %cst_8 {dimension_numbers = #tpu.dot_dimension_numbers<[1], [0], [0], [1], [0, 0, 1, 1], [], []>} : vector<8x512xbf16>, vector<512x512xbf16>, vector<8x512xf32> -> vector<8x512xf32>
    %c0_9 = arith.constant 0 : index
    %c0_10 = arith.constant 0 : index
    %12 = vector.load %arg5[%c0_9, %c0_10] : memref<1x512xf32, #tpu.memory_space<vmem>>, vector<1x512xf32>
    %13 = vector.broadcast %12 : vector<1x512xf32> to vector<8x512xf32>
    %14 = arith.addf %11, %13 : vector<8x512xf32>
    %cst_11 = arith.constant 0.000000e+00 : f32
    %15 = vector.broadcast %cst_11 : f32 to vector<8x512xf32>
    %16 = arith.maximumf %14, %15 : vector<8x512xf32>
    %17 = arith.truncf %16 : vector<8x512xf32> to vector<8x512xbf16>
    %c0_12 = arith.constant 0 : index
    %c0_13 = arith.constant 0 : index
    %18 = vector.load %arg6[%c0_12, %c0_13] : memref<512x2048xbf16, #tpu.memory_space<vmem>>, vector<512x2048xbf16>
    %cst_14 = arith.constant dense<0.000000e+00> : vector<8x2048xf32>
    %19 = tpu.matmul %17, %18, %cst_14 {dimension_numbers = #tpu.dot_dimension_numbers<[1], [0], [0], [1], [0, 0, 1, 1], [], []>} : vector<8x512xbf16>, vector<512x2048xbf16>, vector<8x2048xf32> -> vector<8x2048xf32>
    %c0_15 = arith.constant 0 : index
    %c0_16 = arith.constant 0 : index
    %20 = vector.load %arg7[%c0_15, %c0_16] : memref<1x2048xf32, #tpu.memory_space<vmem>>, vector<1x2048xf32>
    %21 = vector.broadcast %20 : vector<1x2048xf32> to vector<8x2048xf32>
    %22 = arith.addf %19, %21 : vector<8x2048xf32>
    %cst_17 = arith.constant 0.000000e+00 : f32
    %23 = vector.broadcast %cst_17 : f32 to vector<8x2048xf32>
    %24 = arith.maximumf %22, %23 : vector<8x2048xf32>
    %25 = arith.truncf %24 : vector<8x2048xf32> to vector<8x2048xbf16>
    %c0_18 = arith.constant 0 : index
    %c0_19 = arith.constant 0 : index
    %26 = vector.load %arg8[%c0_18, %c0_19] : memref<2048x128xbf16, #tpu.memory_space<vmem>>, vector<2048x128xbf16>
    %cst_20 = arith.constant dense<0.000000e+00> : vector<8x128xf32>
    %27 = tpu.matmul %25, %26, %cst_20 {dimension_numbers = #tpu.dot_dimension_numbers<[1], [0], [0], [1], [0, 0, 1, 1], [], []>} : vector<8x2048xbf16>, vector<2048x128xbf16>, vector<8x128xf32> -> vector<8x128xf32>
    %c0_21 = arith.constant 0 : index
    %c0_22 = arith.constant 0 : index
    %28 = vector.load %arg9[%c0_21, %c0_22] : memref<1x128xf32, #tpu.memory_space<vmem>>, vector<1x128xf32>
    %29 = vector.broadcast %28 : vector<1x128xf32> to vector<8x128xf32>
    %30 = arith.addf %27, %29 : vector<8x128xf32>
    %c0_23 = arith.constant 0 : index
    %c0_24 = arith.constant 0 : index
    %31 = vector.load %arg10[%c0_23, %c0_24] : memref<8x128xf32, #tpu.memory_space<vmem>>, vector<8x128xf32>
    tpu.vector_store %arg10[%c0_23, %c0_24], %30 {strides = array<i32>} : memref<8x128xf32, #tpu.memory_space<vmem>>, vector<8x128xf32>,
    return
  }
  func.func @transform_0(%arg0: i32) -> (i32, i32) {
    %c0_i32 = arith.constant 0 : i32
    %c0_i32_0 = arith.constant 0 : i32
    return %arg0, %c0_i32 : i32, i32
  }
  func.func @transform_1(%arg0: i32) -> (i32, i32) {
    %c0_i32 = arith.constant 0 : i32
    %c0_i32_0 = arith.constant 0 : i32
    %c0_i32_1 = arith.constant 0 : i32
    return %c0_i32, %c0_i32_0 : i32, i32
  }
  func.func @transform_2(%arg0: i32) -> (i32, i32) {
    %c0_i32 = arith.constant 0 : i32
    %c0_i32_0 = arith.constant 0 : i32
    %c0_i32_1 = arith.constant 0 : i32
    return %c0_i32, %c0_i32_0 : i32, i32
  }
  func.func @transform_3(%arg0: i32) -> (i32, i32) {
    %c0_i32 = arith.constant 0 : i32
    %c0_i32_0 = arith.constant 0 : i32
    %c0_i32_1 = arith.constant 0 : i32
    return %c0_i32, %c0_i32_0 : i32, i32
  }
  func.func @transform_4(%arg0: i32) -> (i32, i32) {
    %c0_i32 = arith.constant 0 : i32
    %c0_i32_0 = arith.constant 0 : i32
    %c0_i32_1 = arith.constant 0 : i32
    return %c0_i32, %c0_i32_0 : i32, i32
  }
  func.func @transform_5(%arg0: i32) -> (i32, i32) {
    %c0_i32 = arith.constant 0 : i32
    %c0_i32_0 = arith.constant 0 : i32
    %c0_i32_1 = arith.constant 0 : i32
    return %c0_i32, %c0_i32_0 : i32, i32
  }
  func.func @transform_6(%arg0: i32) -> (i32, i32) {
    %c0_i32 = arith.constant 0 : i32
    %c0_i32_0 = arith.constant 0 : i32
    %c0_i32_1 = arith.constant 0 : i32
    return %c0_i32, %c0_i32_0 : i32, i32
  }
  func.func @transform_7(%arg0: i32) -> (i32, i32) {
    %c0_i32 = arith.constant 0 : i32
    %c0_i32_0 = arith.constant 0 : i32
    %c0_i32_1 = arith.constant 0 : i32
    return %c0_i32, %c0_i32_0 : i32, i32
  }
  func.func @transform_8(%arg0: i32) -> (i32, i32) {
    %c0_i32 = arith.constant 0 : i32
    %c0_i32_0 = arith.constant 0 : i32
    %c0_i32_1 = arith.constant 0 : i32
    return %c0_i32, %c0_i32_0 : i32, i32
  }
  func.func @transform_9(%arg0: i32) -> (i32, i32) {
    %c0_i32 = arith.constant 0 : i32
    %c0_i32_0 = arith.constant 0 : i32
    return %arg0, %c0_i32 : i32, i32
  }
}

</mosaic_0001>

<llo_original>
// kernel: encoder_forward.1
$region0: #{encoder_forward.1}
  #allocation0 [shape = 'u32[]', space=smem, size = 0x4, offset = 0x4, fixed_abs, tag = 'smem constant byte address 0x4 - core index']
  #allocation1 [shape = 'u32[144,128]{1,0:T(1,128)}', space=vmem, size = 0x12000, scoped, tag = 'internal scratch']
  %s0 = inlined_call_operand.vmem [shape: f32[8,2000], index: 0, kind: input, shape index: {}]
  %s1 = inlined_call_operand.hbm [shape: bf16[2000,512], index: 1, kind: input, shape index: {}]
  %s2 = inlined_call_operand.hbm [shape: f32[1,512], index: 2, kind: input, shape index: {}]
  %s3 = inlined_call_operand.hbm [shape: bf16[512,512], index: 3, kind: input, shape index: {}]
  %s4 = inlined_call_operand.hbm [shape: f32[1,512], index: 4, kind: input, shape index: {}]
  %s5 = inlined_call_operand.hbm [shape: bf16[512,2048], index: 5, kind: input, shape index: {}]
  %s6 = inlined_call_operand.hbm [shape: f32[1,2048], index: 6, kind: input, shape index: {}]
  %s7 = inlined_call_operand.hbm [shape: bf16[2048,128], index: 7, kind: input, shape index: {}]
  %s8 = inlined_call_operand.hbm [shape: f32[1,128], index: 8, kind: input, shape index: {}]
  %s9 = inlined_call_operand.vmem [shape: f32[8,128], index: 9, kind: output, shape index: {}]
  %s10 = sld [smem:[#allocation0]]
  $region78: #{encoder_forward.1} parent=0
    _
  %s12 = ssub.s32 1, %s10
  %s13 = scalar_select 0, %s12, %s10
  $region1: #{encoder_forward.1} parent=0
    #allocation2 [shape = 'u8[2048000]{0}', space=vmem, size = 0x1f4000, scoped, tag = 'input window, operand 1, single buffered']
    #allocation3 [shape = 's32[1]{0}', space=sflag, size = 0x4, scoped, tag = 'scoped memory for encoder_forward.1']
    #allocation4 [shape = 'u8[2048]{0}', space=vmem, size = 0x800, scoped, tag = 'input window, operand 2, single buffered']
    #allocation5 [shape = 's32[1]{0}', space=sflag, size = 0x4, scoped, tag = 'scoped memory for encoder_forward.1']
    #allocation6 [shape = 'u8[524288]{0}', space=vmem, size = 0x80000, scoped, tag = 'input window, operand 3, single buffered']
    #allocation7 [shape = 'u8[2048]{0}', space=vmem, size = 0x800, scoped, tag = 'input window, operand 4, single buffered']
    #allocation8 [shape = 's32[1]{0}', space=sflag, size = 0x4, scoped, tag = 'scoped memory for encoder_forward.1']
    #allocation9 [shape = 'u8[2097152]{0}', space=vmem, size = 0x200000, scoped, tag = 'input window, operand 5, single buffered']
    #allocation10 [shape = 'u8[8192]{0}', space=vmem, size = 0x2000, scoped, tag = 'input window, operand 6, single buffered']
    #allocation11 [shape = 's32[1]{0}', space=sflag, size = 0x4, scoped, tag = 'scoped memory for encoder_forward.1']
    #allocation12 [shape = 'u8[524288]{0}', space=vmem, size = 0x80000, scoped, tag = 'input window, operand 7, single buffered']
    #allocation13 [shape = 'u8[512]{0}', space=vmem, size = 0x400, scoped, tag = 'input window, operand 8, single buffered']
    #allocation14 [shape = 's32[1]{0}', space=sflag, size = 0x4, scoped, tag = 'scoped memory for encoder_forward.1']
    %14 = vsyncpa [#allocation3], 0
    %15 = vsyncpa [#allocation5], 0
    %16 = vsyncpa [#allocation8], 0
    %17 = vsyncpa [#allocation11], 0
    %18 = vsyncpa [#allocation14], 0
    // Predicated region
    $region2: #{encoder_forward.1} parent=1 // pred_check
      _
    $region3: #{encoder_forward.1} parent=1 // pred_check_branch
      %20 = sbr.rel (0) target = $region5
    $region4: #{encoder_forward.1} parent=1 // pred_region
      _
    $region5: #{encoder_forward.1} parent=1 // pred_fallthru
      _
    // Predicated region
    $region6: #{encoder_forward.1} parent=1 // pred_check
      _
    $region7: #{encoder_forward.1} parent=1 // pred_check_branch
      %22 = sbr.rel (0) target = $region9
    $region8: #{encoder_forward.1} parent=1 // pred_region
      %s24 = ssub.s32 64000, 64000
      %25 = vsyncadd [#allocation3], %s24
      %s26 = sshll.u32 [#allocation2], 4
      %s27 = int_to_ptr.vmem [resolvable:$true] %s26
      %32 = dma.hbm_to_vmem [thread:$0]  %s1, 64000, %s27, [#allocation3], 256, 256, 16
    $region9: #{encoder_forward.1} parent=1 // pred_fallthru
      _
    // Predicated region
    $region10: #{encoder_forward.1} parent=1 // pred_check
      _
    $region11: #{encoder_forward.1} parent=1 // pred_check_branch
      %34 = sbr.rel (0) target = $region13
    $region12: #{encoder_forward.1} parent=1 // pred_region
      %s36 = ssub.s32 64, 64
      %37 = vsyncadd [#allocation5], %s36
      %s39 = sshll.u32 [#allocation4], 4
      %s40 = int_to_ptr.vmem [resolvable:$true] %s39
      %42 = dma.hbm_to_vmem [thread:$0]  %s2, 64, %s40, [#allocation5]
    $region13: #{encoder_forward.1} parent=1 // pred_fallthru
      _
    // Predicated region
    $region14: #{encoder_forward.1} parent=1 // pred_check
      _
    $region15: #{encoder_forward.1} parent=1 // pred_check_branch
      %44 = sbr.rel (0) target = $region17
    $region16: #{encoder_forward.1} parent=1 // pred_region
      %s46 = ssub.s32 16384, 16384
      %47 = vsyncadd [#allocation5], %s46
      %s48 = sshll.u32 [#allocation6], 4
      %s49 = int_to_ptr.vmem [resolvable:$true] %s48
      %54 = dma.hbm_to_vmem [thread:$0]  %s3, 16384, %s49, [#allocation5], 256, 256, 16
    $region17: #{encoder_forward.1} parent=1 // pred_fallthru
      _
    // Predicated region
    $region18: #{encoder_forward.1} parent=1 // pred_check
      _
    $region19: #{encoder_forward.1} parent=1 // pred_check_branch
      %56 = sbr.rel (0) target = $region21
    $region20: #{encoder_forward.1} parent=1 // pred_region
      %s58 = ssub.s32 64, 64
      %59 = vsyncadd [#allocation8], %s58
      %s61 = sshll.u32 [#allocation7], 4
      %s62 = int_to_ptr.vmem [resolvable:$true] %s61
      %64 = dma.hbm_to_vmem [thread:$0]  %s4, 64, %s62, [#allocation8]
    $region21: #{encoder_forward.1} parent=1 // pred_fallthru
      _
    // Predicated region
    $region22: #{encoder_forward.1} parent=1 // pred_check
      _
    $region23: #{encoder_forward.1} parent=1 // pred_check_branch
      %66 = sbr.rel (0) target = $region25
    $region24: #{encoder_forward.1} parent=1 // pred_region
      %s68 = ssub.s32 65536, 65536
      %69 = vsyncadd [#allocation8], %s68
      %s70 = sshll.u32 [#allocation9], 4
      %s71 = int_to_ptr.vmem [resolvable:$true] %s70
      %76 = dma.hbm_to_vmem [thread:$0]  %s5, 65536, %s71, [#allocation8], 1024, 1024, 64
    $region25: #{encoder_forward.1} parent=1 // pred_fallthru
      _
    // Predicated region
    $region26: #{encoder_forward.1} parent=1 // pred_check
      _
    $region27: #{encoder_forward.1} parent=1 // pred_check_branch
      %78 = sbr.rel (0) target = $region29
    $region28: #{encoder_forward.1} parent=1 // pred_region
      %s80 = ssub.s32 256, 256
      %81 = vsyncadd [#allocation11], %s80
      %s83 = sshll.u32 [#allocation10], 4
      %s84 = int_to_ptr.vmem [resolvable:$true] %s83
      %86 = dma.hbm_to_vmem [thread:$0]  %s6, 256, %s84, [#allocation11]
    $region29: #{encoder_forward.1} parent=1 // pred_fallthru
      _
    // Predicated region
    $region30: #{encoder_forward.1} parent=1 // pred_check
      _
    $region31: #{encoder_forward.1} parent=1 // pred_check_branch
      %88 = sbr.rel (0) target = $region33
    $region32: #{encoder_forward.1} parent=1 // pred_region
      %s90 = ssub.s32 16384, 16384
      %91 = vsyncadd [#allocation11], %s90
      %s92 = sshll.u32 [#allocation12], 4
      %s93 = int_to_ptr.vmem [resolvable:$true] %s92
      %98 = dma.hbm_to_vmem [thread:$0]  %s7, 16384, %s93, [#allocation11], 64, 64, 4
    $region33: #{encoder_forward.1} parent=1 // pred_fallthru
      _
    // Predicated region
    $region34: #{encoder_forward.1} parent=1 // pred_check
      _
    $region35: #{encoder_forward.1} parent=1 // pred_check_branch
      %100 = sbr.rel (0) target = $region37
    $region36: #{encoder_forward.1} parent=1 // pred_region
      %s102 = ssub.s32 16, 16
      %103 = vsyncadd [#allocation14], %s102
      %s105 = sshll.u32 [#allocation13], 4
      %s106 = int_to_ptr.vmem [resolvable:$true] %s105
      %108 = dma.hbm_to_vmem [thread:$0]  %s8, 16, %s106, [#allocation14]
    $region37: #{encoder_forward.1} parent=1 // pred_fallthru
      _
    // Predicated region
    $region38: #{encoder_forward.1} parent=1 // pred_check
      _
    $region39: #{encoder_forward.1} parent=1 // pred_check_branch
      %110 = sbr.rel (0) target = $region41
    $region40: #{encoder_forward.1} parent=1 // pred_region
      %111 = dma.done [#allocation3], 64000
    $region41: #{encoder_forward.1} parent=1 // pred_fallthru
      _
    // Predicated region
    $region42: #{encoder_forward.1} parent=1 // pred_check
      _
    $region43: #{encoder_forward.1} parent=1 // pred_check_branch
      %113 = sbr.rel (0) target = $region45
    $region44: #{encoder_forward.1} parent=1 // pred_region
      %114 = dma.done [#allocation5], 64
    $region45: #{encoder_forward.1} parent=1 // pred_fallthru
      _
    // Predicated region
    $region46: #{encoder_forward.1} parent=1 // pred_check
      _
    $region47: #{encoder_forward.1} parent=1 // pred_check_branch
      %116 = sbr.rel (0) target = $region49
    $region48: #{encoder_forward.1} parent=1 // pred_region
      %117 = dma.done [#allocation5], 16384
    $region49: #{encoder_forward.1} parent=1 // pred_fallthru
      _
    // Predicated region
    $region50: #{encoder_forward.1} parent=1 // pred_check
      _
    $region51: #{encoder_forward.1} parent=1 // pred_check_branch
      %119 = sbr.rel (0) target = $region53
    $region52: #{encoder_forward.1} parent=1 // pred_region
      %120 = dma.done [#allocation8], 64
    $region53: #{encoder_forward.1} parent=1 // pred_fallthru
      _
    // Predicated region
    $region54: #{encoder_forward.1} parent=1 // pred_check
      _
    $region55: #{encoder_forward.1} parent=1 // pred_check_branch
      %122 = sbr.rel (0) target = $region57
    $region56: #{encoder_forward.1} parent=1 // pred_region
      %123 = dma.done [#allocation8], 65536
    $region57: #{encoder_forward.1} parent=1 // pred_fallthru
      _
    // Predicated region
    $region58: #{encoder_forward.1} parent=1 // pred_check
      _
    $region59: #{encoder_forward.1} parent=1 // pred_check_branch
      %125 = sbr.rel (0) target = $region61
    $region60: #{encoder_forward.1} parent=1 // pred_region
      %126 = dma.done [#allocation11], 256
    $region61: #{encoder_forward.1} parent=1 // pred_fallthru
      _
    // Predicated region
    $region62: #{encoder_forward.1} parent=1 // pred_check
      _
    $region63: #{encoder_forward.1} parent=1 // pred_check_branch
      %128 = sbr.rel (0) target = $region65
    $region64: #{encoder_forward.1} parent=1 // pred_region
      %129 = dma.done [#allocation11], 16384
    $region65: #{encoder_forward.1} parent=1 // pred_fallthru
      _
    // Predicated region
    $region66: #{encoder_forward.1} parent=1 // pred_check
      _
    $region67: #{encoder_forward.1} parent=1 // pred_check_branch
      %131 = sbr.rel (0) target = $region69
    $region68: #{encoder_forward.1} parent=1 // pred_region
      %132 = dma.done [#allocation14], 16
    $region69: #{encoder_forward.1} parent=1 // pred_fallthru
      _
    %v134 = vld [vmem:[%s0] sm:$0xff]
    %v135 = vld [vmem:[%s0 + $0x8] sm:$0xff]
    %v136 = vld [vmem:[%s0 + $0x10] sm:$0xff]
    %v137 = vld [vmem:[%s0 + $0x18] sm:$0xff]
    %v138 = vld [vmem:[%s0 + $0x20] sm:$0xff]
    %v139 = vld [vmem:[%s0 + $0x28] sm:$0xff]
    %v140 = vld [vmem:[%s0 + $0x30] sm:$0xff]
    %v141 = vld [vmem:[%s0 + $0x38] sm:$0xff]
    %v142 = vld [vmem:[%s0 + $0x40] sm:$0xff]
    %v143 = vld [vmem:[%s0 + $0x48] sm:$0xff]
    %v144 = vld [vmem:[%s0 + $0x50] sm:$0xff]
    %v145 = vld [vmem:[%s0 + $0x58] sm:$0xff]
    %v146 = vld [vmem:[%s0 + $0x60] sm:$0xff]
    %v147 = vld [vmem:[%s0 + $0x68] sm:$0xff]
    %v148 = vld [vmem:[%s0 + $0x70] sm:$0xff]
    %v149 = vld [vmem:[%s0 + $0x78] sm:$0xff]
    %v150 = vpack.c.bf16 %v134, %v134
    %v151 = vpack.c.bf16 %v135, %v135
    %v152 = vpack.c.bf16 %v136, %v136
    %v153 = vpack.c.bf16 %v137, %v137
    %v154 = vpack.c.bf16 %v138, %v138
    %v155 = vpack.c.bf16 %v139, %v139
    %v156 = vpack.c.bf16 %v140, %v140
    %v157 = vpack.c.bf16 %v141, %v141
    %v158 = vpack.c.bf16 %v142, %v142
    %v159 = vpack.c.bf16 %v143, %v143
    %v160 = vpack.c.bf16 %v144, %v144
    %v161 = vpack.c.bf16 %v145, %v145
    %v162 = vpack.c.bf16 %v146, %v146
    %v163 = vpack.c.bf16 %v147, %v147
    %v164 = vpack.c.bf16 %v148, %v148
    %v165 = vpack.c.bf16 %v149, %v149
    %v166 = vld [vmem:[#allocation2] sm:$0xff]
    %v167 = vld [vmem:[#allocation2 + $0x8] sm:$0xff]
    %v168 = vld [vmem:[#allocation2 + $0x10] sm:$0xff]
    %v169 = vld [vmem:[#allocation2 + $0x18] sm:$0xff]
    %v170 = vld [vmem:[#allocation2 + $0x20] sm:$0xff]
    %v171 = vld [vmem:[#allocation2 + $0x28] sm:$0xff]
    %v172 = vld [vmem:[#allocation2 + $0x30] sm:$0xff]
    %v173 = vld [vmem:[#allocation2 + $0x38] sm:$0xff]
    %v174 = vld [vmem:[#allocation2 + $0x40] sm:$0xff]
    %v175 = vld [vmem:[#allocation2 + $0x48] sm:$0xff]
    %v176 = vld [vmem:[#allocation2 + $0x50] sm:$0xff]
    %v177 = vld [vmem:[#allocation2 + $0x58] sm:$0xff]
    %v178 = vld [vmem:[#allocation2 + $0x60] sm:$0xff]
    %v179 = vld [vmem:[#allocation2 + $0x68] sm:$0xff]
    %v180 = vld [vmem:[#allocation2 + $0x70] sm:$0xff]
    %v181 = vld [vmem:[#allocation2 + $0x78] sm:$0xff]
    %v182 = vld [vmem:[#allocation2 + $0x80] sm:$0xff]
    %v183 = vld [vmem:[#allocation2 + $0x88] sm:$0xff]
    %v184 = vld [vmem:[#allocation2 + $0x90] sm:$0xff]
    %v185 = vld [vmem:[#allocation2 + $0x98] sm:$0xff]
    %v186 = vld [vmem:[#allocation2 + $0xa0] sm:$0xff]
    %v187 = vld [vmem:[#allocation2 + $0xa8] sm:$0xff]
    %v188 = vld [vmem:[#allocation2 + $0xb0] sm:$0xff]
    %v189 = vld [vmem:[#allocation2 + $0xb8] sm:$0xff]
    %v190 = vld [vmem:[#allocation2 + $0xc0] sm:$0xff]
    %v191 = vld [vmem:[#allocation2 + $0xc8] sm:$0xff]
    %v192 = vld [vmem:[#allocation2 + $0xd0] sm:$0xff]
    %v193 = vld [vmem:[#allocation2 + $0xd8] sm:$0xff]
    %v194 = vld [vmem:[#allocation2 + $0xe0] sm:$0xff]
    %v195 = vld [vmem:[#allocation2 + $0xe8] sm:$0xff]
    %v196 = vld [vmem:[#allocation2 + $0xf0] sm:$0xff]
    %v197 = vld [vmem:[#allocation2 + $0xf8] sm:$0xff]
    %v198 = vld [vmem:[#allocation2 + $0x100] sm:$0xff]
    %v199 = vld [vmem:[#allocation2 + $0x108] sm:$0xff]
    %v200 = vld [vmem:[#allocation2 + $0x110] sm:$0xff]
    %v201 = vld [vmem:[#allocation2 + $0x118] sm:$0xff]
    %v202 = vld [vmem:[#allocation2 + $0x120] sm:$0xff]
    %v203 = vld [vmem:[#allocation2 + $0x128] sm:$0xff]
    %v204 = vld [vmem:[#allocation2 + $0x130] sm:$0xff]
    %v205 = vld [vmem:[#allocation2 + $0x138] sm:$0xff]
    %v206 = vld [vmem:[#allocation2 + $0x140] sm:$0xff]
    %v207 = vld [vmem:[#allocation2 + $0x148] sm:$0xff]
    %v208 = vld [vmem:[#allocation2 + $0x150] sm:$0xff]
    %v209 = vld [vmem:[#allocation2 + $0x158] sm:$0xff]
    %v210 = vld [vmem:[#allocation2 + $0x160] sm:$0xff]
    %v211 = vld [vmem:[#allocation2 + $0x168] sm:$0xff]
    %v212 = vld [vmem:[#allocation2 + $0x170] sm:$0xff]
    %v213 = vld [vmem:[#allocation2 + $0x178] sm:$0xff]
    %v214 = vld [vmem:[#allocation2 + $0x180] sm:$0xff]
    %v215 = vld [vmem:[#allocation2 + $0x188] sm:$0xff]
    %v216 = vld [vmem:[#allocation2 + $0x190] sm:$0xff]
    %v217 = vld [vmem:[#allocation2 + $0x198] sm:$0xff]
    %v218 = vld [vmem:[#allocation2 + $0x1a0] sm:$0xff]
    %v219 = vld [vmem:[#allocation2 + $0x1a8] sm:$0xff]
    %v220 = vld [vmem:[#allocation2 + $0x1b0] sm:$0xff]
    %v221 = vld [vmem:[#allocation2 + $0x1b8] sm:$0xff]
    %v222 = vld [vmem:[#allocation2 + $0x1c0] sm:$0xff]
    %v223 = vld [vmem:[#allocation2 + $0x1c8] sm:$0xff]
    %v224 = vld [vmem:[#allocation2 + $0x1d0] sm:$0xff]
    %v225 = vld [vmem:[#allocation2 + $0x1d8] sm:$0xff]
    %v226 = vld [vmem:[#allocation2 + $0x1e0] sm:$0xff]
    %v227 = vld [vmem:[#allocation2 + $0x1e8] sm:$0xff]
    %v228 = vld [vmem:[#allocation2 + $0x1f0] sm:$0xff]
    %v229 = vld [vmem:[#allocation2 + $0x1f8] sm:$0xff]
    %v230 = vld [vmem:[#allocation2 + $0x200] sm:$0xff]
    %v231 = vld [vmem:[#allocation2 + $0x208] sm:$0xff]
    %v232 = vld [vmem:[#allocation2 + $0x210] sm:$0xff]
    %v233 = vld [vmem:[#allocation2 + $0x218] sm:$0xff]
    %v234 = vld [vmem:[#allocation2 + $0x220] sm:$0xff]
    %v235 = vld [vmem:[#allocation2 + $0x228] sm:$0xff]
    %v236 = vld [vmem:[#allocation2 + $0x230] sm:$0xff]
    %v237 = vld [vmem:[#allocation2 + $0x238] sm:$0xff]
    %v238 = vld [vmem:[#allocation2 + $0x240] sm:$0xff]
    %v239 = vld [vmem:[#allocation2 + $0x248] sm:$0xff]
    %v240 = vld [vmem:[#allocation2 + $0x250] sm:$0xff]
    %v241 = vld [vmem:[#allocation2 + $0x258] sm:$0xff]
    %v242 = vld [vmem:[#allocation2 + $0x260] sm:$0xff]
    %v243 = vld [vmem:[#allocation2 + $0x268] sm:$0xff]
    %v244 = vld [vmem:[#allocation2 + $0x270] sm:$0xff]
    %v245 = vld [vmem:[#allocation2 + $0x278] sm:$0xff]
    %v246 = vld [vmem:[#allocation2 + $0x280] sm:$0xff]
    %v247 = vld [vmem:[#allocation2 + $0x288] sm:$0xff]
    %v248 = vld [vmem:[#allocation2 + $0x290] sm:$0xff]
    %v249 = vld [vmem:[#allocation2 + $0x298] sm:$0xff]
    %v250 = vld [vmem:[#allocation2 + $0x2a0] sm:$0xff]
    %v251 = vld [vmem:[#allocation2 + $0x2a8] sm:$0xff]
    %v252 = vld [vmem:[#allocation2 + $0x2b0] sm:$0xff]
    %v253 = vld [vmem:[#allocation2 + $0x2b8] sm:$0xff]
    %v254 = vld [vmem:[#allocation2 + $0x2c0] sm:$0xff]
    %v255 = vld [vmem:[#allocation2 + $0x2c8] sm:$0xff]
    %v256 = vld [vmem:[#allocation2 + $0x2d0] sm:$0xff]
    %v257 = vld [vmem:[#allocation2 + $0x2d8] sm:$0xff]
    %v258 = vld [vmem:[#allocation2 + $0x2e0] sm:$0xff]
    %v259 = vld [vmem:[#allocation2 + $0x2e8] sm:$0xff]
    %v260 = vld [vmem:[#allocation2 + $0x2f0] sm:$0xff]
    %v261 = vld [vmem:[#allocation2 + $0x2f8] sm:$0xff]
    %v262 = vld [vmem:[#allocation2 + $0x300] sm:$0xff]
    %v263 = vld [vmem:[#allocation2 + $0x308] sm:$0xff]
    %v264 = vld [vmem:[#allocation2 + $0x310] sm:$0xff]
    %v265 = vld [vmem:[#allocation2 + $0x318] sm:$0xff]
    %v266 = vld [vmem:[#allocation2 + $0x320] sm:$0xff]
    %v267 = vld [vmem:[#allocation2 + $0x328] sm:$0xff]
    %v268 = vld [vmem:[#allocation2 + $0x330] sm:$0xff]
    %v269 = vld [vmem:[#allocation2 + $0x338] sm:$0xff]
    %v270 = vld [vmem:[#allocation2 + $0x340] sm:$0xff]
    %v271 = vld [vmem:[#allocation2 + $0x348] sm:$0xff]
    %v272 = vld [vmem:[#allocation2 + $0x350] sm:$0xff]
    %v273 = vld [vmem:[#allocation2 + $0x358] sm:$0xff]
    %v274 = vld [vmem:[#allocation2 + $0x360] sm:$0xff]
    %v275 = vld [vmem:[#allocation2 + $0x368] sm:$0xff]
    %v276 = vld [vmem:[#allocation2 + $0x370] sm:$0xff]
    %v277 = vld [vmem:[#allocation2 + $0x378] sm:$0xff]
    %v278 = vld [vmem:[#allocation2 + $0x380] sm:$0xff]
    %v279 = vld [vmem:[#allocation2 + $0x388] sm:$0xff]
    %v280 = vld [vmem:[#allocation2 + $0x390] sm:$0xff]
    %v281 = vld [vmem:[#allocation2 + $0x398] sm:$0xff]
    %v282 = vld [vmem:[#allocation2 + $0x3a0] sm:$0xff]
    %v283 = vld [vmem:[#allocation2 + $0x3a8] sm:$0xff]
    %v284 = vld [vmem:[#allocation2 + $0x3b0] sm:$0xff]
    %v285 = vld [vmem:[#allocation2 + $0x3b8] sm:$0xff]
    %v286 = vld [vmem:[#allocation2 + $0x3c0] sm:$0xff]
    %v287 = vld [vmem:[#allocation2 + $0x3c8] sm:$0xff]
    %v288 = vld [vmem:[#allocation2 + $0x3d0] sm:$0xff]
    %v289 = vld [vmem:[#allocation2 + $0x3d8] sm:$0xff]
    %v290 = vld [vmem:[#allocation2 + $0x3e0] sm:$0xff]
    %v291 = vld [vmem:[#allocation2 + $0x3e8] sm:$0xff]
    %v292 = vld [vmem:[#allocation2 + $0x3f0] sm:$0xff]
    %v293 = vld [vmem:[#allocation2 + $0x3f8] sm:$0xff]
    %v294 = vld [vmem:[#allocation2 + $0x400] sm:$0xff]
    %v295 = vld [vmem:[#allocation2 + $0x408] sm:$0xff]
    %v296 = vld [vmem:[#allocation2 + $0x410] sm:$0xff]
    %v297 = vld [vmem:[#allocation2 + $0x418] sm:$0xff]
    %v298 = vld [vmem:[#allocation2 + $0x420] sm:$0xff]
    %v299 = vld [vmem:[#allocation2 + $0x428] sm:$0xff]
    %v300 = vld [vmem:[#allocation2 + $0x430] sm:$0xff]
    %v301 = vld [vmem:[#allocation2 + $0x438] sm:$0xff]
    %v302 = vld [vmem:[#allocation2 + $0x440] sm:$0xff]
    %v303 = vld [vmem:[#allocation2 + $0x448] sm:$0xff]
    %v304 = vld [vmem:[#allocation2 + $0x450] sm:$0xff]
    %v305 = vld [vmem:[#allocation2 + $0x458] sm:$0xff]
    %v306 = vld [vmem:[#allocation2 + $0x460] sm:$0xff]
    %v307 = vld [vmem:[#allocation2 + $0x468] sm:$0xff]
    %v308 = vld [vmem:[#allocation2 + $0x470] sm:$0xff]
    %v309 = vld [vmem:[#allocation2 + $0x478] sm:$0xff]
    %v310 = vld [vmem:[#allocation2 + $0x480] sm:$0xff]
    %v311 = vld [vmem:[#allocation2 + $0x488] sm:$0xff]
    %v312 = vld [vmem:[#allocation2 + $0x490] sm:$0xff]
    %v313 = vld [vmem:[#allocation2 + $0x498] sm:$0xff]
    %v314 = vld [vmem:[#allocation2 + $0x4a0] sm:$0xff]
    %v315 = vld [vmem:[#allocation2 + $0x4a8] sm:$0xff]
    %v316 = vld [vmem:[#allocation2 + $0x4b0] sm:$0xff]
    %v317 = vld [vmem:[#allocation2 + $0x4b8] sm:$0xff]
    %v318 = vld [vmem:[#allocation2 + $0x4c0] sm:$0xff]
    %v319 = vld [vmem:[#allocation2 + $0x4c8] sm:$0xff]
    %v320 = vld [vmem:[#allocation2 + $0x4d0] sm:$0xff]
    %v321 = vld [vmem:[#allocation2 + $0x4d8] sm:$0xff]
    %v322 = vld [vmem:[#allocation2 + $0x4e0] sm:$0xff]
    %v323 = vld [vmem:[#allocation2 + $0x4e8] sm:$0xff]
    %v324 = vld [vmem:[#allocation2 + $0x4f0] sm:$0xff]
    %v325 = vld [vmem:[#allocation2 + $0x4f8] sm:$0xff]
    %v326 = vld [vmem:[#allocation2 + $0x500] sm:$0xff]
    %v327 = vld [vmem:[#allocation2 + $0x508] sm:$0xff]
    %v328 = vld [vmem:[#allocation2 + $0x510] sm:$0xff]
    %v329 = vld [vmem:[#allocation2 + $0x518] sm:$0xff]
    %v330 = vld [vmem:[#allocation2 + $0x520] sm:$0xff]
    %v331 = vld [vmem:[#allocation2 + $0x528] sm:$0xff]
    %v332 = vld [vmem:[#allocation2 + $0x530] sm:$0xff]
    %v333 = vld [vmem:[#allocation2 + $0x538] sm:$0xff]
    %v334 = vld [vmem:[#allocation2 + $0x540] sm:$0xff]
    %v335 = vld [vmem:[#allocation2 + $0x548] sm:$0xff]
    %v336 = vld [vmem:[#allocation2 + $0x550] sm:$0xff]
    %v337 = vld [vmem:[#allocation2 + $0x558] sm:$0xff]
    %v338 = vld [vmem:[#allocation2 + $0x560] sm:$0xff]
    %v339 = vld [vmem:[#allocation2 + $0x568] sm:$0xff]
    %v340 = vld [vmem:[#allocation2 + $0x570] sm:$0xff]
    %v341 = vld [vmem:[#allocation2 + $0x578] sm:$0xff]
    %v342 = vld [vmem:[#allocation2 + $0x580] sm:$0xff]
    %v343 = vld [vmem:[#allocation2 + $0x588] sm:$0xff]
    %v344 = vld [vmem:[#allocation2 + $0x590] sm:$0xff]
    %v345 = vld [vmem:[#allocation2 + $0x598] sm:$0xff]
    %v346 = vld [vmem:[#allocation2 + $0x5a0] sm:$0xff]
    %v347 = vld [vmem:[#allocation2 + $0x5a8] sm:$0xff]
    %v348 = vld [vmem:[#allocation2 + $0x5b0] sm:$0xff]
    %v349 = vld [vmem:[#allocation2 + $0x5b8] sm:$0xff]
    %v350 = vld [vmem:[#allocation2 + $0x5c0] sm:$0xff]
    %v351 = vld [vmem:[#allocation2 + $0x5c8] sm:$0xff]
    %v352 = vld [vmem:[#allocation2 + $0x5d0] sm:$0xff]
    %v353 = vld [vmem:[#allocation2 + $0x5d8] sm:$0xff]
    %v354 = vld [vmem:[#allocation2 + $0x5e0] sm:$0xff]
    %v355 = vld [vmem:[#allocation2 + $0x5e8] sm:$0xff]
    %v356 = vld [vmem:[#allocation2 + $0x5f0] sm:$0xff]
    %v357 = vld [vmem:[#allocation2 + $0x5f8] sm:$0xff]
    %v358 = vld [vmem:[#allocation2 + $0x600] sm:$0xff]
    %v359 = vld [vmem:[#allocation2 + $0x608] sm:$0xff]
    %v360 = vld [vmem:[#allocation2 + $0x610] sm:$0xff]
    %v361 = vld [vmem:[#allocation2 + $0x618] sm:$0xff]
    %v362 = vld [vmem:[#allocation2 + $0x620] sm:$0xff]
    %v363 = vld [vmem:[#allocation2 + $0x628] sm:$0xff]
    %v364 = vld [vmem:[#allocation2 + $0x630] sm:$0xff]
    %v365 = vld [vmem:[#allocation2 + $0x638] sm:$0xff]
    %v366 = vld [vmem:[#allocation2 + $0x640] sm:$0xff]
    %v367 = vld [vmem:[#allocation2 + $0x648] sm:$0xff]
    %v368 = vld [vmem:[#allocation2 + $0x650] sm:$0xff]
    %v369 = vld [vmem:[#allocation2 + $0x658] sm:$0xff]
    %v370 = vld [vmem:[#allocation2 + $0x660] sm:$0xff]
    %v371 = vld [vmem:[#allocation2 + $0x668] sm:$0xff]
    %v372 = vld [vmem:[#allocation2 + $0x670] sm:$0xff]
    %v373 = vld [vmem:[#allocation2 + $0x678] sm:$0xff]
    %v374 = vld [vmem:[#allocation2 + $0x680] sm:$0xff]
    %v375 = vld [vmem:[#allocation2 + $0x688] sm:$0xff]
    %v376 = vld [vmem:[#allocation2 + $0x690] sm:$0xff]
    %v377 = vld [vmem:[#allocation2 + $0x698] sm:$0xff]
    %v378 = vld [vmem:[#allocation2 + $0x6a0] sm:$0xff]
    %v379 = vld [vmem:[#allocation2 + $0x6a8] sm:$0xff]
    %v380 = vld [vmem:[#allocation2 + $0x6b0] sm:$0xff]
    %v381 = vld [vmem:[#allocation2 + $0x6b8] sm:$0xff]
    %v382 = vld [vmem:[#allocation2 + $0x6c0] sm:$0xff]
    %v383 = vld [vmem:[#allocation2 + $0x6c8] sm:$0xff]
    %v384 = vld [vmem:[#allocation2 + $0x6d0] sm:$0xff]
    %v385 = vld [vmem:[#allocation2 + $0x6d8] sm:$0xff]
    %v386 = vld [vmem:[#allocation2 + $0x6e0] sm:$0xff]
    %v387 = vld [vmem:[#allocation2 + $0x6e8] sm:$0xff]
    %v388 = vld [vmem:[#allocation2 + $0x6f0] sm:$0xff]
    %v389 = vld [vmem:[#allocation2 + $0x6f8] sm:$0xff]
    %v390 = vld [vmem:[#allocation2 + $0x700] sm:$0xff]
    %v391 = vld [vmem:[#allocation2 + $0x708] sm:$0xff]
    %v392 = vld [vmem:[#allocation2 + $0x710] sm:$0xff]
    %v393 = vld [vmem:[#allocation2 + $0x718] sm:$0xff]
    %v394 = vld [vmem:[#allocation2 + $0x720] sm:$0xff]
    %v395 = vld [vmem:[#allocation2 + $0x728] sm:$0xff]
    %v396 = vld [vmem:[#allocation2 + $0x730] sm:$0xff]
    %v397 = vld [vmem:[#allocation2 + $0x738] sm:$0xff]
    %v398 = vld [vmem:[#allocation2 + $0x740] sm:$0xff]
    %v399 = vld [vmem:[#allocation2 + $0x748] sm:$0xff]
    %v400 = vld [vmem:[#allocation2 + $0x750] sm:$0xff]
    %v401 = vld [vmem:[#allocation2 + $0x758] sm:$0xff]
    %v402 = vld [vmem:[#allocation2 + $0x760] sm:$0xff]
    %v403 = vld [vmem:[#allocation2 + $0x768] sm:$0xff]
    %v404 = vld [vmem:[#allocation2 + $0x770] sm:$0xff]
    %v405 = vld [vmem:[#allocation2 + $0x778] sm:$0xff]
    %v406 = vld [vmem:[#allocation2 + $0x780] sm:$0xff]
    %v407 = vld [vmem:[#allocation2 + $0x788] sm:$0xff]
    %v408 = vld [vmem:[#allocation2 + $0x790] sm:$0xff]
    %v409 = vld [vmem:[#allocation2 + $0x798] sm:$0xff]
    %v410 = vld [vmem:[#allocation2 + $0x7a0] sm:$0xff]
    %v411 = vld [vmem:[#allocation2 + $0x7a8] sm:$0xff]
    %v412 = vld [vmem:[#allocation2 + $0x7b0] sm:$0xff]
    %v413 = vld [vmem:[#allocation2 + $0x7b8] sm:$0xff]
    %v414 = vld [vmem:[#allocation2 + $0x7c0] sm:$0xff]
    %v415 = vld [vmem:[#allocation2 + $0x7c8] sm:$0xff]
    %v416 = vld [vmem:[#allocation2 + $0x7d0] sm:$0xff]
    %v417 = vld [vmem:[#allocation2 + $0x7d8] sm:$0xff]
    %v418 = vld [vmem:[#allocation2 + $0x7e0] sm:$0xff]
    %v419 = vld [vmem:[#allocation2 + $0x7e8] sm:$0xff]
    %v420 = vld [vmem:[#allocation2 + $0x7f0] sm:$0xff]
    %v421 = vld [vmem:[#allocation2 + $0x7f8] sm:$0xff]
    %v422 = vld [vmem:[#allocation2 + $0x800] sm:$0xff]
    %v423 = vld [vmem:[#allocation2 + $0x808] sm:$0xff]
    %v424 = vld [vmem:[#allocation2 + $0x810] sm:$0xff]
    %v425 = vld [vmem:[#allocation2 + $0x818] sm:$0xff]
    %v426 = vld [vmem:[#allocation2 + $0x820] sm:$0xff]
    %v427 = vld [vmem:[#allocation2 + $0x828] sm:$0xff]
    %v428 = vld [vmem:[#allocation2 + $0x830] sm:$0xff]
    %v429 = vld [vmem:[#allocation2 + $0x838] sm:$0xff]
    %v430 = vld [vmem:[#allocation2 + $0x840] sm:$0xff]
    %v431 = vld [vmem:[#allocation2 + $0x848] sm:$0xff]
    %v432 = vld [vmem:[#allocation2 + $0x850] sm:$0xff]
    %v433 = vld [vmem:[#allocation2 + $0x858] sm:$0xff]
    %v434 = vld [vmem:[#allocation2 + $0x860] sm:$0xff]
    %v435 = vld [vmem:[#allocation2 + $0x868] sm:$0xff]
    %v436 = vld [vmem:[#allocation2 + $0x870] sm:$0xff]
    %v437 = vld [vmem:[#allocation2 + $0x878] sm:$0xff]
    %v438 = vld [vmem:[#allocation2 + $0x880] sm:$0xff]
    %v439 = vld [vmem:[#allocation2 + $0x888] sm:$0xff]
    %v440 = vld [vmem:[#allocation2 + $0x890] sm:$0xff]
    %v441 = vld [vmem:[#allocation2 + $0x898] sm:$0xff]
    %v442 = vld [vmem:[#allocation2 + $0x8a0] sm:$0xff]
    %v443 = vld [vmem:[#allocation2 + $0x8a8] sm:$0xff]
    %v444 = vld [vmem:[#allocation2 + $0x8b0] sm:$0xff]
    %v445 = vld [vmem:[#allocation2 + $0x8b8] sm:$0xff]
    %v446 = vld [vmem:[#allocation2 + $0x8c0] sm:$0xff]
    %v447 = vld [vmem:[#allocation2 + $0x8c8] sm:$0xff]
    %v448 = vld [vmem:[#allocation2 + $0x8d0] sm:$0xff]
    %v449 = vld [vmem:[#allocation2 + $0x8d8] sm:$0xff]
    %v450 = vld [vmem:[#allocation2 + $0x8e0] sm:$0xff]
    %v451 = vld [vmem:[#allocation2 + $0x8e8] sm:$0xff]
    %v452 = vld [vmem:[#allocation2 + $0x8f0] sm:$0xff]
    %v453 = vld [vmem:[#allocation2 + $0x8f8] sm:$0xff]
    %v454 = vld [vmem:[#allocation2 + $0x900] sm:$0xff]
    %v455 = vld [vmem:[#allocation2 + $0x908] sm:$0xff]
    %v456 = vld [vmem:[#allocation2 + $0x910] sm:$0xff]
    %v457 = vld [vmem:[#allocation2 + $0x918] sm:$0xff]
    %v458 = vld [vmem:[#allocation2 + $0x920] sm:$0xff]
    %v459 = vld [vmem:[#allocation2 + $0x928] sm:$0xff]
    %v460 = vld [vmem:[#allocation2 + $0x930] sm:$0xff]
    %v461 = vld [vmem:[#allocation2 + $0x938] sm:$0xff]
    %v462 = vld [vmem:[#allocation2 + $0x940] sm:$0xff]
    %v463 = vld [vmem:[#allocation2 + $0x948] sm:$0xff]
    %v464 = vld [vmem:[#allocation2 + $0x950] sm:$0xff]
    %v465 = vld [vmem:[#allocation2 + $0x958] sm:$0xff]
    %v466 = vld [vmem:[#allocation2 + $0x960] sm:$0xff]
    %v467 = vld [vmem:[#allocation2 + $0x968] sm:$0xff]
    %v468 = vld [vmem:[#allocation2 + $0x970] sm:$0xff]
    %v469 = vld [vmem:[#allocation2 + $0x978] sm:$0xff]
    %v470 = vld [vmem:[#allocation2 + $0x980] sm:$0xff]
    %v471 = vld [vmem:[#allocation2 + $0x988] sm:$0xff]
    %v472 = vld [vmem:[#allocation2 + $0x990] sm:$0xff]
    %v473 = vld [vmem:[#allocation2 + $0x998] sm:$0xff]
    %v474 = vld [vmem:[#allocation2 + $0x9a0] sm:$0xff]
    %v475 = vld [vmem:[#allocation2 + $0x9a8] sm:$0xff]
    %v476 = vld [vmem:[#allocation2 + $0x9b0] sm:$0xff]
    %v477 = vld [vmem:[#allocation2 + $0x9b8] sm:$0xff]
    %v478 = vld [vmem:[#allocation2 + $0x9c0] sm:$0xff]
    %v479 = vld [vmem:[#allocation2 + $0x9c8] sm:$0xff]
    %v480 = vld [vmem:[#allocation2 + $0x9d0] sm:$0xff]
    %v481 = vld [vmem:[#allocation2 + $0x9d8] sm:$0xff]
    %v482 = vld [vmem:[#allocation2 + $0x9e0] sm:$0xff]
    %v483 = vld [vmem:[#allocation2 + $0x9e8] sm:$0xff]
    %v484 = vld [vmem:[#allocation2 + $0x9f0] sm:$0xff]
    %v485 = vld [vmem:[#allocation2 + $0x9f8] sm:$0xff]
    %v486 = vld [vmem:[#allocation2 + $0xa00] sm:$0xff]
    %v487 = vld [vmem:[#allocation2 + $0xa08] sm:$0xff]
    %v488 = vld [vmem:[#allocation2 + $0xa10] sm:$0xff]
    %v489 = vld [vmem:[#allocation2 + $0xa18] sm:$0xff]
    %v490 = vld [vmem:[#allocation2 + $0xa20] sm:$0xff]
    %v491 = vld [vmem:[#allocation2 + $0xa28] sm:$0xff]
    %v492 = vld [vmem:[#allocation2 + $0xa30] sm:$0xff]
    %v493 = vld [vmem:[#allocation2 + $0xa38] sm:$0xff]
    %v494 = vld [vmem:[#allocation2 + $0xa40] sm:$0xff]
    %v495 = vld [vmem:[#allocation2 + $0xa48] sm:$0xff]
    %v496 = vld [vmem:[#allocation2 + $0xa50] sm:$0xff]
    %v497 = vld [vmem:[#allocation2 + $0xa58] sm:$0xff]
    %v498 = vld [vmem:[#allocation2 + $0xa60] sm:$0xff]
    %v499 = vld [vmem:[#allocation2 + $0xa68] sm:$0xff]
    %v500 = vld [vmem:[#allocation2 + $0xa70] sm:$0xff]
    %v501 = vld [vmem:[#allocation2 + $0xa78] sm:$0xff]
    %v502 = vld [vmem:[#allocation2 + $0xa80] sm:$0xff]
    %v503 = vld [vmem:[#allocation2 + $0xa88] sm:$0xff]
    %v504 = vld [vmem:[#allocation2 + $0xa90] sm:$0xff]
    %v505 = vld [vmem:[#allocation2 + $0xa98] sm:$0xff]
    %v506 = vld [vmem:[#allocation2 + $0xaa0] sm:$0xff]
    %v507 = vld [vmem:[#allocation2 + $0xaa8] sm:$0xff]
    %v508 = vld [vmem:[#allocation2 + $0xab0] sm:$0xff]
    %v509 = vld [vmem:[#allocation2 + $0xab8] sm:$0xff]
    %v510 = vld [vmem:[#allocation2 + $0xac0] sm:$0xff]
    %v511 = vld [vmem:[#allocation2 + $0xac8] sm:$0xff]
    %v512 = vld [vmem:[#allocation2 + $0xad0] sm:$0xff]
    %v513 = vld [vmem:[#allocation2 + $0xad8] sm:$0xff]
    %v514 = vld [vmem:[#allocation2 + $0xae0] sm:$0xff]
    %v515 = vld [vmem:[#allocation2 + $0xae8] sm:$0xff]
    %v516 = vld [vmem:[#allocation2 + $0xaf0] sm:$0xff]
    %v517 = vld [vmem:[#allocation2 + $0xaf8] sm:$0xff]
    %v518 = vld [vmem:[#allocation2 + $0xb00] sm:$0xff]
    %v519 = vld [vmem:[#allocation2 + $0xb08] sm:$0xff]
    %v520 = vld [vmem:[#allocation2 + $0xb10] sm:$0xff]
    %v521 = vld [vmem:[#allocation2 + $0xb18] sm:$0xff]
    %v522 = vld [vmem:[#allocation2 + $0xb20] sm:$0xff]
    %v523 = vld [vmem:[#allocation2 + $0xb28] sm:$0xff]
    %v524 = vld [vmem:[#allocation2 + $0xb30] sm:$0xff]
    %v525 = vld [vmem:[#allocation2 + $0xb38] sm:$0xff]
    %v526 = vld [vmem:[#allocation2 + $0xb40] sm:$0xff]
    %v527 = vld [vmem:[#allocation2 + $0xb48] sm:$0xff]
    %v528 = vld [vmem:[#allocation2 + $0xb50] sm:$0xff]
    %v529 = vld [vmem:[#allocation2 + $0xb58] sm:$0xff]
    %v530 = vld [vmem:[#allocation2 + $0xb60] sm:$0xff]
    %v531 = vld [vmem:[#allocation2 + $0xb68] sm:$0xff]
    %v532 = vld [vmem:[#allocation2 + $0xb70] sm:$0xff]
    %v533 = vld [vmem:[#allocation2 + $0xb78] sm:$0xff]
    %v534 = vld [vmem:[#allocation2 + $0xb80] sm:$0xff]
    %v535 = vld [vmem:[#allocation2 + $0xb88] sm:$0xff]
    %v536 = vld [vmem:[#allocation2 + $0xb90] sm:$0xff]
    %v537 = vld [vmem:[#allocation2 + $0xb98] sm:$0xff]
    %v538 = vld [vmem:[#allocation2 + $0xba0] sm:$0xff]
    %v539 = vld [vmem:[#allocation2 + $0xba8] sm:$0xff]
    %v540 = vld [vmem:[#allocation2 + $0xbb0] sm:$0xff]
    %v541 = vld [vmem:[#allocation2 + $0xbb8] sm:$0xff]
    %v542 = vld [vmem:[#allocation2 + $0xbc0] sm:$0xff]
    %v543 = vld [vmem:[#allocation2 + $0xbc8] sm:$0xff]
    %v544 = vld [vmem:[#allocation2 + $0xbd0] sm:$0xff]
    %v545 = vld [vmem:[#allocation2 + $0xbd8] sm:$0xff]
    %v546 = vld [vmem:[#allocation2 + $0xbe0] sm:$0xff]
    %v547 = vld [vmem:[#allocation2 + $0xbe8] sm:$0xff]
    %v548 = vld [vmem:[#allocation2 + $0xbf0] sm:$0xff]
    %v549 = vld [vmem:[#allocation2 + $0xbf8] sm:$0xff]
    %v550 = vld [vmem:[#allocation2 + $0xc00] sm:$0xff]
    %v551 = vld [vmem:[#allocation2 + $0xc08] sm:$0xff]
    %v552 = vld [vmem:[#allocation2 + $0xc10] sm:$0xff]
    %v553 = vld [vmem:[#allocation2 + $0xc18] sm:$0xff]
    %v554 = vld [vmem:[#allocation2 + $0xc20] sm:$0xff]
    %v555 = vld [vmem:[#allocation2 + $0xc28] sm:$0xff]
    %v556 = vld [vmem:[#allocation2 + $0xc30] sm:$0xff]
    %v557 = vld [vmem:[#allocation2 + $0xc38] sm:$0xff]
    %v558 = vld [vmem:[#allocation2 + $0xc40] sm:$0xff]
    %v559 = vld [vmem:[#allocation2 + $0xc48] sm:$0xff]
    %v560 = vld [vmem:[#allocation2 + $0xc50] sm:$0xff]
    %v561 = vld [vmem:[#allocation2 + $0xc58] sm:$0xff]
    %v562 = vld [vmem:[#allocation2 + $0xc60] sm:$0xff]
    %v563 = vld [vmem:[#allocation2 + $0xc68] sm:$0xff]
    %v564 = vld [vmem:[#allocation2 + $0xc70] sm:$0xff]
    %v565 = vld [vmem:[#allocation2 + $0xc78] sm:$0xff]
    %v566 = vld [vmem:[#allocation2 + $0xc80] sm:$0xff]
    %v567 = vld [vmem:[#allocation2 + $0xc88] sm:$0xff]
    %v568 = vld [vmem:[#allocation2 + $0xc90] sm:$0xff]
    %v569 = vld [vmem:[#allocation2 + $0xc98] sm:$0xff]
    %v570 = vld [vmem:[#allocation2 + $0xca0] sm:$0xff]
    %v571 = vld [vmem:[#allocation2 + $0xca8] sm:$0xff]
    %v572 = vld [vmem:[#allocation2 + $0xcb0] sm:$0xff]
    %v573 = vld [vmem:[#allocation2 + $0xcb8] sm:$0xff]
    %v574 = vld [vmem:[#allocation2 + $0xcc0] sm:$0xff]
    %v575 = vld [vmem:[#allocation2 + $0xcc8] sm:$0xff]
    %v576 = vld [vmem:[#allocation2 + $0xcd0] sm:$0xff]
    %v577 = vld [vmem:[#allocation2 + $0xcd8] sm:$0xff]
    %v578 = vld [vmem:[#allocation2 + $0xce0] sm:$0xff]
    %v579 = vld [vmem:[#allocation2 + $0xce8] sm:$0xff]
    %v580 = vld [vmem:[#allocation2 + $0xcf0] sm:$0xff]
    %v581 = vld [vmem:[#allocation2 + $0xcf8] sm:$0xff]
    %v582 = vld [vmem:[#allocation2 + $0xd00] sm:$0xff]
    %v583 = vld [vmem:[#allocation2 + $0xd08] sm:$0xff]
    %v584 = vld [vmem:[#allocation2 + $0xd10] sm:$0xff]
    %v585 = vld [vmem:[#allocation2 + $0xd18] sm:$0xff]
    %v586 = vld [vmem:[#allocation2 + $0xd20] sm:$0xff]
    %v587 = vld [vmem:[#allocation2 + $0xd28] sm:$0xff]
    %v588 = vld [vmem:[#allocation2 + $0xd30] sm:$0xff]
    %v589 = vld [vmem:[#allocation2 + $0xd38] sm:$0xff]
    %v590 = vld [vmem:[#allocation2 + $0xd40] sm:$0xff]
    %v591 = vld [vmem:[#allocation2 + $0xd48] sm:$0xff]
    %v592 = vld [vmem:[#allocation2 + $0xd50] sm:$0xff]
    %v593 = vld [vmem:[#allocation2 + $0xd58] sm:$0xff]
    %v594 = vld [vmem:[#allocation2 + $0xd60] sm:$0xff]
    %v595 = vld [vmem:[#allocation2 + $0xd68] sm:$0xff]
    %v596 = vld [vmem:[#allocation2 + $0xd70] sm:$0xff]
    %v597 = vld [vmem:[#allocation2 + $0xd78] sm:$0xff]
    %v598 = vld [vmem:[#allocation2 + $0xd80] sm:$0xff]
    %v599 = vld [vmem:[#allocation2 + $0xd88] sm:$0xff]
    %v600 = vld [vmem:[#allocation2 + $0xd90] sm:$0xff]
    %v601 = vld [vmem:[#allocation2 + $0xd98] sm:$0xff]
    %v602 = vld [vmem:[#allocation2 + $0xda0] sm:$0xff]
    %v603 = vld [vmem:[#allocation2 + $0xda8] sm:$0xff]
    %v604 = vld [vmem:[#allocation2 + $0xdb0] sm:$0xff]
    %v605 = vld [vmem:[#allocation2 + $0xdb8] sm:$0xff]
    %v606 = vld [vmem:[#allocation2 + $0xdc0] sm:$0xff]
    %v607 = vld [vmem:[#allocation2 + $0xdc8] sm:$0xff]
    %v608 = vld [vmem:[#allocation2 + $0xdd0] sm:$0xff]
    %v609 = vld [vmem:[#allocation2 + $0xdd8] sm:$0xff]
    %v610 = vld [vmem:[#allocation2 + $0xde0] sm:$0xff]
    %v611 = vld [vmem:[#allocation2 + $0xde8] sm:$0xff]
    %v612 = vld [vmem:[#allocation2 + $0xdf0] sm:$0xff]
    %v613 = vld [vmem:[#allocation2 + $0xdf8] sm:$0xff]
    %v614 = vld [vmem:[#allocation2 + $0xe00] sm:$0xff]
    %v615 = vld [vmem:[#allocation2 + $0xe08] sm:$0xff]
    %v616 = vld [vmem:[#allocation2 + $0xe10] sm:$0xff]
    %v617 = vld [vmem:[#allocation2 + $0xe18] sm:$0xff]
    %v618 = vld [vmem:[#allocation2 + $0xe20] sm:$0xff]
    %v619 = vld [vmem:[#allocation2 + $0xe28] sm:$0xff]
    %v620 = vld [vmem:[#allocation2 + $0xe30] sm:$0xff]
    %v621 = vld [vmem:[#allocation2 + $0xe38] sm:$0xff]
    %v622 = vld [vmem:[#allocation2 + $0xe40] sm:$0xff]
    %v623 = vld [vmem:[#allocation2 + $0xe48] sm:$0xff]
    %v624 = vld [vmem:[#allocation2 + $0xe50] sm:$0xff]
    %v625 = vld [vmem:[#allocation2 + $0xe58] sm:$0xff]
    %v626 = vld [vmem:[#allocation2 + $0xe60] sm:$0xff]
    %v627 = vld [vmem:[#allocation2 + $0xe68] sm:$0xff]
    %v628 = vld [vmem:[#allocation2 + $0xe70] sm:$0xff]
    %v629 = vld [vmem:[#allocation2 + $0xe78] sm:$0xff]
    %v630 = vld [vmem:[#allocation2 + $0xe80] sm:$0xff]
    %v631 = vld [vmem:[#allocation2 + $0xe88] sm:$0xff]
    %v632 = vld [vmem:[#allocation2 + $0xe90] sm:$0xff]
    %v633 = vld [vmem:[#allocation2 + $0xe98] sm:$0xff]
    %v634 = vld [vmem:[#allocation2 + $0xea0] sm:$0xff]
    %v635 = vld [vmem:[#allocation2 + $0xea8] sm:$0xff]
    %v636 = vld [vmem:[#allocation2 + $0xeb0] sm:$0xff]
    %v637 = vld [vmem:[#allocation2 + $0xeb8] sm:$0xff]
    %v638 = vld [vmem:[#allocation2 + $0xec0] sm:$0xff]
    %v639 = vld [vmem:[#allocation2 + $0xec8] sm:$0xff]
    %v640 = vld [vmem:[#allocation2 + $0xed0] sm:$0xff]
    %v641 = vld [vmem:[#allocation2 + $0xed8] sm:$0xff]
    %v642 = vld [vmem:[#allocation2 + $0xee0] sm:$0xff]
    %v643 = vld [vmem:[#allocation2 + $0xee8] sm:$0xff]
    %v644 = vld [vmem:[#allocation2 + $0xef0] sm:$0xff]
    %v645 = vld [vmem:[#allocation2 + $0xef8] sm:$0xff]
    %v646 = vld [vmem:[#allocation2 + $0xf00] sm:$0xff]
    %v647 = vld [vmem:[#allocation2 + $0xf08] sm:$0xff]
    %v648 = vld [vmem:[#allocation2 + $0xf10] sm:$0xff]
    %v649 = vld [vmem:[#allocation2 + $0xf18] sm:$0xff]
    %v650 = vld [vmem:[#allocation2 + $0xf20] sm:$0xff]
    %v651 = vld [vmem:[#allocation2 + $0xf28] sm:$0xff]
    %v652 = vld [vmem:[#allocation2 + $0xf30] sm:$0xff]
    %v653 = vld [vmem:[#allocation2 + $0xf38] sm:$0xff]
    %v654 = vld [vmem:[#allocation2 + $0xf40] sm:$0xff]
    %v655 = vld [vmem:[#allocation2 + $0xf48] sm:$0xff]
    %v656 = vld [vmem:[#allocation2 + $0xf50] sm:$0xff]
    %v657 = vld [vmem:[#allocation2 + $0xf58] sm:$0xff]
    %v658 = vld [vmem:[#allocation2 + $0xf60] sm:$0xff]
    %v659 = vld [vmem:[#allocation2 + $0xf68] sm:$0xff]
    %v660 = vld [vmem:[#allocation2 + $0xf70] sm:$0xff]
    %v661 = vld [vmem:[#allocation2 + $0xf78] sm:$0xff]
    %v662 = vld [vmem:[#allocation2 + $0xf80] sm:$0xff]
    %v663 = vld [vmem:[#allocation2 + $0xf88] sm:$0xff]
    %v664 = vld [vmem:[#allocation2 + $0xf90] sm:$0xff]
    %v665 = vld [vmem:[#allocation2 + $0xf98] sm:$0xff]
    %v666 = vld [vmem:[#allocation4] sm:$0xf]
    %v668 = vlaneseq
    %v669 = vshrl.u32 %v668, 7
    %v670 = vsub.s32 0, %v669
    %v671 = vrot.slane %v666, %v670
    %v672 = vlaneseq
    %v673 = vshrl.u32 %v672, 7
    %v674 = vsub.s32 1, %v673
    %v675 = vrot.slane %v666, %v674
    %v676 = vlaneseq
    %v677 = vshrl.u32 %v676, 7
    %v678 = vsub.s32 2, %v677
    %v679 = vrot.slane %v666, %v678
    %v680 = vlaneseq
    %v681 = vshrl.u32 %v680, 7
    %v682 = vsub.s32 3, %v681
    %v683 = vrot.slane %v666, %v682
    %v1188 = vunpack.c.l.b16 %v166
    %v1189 = vunpack.c.h.b16 %v166
    %v1190 = vunpack.c.l.b16 %v167
    %v1191 = vunpack.c.h.b16 %v167
    %v1192 = vunpack.c.l.b16 %v168
    %v1193 = vunpack.c.h.b16 %v168
    %v1194 = vunpack.c.l.b16 %v169
    %v1195 = vunpack.c.h.b16 %v169
    %v1196 = vunpack.c.l.b16 %v170
    %v1197 = vunpack.c.h.b16 %v170
    %v1198 = vunpack.c.l.b16 %v171
    %v1199 = vunpack.c.h.b16 %v171
    %v1200 = vunpack.c.l.b16 %v172
    %v1201 = vunpack.c.h.b16 %v172
    %v1202 = vunpack.c.l.b16 %v173
    %v1203 = vunpack.c.h.b16 %v173
    %v1204 = vunpack.c.l.b16 %v174
    %v1205 = vunpack.c.h.b16 %v174
    %v1206 = vunpack.c.l.b16 %v175
    %v1207 = vunpack.c.h.b16 %v175
    %v1208 = vunpack.c.l.b16 %v176
    %v1209 = vunpack.c.h.b16 %v176
    %v1210 = vunpack.c.l.b16 %v177
    %v1211 = vunpack.c.h.b16 %v177
    %v1212 = vunpack.c.l.b16 %v178
    %v1213 = vunpack.c.h.b16 %v178
    %v1214 = vunpack.c.l.b16 %v179
    %v1215 = vunpack.c.h.b16 %v179
    %v1216 = vunpack.c.l.b16 %v180
    %v1217 = vunpack.c.h.b16 %v180
    %v1218 = vunpack.c.l.b16 %v181
    %v1219 = vunpack.c.h.b16 %v181
    %v1220 = vunpack.c.l.b16 %v182
    %v1221 = vunpack.c.h.b16 %v182
    %v1222 = vunpack.c.l.b16 %v183
    %v1223 = vunpack.c.h.b16 %v183
    %v1224 = vunpack.c.l.b16 %v184
    %v1225 = vunpack.c.h.b16 %v184
    %v1226 = vunpack.c.l.b16 %v185
    %v1227 = vunpack.c.h.b16 %v185
    %v1228 = vunpack.c.l.b16 %v186
    %v1229 = vunpack.c.h.b16 %v186
    %v1230 = vunpack.c.l.b16 %v187
    %v1231 = vunpack.c.h.b16 %v187
    %v1232 = vunpack.c.l.b16 %v188
    %v1233 = vunpack.c.h.b16 %v188
    %v1234 = vunpack.c.l.b16 %v189
    %v1235 = vunpack.c.h.b16 %v189
    %v1236 = vunpack.c.l.b16 %v190
    %v1237 = vunpack.c.h.b16 %v190
    %v1238 = vunpack.c.l.b16 %v191
    %v1239 = vunpack.c.h.b16 %v191
    %v1240 = vunpack.c.l.b16 %v192
    %v1241 = vunpack.c.h.b16 %v192
    %v1242 = vunpack.c.l.b16 %v193
    %v1243 = vunpack.c.h.b16 %v193
    %v1244 = vunpack.c.l.b16 %v194
    %v1245 = vunpack.c.h.b16 %v194
    %v1246 = vunpack.c.l.b16 %v195
    %v1247 = vunpack.c.h.b16 %v195
    %v1248 = vunpack.c.l.b16 %v196
    %v1249 = vunpack.c.h.b16 %v196
    %v1250 = vunpack.c.l.b16 %v197
    %v1251 = vunpack.c.h.b16 %v197
    %v1252 = vunpack.c.l.b16 %v198
    %v1253 = vunpack.c.h.b16 %v198
    %v1254 = vunpack.c.l.b16 %v199
    %v1255 = vunpack.c.h.b16 %v199
    %v1256 = vunpack.c.l.b16 %v200
    %v1257 = vunpack.c.h.b16 %v200
    %v1258 = vunpack.c.l.b16 %v201
    %v1259 = vunpack.c.h.b16 %v201
    %v1260 = vunpack.c.l.b16 %v202
    %v1261 = vunpack.c.h.b16 %v202
    %v1262 = vunpack.c.l.b16 %v203
    %v1263 = vunpack.c.h.b16 %v203
    %v1264 = vunpack.c.l.b16 %v204
    %v1265 = vunpack.c.h.b16 %v204
    %v1266 = vunpack.c.l.b16 %v205
    %v1267 = vunpack.c.h.b16 %v205
    %v1268 = vunpack.c.l.b16 %v206
    %v1269 = vunpack.c.h.b16 %v206
    %v1270 = vunpack.c.l.b16 %v207
    %v1271 = vunpack.c.h.b16 %v207
    %v1272 = vunpack.c.l.b16 %v208
    %v1273 = vunpack.c.h.b16 %v208
    %v1274 = vunpack.c.l.b16 %v209
    %v1275 = vunpack.c.h.b16 %v209
    %v1276 = vunpack.c.l.b16 %v210
    %v1277 = vunpack.c.h.b16 %v210
    %v1278 = vunpack.c.l.b16 %v211
    %v1279 = vunpack.c.h.b16 %v211
    %v1280 = vunpack.c.l.b16 %v212
    %v1281 = vunpack.c.h.b16 %v212
    %v1282 = vunpack.c.l.b16 %v213
    %v1283 = vunpack.c.h.b16 %v213
    %v1284 = vunpack.c.l.b16 %v214
    %v1285 = vunpack.c.h.b16 %v214
    %v1286 = vunpack.c.l.b16 %v215
    %v1287 = vunpack.c.h.b16 %v215
    %v1288 = vunpack.c.l.b16 %v216
    %v1289 = vunpack.c.h.b16 %v216
    %v1290 = vunpack.c.l.b16 %v217
    %v1291 = vunpack.c.h.b16 %v217
    %v1292 = vunpack.c.l.b16 %v218
    %v1293 = vunpack.c.h.b16 %v218
    %v1294 = vunpack.c.l.b16 %v219
    %v1295 = vunpack.c.h.b16 %v219
    %v1296 = vunpack.c.l.b16 %v220
    %v1297 = vunpack.c.h.b16 %v220
    %v1298 = vunpack.c.l.b16 %v221
    %v1299 = vunpack.c.h.b16 %v221
    %v1300 = vunpack.c.l.b16 %v222
    %v1301 = vunpack.c.h.b16 %v222
    %v1302 = vunpack.c.l.b16 %v223
    %v1303 = vunpack.c.h.b16 %v223
    %v1304 = vunpack.c.l.b16 %v224
    %v1305 = vunpack.c.h.b16 %v224
    %v1306 = vunpack.c.l.b16 %v225
    %v1307 = vunpack.c.h.b16 %v225
    %v1308 = vunpack.c.l.b16 %v226
    %v1309 = vunpack.c.h.b16 %v226
    %v1310 = vunpack.c.l.b16 %v227
    %v1311 = vunpack.c.h.b16 %v227
    %v1312 = vunpack.c.l.b16 %v228
    %v1313 = vunpack.c.h.b16 %v228
    %v1314 = vunpack.c.l.b16 %v229
    %v1315 = vunpack.c.h.b16 %v229
    %v1316 = vunpack.c.l.b16 %v230
    %v1317 = vunpack.c.h.b16 %v230
    %v1318 = vunpack.c.l.b16 %v231
    %v1319 = vunpack.c.h.b16 %v231
    %v1320 = vunpack.c.l.b16 %v232
    %v1321 = vunpack.c.h.b16 %v232
    %v1322 = vunpack.c.l.b16 %v233
    %v1323 = vunpack.c.h.b16 %v233
    %v1324 = vunpack.c.l.b16 %v234
    %v1325 = vunpack.c.h.b16 %v234
    %v1326 = vunpack.c.l.b16 %v235
    %v1327 = vunpack.c.h.b16 %v235
    %v1328 = vunpack.c.l.b16 %v236
    %v1329 = vunpack.c.h.b16 %v236
    %v1330 = vunpack.c.l.b16 %v237
    %v1331 = vunpack.c.h.b16 %v237
    %v1332 = vunpack.c.l.b16 %v238
    %v1333 = vunpack.c.h.b16 %v238
    %v1334 = vunpack.c.l.b16 %v239
    %v1335 = vunpack.c.h.b16 %v239
    %v1336 = vunpack.c.l.b16 %v240
    %v1337 = vunpack.c.h.b16 %v240
    %v1338 = vunpack.c.l.b16 %v241
    %v1339 = vunpack.c.h.b16 %v241
    %v1340 = vunpack.c.l.b16 %v242
    %v1341 = vunpack.c.h.b16 %v242
    %v1342 = vunpack.c.l.b16 %v243
    %v1343 = vunpack.c.h.b16 %v243
    %v1344 = vunpack.c.l.b16 %v244
    %v1345 = vunpack.c.h.b16 %v244
    %v1346 = vunpack.c.l.b16 %v245
    %v1347 = vunpack.c.h.b16 %v245
    %v1348 = vunpack.c.l.b16 %v246
    %v1349 = vunpack.c.h.b16 %v246
    %v1350 = vunpack.c.l.b16 %v247
    %v1351 = vunpack.c.h.b16 %v247
    %v1352 = vunpack.c.l.b16 %v248
    %v1353 = vunpack.c.h.b16 %v248
    %v1354 = vunpack.c.l.b16 %v249
    %v1355 = vunpack.c.h.b16 %v249
    %v1356 = vunpack.c.l.b16 %v250
    %v1357 = vunpack.c.h.b16 %v250
    %v1358 = vunpack.c.l.b16 %v251
    %v1359 = vunpack.c.h.b16 %v251
    %v1360 = vunpack.c.l.b16 %v252
    %v1361 = vunpack.c.h.b16 %v252
    %v1362 = vunpack.c.l.b16 %v253
    %v1363 = vunpack.c.h.b16 %v253
    %v1364 = vunpack.c.l.b16 %v254
    %v1365 = vunpack.c.h.b16 %v254
    %v1366 = vunpack.c.l.b16 %v255
    %v1367 = vunpack.c.h.b16 %v255
    %v1368 = vunpack.c.l.b16 %v256
    %v1369 = vunpack.c.h.b16 %v256
    %v1370 = vunpack.c.l.b16 %v257
    %v1371 = vunpack.c.h.b16 %v257
    %v1372 = vunpack.c.l.b16 %v258
    %v1373 = vunpack.c.h.b16 %v258
    %v1374 = vunpack.c.l.b16 %v259
    %v1375 = vunpack.c.h.b16 %v259
    %v1376 = vunpack.c.l.b16 %v260
    %v1377 = vunpack.c.h.b16 %v260
    %v1378 = vunpack.c.l.b16 %v261
    %v1379 = vunpack.c.h.b16 %v261
    %v1380 = vunpack.c.l.b16 %v262
    %v1381 = vunpack.c.h.b16 %v262
    %v1382 = vunpack.c.l.b16 %v263
    %v1383 = vunpack.c.h.b16 %v263
    %v1384 = vunpack.c.l.b16 %v264
    %v1385 = vunpack.c.h.b16 %v264
    %v1386 = vunpack.c.l.b16 %v265
    %v1387 = vunpack.c.h.b16 %v265
    %v1388 = vunpack.c.l.b16 %v266
    %v1389 = vunpack.c.h.b16 %v266
    %v1390 = vunpack.c.l.b16 %v267
    %v1391 = vunpack.c.h.b16 %v267
    %v1392 = vunpack.c.l.b16 %v268
    %v1393 = vunpack.c.h.b16 %v268
    %v1394 = vunpack.c.l.b16 %v269
    %v1395 = vunpack.c.h.b16 %v269
    %v1396 = vunpack.c.l.b16 %v270
    %v1397 = vunpack.c.h.b16 %v270
    %v1398 = vunpack.c.l.b16 %v271
    %v1399 = vunpack.c.h.b16 %v271
    %v1400 = vunpack.c.l.b16 %v272
    %v1401 = vunpack.c.h.b16 %v272
    %v1402 = vunpack.c.l.b16 %v273
    %v1403 = vunpack.c.h.b16 %v273
    %v1404 = vunpack.c.l.b16 %v274
    %v1405 = vunpack.c.h.b16 %v274
    %v1406 = vunpack.c.l.b16 %v275
    %v1407 = vunpack.c.h.b16 %v275
    %v1408 = vunpack.c.l.b16 %v276
    %v1409 = vunpack.c.h.b16 %v276
    %v1410 = vunpack.c.l.b16 %v277
    %v1411 = vunpack.c.h.b16 %v277
    %v1412 = vunpack.c.l.b16 %v278
    %v1413 = vunpack.c.h.b16 %v278
    %v1414 = vunpack.c.l.b16 %v279
    %v1415 = vunpack.c.h.b16 %v279
    %v1416 = vunpack.c.l.b16 %v280
    %v1417 = vunpack.c.h.b16 %v280
    %v1418 = vunpack.c.l.b16 %v281
    %v1419 = vunpack.c.h.b16 %v281
    %v1420 = vunpack.c.l.b16 %v282
    %v1421 = vunpack.c.h.b16 %v282
    %v1422 = vunpack.c.l.b16 %v283
    %v1423 = vunpack.c.h.b16 %v283
    %v1424 = vunpack.c.l.b16 %v284
    %v1425 = vunpack.c.h.b16 %v284
    %v1426 = vunpack.c.l.b16 %v285
    %v1427 = vunpack.c.h.b16 %v285
    %v1428 = vunpack.c.l.b16 %v286
    %v1429 = vunpack.c.h.b16 %v286
    %v1430 = vunpack.c.l.b16 %v287
    %v1431 = vunpack.c.h.b16 %v287
    %v1432 = vunpack.c.l.b16 %v288
    %v1433 = vunpack.c.h.b16 %v288
    %v1434 = vunpack.c.l.b16 %v289
    %v1435 = vunpack.c.h.b16 %v289
    %v1436 = vunpack.c.l.b16 %v290
    %v1437 = vunpack.c.h.b16 %v290
    %v1438 = vunpack.c.l.b16 %v291
    %v1439 = vunpack.c.h.b16 %v291
    %v1440 = vunpack.c.l.b16 %v292
    %v1441 = vunpack.c.h.b16 %v292
    %v1442 = vunpack.c.l.b16 %v293
    %v1443 = vunpack.c.h.b16 %v293
    %v1444 = vunpack.c.l.b16 %v294
    %v1445 = vunpack.c.h.b16 %v294
    %v1446 = vunpack.c.l.b16 %v295
    %v1447 = vunpack.c.h.b16 %v295
    %v1448 = vunpack.c.l.b16 %v296
    %v1449 = vunpack.c.h.b16 %v296
    %v1450 = vunpack.c.l.b16 %v297
    %v1451 = vunpack.c.h.b16 %v297
    %v1452 = vunpack.c.l.b16 %v298
    %v1453 = vunpack.c.h.b16 %v298
    %v1454 = vunpack.c.l.b16 %v299
    %v1455 = vunpack.c.h.b16 %v299
    %v1456 = vunpack.c.l.b16 %v300
    %v1457 = vunpack.c.h.b16 %v300
    %v1458 = vunpack.c.l.b16 %v301
    %v1459 = vunpack.c.h.b16 %v301
    %v1460 = vunpack.c.l.b16 %v302
    %v1461 = vunpack.c.h.b16 %v302
    %v1462 = vunpack.c.l.b16 %v303
    %v1463 = vunpack.c.h.b16 %v303
    %v1464 = vunpack.c.l.b16 %v304
    %v1465 = vunpack.c.h.b16 %v304
    %v1466 = vunpack.c.l.b16 %v305
    %v1467 = vunpack.c.h.b16 %v305
    %v1468 = vunpack.c.l.b16 %v306
    %v1469 = vunpack.c.h.b16 %v306
    %v1470 = vunpack.c.l.b16 %v307
    %v1471 = vunpack.c.h.b16 %v307
    %v1472 = vunpack.c.l.b16 %v308
    %v1473 = vunpack.c.h.b16 %v308
    %v1474 = vunpack.c.l.b16 %v309
    %v1475 = vunpack.c.h.b16 %v309
    %v1476 = vunpack.c.l.b16 %v310
    %v1477 = vunpack.c.h.b16 %v310
    %v1478 = vunpack.c.l.b16 %v311
    %v1479 = vunpack.c.h.b16 %v311
    %v1480 = vunpack.c.l.b16 %v312
    %v1481 = vunpack.c.h.b16 %v312
    %v1482 = vunpack.c.l.b16 %v313
    %v1483 = vunpack.c.h.b16 %v313
    %v1484 = vunpack.c.l.b16 %v314
    %v1485 = vunpack.c.h.b16 %v314
    %v1486 = vunpack.c.l.b16 %v315
    %v1487 = vunpack.c.h.b16 %v315
    %v1488 = vunpack.c.l.b16 %v316
    %v1489 = vunpack.c.h.b16 %v316
    %v1490 = vunpack.c.l.b16 %v317
    %v1491 = vunpack.c.h.b16 %v317
    %v1492 = vunpack.c.l.b16 %v318
    %v1493 = vunpack.c.h.b16 %v318
    %v1494 = vunpack.c.l.b16 %v319
    %v1495 = vunpack.c.h.b16 %v319
    %v1496 = vunpack.c.l.b16 %v320
    %v1497 = vunpack.c.h.b16 %v320
    %v1498 = vunpack.c.l.b16 %v321
    %v1499 = vunpack.c.h.b16 %v321
    %v1500 = vunpack.c.l.b16 %v322
    %v1501 = vunpack.c.h.b16 %v322
    %v1502 = vunpack.c.l.b16 %v323
    %v1503 = vunpack.c.h.b16 %v323
    %v1504 = vunpack.c.l.b16 %v324
    %v1505 = vunpack.c.h.b16 %v324
    %v1506 = vunpack.c.l.b16 %v325
    %v1507 = vunpack.c.h.b16 %v325
    %v1508 = vunpack.c.l.b16 %v326
    %v1509 = vunpack.c.h.b16 %v326
    %v1510 = vunpack.c.l.b16 %v327
    %v1511 = vunpack.c.h.b16 %v327
    %v1512 = vunpack.c.l.b16 %v328
    %v1513 = vunpack.c.h.b16 %v328
    %v1514 = vunpack.c.l.b16 %v329
    %v1515 = vunpack.c.h.b16 %v329
    %v1516 = vunpack.c.l.b16 %v330
    %v1517 = vunpack.c.h.b16 %v330
    %v1518 = vunpack.c.l.b16 %v331
    %v1519 = vunpack.c.h.b16 %v331
    %v1520 = vunpack.c.l.b16 %v332
    %v1521 = vunpack.c.h.b16 %v332
    %v1522 = vunpack.c.l.b16 %v333
    %v1523 = vunpack.c.h.b16 %v333
    %v1524 = vunpack.c.l.b16 %v334
    %v1525 = vunpack.c.h.b16 %v334
    %v1526 = vunpack.c.l.b16 %v335
    %v1527 = vunpack.c.h.b16 %v335
    %v1528 = vunpack.c.l.b16 %v336
    %v1529 = vunpack.c.h.b16 %v336
    %v1530 = vunpack.c.l.b16 %v337
    %v1531 = vunpack.c.h.b16 %v337
    %v1532 = vunpack.c.l.b16 %v338
    %v1533 = vunpack.c.h.b16 %v338
    %v1534 = vunpack.c.l.b16 %v339
    %v1535 = vunpack.c.h.b16 %v339
    %v1536 = vunpack.c.l.b16 %v340
    %v1537 = vunpack.c.h.b16 %v340
    %v1538 = vunpack.c.l.b16 %v341
    %v1539 = vunpack.c.h.b16 %v341
    %v1540 = vunpack.c.l.b16 %v342
    %v1541 = vunpack.c.h.b16 %v342
    %v1542 = vunpack.c.l.b16 %v343
    %v1543 = vunpack.c.h.b16 %v343
    %v1544 = vunpack.c.l.b16 %v344
    %v1545 = vunpack.c.h.b16 %v344
    %v1546 = vunpack.c.l.b16 %v345
    %v1547 = vunpack.c.h.b16 %v345
    %v1548 = vunpack.c.l.b16 %v346
    %v1549 = vunpack.c.h.b16 %v346
    %v1550 = vunpack.c.l.b16 %v347
    %v1551 = vunpack.c.h.b16 %v347
    %v1552 = vunpack.c.l.b16 %v348
    %v1553 = vunpack.c.h.b16 %v348
    %v1554 = vunpack.c.l.b16 %v349
    %v1555 = vunpack.c.h.b16 %v349
    %v1556 = vunpack.c.l.b16 %v350
    %v1557 = vunpack.c.h.b16 %v350
    %v1558 = vunpack.c.l.b16 %v351
    %v1559 = vunpack.c.h.b16 %v351
    %v1560 = vunpack.c.l.b16 %v352
    %v1561 = vunpack.c.h.b16 %v352
    %v1562 = vunpack.c.l.b16 %v353
    %v1563 = vunpack.c.h.b16 %v353
    %v1564 = vunpack.c.l.b16 %v354
    %v1565 = vunpack.c.h.b16 %v354
    %v1566 = vunpack.c.l.b16 %v355
    %v1567 = vunpack.c.h.b16 %v355
    %v1568 = vunpack.c.l.b16 %v356
    %v1569 = vunpack.c.h.b16 %v356
    %v1570 = vunpack.c.l.b16 %v357
    %v1571 = vunpack.c.h.b16 %v357
    %v1572 = vunpack.c.l.b16 %v358
    %v1573 = vunpack.c.h.b16 %v358
    %v1574 = vunpack.c.l.b16 %v359
    %v1575 = vunpack.c.h.b16 %v359
    %v1576 = vunpack.c.l.b16 %v360
    %v1577 = vunpack.c.h.b16 %v360
    %v1578 = vunpack.c.l.b16 %v361
    %v1579 = vunpack.c.h.b16 %v361
    %v1580 = vunpack.c.l.b16 %v362
    %v1581 = vunpack.c.h.b16 %v362
    %v1582 = vunpack.c.l.b16 %v363
    %v1583 = vunpack.c.h.b16 %v363
    %v1584 = vunpack.c.l.b16 %v364
    %v1585 = vunpack.c.h.b16 %v364
    %v1586 = vunpack.c.l.b16 %v365
    %v1587 = vunpack.c.h.b16 %v365
    %v1588 = vunpack.c.l.b16 %v366
    %v1589 = vunpack.c.h.b16 %v366
    %v1590 = vunpack.c.l.b16 %v367
    %v1591 = vunpack.c.h.b16 %v367
    %v1592 = vunpack.c.l.b16 %v368
    %v1593 = vunpack.c.h.b16 %v368
    %v1594 = vunpack.c.l.b16 %v369
    %v1595 = vunpack.c.h.b16 %v369
    %v1596 = vunpack.c.l.b16 %v370
    %v1597 = vunpack.c.h.b16 %v370
    %v1598 = vunpack.c.l.b16 %v371
    %v1599 = vunpack.c.h.b16 %v371
    %v1600 = vunpack.c.l.b16 %v372
    %v1601 = vunpack.c.h.b16 %v372
    %v1602 = vunpack.c.l.b16 %v373
    %v1603 = vunpack.c.h.b16 %v373
    %v1604 = vunpack.c.l.b16 %v374
    %v1605 = vunpack.c.h.b16 %v374
    %v1606 = vunpack.c.l.b16 %v375
    %v1607 = vunpack.c.h.b16 %v375
    %v1608 = vunpack.c.l.b16 %v376
    %v1609 = vunpack.c.h.b16 %v376
    %v1610 = vunpack.c.l.b16 %v377
    %v1611 = vunpack.c.h.b16 %v377
    %v1612 = vunpack.c.l.b16 %v378
    %v1613 = vunpack.c.h.b16 %v378
    %v1614 = vunpack.c.l.b16 %v379
    %v1615 = vunpack.c.h.b16 %v379
    %v1616 = vunpack.c.l.b16 %v380
    %v1617 = vunpack.c.h.b16 %v380
    %v1618 = vunpack.c.l.b16 %v381
    %v1619 = vunpack.c.h.b16 %v381
    %v1620 = vunpack.c.l.b16 %v382
    %v1621 = vunpack.c.h.b16 %v382
    %v1622 = vunpack.c.l.b16 %v383
    %v1623 = vunpack.c.h.b16 %v383
    %v1624 = vunpack.c.l.b16 %v384
    %v1625 = vunpack.c.h.b16 %v384
    %v1626 = vunpack.c.l.b16 %v385
    %v1627 = vunpack.c.h.b16 %v385
    %v1628 = vunpack.c.l.b16 %v386
    %v1629 = vunpack.c.h.b16 %v386
    %v1630 = vunpack.c.l.b16 %v387
    %v1631 = vunpack.c.h.b16 %v387
    %v1632 = vunpack.c.l.b16 %v388
    %v1633 = vunpack.c.h.b16 %v388
    %v1634 = vunpack.c.l.b16 %v389
    %v1635 = vunpack.c.h.b16 %v389
    %v1636 = vunpack.c.l.b16 %v390
    %v1637 = vunpack.c.h.b16 %v390
    %v1638 = vunpack.c.l.b16 %v391
    %v1639 = vunpack.c.h.b16 %v391
    %v1640 = vunpack.c.l.b16 %v392
    %v1641 = vunpack.c.h.b16 %v392
    %v1642 = vunpack.c.l.b16 %v393
    %v1643 = vunpack.c.h.b16 %v393
    %v1644 = vunpack.c.l.b16 %v394
    %v1645 = vunpack.c.h.b16 %v394
    %v1646 = vunpack.c.l.b16 %v395
    %v1647 = vunpack.c.h.b16 %v395
    %v1648 = vunpack.c.l.b16 %v396
    %v1649 = vunpack.c.h.b16 %v396
    %v1650 = vunpack.c.l.b16 %v397
    %v1651 = vunpack.c.h.b16 %v397
    %v1652 = vunpack.c.l.b16 %v398
    %v1653 = vunpack.c.h.b16 %v398
    %v1654 = vunpack.c.l.b16 %v399
    %v1655 = vunpack.c.h.b16 %v399
    %v1656 = vunpack.c.l.b16 %v400
    %v1657 = vunpack.c.h.b16 %v400
    %v1658 = vunpack.c.l.b16 %v401
    %v1659 = vunpack.c.h.b16 %v401
    %v1660 = vunpack.c.l.b16 %v402
    %v1661 = vunpack.c.h.b16 %v402
    %v1662 = vunpack.c.l.b16 %v403
    %v1663 = vunpack.c.h.b16 %v403
    %v1664 = vunpack.c.l.b16 %v404
    %v1665 = vunpack.c.h.b16 %v404
    %v1666 = vunpack.c.l.b16 %v405
    %v1667 = vunpack.c.h.b16 %v405
    %v1668 = vunpack.c.l.b16 %v406
    %v1669 = vunpack.c.h.b16 %v406
    %v1670 = vunpack.c.l.b16 %v407
    %v1671 = vunpack.c.h.b16 %v407
    %v1672 = vunpack.c.l.b16 %v408
    %v1673 = vunpack.c.h.b16 %v408
    %v1674 = vunpack.c.l.b16 %v409
    %v1675 = vunpack.c.h.b16 %v409
    %v1676 = vunpack.c.l.b16 %v410
    %v1677 = vunpack.c.h.b16 %v410
    %v1678 = vunpack.c.l.b16 %v411
    %v1679 = vunpack.c.h.b16 %v411
    %v1680 = vunpack.c.l.b16 %v412
    %v1681 = vunpack.c.h.b16 %v412
    %v1682 = vunpack.c.l.b16 %v413
    %v1683 = vunpack.c.h.b16 %v413
    %v1684 = vunpack.c.l.b16 %v414
    %v1685 = vunpack.c.h.b16 %v414
    %v1686 = vunpack.c.l.b16 %v415
    %v1687 = vunpack.c.h.b16 %v415
    %v1688 = vunpack.c.l.b16 %v416
    %v1689 = vunpack.c.h.b16 %v416
    %v1690 = vunpack.c.l.b16 %v417
    %v1691 = vunpack.c.h.b16 %v417
    %v1692 = vunpack.c.l.b16 %v418
    %v1693 = vunpack.c.h.b16 %v418
    %v1694 = vunpack.c.l.b16 %v419
    %v1695 = vunpack.c.h.b16 %v419
    %v1696 = vunpack.c.l.b16 %v420
    %v1697 = vunpack.c.h.b16 %v420
    %v1698 = vunpack.c.l.b16 %v421
    %v1699 = vunpack.c.h.b16 %v421
    %v1700 = vunpack.c.l.b16 %v422
    %v1701 = vunpack.c.h.b16 %v422
    %v1702 = vunpack.c.l.b16 %v423
    %v1703 = vunpack.c.h.b16 %v423
    %v1704 = vunpack.c.l.b16 %v424
    %v1705 = vunpack.c.h.b16 %v424
    %v1706 = vunpack.c.l.b16 %v425
    %v1707 = vunpack.c.h.b16 %v425
    %v1708 = vunpack.c.l.b16 %v426
    %v1709 = vunpack.c.h.b16 %v426
    %v1710 = vunpack.c.l.b16 %v427
    %v1711 = vunpack.c.h.b16 %v427
    %v1712 = vunpack.c.l.b16 %v428
    %v1713 = vunpack.c.h.b16 %v428
    %v1714 = vunpack.c.l.b16 %v429
    %v1715 = vunpack.c.h.b16 %v429
    %v1716 = vunpack.c.l.b16 %v430
    %v1717 = vunpack.c.h.b16 %v430
    %v1718 = vunpack.c.l.b16 %v431
    %v1719 = vunpack.c.h.b16 %v431
    %v1720 = vunpack.c.l.b16 %v432
    %v1721 = vunpack.c.h.b16 %v432
    %v1722 = vunpack.c.l.b16 %v433
    %v1723 = vunpack.c.h.b16 %v433
    %v1724 = vunpack.c.l.b16 %v434
    %v1725 = vunpack.c.h.b16 %v434
    %v1726 = vunpack.c.l.b16 %v435
    %v1727 = vunpack.c.h.b16 %v435
    %v1728 = vunpack.c.l.b16 %v436
    %v1729 = vunpack.c.h.b16 %v436
    %v1730 = vunpack.c.l.b16 %v437
    %v1731 = vunpack.c.h.b16 %v437
    %v1732 = vunpack.c.l.b16 %v438
    %v1733 = vunpack.c.h.b16 %v438
    %v1734 = vunpack.c.l.b16 %v439
    %v1735 = vunpack.c.h.b16 %v439
    %v1736 = vunpack.c.l.b16 %v440
    %v1737 = vunpack.c.h.b16 %v440
    %v1738 = vunpack.c.l.b16 %v441
    %v1739 = vunpack.c.h.b16 %v441
    %v1740 = vunpack.c.l.b16 %v442
    %v1741 = vunpack.c.h.b16 %v442
    %v1742 = vunpack.c.l.b16 %v443
    %v1743 = vunpack.c.h.b16 %v443
    %v1744 = vunpack.c.l.b16 %v444
    %v1745 = vunpack.c.h.b16 %v444
    %v1746 = vunpack.c.l.b16 %v445
    %v1747 = vunpack.c.h.b16 %v445
    %v1748 = vunpack.c.l.b16 %v446
    %v1749 = vunpack.c.h.b16 %v446
    %v1750 = vunpack.c.l.b16 %v447
    %v1751 = vunpack.c.h.b16 %v447
    %v1752 = vunpack.c.l.b16 %v448
    %v1753 = vunpack.c.h.b16 %v448
    %v1754 = vunpack.c.l.b16 %v449
    %v1755 = vunpack.c.h.b16 %v449
    %v1756 = vunpack.c.l.b16 %v450
    %v1757 = vunpack.c.h.b16 %v450
    %v1758 = vunpack.c.l.b16 %v451
    %v1759 = vunpack.c.h.b16 %v451
    %v1760 = vunpack.c.l.b16 %v452
    %v1761 = vunpack.c.h.b16 %v452
    %v1762 = vunpack.c.l.b16 %v453
    %v1763 = vunpack.c.h.b16 %v453
    %v1764 = vunpack.c.l.b16 %v454
    %v1765 = vunpack.c.h.b16 %v454
    %v1766 = vunpack.c.l.b16 %v455
    %v1767 = vunpack.c.h.b16 %v455
    %v1768 = vunpack.c.l.b16 %v456
    %v1769 = vunpack.c.h.b16 %v456
    %v1770 = vunpack.c.l.b16 %v457
    %v1771 = vunpack.c.h.b16 %v457
    %v1772 = vunpack.c.l.b16 %v458
    %v1773 = vunpack.c.h.b16 %v458
    %v1774 = vunpack.c.l.b16 %v459
    %v1775 = vunpack.c.h.b16 %v459
    %v1776 = vunpack.c.l.b16 %v460
    %v1777 = vunpack.c.h.b16 %v460
    %v1778 = vunpack.c.l.b16 %v461
    %v1779 = vunpack.c.h.b16 %v461
    %v1780 = vunpack.c.l.b16 %v462
    %v1781 = vunpack.c.h.b16 %v462
    %v1782 = vunpack.c.l.b16 %v463
    %v1783 = vunpack.c.h.b16 %v463
    %v1784 = vunpack.c.l.b16 %v464
    %v1785 = vunpack.c.h.b16 %v464
    %v1786 = vunpack.c.l.b16 %v465
    %v1787 = vunpack.c.h.b16 %v465
    %v1788 = vunpack.c.l.b16 %v466
    %v1789 = vunpack.c.h.b16 %v466
    %v1790 = vunpack.c.l.b16 %v467
    %v1791 = vunpack.c.h.b16 %v467
    %v1792 = vunpack.c.l.b16 %v468
    %v1793 = vunpack.c.h.b16 %v468
    %v1794 = vunpack.c.l.b16 %v469
    %v1795 = vunpack.c.h.b16 %v469
    %v1796 = vunpack.c.l.b16 %v470
    %v1797 = vunpack.c.h.b16 %v470
    %v1798 = vunpack.c.l.b16 %v471
    %v1799 = vunpack.c.h.b16 %v471
    %v1800 = vunpack.c.l.b16 %v472
    %v1801 = vunpack.c.h.b16 %v472
    %v1802 = vunpack.c.l.b16 %v473
    %v1803 = vunpack.c.h.b16 %v473
    %v1804 = vunpack.c.l.b16 %v474
    %v1805 = vunpack.c.h.b16 %v474
    %v1806 = vunpack.c.l.b16 %v475
    %v1807 = vunpack.c.h.b16 %v475
    %v1808 = vunpack.c.l.b16 %v476
    %v1809 = vunpack.c.h.b16 %v476
    %v1810 = vunpack.c.l.b16 %v477
    %v1811 = vunpack.c.h.b16 %v477
    %v1812 = vunpack.c.l.b16 %v478
    %v1813 = vunpack.c.h.b16 %v478
    %v1814 = vunpack.c.l.b16 %v479
    %v1815 = vunpack.c.h.b16 %v479
    %v1816 = vunpack.c.l.b16 %v480
    %v1817 = vunpack.c.h.b16 %v480
    %v1818 = vunpack.c.l.b16 %v481
    %v1819 = vunpack.c.h.b16 %v481
    %v1820 = vunpack.c.l.b16 %v482
    %v1821 = vunpack.c.h.b16 %v482
    %v1822 = vunpack.c.l.b16 %v483
    %v1823 = vunpack.c.h.b16 %v483
    %v1824 = vunpack.c.l.b16 %v484
    %v1825 = vunpack.c.h.b16 %v484
    %v1826 = vunpack.c.l.b16 %v485
    %v1827 = vunpack.c.h.b16 %v485
    %v1828 = vunpack.c.l.b16 %v486
    %v1829 = vunpack.c.h.b16 %v486
    %v1830 = vunpack.c.l.b16 %v487
    %v1831 = vunpack.c.h.b16 %v487
    %v1832 = vunpack.c.l.b16 %v488
    %v1833 = vunpack.c.h.b16 %v488
    %v1834 = vunpack.c.l.b16 %v489
    %v1835 = vunpack.c.h.b16 %v489
    %v1836 = vunpack.c.l.b16 %v490
    %v1837 = vunpack.c.h.b16 %v490
    %v1838 = vunpack.c.l.b16 %v491
    %v1839 = vunpack.c.h.b16 %v491
    %v1840 = vunpack.c.l.b16 %v492
    %v1841 = vunpack.c.h.b16 %v492
    %v1842 = vunpack.c.l.b16 %v493
    %v1843 = vunpack.c.h.b16 %v493
    %v1844 = vunpack.c.l.b16 %v494
    %v1845 = vunpack.c.h.b16 %v494
    %v1846 = vunpack.c.l.b16 %v495
    %v1847 = vunpack.c.h.b16 %v495
    %v1848 = vunpack.c.l.b16 %v496
    %v1849 = vunpack.c.h.b16 %v496
    %v1850 = vunpack.c.l.b16 %v497
    %v1851 = vunpack.c.h.b16 %v497
    %v1852 = vunpack.c.l.b16 %v498
    %v1853 = vunpack.c.h.b16 %v498
    %v1854 = vunpack.c.l.b16 %v499
    %v1855 = vunpack.c.h.b16 %v499
    %v1856 = vunpack.c.l.b16 %v500
    %v1857 = vunpack.c.h.b16 %v500
    %v1858 = vunpack.c.l.b16 %v501
    %v1859 = vunpack.c.h.b16 %v501
    %v1860 = vunpack.c.l.b16 %v502
    %v1861 = vunpack.c.h.b16 %v502
    %v1862 = vunpack.c.l.b16 %v503
    %v1863 = vunpack.c.h.b16 %v503
    %v1864 = vunpack.c.l.b16 %v504
    %v1865 = vunpack.c.h.b16 %v504
    %v1866 = vunpack.c.l.b16 %v505
    %v1867 = vunpack.c.h.b16 %v505
    %v1868 = vunpack.c.l.b16 %v506
    %v1869 = vunpack.c.h.b16 %v506
    %v1870 = vunpack.c.l.b16 %v507
    %v1871 = vunpack.c.h.b16 %v507
    %v1872 = vunpack.c.l.b16 %v508
    %v1873 = vunpack.c.h.b16 %v508
    %v1874 = vunpack.c.l.b16 %v509
    %v1875 = vunpack.c.h.b16 %v509
    %v1876 = vunpack.c.l.b16 %v510
    %v1877 = vunpack.c.h.b16 %v510
    %v1878 = vunpack.c.l.b16 %v511
    %v1879 = vunpack.c.h.b16 %v511
    %v1880 = vunpack.c.l.b16 %v512
    %v1881 = vunpack.c.h.b16 %v512
    %v1882 = vunpack.c.l.b16 %v513
    %v1883 = vunpack.c.h.b16 %v513
    %v1884 = vunpack.c.l.b16 %v514
    %v1885 = vunpack.c.h.b16 %v514
    %v1886 = vunpack.c.l.b16 %v515
    %v1887 = vunpack.c.h.b16 %v515
    %v1888 = vunpack.c.l.b16 %v516
    %v1889 = vunpack.c.h.b16 %v516
    %v1890 = vunpack.c.l.b16 %v517
    %v1891 = vunpack.c.h.b16 %v517
    %v1892 = vunpack.c.l.b16 %v518
    %v1893 = vunpack.c.h.b16 %v518
    %v1894 = vunpack.c.l.b16 %v519
    %v1895 = vunpack.c.h.b16 %v519
    %v1896 = vunpack.c.l.b16 %v520
    %v1897 = vunpack.c.h.b16 %v520
    %v1898 = vunpack.c.l.b16 %v521
    %v1899 = vunpack.c.h.b16 %v521
    %v1900 = vunpack.c.l.b16 %v522
    %v1901 = vunpack.c.h.b16 %v522
    %v1902 = vunpack.c.l.b16 %v523
    %v1903 = vunpack.c.h.b16 %v523
    %v1904 = vunpack.c.l.b16 %v524
    %v1905 = vunpack.c.h.b16 %v524
    %v1906 = vunpack.c.l.b16 %v525
    %v1907 = vunpack.c.h.b16 %v525
    %v1908 = vunpack.c.l.b16 %v526
    %v1909 = vunpack.c.h.b16 %v526
    %v1910 = vunpack.c.l.b16 %v527
    %v1911 = vunpack.c.h.b16 %v527
    %v1912 = vunpack.c.l.b16 %v528
    %v1913 = vunpack.c.h.b16 %v528
    %v1914 = vunpack.c.l.b16 %v529
    %v1915 = vunpack.c.h.b16 %v529
    %v1916 = vunpack.c.l.b16 %v530
    %v1917 = vunpack.c.h.b16 %v530
    %v1918 = vunpack.c.l.b16 %v531
    %v1919 = vunpack.c.h.b16 %v531
    %v1920 = vunpack.c.l.b16 %v532
    %v1921 = vunpack.c.h.b16 %v532
    %v1922 = vunpack.c.l.b16 %v533
    %v1923 = vunpack.c.h.b16 %v533
    %v1924 = vunpack.c.l.b16 %v534
    %v1925 = vunpack.c.h.b16 %v534
    %v1926 = vunpack.c.l.b16 %v535
    %v1927 = vunpack.c.h.b16 %v535
    %v1928 = vunpack.c.l.b16 %v536
    %v1929 = vunpack.c.h.b16 %v536
    %v1930 = vunpack.c.l.b16 %v537
    %v1931 = vunpack.c.h.b16 %v537
    %v1932 = vunpack.c.l.b16 %v538
    %v1933 = vunpack.c.h.b16 %v538
    %v1934 = vunpack.c.l.b16 %v539
    %v1935 = vunpack.c.h.b16 %v539
    %v1936 = vunpack.c.l.b16 %v540
    %v1937 = vunpack.c.h.b16 %v540
    %v1938 = vunpack.c.l.b16 %v541
    %v1939 = vunpack.c.h.b16 %v541
    %v1940 = vunpack.c.l.b16 %v542
    %v1941 = vunpack.c.h.b16 %v542
    %v1942 = vunpack.c.l.b16 %v543
    %v1943 = vunpack.c.h.b16 %v543
    %v1944 = vunpack.c.l.b16 %v544
    %v1945 = vunpack.c.h.b16 %v544
    %v1946 = vunpack.c.l.b16 %v545
    %v1947 = vunpack.c.h.b16 %v545
    %v1948 = vunpack.c.l.b16 %v546
    %v1949 = vunpack.c.h.b16 %v546
    %v1950 = vunpack.c.l.b16 %v547
    %v1951 = vunpack.c.h.b16 %v547
    %v1952 = vunpack.c.l.b16 %v548
    %v1953 = vunpack.c.h.b16 %v548
    %v1954 = vunpack.c.l.b16 %v549
    %v1955 = vunpack.c.h.b16 %v549
    %v1956 = vunpack.c.l.b16 %v550
    %v1957 = vunpack.c.h.b16 %v550
    %v1958 = vunpack.c.l.b16 %v551
    %v1959 = vunpack.c.h.b16 %v551
    %v1960 = vunpack.c.l.b16 %v552
    %v1961 = vunpack.c.h.b16 %v552
    %v1962 = vunpack.c.l.b16 %v553
    %v1963 = vunpack.c.h.b16 %v553
    %v1964 = vunpack.c.l.b16 %v554
    %v1965 = vunpack.c.h.b16 %v554
    %v1966 = vunpack.c.l.b16 %v555
    %v1967 = vunpack.c.h.b16 %v555
    %v1968 = vunpack.c.l.b16 %v556
    %v1969 = vunpack.c.h.b16 %v556
    %v1970 = vunpack.c.l.b16 %v557
    %v1971 = vunpack.c.h.b16 %v557
    %v1972 = vunpack.c.l.b16 %v558
    %v1973 = vunpack.c.h.b16 %v558
    %v1974 = vunpack.c.l.b16 %v559
    %v1975 = vunpack.c.h.b16 %v559
    %v1976 = vunpack.c.l.b16 %v560
    %v1977 = vunpack.c.h.b16 %v560
    %v1978 = vunpack.c.l.b16 %v561
    %v1979 = vunpack.c.h.b16 %v561
    %v1980 = vunpack.c.l.b16 %v562
    %v1981 = vunpack.c.h.b16 %v562
    %v1982 = vunpack.c.l.b16 %v563
    %v1983 = vunpack.c.h.b16 %v563
    %v1984 = vunpack.c.l.b16 %v564
    %v1985 = vunpack.c.h.b16 %v564
    %v1986 = vunpack.c.l.b16 %v565
    %v1987 = vunpack.c.h.b16 %v565
    %v1988 = vunpack.c.l.b16 %v566
    %v1989 = vunpack.c.h.b16 %v566
    %v1990 = vunpack.c.l.b16 %v567
    %v1991 = vunpack.c.h.b16 %v567
    %v1992 = vunpack.c.l.b16 %v568
    %v1993 = vunpack.c.h.b16 %v568
    %v1994 = vunpack.c.l.b16 %v569
    %v1995 = vunpack.c.h.b16 %v569
    %v1996 = vunpack.c.l.b16 %v570
    %v1997 = vunpack.c.h.b16 %v570
    %v1998 = vunpack.c.l.b16 %v571
    %v1999 = vunpack.c.h.b16 %v571
    %v2000 = vunpack.c.l.b16 %v572
    %v2001 = vunpack.c.h.b16 %v572
    %v2002 = vunpack.c.l.b16 %v573
    %v2003 = vunpack.c.h.b16 %v573
    %v2004 = vunpack.c.l.b16 %v574
    %v2005 = vunpack.c.h.b16 %v574
    %v2006 = vunpack.c.l.b16 %v575
    %v2007 = vunpack.c.h.b16 %v575
    %v2008 = vunpack.c.l.b16 %v576
    %v2009 = vunpack.c.h.b16 %v576
    %v2010 = vunpack.c.l.b16 %v577
    %v2011 = vunpack.c.h.b16 %v577
    %v2012 = vunpack.c.l.b16 %v578
    %v2013 = vunpack.c.h.b16 %v578
    %v2014 = vunpack.c.l.b16 %v579
    %v2015 = vunpack.c.h.b16 %v579
    %v2016 = vunpack.c.l.b16 %v580
    %v2017 = vunpack.c.h.b16 %v580
    %v2018 = vunpack.c.l.b16 %v581
    %v2019 = vunpack.c.h.b16 %v581
    %v2020 = vunpack.c.l.b16 %v582
    %v2021 = vunpack.c.h.b16 %v582
    %v2022 = vunpack.c.l.b16 %v583
    %v2023 = vunpack.c.h.b16 %v583
    %v2024 = vunpack.c.l.b16 %v584
    %v2025 = vunpack.c.h.b16 %v584
    %v2026 = vunpack.c.l.b16 %v585
    %v2027 = vunpack.c.h.b16 %v585
    %v2028 = vunpack.c.l.b16 %v586
    %v2029 = vunpack.c.h.b16 %v586
    %v2030 = vunpack.c.l.b16 %v587
    %v2031 = vunpack.c.h.b16 %v587
    %v2032 = vunpack.c.l.b16 %v588
    %v2033 = vunpack.c.h.b16 %v588
    %v2034 = vunpack.c.l.b16 %v589
    %v2035 = vunpack.c.h.b16 %v589
    %v2036 = vunpack.c.l.b16 %v590
    %v2037 = vunpack.c.h.b16 %v590
    %v2038 = vunpack.c.l.b16 %v591
    %v2039 = vunpack.c.h.b16 %v591
    %v2040 = vunpack.c.l.b16 %v592
    %v2041 = vunpack.c.h.b16 %v592
    %v2042 = vunpack.c.l.b16 %v593
    %v2043 = vunpack.c.h.b16 %v593
    %v2044 = vunpack.c.l.b16 %v594
    %v2045 = vunpack.c.h.b16 %v594
    %v2046 = vunpack.c.l.b16 %v595
    %v2047 = vunpack.c.h.b16 %v595
    %v2048 = vunpack.c.l.b16 %v596
    %v2049 = vunpack.c.h.b16 %v596
    %v2050 = vunpack.c.l.b16 %v597
    %v2051 = vunpack.c.h.b16 %v597
    %v2052 = vunpack.c.l.b16 %v598
    %v2053 = vunpack.c.h.b16 %v598
    %v2054 = vunpack.c.l.b16 %v599
    %v2055 = vunpack.c.h.b16 %v599
    %v2056 = vunpack.c.l.b16 %v600
    %v2057 = vunpack.c.h.b16 %v600
    %v2058 = vunpack.c.l.b16 %v601
    %v2059 = vunpack.c.h.b16 %v601
    %v2060 = vunpack.c.l.b16 %v602
    %v2061 = vunpack.c.h.b16 %v602
    %v2062 = vunpack.c.l.b16 %v603
    %v2063 = vunpack.c.h.b16 %v603
    %v2064 = vunpack.c.l.b16 %v604
    %v2065 = vunpack.c.h.b16 %v604
    %v2066 = vunpack.c.l.b16 %v605
    %v2067 = vunpack.c.h.b16 %v605
    %v2068 = vunpack.c.l.b16 %v606
    %v2069 = vunpack.c.h.b16 %v606
    %v2070 = vunpack.c.l.b16 %v607
    %v2071 = vunpack.c.h.b16 %v607
    %v2072 = vunpack.c.l.b16 %v608
    %v2073 = vunpack.c.h.b16 %v608
    %v2074 = vunpack.c.l.b16 %v609
    %v2075 = vunpack.c.h.b16 %v609
    %v2076 = vunpack.c.l.b16 %v610
    %v2077 = vunpack.c.h.b16 %v610
    %v2078 = vunpack.c.l.b16 %v611
    %v2079 = vunpack.c.h.b16 %v611
    %v2080 = vunpack.c.l.b16 %v612
    %v2081 = vunpack.c.h.b16 %v612
    %v2082 = vunpack.c.l.b16 %v613
    %v2083 = vunpack.c.h.b16 %v613
    %v2084 = vunpack.c.l.b16 %v614
    %v2085 = vunpack.c.h.b16 %v614
    %v2086 = vunpack.c.l.b16 %v615
    %v2087 = vunpack.c.h.b16 %v615
    %v2088 = vunpack.c.l.b16 %v616
    %v2089 = vunpack.c.h.b16 %v616
    %v2090 = vunpack.c.l.b16 %v617
    %v2091 = vunpack.c.h.b16 %v617
    %v2092 = vunpack.c.l.b16 %v618
    %v2093 = vunpack.c.h.b16 %v618
    %v2094 = vunpack.c.l.b16 %v619
    %v2095 = vunpack.c.h.b16 %v619
    %v2096 = vunpack.c.l.b16 %v620
    %v2097 = vunpack.c.h.b16 %v620
    %v2098 = vunpack.c.l.b16 %v621
    %v2099 = vunpack.c.h.b16 %v621
    %v2100 = vunpack.c.l.b16 %v622
    %v2101 = vunpack.c.h.b16 %v622
    %v2102 = vunpack.c.l.b16 %v623
    %v2103 = vunpack.c.h.b16 %v623
    %v2104 = vunpack.c.l.b16 %v624
    %v2105 = vunpack.c.h.b16 %v624
    %v2106 = vunpack.c.l.b16 %v625
    %v2107 = vunpack.c.h.b16 %v625
    %v2108 = vunpack.c.l.b16 %v626
    %v2109 = vunpack.c.h.b16 %v626
    %v2110 = vunpack.c.l.b16 %v627
    %v2111 = vunpack.c.h.b16 %v627
    %v2112 = vunpack.c.l.b16 %v628
    %v2113 = vunpack.c.h.b16 %v628
    %v2114 = vunpack.c.l.b16 %v629
    %v2115 = vunpack.c.h.b16 %v629
    %v2116 = vunpack.c.l.b16 %v630
    %v2117 = vunpack.c.h.b16 %v630
    %v2118 = vunpack.c.l.b16 %v631
    %v2119 = vunpack.c.h.b16 %v631
    %v2120 = vunpack.c.l.b16 %v632
    %v2121 = vunpack.c.h.b16 %v632
    %v2122 = vunpack.c.l.b16 %v633
    %v2123 = vunpack.c.h.b16 %v633
    %v2124 = vunpack.c.l.b16 %v634
    %v2125 = vunpack.c.h.b16 %v634
    %v2126 = vunpack.c.l.b16 %v635
    %v2127 = vunpack.c.h.b16 %v635
    %v2128 = vunpack.c.l.b16 %v636
    %v2129 = vunpack.c.h.b16 %v636
    %v2130 = vunpack.c.l.b16 %v637
    %v2131 = vunpack.c.h.b16 %v637
    %v2132 = vunpack.c.l.b16 %v638
    %v2133 = vunpack.c.h.b16 %v638
    %v2134 = vunpack.c.l.b16 %v639
    %v2135 = vunpack.c.h.b16 %v639
    %v2136 = vunpack.c.l.b16 %v640
    %v2137 = vunpack.c.h.b16 %v640
    %v2138 = vunpack.c.l.b16 %v641
    %v2139 = vunpack.c.h.b16 %v641
    %v2140 = vunpack.c.l.b16 %v642
    %v2141 = vunpack.c.h.b16 %v642
    %v2142 = vunpack.c.l.b16 %v643
    %v2143 = vunpack.c.h.b16 %v643
    %v2144 = vunpack.c.l.b16 %v644
    %v2145 = vunpack.c.h.b16 %v644
    %v2146 = vunpack.c.l.b16 %v645
    %v2147 = vunpack.c.h.b16 %v645
    %v2148 = vunpack.c.l.b16 %v646
    %v2149 = vunpack.c.h.b16 %v646
    %v2150 = vunpack.c.l.b16 %v647
    %v2151 = vunpack.c.h.b16 %v647
    %v2152 = vunpack.c.l.b16 %v648
    %v2153 = vunpack.c.h.b16 %v648
    %v2154 = vunpack.c.l.b16 %v649
    %v2155 = vunpack.c.h.b16 %v649
    %v2156 = vunpack.c.l.b16 %v650
    %v2157 = vunpack.c.h.b16 %v650
    %v2158 = vunpack.c.l.b16 %v651
    %v2159 = vunpack.c.h.b16 %v651
    %v2160 = vunpack.c.l.b16 %v652
    %v2161 = vunpack.c.h.b16 %v652
    %v2162 = vunpack.c.l.b16 %v653
    %v2163 = vunpack.c.h.b16 %v653
    %v2164 = vunpack.c.l.b16 %v654
    %v2165 = vunpack.c.h.b16 %v654
    %v2166 = vunpack.c.l.b16 %v655
    %v2167 = vunpack.c.h.b16 %v655
    %v2168 = vunpack.c.l.b16 %v656
    %v2169 = vunpack.c.h.b16 %v656
    %v2170 = vunpack.c.l.b16 %v657
    %v2171 = vunpack.c.h.b16 %v657
    %v2172 = vunpack.c.l.b16 %v658
    %v2173 = vunpack.c.h.b16 %v658
    %v2174 = vunpack.c.l.b16 %v659
    %v2175 = vunpack.c.h.b16 %v659
    %v2176 = vunpack.c.l.b16 %v660
    %v2177 = vunpack.c.h.b16 %v660
    %v2178 = vunpack.c.l.b16 %v661
    %v2179 = vunpack.c.h.b16 %v661
    %v2180 = vunpack.c.l.b16 %v662
    %v2181 = vunpack.c.h.b16 %v662
    %v2182 = vunpack.c.l.b16 %v663
    %v2183 = vunpack.c.h.b16 %v663
    %v2184 = vunpack.c.l.b16 %v664
    %v2185 = vunpack.c.h.b16 %v664
    %v2186 = vunpack.c.l.b16 %v665
    %v2187 = vunpack.c.h.b16 %v665
    %v2188 = vpack.c.b16 %v1192, %v1188
    %v2189 = vpack.c.b16 %v1193, %v1189
    %v2190 = vpack.c.b16 %v1194, %v1190
    %v2191 = vpack.c.b16 %v1195, %v1191
    %v2192 = vpack.c.b16 %v1200, %v1196
    %v2193 = vpack.c.b16 %v1201, %v1197
    %v2194 = vpack.c.b16 %v1202, %v1198
    %v2195 = vpack.c.b16 %v1203, %v1199
    %v2196 = vpack.c.b16 %v1208, %v1204
    %v2197 = vpack.c.b16 %v1209, %v1205
    %v2198 = vpack.c.b16 %v1210, %v1206
    %v2199 = vpack.c.b16 %v1211, %v1207
    %v2200 = vpack.c.b16 %v1216, %v1212
    %v2201 = vpack.c.b16 %v1217, %v1213
    %v2202 = vpack.c.b16 %v1218, %v1214
    %v2203 = vpack.c.b16 %v1219, %v1215
    %v2204 = vpack.c.b16 %v1224, %v1220
    %v2205 = vpack.c.b16 %v1225, %v1221
    %v2206 = vpack.c.b16 %v1226, %v1222
    %v2207 = vpack.c.b16 %v1227, %v1223
    %v2208 = vpack.c.b16 %v1232, %v1228
    %v2209 = vpack.c.b16 %v1233, %v1229
    %v2210 = vpack.c.b16 %v1234, %v1230
    %v2211 = vpack.c.b16 %v1235, %v1231
    %v2212 = vpack.c.b16 %v1240, %v1236
    %v2213 = vpack.c.b16 %v1241, %v1237
    %v2214 = vpack.c.b16 %v1242, %v1238
    %v2215 = vpack.c.b16 %v1243, %v1239
    %v2216 = vpack.c.b16 %v1248, %v1244
    %v2217 = vpack.c.b16 %v1249, %v1245
    %v2218 = vpack.c.b16 %v1250, %v1246
    %v2219 = vpack.c.b16 %v1251, %v1247
    %v2220 = vpack.c.b16 %v1256, %v1252
    %v2221 = vpack.c.b16 %v1257, %v1253
    %v2222 = vpack.c.b16 %v1258, %v1254
    %v2223 = vpack.c.b16 %v1259, %v1255
    %v2224 = vpack.c.b16 %v1264, %v1260
    %v2225 = vpack.c.b16 %v1265, %v1261
    %v2226 = vpack.c.b16 %v1266, %v1262
    %v2227 = vpack.c.b16 %v1267, %v1263
    %v2228 = vpack.c.b16 %v1272, %v1268
    %v2229 = vpack.c.b16 %v1273, %v1269
    %v2230 = vpack.c.b16 %v1274, %v1270
    %v2231 = vpack.c.b16 %v1275, %v1271
    %v2232 = vpack.c.b16 %v1280, %v1276
    %v2233 = vpack.c.b16 %v1281, %v1277
    %v2234 = vpack.c.b16 %v1282, %v1278
    %v2235 = vpack.c.b16 %v1283, %v1279
    %v2236 = vpack.c.b16 %v1288, %v1284
    %v2237 = vpack.c.b16 %v1289, %v1285
    %v2238 = vpack.c.b16 %v1290, %v1286
    %v2239 = vpack.c.b16 %v1291, %v1287
    %v2240 = vpack.c.b16 %v1296, %v1292
    %v2241 = vpack.c.b16 %v1297, %v1293
    %v2242 = vpack.c.b16 %v1298, %v1294
    %v2243 = vpack.c.b16 %v1299, %v1295
    %v2244 = vpack.c.b16 %v1304, %v1300
    %v2245 = vpack.c.b16 %v1305, %v1301
    %v2246 = vpack.c.b16 %v1306, %v1302
    %v2247 = vpack.c.b16 %v1307, %v1303
    %v2248 = vpack.c.b16 %v1312, %v1308
    %v2249 = vpack.c.b16 %v1313, %v1309
    %v2250 = vpack.c.b16 %v1314, %v1310
    %v2251 = vpack.c.b16 %v1315, %v1311
    %v2252 = vpack.c.b16 %v1320, %v1316
    %v2253 = vpack.c.b16 %v1321, %v1317
    %v2254 = vpack.c.b16 %v1322, %v1318
    %v2255 = vpack.c.b16 %v1323, %v1319
    %v2256 = vpack.c.b16 %v1328, %v1324
    %v2257 = vpack.c.b16 %v1329, %v1325
    %v2258 = vpack.c.b16 %v1330, %v1326
    %v2259 = vpack.c.b16 %v1331, %v1327
    %v2260 = vpack.c.b16 %v1336, %v1332
    %v2261 = vpack.c.b16 %v1337, %v1333
    %v2262 = vpack.c.b16 %v1338, %v1334
    %v2263 = vpack.c.b16 %v1339, %v1335
    %v2264 = vpack.c.b16 %v1344, %v1340
    %v2265 = vpack.c.b16 %v1345, %v1341
    %v2266 = vpack.c.b16 %v1346, %v1342
    %v2267 = vpack.c.b16 %v1347, %v1343
    %v2268 = vpack.c.b16 %v1352, %v1348
    %v2269 = vpack.c.b16 %v1353, %v1349
    %v2270 = vpack.c.b16 %v1354, %v1350
    %v2271 = vpack.c.b16 %v1355, %v1351
    %v2272 = vpack.c.b16 %v1360, %v1356
    %v2273 = vpack.c.b16 %v1361, %v1357
    %v2274 = vpack.c.b16 %v1362, %v1358
    %v2275 = vpack.c.b16 %v1363, %v1359
    %v2276 = vpack.c.b16 %v1368, %v1364
    %v2277 = vpack.c.b16 %v1369, %v1365
    %v2278 = vpack.c.b16 %v1370, %v1366
    %v2279 = vpack.c.b16 %v1371, %v1367
    %v2280 = vpack.c.b16 %v1376, %v1372
    %v2281 = vpack.c.b16 %v1377, %v1373
    %v2282 = vpack.c.b16 %v1378, %v1374
    %v2283 = vpack.c.b16 %v1379, %v1375
    %v2284 = vpack.c.b16 %v1384, %v1380
    %v2285 = vpack.c.b16 %v1385, %v1381
    %v2286 = vpack.c.b16 %v1386, %v1382
    %v2287 = vpack.c.b16 %v1387, %v1383
    %v2288 = vpack.c.b16 %v1392, %v1388
    %v2289 = vpack.c.b16 %v1393, %v1389
    %v2290 = vpack.c.b16 %v1394, %v1390
    %v2291 = vpack.c.b16 %v1395, %v1391
    %v2292 = vpack.c.b16 %v1400, %v1396
    %v2293 = vpack.c.b16 %v1401, %v1397
    %v2294 = vpack.c.b16 %v1402, %v1398
    %v2295 = vpack.c.b16 %v1403, %v1399
    %v2296 = vpack.c.b16 %v1408, %v1404
    %v2297 = vpack.c.b16 %v1409, %v1405
    %v2298 = vpack.c.b16 %v1410, %v1406
    %v2299 = vpack.c.b16 %v1411, %v1407
    %v2300 = vpack.c.b16 %v1416, %v1412
    %v2301 = vpack.c.b16 %v1417, %v1413
    %v2302 = vpack.c.b16 %v1418, %v1414
    %v2303 = vpack.c.b16 %v1419, %v1415
    %v2304 = vpack.c.b16 %v1424, %v1420
    %v2305 = vpack.c.b16 %v1425, %v1421
    %v2306 = vpack.c.b16 %v1426, %v1422
    %v2307 = vpack.c.b16 %v1427, %v1423
    %v2308 = vpack.c.b16 %v1432, %v1428
    %v2309 = vpack.c.b16 %v1433, %v1429
    %v2310 = vpack.c.b16 %v1434, %v1430
    %v2311 = vpack.c.b16 %v1435, %v1431
    %v2312 = vpack.c.b16 %v1440, %v1436
    %v2313 = vpack.c.b16 %v1441, %v1437
    %v2314 = vpack.c.b16 %v1442, %v1438
    %v2315 = vpack.c.b16 %v1443, %v1439
    %v2316 = vpack.c.b16 %v1448, %v1444
    %v2317 = vpack.c.b16 %v1449, %v1445
    %v2318 = vpack.c.b16 %v1450, %v1446
    %v2319 = vpack.c.b16 %v1451, %v1447
    %v2320 = vpack.c.b16 %v1456, %v1452
    %v2321 = vpack.c.b16 %v1457, %v1453
    %v2322 = vpack.c.b16 %v1458, %v1454
    %v2323 = vpack.c.b16 %v1459, %v1455
    %v2324 = vpack.c.b16 %v1464, %v1460
    %v2325 = vpack.c.b16 %v1465, %v1461
    %v2326 = vpack.c.b16 %v1466, %v1462
    %v2327 = vpack.c.b16 %v1467, %v1463
    %v2328 = vpack.c.b16 %v1472, %v1468
    %v2329 = vpack.c.b16 %v1473, %v1469
    %v2330 = vpack.c.b16 %v1474, %v1470
    %v2331 = vpack.c.b16 %v1475, %v1471
    %v2332 = vpack.c.b16 %v1480, %v1476
    %v2333 = vpack.c.b16 %v1481, %v1477
    %v2334 = vpack.c.b16 %v1482, %v1478
    %v2335 = vpack.c.b16 %v1483, %v1479
    %v2336 = vpack.c.b16 %v1488, %v1484
    %v2337 = vpack.c.b16 %v1489, %v1485
    %v2338 = vpack.c.b16 %v1490, %v1486
    %v2339 = vpack.c.b16 %v1491, %v1487
    %v2340 = vpack.c.b16 %v1496, %v1492
    %v2341 = vpack.c.b16 %v1497, %v1493
    %v2342 = vpack.c.b16 %v1498, %v1494
    %v2343 = vpack.c.b16 %v1499, %v1495
    %v2344 = vpack.c.b16 %v1504, %v1500
    %v2345 = vpack.c.b16 %v1505, %v1501
    %v2346 = vpack.c.b16 %v1506, %v1502
    %v2347 = vpack.c.b16 %v1507, %v1503
    %v2348 = vpack.c.b16 %v1512, %v1508
    %v2349 = vpack.c.b16 %v1513, %v1509
    %v2350 = vpack.c.b16 %v1514, %v1510
    %v2351 = vpack.c.b16 %v1515, %v1511
    %v2352 = vpack.c.b16 %v1520, %v1516
    %v2353 = vpack.c.b16 %v1521, %v1517
    %v2354 = vpack.c.b16 %v1522, %v1518
    %v2355 = vpack.c.b16 %v1523, %v1519
    %v2356 = vpack.c.b16 %v1528, %v1524
    %v2357 = vpack.c.b16 %v1529, %v1525
    %v2358 = vpack.c.b16 %v1530, %v1526
    %v2359 = vpack.c.b16 %v1531, %v1527
    %v2360 = vpack.c.b16 %v1536, %v1532
    %v2361 = vpack.c.b16 %v1537, %v1533
    %v2362 = vpack.c.b16 %v1538, %v1534
    %v2363 = vpack.c.b16 %v1539, %v1535
    %v2364 = vpack.c.b16 %v1544, %v1540
    %v2365 = vpack.c.b16 %v1545, %v1541
    %v2366 = vpack.c.b16 %v1546, %v1542
    %v2367 = vpack.c.b16 %v1547, %v1543
    %v2368 = vpack.c.b16 %v1552, %v1548
    %v2369 = vpack.c.b16 %v1553, %v1549
    %v2370 = vpack.c.b16 %v1554, %v1550
    %v2371 = vpack.c.b16 %v1555, %v1551
    %v2372 = vpack.c.b16 %v1560, %v1556
    %v2373 = vpack.c.b16 %v1561, %v1557
    %v2374 = vpack.c.b16 %v1562, %v1558
    %v2375 = vpack.c.b16 %v1563, %v1559
    %v2376 = vpack.c.b16 %v1568, %v1564
    %v2377 = vpack.c.b16 %v1569, %v1565
    %v2378 = vpack.c.b16 %v1570, %v1566
    %v2379 = vpack.c.b16 %v1571, %v1567
    %v2380 = vpack.c.b16 %v1576, %v1572
    %v2381 = vpack.c.b16 %v1577, %v1573
    %v2382 = vpack.c.b16 %v1578, %v1574
    %v2383 = vpack.c.b16 %v1579, %v1575
    %v2384 = vpack.c.b16 %v1584, %v1580
    %v2385 = vpack.c.b16 %v1585, %v1581
    %v2386 = vpack.c.b16 %v1586, %v1582
    %v2387 = vpack.c.b16 %v1587, %v1583
    %v2388 = vpack.c.b16 %v1592, %v1588
    %v2389 = vpack.c.b16 %v1593, %v1589
    %v2390 = vpack.c.b16 %v1594, %v1590
    %v2391 = vpack.c.b16 %v1595, %v1591
    %v2392 = vpack.c.b16 %v1600, %v1596
    %v2393 = vpack.c.b16 %v1601, %v1597
    %v2394 = vpack.c.b16 %v1602, %v1598
    %v2395 = vpack.c.b16 %v1603, %v1599
    %v2396 = vpack.c.b16 %v1608, %v1604
    %v2397 = vpack.c.b16 %v1609, %v1605
    %v2398 = vpack.c.b16 %v1610, %v1606
    %v2399 = vpack.c.b16 %v1611, %v1607
    %v2400 = vpack.c.b16 %v1616, %v1612
    %v2401 = vpack.c.b16 %v1617, %v1613
    %v2402 = vpack.c.b16 %v1618, %v1614
    %v2403 = vpack.c.b16 %v1619, %v1615
    %v2404 = vpack.c.b16 %v1624, %v1620
    %v2405 = vpack.c.b16 %v1625, %v1621
    %v2406 = vpack.c.b16 %v1626, %v1622
    %v2407 = vpack.c.b16 %v1627, %v1623
    %v2408 = vpack.c.b16 %v1632, %v1628
    %v2409 = vpack.c.b16 %v1633, %v1629
    %v2410 = vpack.c.b16 %v1634, %v1630
    %v2411 = vpack.c.b16 %v1635, %v1631
    %v2412 = vpack.c.b16 %v1640, %v1636
    %v2413 = vpack.c.b16 %v1641, %v1637
    %v2414 = vpack.c.b16 %v1642, %v1638
    %v2415 = vpack.c.b16 %v1643, %v1639
    %v2416 = vpack.c.b16 %v1648, %v1644
    %v2417 = vpack.c.b16 %v1649, %v1645
    %v2418 = vpack.c.b16 %v1650, %v1646
    %v2419 = vpack.c.b16 %v1651, %v1647
    %v2420 = vpack.c.b16 %v1656, %v1652
    %v2421 = vpack.c.b16 %v1657, %v1653
    %v2422 = vpack.c.b16 %v1658, %v1654
    %v2423 = vpack.c.b16 %v1659, %v1655
    %v2424 = vpack.c.b16 %v1664, %v1660
    %v2425 = vpack.c.b16 %v1665, %v1661
    %v2426 = vpack.c.b16 %v1666, %v1662
    %v2427 = vpack.c.b16 %v1667, %v1663
    %v2428 = vpack.c.b16 %v1672, %v1668
    %v2429 = vpack.c.b16 %v1673, %v1669
    %v2430 = vpack.c.b16 %v1674, %v1670
    %v2431 = vpack.c.b16 %v1675, %v1671
    %v2432 = vpack.c.b16 %v1680, %v1676
    %v2433 = vpack.c.b16 %v1681, %v1677
    %v2434 = vpack.c.b16 %v1682, %v1678
    %v2435 = vpack.c.b16 %v1683, %v1679
    %v2436 = vpack.c.b16 %v1688, %v1684
    %v2437 = vpack.c.b16 %v1689, %v1685
    %v2438 = vpack.c.b16 %v1690, %v1686
    %v2439 = vpack.c.b16 %v1691, %v1687
    %v2440 = vpack.c.b16 %v1696, %v1692
    %v2441 = vpack.c.b16 %v1697, %v1693
    %v2442 = vpack.c.b16 %v1698, %v1694
    %v2443 = vpack.c.b16 %v1699, %v1695
    %v2444 = vpack.c.b16 %v1704, %v1700
    %v2445 = vpack.c.b16 %v1705, %v1701
    %v2446 = vpack.c.b16 %v1706, %v1702
    %v2447 = vpack.c.b16 %v1707, %v1703
    %v2448 = vpack.c.b16 %v1712, %v1708
    %v2449 = vpack.c.b16 %v1713, %v1709
    %v2450 = vpack.c.b16 %v1714, %v1710
    %v2451 = vpack.c.b16 %v1715, %v1711
    %v2452 = vpack.c.b16 %v1720, %v1716
    %v2453 = vpack.c.b16 %v1721, %v1717
    %v2454 = vpack.c.b16 %v1722, %v1718
    %v2455 = vpack.c.b16 %v1723, %v1719
    %v2456 = vpack.c.b16 %v1728, %v1724
    %v2457 = vpack.c.b16 %v1729, %v1725
    %v2458 = vpack.c.b16 %v1730, %v1726
    %v2459 = vpack.c.b16 %v1731, %v1727
    %v2460 = vpack.c.b16 %v1736, %v1732
    %v2461 = vpack.c.b16 %v1737, %v1733
    %v2462 = vpack.c.b16 %v1738, %v1734
    %v2463 = vpack.c.b16 %v1739, %v1735
    %v2464 = vpack.c.b16 %v1744, %v1740
    %v2465 = vpack.c.b16 %v1745, %v1741
    %v2466 = vpack.c.b16 %v1746, %v1742
    %v2467 = vpack.c.b16 %v1747, %v1743
    %v2468 = vpack.c.b16 %v1752, %v1748
    %v2469 = vpack.c.b16 %v1753, %v1749
    %v2470 = vpack.c.b16 %v1754, %v1750
    %v2471 = vpack.c.b16 %v1755, %v1751
    %v2472 = vpack.c.b16 %v1760, %v1756
    %v2473 = vpack.c.b16 %v1761, %v1757
    %v2474 = vpack.c.b16 %v1762, %v1758
    %v2475 = vpack.c.b16 %v1763, %v1759
    %v2476 = vpack.c.b16 %v1768, %v1764
    %v2477 = vpack.c.b16 %v1769, %v1765
    %v2478 = vpack.c.b16 %v1770, %v1766
    %v2479 = vpack.c.b16 %v1771, %v1767
    %v2480 = vpack.c.b16 %v1776, %v1772
    %v2481 = vpack.c.b16 %v1777, %v1773
    %v2482 = vpack.c.b16 %v1778, %v1774
    %v2483 = vpack.c.b16 %v1779, %v1775
    %v2484 = vpack.c.b16 %v1784, %v1780
    %v2485 = vpack.c.b16 %v1785, %v1781
    %v2486 = vpack.c.b16 %v1786, %v1782
    %v2487 = vpack.c.b16 %v1787, %v1783
    %v2488 = vpack.c.b16 %v1792, %v1788
    %v2489 = vpack.c.b16 %v1793, %v1789
    %v2490 = vpack.c.b16 %v1794, %v1790
    %v2491 = vpack.c.b16 %v1795, %v1791
    %v2492 = vpack.c.b16 %v1800, %v1796
    %v2493 = vpack.c.b16 %v1801, %v1797
    %v2494 = vpack.c.b16 %v1802, %v1798
    %v2495 = vpack.c.b16 %v1803, %v1799
    %v2496 = vpack.c.b16 %v1808, %v1804
    %v2497 = vpack.c.b16 %v1809, %v1805
    %v2498 = vpack.c.b16 %v1810, %v1806
    %v2499 = vpack.c.b16 %v1811, %v1807
    %v2500 = vpack.c.b16 %v1816, %v1812
    %v2501 = vpack.c.b16 %v1817, %v1813
    %v2502 = vpack.c.b16 %v1818, %v1814
    %v2503 = vpack.c.b16 %v1819, %v1815
    %v2504 = vpack.c.b16 %v1824, %v1820
    %v2505 = vpack.c.b16 %v1825, %v1821
    %v2506 = vpack.c.b16 %v1826, %v1822
    %v2507 = vpack.c.b16 %v1827, %v1823
    %v2508 = vpack.c.b16 %v1832, %v1828
    %v2509 = vpack.c.b16 %v1833, %v1829
    %v2510 = vpack.c.b16 %v1834, %v1830
    %v2511 = vpack.c.b16 %v1835, %v1831
    %v2512 = vpack.c.b16 %v1840, %v1836
    %v2513 = vpack.c.b16 %v1841, %v1837
    %v2514 = vpack.c.b16 %v1842, %v1838
    %v2515 = vpack.c.b16 %v1843, %v1839
    %v2516 = vpack.c.b16 %v1848, %v1844
    %v2517 = vpack.c.b16 %v1849, %v1845
    %v2518 = vpack.c.b16 %v1850, %v1846
    %v2519 = vpack.c.b16 %v1851, %v1847
    %v2520 = vpack.c.b16 %v1856, %v1852
    %v2521 = vpack.c.b16 %v1857, %v1853
    %v2522 = vpack.c.b16 %v1858, %v1854
    %v2523 = vpack.c.b16 %v1859, %v1855
    %v2524 = vpack.c.b16 %v1864, %v1860
    %v2525 = vpack.c.b16 %v1865, %v1861
    %v2526 = vpack.c.b16 %v1866, %v1862
    %v2527 = vpack.c.b16 %v1867, %v1863
    %v2528 = vpack.c.b16 %v1872, %v1868
    %v2529 = vpack.c.b16 %v1873, %v1869
    %v2530 = vpack.c.b16 %v1874, %v1870
    %v2531 = vpack.c.b16 %v1875, %v1871
    %v2532 = vpack.c.b16 %v1880, %v1876
    %v2533 = vpack.c.b16 %v1881, %v1877
    %v2534 = vpack.c.b16 %v1882, %v1878
    %v2535 = vpack.c.b16 %v1883, %v1879
    %v2536 = vpack.c.b16 %v1888, %v1884
    %v2537 = vpack.c.b16 %v1889, %v1885
    %v2538 = vpack.c.b16 %v1890, %v1886
    %v2539 = vpack.c.b16 %v1891, %v1887
    %v2540 = vpack.c.b16 %v1896, %v1892
    %v2541 = vpack.c.b16 %v1897, %v1893
    %v2542 = vpack.c.b16 %v1898, %v1894
    %v2543 = vpack.c.b16 %v1899, %v1895
    %v2544 = vpack.c.b16 %v1904, %v1900
    %v2545 = vpack.c.b16 %v1905, %v1901
    %v2546 = vpack.c.b16 %v1906, %v1902
    %v2547 = vpack.c.b16 %v1907, %v1903
    %v2548 = vpack.c.b16 %v1912, %v1908
    %v2549 = vpack.c.b16 %v1913, %v1909
    %v2550 = vpack.c.b16 %v1914, %v1910
    %v2551 = vpack.c.b16 %v1915, %v1911
    %v2552 = vpack.c.b16 %v1920, %v1916
    %v2553 = vpack.c.b16 %v1921, %v1917
    %v2554 = vpack.c.b16 %v1922, %v1918
    %v2555 = vpack.c.b16 %v1923, %v1919
    %v2556 = vpack.c.b16 %v1928, %v1924
    %v2557 = vpack.c.b16 %v1929, %v1925
    %v2558 = vpack.c.b16 %v1930, %v1926
    %v2559 = vpack.c.b16 %v1931, %v1927
    %v2560 = vpack.c.b16 %v1936, %v1932
    %v2561 = vpack.c.b16 %v1937, %v1933
    %v2562 = vpack.c.b16 %v1938, %v1934
    %v2563 = vpack.c.b16 %v1939, %v1935
    %v2564 = vpack.c.b16 %v1944, %v1940
    %v2565 = vpack.c.b16 %v1945, %v1941
    %v2566 = vpack.c.b16 %v1946, %v1942
    %v2567 = vpack.c.b16 %v1947, %v1943
    %v2568 = vpack.c.b16 %v1952, %v1948
    %v2569 = vpack.c.b16 %v1953, %v1949
    %v2570 = vpack.c.b16 %v1954, %v1950
    %v2571 = vpack.c.b16 %v1955, %v1951
    %v2572 = vpack.c.b16 %v1960, %v1956
    %v2573 = vpack.c.b16 %v1961, %v1957
    %v2574 = vpack.c.b16 %v1962, %v1958
    %v2575 = vpack.c.b16 %v1963, %v1959
    %v2576 = vpack.c.b16 %v1968, %v1964
    %v2577 = vpack.c.b16 %v1969, %v1965
    %v2578 = vpack.c.b16 %v1970, %v1966
    %v2579 = vpack.c.b16 %v1971, %v1967
    %v2580 = vpack.c.b16 %v1976, %v1972
    %v2581 = vpack.c.b16 %v1977, %v1973
    %v2582 = vpack.c.b16 %v1978, %v1974
    %v2583 = vpack.c.b16 %v1979, %v1975
    %v2584 = vpack.c.b16 %v1984, %v1980
    %v2585 = vpack.c.b16 %v1985, %v1981
    %v2586 = vpack.c.b16 %v1986, %v1982
    %v2587 = vpack.c.b16 %v1987, %v1983
    %v2588 = vpack.c.b16 %v1992, %v1988
    %v2589 = vpack.c.b16 %v1993, %v1989
    %v2590 = vpack.c.b16 %v1994, %v1990
    %v2591 = vpack.c.b16 %v1995, %v1991
    %v2592 = vpack.c.b16 %v2000, %v1996
    %v2593 = vpack.c.b16 %v2001, %v1997
    %v2594 = vpack.c.b16 %v2002, %v1998
    %v2595 = vpack.c.b16 %v2003, %v1999
    %v2596 = vpack.c.b16 %v2008, %v2004
    %v2597 = vpack.c.b16 %v2009, %v2005
    %v2598 = vpack.c.b16 %v2010, %v2006
    %v2599 = vpack.c.b16 %v2011, %v2007
    %v2600 = vpack.c.b16 %v2016, %v2012
    %v2601 = vpack.c.b16 %v2017, %v2013
    %v2602 = vpack.c.b16 %v2018, %v2014
    %v2603 = vpack.c.b16 %v2019, %v2015
    %v2604 = vpack.c.b16 %v2024, %v2020
    %v2605 = vpack.c.b16 %v2025, %v2021
    %v2606 = vpack.c.b16 %v2026, %v2022
    %v2607 = vpack.c.b16 %v2027, %v2023
    %v2608 = vpack.c.b16 %v2032, %v2028
    %v2609 = vpack.c.b16 %v2033, %v2029
    %v2610 = vpack.c.b16 %v2034, %v2030
    %v2611 = vpack.c.b16 %v2035, %v2031
    %v2612 = vpack.c.b16 %v2040, %v2036
    %v2613 = vpack.c.b16 %v2041, %v2037
    %v2614 = vpack.c.b16 %v2042, %v2038
    %v2615 = vpack.c.b16 %v2043, %v2039
    %v2616 = vpack.c.b16 %v2048, %v2044
    %v2617 = vpack.c.b16 %v2049, %v2045
    %v2618 = vpack.c.b16 %v2050, %v2046
    %v2619 = vpack.c.b16 %v2051, %v2047
    %v2620 = vpack.c.b16 %v2056, %v2052
    %v2621 = vpack.c.b16 %v2057, %v2053
    %v2622 = vpack.c.b16 %v2058, %v2054
    %v2623 = vpack.c.b16 %v2059, %v2055
    %v2624 = vpack.c.b16 %v2064, %v2060
    %v2625 = vpack.c.b16 %v2065, %v2061
    %v2626 = vpack.c.b16 %v2066, %v2062
    %v2627 = vpack.c.b16 %v2067, %v2063
    %v2628 = vpack.c.b16 %v2072, %v2068
    %v2629 = vpack.c.b16 %v2073, %v2069
    %v2630 = vpack.c.b16 %v2074, %v2070
    %v2631 = vpack.c.b16 %v2075, %v2071
    %v2632 = vpack.c.b16 %v2080, %v2076
    %v2633 = vpack.c.b16 %v2081, %v2077
    %v2634 = vpack.c.b16 %v2082, %v2078
    %v2635 = vpack.c.b16 %v2083, %v2079
    %v2636 = vpack.c.b16 %v2088, %v2084
    %v2637 = vpack.c.b16 %v2089, %v2085
    %v2638 = vpack.c.b16 %v2090, %v2086
    %v2639 = vpack.c.b16 %v2091, %v2087
    %v2640 = vpack.c.b16 %v2096, %v2092
    %v2641 = vpack.c.b16 %v2097, %v2093
    %v2642 = vpack.c.b16 %v2098, %v2094
    %v2643 = vpack.c.b16 %v2099, %v2095
    %v2644 = vpack.c.b16 %v2104, %v2100
    %v2645 = vpack.c.b16 %v2105, %v2101
    %v2646 = vpack.c.b16 %v2106, %v2102
    %v2647 = vpack.c.b16 %v2107, %v2103
    %v2648 = vpack.c.b16 %v2112, %v2108
    %v2649 = vpack.c.b16 %v2113, %v2109
    %v2650 = vpack.c.b16 %v2114, %v2110
    %v2651 = vpack.c.b16 %v2115, %v2111
    %v2652 = vpack.c.b16 %v2120, %v2116
    %v2653 = vpack.c.b16 %v2121, %v2117
    %v2654 = vpack.c.b16 %v2122, %v2118
    %v2655 = vpack.c.b16 %v2123, %v2119
    %v2656 = vpack.c.b16 %v2128, %v2124
    %v2657 = vpack.c.b16 %v2129, %v2125
    %v2658 = vpack.c.b16 %v2130, %v2126
    %v2659 = vpack.c.b16 %v2131, %v2127
    %v2660 = vpack.c.b16 %v2136, %v2132
    %v2661 = vpack.c.b16 %v2137, %v2133
    %v2662 = vpack.c.b16 %v2138, %v2134
    %v2663 = vpack.c.b16 %v2139, %v2135
    %v2664 = vpack.c.b16 %v2144, %v2140
    %v2665 = vpack.c.b16 %v2145, %v2141
    %v2666 = vpack.c.b16 %v2146, %v2142
    %v2667 = vpack.c.b16 %v2147, %v2143
    %v2668 = vpack.c.b16 %v2152, %v2148
    %v2669 = vpack.c.b16 %v2153, %v2149
    %v2670 = vpack.c.b16 %v2154, %v2150
    %v2671 = vpack.c.b16 %v2155, %v2151
    %v2672 = vpack.c.b16 %v2160, %v2156
    %v2673 = vpack.c.b16 %v2161, %v2157
    %v2674 = vpack.c.b16 %v2162, %v2158
    %v2675 = vpack.c.b16 %v2163, %v2159
    %v2676 = vpack.c.b16 %v2168, %v2164
    %v2677 = vpack.c.b16 %v2169, %v2165
    %v2678 = vpack.c.b16 %v2170, %v2166
    %v2679 = vpack.c.b16 %v2171, %v2167
    %v2680 = vpack.c.b16 %v2176, %v2172
    %v2681 = vpack.c.b16 %v2177, %v2173
    %v2682 = vpack.c.b16 %v2178, %v2174
    %v2683 = vpack.c.b16 %v2179, %v2175
    %v2684 = vpack.c.b16 %v2184, %v2180
    %v2685 = vpack.c.b16 %v2185, %v2181
    %v2686 = vpack.c.b16 %v2186, %v2182
    %v2687 = vpack.c.b16 %v2187, %v2183
    %vm3188 = vcmask 654336
    %v3190 = vsel %vm3188, %v165, 0
    %3192 = vmatprep.subr.bf16.mxu0 %v2189
    %3193 = vmatpush1.bf16.msra.mxu0 %v2188
    %3194 = vmatprep.subr.bf16.mxu0 %v2193
    %3195 = vmatpush1.bf16.msra.mxu0 %v2192
    %3196 = vmatprep.subr.bf16.mxu0 %v2197
    %3197 = vmatpush1.bf16.msra.mxu0 %v2196
    %3198 = vmatprep.subr.bf16.mxu0 %v2201
    %3199 = vmatpush1.bf16.msra.mxu0 %v2200
    %3200 = vmatprep.subr.bf16.mxu0 %v2205
    %3201 = vmatpush1.bf16.msra.mxu0 %v2204
    %3202 = vmatprep.subr.bf16.mxu0 %v2209
    %3203 = vmatpush1.bf16.msra.mxu0 %v2208
    %3204 = vmatprep.subr.bf16.mxu0 %v2213
    %3205 = vmatpush1.bf16.msra.mxu0 %v2212
    %3206 = vmatprep.subr.bf16.mxu0 %v2217
    %3207 = vmatpush1.bf16.msra.mxu0 %v2216
    %3208 = vmatprep.subr.bf16.mxu0 %v2221
    %3209 = vmatpush1.bf16.msra.mxu0 %v2220
    %3210 = vmatprep.subr.bf16.mxu0 %v2225
    %3211 = vmatpush1.bf16.msra.mxu0 %v2224
    %3212 = vmatprep.subr.bf16.mxu0 %v2229
    %3213 = vmatpush1.bf16.msra.mxu0 %v2228
    %3214 = vmatprep.subr.bf16.mxu0 %v2233
    %3215 = vmatpush1.bf16.msra.mxu0 %v2232
    %3216 = vmatprep.subr.bf16.mxu0 %v2237
    %3217 = vmatpush1.bf16.msra.mxu0 %v2236
    %3218 = vmatprep.subr.bf16.mxu0 %v2241
    %3219 = vmatpush1.bf16.msra.mxu0 %v2240
    %3220 = vmatprep.subr.bf16.mxu0 %v2245
    %3221 = vmatpush1.bf16.msra.mxu0 %v2244
    %3222 = vmatprep.subr.bf16.mxu0 %v2249
    %3223 = vmatpush1.bf16.msra.mxu0 %v2248
    %3224 = vmatprep.mubr.bf16.mxu0 %v151
    %3225 = vmatmul.mubr.bf16.gmra.mrb[0].mxu0 %v150
    %v3226 = vpop.f32.mrb[0].mxu0
    %v3227 = vadd.f32 %v671, %v3226
    %v3228 = vpop.f32.mrb[0].mxu0
    %v3229 = vadd.f32 %v675, %v3228
    %v3230 = vpop.f32.mrb[0].mxu0
    %v3231 = vpop.f32.mrb[0].mxu0
    %3232 = vdwg.mxu0
    %3233 = vmatprep.subr.bf16.mxu0 %v2253
    %3234 = vmatpush1.bf16.msra.mxu0 %v2252
    %3235 = vmatprep.subr.bf16.mxu0 %v2257
    %3236 = vmatpush1.bf16.msra.mxu0 %v2256
    %3237 = vmatprep.subr.bf16.mxu0 %v2261
    %3238 = vmatpush1.bf16.msra.mxu0 %v2260
    %3239 = vmatprep.subr.bf16.mxu0 %v2265
    %3240 = vmatpush1.bf16.msra.mxu0 %v2264
    %3241 = vmatprep.subr.bf16.mxu0 %v2269
    %3242 = vmatpush1.bf16.msra.mxu0 %v2268
    %3243 = vmatprep.subr.bf16.mxu0 %v2273
    %3244 = vmatpush1.bf16.msra.mxu0 %v2272
    %3245 = vmatprep.subr.bf16.mxu0 %v2277
    %3246 = vmatpush1.bf16.msra.mxu0 %v2276
    %3247 = vmatprep.subr.bf16.mxu0 %v2281
    %3248 = vmatpush1.bf16.msra.mxu0 %v2280
    %3249 = vmatprep.subr.bf16.mxu0 %v2285
    %3250 = vmatpush1.bf16.msra.mxu0 %v2284
    %3251 = vmatprep.subr.bf16.mxu0 %v2289
    %3252 = vmatpush1.bf16.msra.mxu0 %v2288
    %3253 = vmatprep.subr.bf16.mxu0 %v2293
    %3254 = vmatpush1.bf16.msra.mxu0 %v2292
    %3255 = vmatprep.subr.bf16.mxu0 %v2297
    %3256 = vmatpush1.bf16.msra.mxu0 %v2296
    %3257 = vmatprep.subr.bf16.mxu0 %v2301
    %3258 = vmatpush1.bf16.msra.mxu0 %v2300
    %3259 = vmatprep.subr.bf16.mxu0 %v2305
    %3260 = vmatpush1.bf16.msra.mxu0 %v2304
    %3261 = vmatprep.subr.bf16.mxu0 %v2309
    %3262 = vmatpush1.bf16.msra.mxu0 %v2308
    %3263 = vmatprep.subr.bf16.mxu0 %v2313
    %3264 = vmatpush1.bf16.msra.mxu0 %v2312
    %3265 = vmatprep.mubr.bf16.mxu0 %v153
    %3266 = vmatmul.mubr.bf16.gmra.mrb[0].mxu0 %v152
    %v3267 = vpop.f32.mrb[0].mxu0
    %v3268 = vadd.f32 %v3227, %v3267
    %v3269 = vpop.f32.mrb[0].mxu0
    %v3270 = vadd.f32 %v3229, %v3269
    %v3271 = vpop.f32.mrb[0].mxu0
    %v3272 = vpop.f32.mrb[0].mxu0
    %3273 = vdwg.mxu0
    %3274 = vmatprep.subr.bf16.mxu0 %v2317
    %3275 = vmatpush1.bf16.msra.mxu0 %v2316
    %3276 = vmatprep.subr.bf16.mxu0 %v2321
    %3277 = vmatpush1.bf16.msra.mxu0 %v2320
    %3278 = vmatprep.subr.bf16.mxu0 %v2325
    %3279 = vmatpush1.bf16.msra.mxu0 %v2324
    %3280 = vmatprep.subr.bf16.mxu0 %v2329
    %3281 = vmatpush1.bf16.msra.mxu0 %v2328
    %3282 = vmatprep.subr.bf16.mxu0 %v2333
    %3283 = vmatpush1.bf16.msra.mxu0 %v2332
    %3284 = vmatprep.subr.bf16.mxu0 %v2337
    %3285 = vmatpush1.bf16.msra.mxu0 %v2336
    %3286 = vmatprep.subr.bf16.mxu0 %v2341
    %3287 = vmatpush1.bf16.msra.mxu0 %v2340
    %3288 = vmatprep.subr.bf16.mxu0 %v2345
    %3289 = vmatpush1.bf16.msra.mxu0 %v2344
    %3290 = vmatprep.subr.bf16.mxu0 %v2349
    %3291 = vmatpush1.bf16.msra.mxu0 %v2348
    %3292 = vmatprep.subr.bf16.mxu0 %v2353
    %3293 = vmatpush1.bf16.msra.mxu0 %v2352
    %3294 = vmatprep.subr.bf16.mxu0 %v2357
    %3295 = vmatpush1.bf16.msra.mxu0 %v2356
    %3296 = vmatprep.subr.bf16.mxu0 %v2361
    %3297 = vmatpush1.bf16.msra.mxu0 %v2360
    %3298 = vmatprep.subr.bf16.mxu0 %v2365
    %3299 = vmatpush1.bf16.msra.mxu0 %v2364
    %3300 = vmatprep.subr.bf16.mxu0 %v2369
    %3301 = vmatpush1.bf16.msra.mxu0 %v2368
    %3302 = vmatprep.subr.bf16.mxu0 %v2373
    %3303 = vmatpush1.bf16.msra.mxu0 %v2372
    %3304 = vmatprep.subr.bf16.mxu0 %v2377
    %3305 = vmatpush1.bf16.msra.mxu0 %v2376
    %3306 = vmatprep.mubr.bf16.mxu0 %v155
    %3307 = vmatmul.mubr.bf16.gmra.mrb[0].mxu0 %v154
    %v3308 = vpop.f32.mrb[0].mxu0
    %v3309 = vadd.f32 %v3268, %v3308
    %v3310 = vpop.f32.mrb[0].mxu0
    %v3311 = vadd.f32 %v3270, %v3310
    %v3312 = vpop.f32.mrb[0].mxu0
    %v3313 = vpop.f32.mrb[0].mxu0
    %3314 = vdwg.mxu0
    %3315 = vmatprep.subr.bf16.mxu0 %v2381
    %3316 = vmatpush1.bf16.msra.mxu0 %v2380
    %3317 = vmatprep.subr.bf16.mxu0 %v2385
    %3318 = vmatpush1.bf16.msra.mxu0 %v2384
    %3319 = vmatprep.subr.bf16.mxu0 %v2389
    %3320 = vmatpush1.bf16.msra.mxu0 %v2388
    %3321 = vmatprep.subr.bf16.mxu0 %v2393
    %3322 = vmatpush1.bf16.msra.mxu0 %v2392
    %3323 = vmatprep.subr.bf16.mxu0 %v2397
    %3324 = vmatpush1.bf16.msra.mxu0 %v2396
    %3325 = vmatprep.subr.bf16.mxu0 %v2401
    %3326 = vmatpush1.bf16.msra.mxu0 %v2400
    %3327 = vmatprep.subr.bf16.mxu0 %v2405
    %3328 = vmatpush1.bf16.msra.mxu0 %v2404
    %3329 = vmatprep.subr.bf16.mxu0 %v2409
    %3330 = vmatpush1.bf16.msra.mxu0 %v2408
    %3331 = vmatprep.subr.bf16.mxu0 %v2413
    %3332 = vmatpush1.bf16.msra.mxu0 %v2412
    %3333 = vmatprep.subr.bf16.mxu0 %v2417
    %3334 = vmatpush1.bf16.msra.mxu0 %v2416
    %3335 = vmatprep.subr.bf16.mxu0 %v2421
    %3336 = vmatpush1.bf16.msra.mxu0 %v2420
    %3337 = vmatprep.subr.bf16.mxu0 %v2425
    %3338 = vmatpush1.bf16.msra.mxu0 %v2424
    %3339 = vmatprep.subr.bf16.mxu0 %v2429
    %3340 = vmatpush1.bf16.msra.mxu0 %v2428
    %3341 = vmatprep.subr.bf16.mxu0 %v2433
    %3342 = vmatpush1.bf16.msra.mxu0 %v2432
    %3343 = vmatprep.subr.bf16.mxu0 %v2437
    %3344 = vmatpush1.bf16.msra.mxu0 %v2436
    %3345 = vmatprep.subr.bf16.mxu0 %v2441
    %3346 = vmatpush1.bf16.msra.mxu0 %v2440
    %3347 = vmatprep.mubr.bf16.mxu0 %v157
    %3348 = vmatmul.mubr.bf16.gmra.mrb[0].mxu0 %v156
    %v3349 = vpop.f32.mrb[0].mxu0
    %v3350 = vadd.f32 %v3309, %v3349
    %v3351 = vpop.f32.mrb[0].mxu0
    %v3352 = vadd.f32 %v3311, %v3351
    %v3353 = vpop.f32.mrb[0].mxu0
    %v3354 = vpop.f32.mrb[0].mxu0
    %3355 = vdwg.mxu0
    %3356 = vmatprep.subr.bf16.mxu0 %v2445
    %3357 = vmatpush1.bf16.msra.mxu0 %v2444
    %3358 = vmatprep.subr.bf16.mxu0 %v2449
    %3359 = vmatpush1.bf16.msra.mxu0 %v2448
    %3360 = vmatprep.subr.bf16.mxu0 %v2453
    %3361 = vmatpush1.bf16.msra.mxu0 %v2452
    %3362 = vmatprep.subr.bf16.mxu0 %v2457
    %3363 = vmatpush1.bf16.msra.mxu0 %v2456
    %3364 = vmatprep.subr.bf16.mxu0 %v2461
    %3365 = vmatpush1.bf16.msra.mxu0 %v2460
    %3366 = vmatprep.subr.bf16.mxu0 %v2465
    %3367 = vmatpush1.bf16.msra.mxu0 %v2464
    %3368 = vmatprep.subr.bf16.mxu0 %v2469
    %3369 = vmatpush1.bf16.msra.mxu0 %v2468
    %3370 = vmatprep.subr.bf16.mxu0 %v2473
    %3371 = vmatpush1.bf16.msra.mxu0 %v2472
    %3372 = vmatprep.subr.bf16.mxu0 %v2477
    %3373 = vmatpush1.bf16.msra.mxu0 %v2476
    %3374 = vmatprep.subr.bf16.mxu0 %v2481
    %3375 = vmatpush1.bf16.msra.mxu0 %v2480
    %3376 = vmatprep.subr.bf16.mxu0 %v2485
    %3377 = vmatpush1.bf16.msra.mxu0 %v2484
    %3378 = vmatprep.subr.bf16.mxu0 %v2489
    %3379 = vmatpush1.bf16.msra.mxu0 %v2488
    %3380 = vmatprep.subr.bf16.mxu0 %v2493
    %3381 = vmatpush1.bf16.msra.mxu0 %v2492
    %3382 = vmatprep.subr.bf16.mxu0 %v2497
    %3383 = vmatpush1.bf16.msra.mxu0 %v2496
    %3384 = vmatprep.subr.bf16.mxu0 %v2501
    %3385 = vmatpush1.bf16.msra.mxu0 %v2500
    %3386 = vmatprep.subr.bf16.mxu0 %v2505
    %3387 = vmatpush1.bf16.msra.mxu0 %v2504
    %3388 = vmatprep.mubr.bf16.mxu0 %v159
    %3389 = vmatmul.mubr.bf16.gmra.mrb[0].mxu0 %v158
    %v3390 = vpop.f32.mrb[0].mxu0
    %v3391 = vadd.f32 %v3350, %v3390
    %v3392 = vpop.f32.mrb[0].mxu0
    %v3393 = vadd.f32 %v3352, %v3392
    %v3394 = vpop.f32.mrb[0].mxu0
    %v3395 = vpop.f32.mrb[0].mxu0
    %3396 = vdwg.mxu0
    %3397 = vmatprep.subr.bf16.mxu0 %v2509
    %3398 = vmatpush1.bf16.msra.mxu0 %v2508
    %3399 = vmatprep.subr.bf16.mxu0 %v2513
    %3400 = vmatpush1.bf16.msra.mxu0 %v2512
    %3401 = vmatprep.subr.bf16.mxu0 %v2517
    %3402 = vmatpush1.bf16.msra.mxu0 %v2516
    %3403 = vmatprep.subr.bf16.mxu0 %v2521
    %3404 = vmatpush1.bf16.msra.mxu0 %v2520
    %3405 = vmatprep.subr.bf16.mxu0 %v2525
    %3406 = vmatpush1.bf16.msra.mxu0 %v2524
    %3407 = vmatprep.subr.bf16.mxu0 %v2529
    %3408 = vmatpush1.bf16.msra.mxu0 %v2528
    %3409 = vmatprep.subr.bf16.mxu0 %v2533
    %3410 = vmatpush1.bf16.msra.mxu0 %v2532
    %3411 = vmatprep.subr.bf16.mxu0 %v2537
    %3412 = vmatpush1.bf16.msra.mxu0 %v2536
    %3413 = vmatprep.subr.bf16.mxu0 %v2541
    %3414 = vmatpush1.bf16.msra.mxu0 %v2540
    %3415 = vmatprep.subr.bf16.mxu0 %v2545
    %3416 = vmatpush1.bf16.msra.mxu0 %v2544
    %3417 = vmatprep.subr.bf16.mxu0 %v2549
    %3418 = vmatpush1.bf16.msra.mxu0 %v2548
    %3419 = vmatprep.subr.bf16.mxu0 %v2553
    %3420 = vmatpush1.bf16.msra.mxu0 %v2552
    %3421 = vmatprep.subr.bf16.mxu0 %v2557
    %3422 = vmatpush1.bf16.msra.mxu0 %v2556
    %3423 = vmatprep.subr.bf16.mxu0 %v2561
    %3424 = vmatpush1.bf16.msra.mxu0 %v2560
    %3425 = vmatprep.subr.bf16.mxu0 %v2565
    %3426 = vmatpush1.bf16.msra.mxu0 %v2564
    %3427 = vmatprep.subr.bf16.mxu0 %v2569
    %3428 = vmatpush1.bf16.msra.mxu0 %v2568
    %3429 = vmatprep.mubr.bf16.mxu0 %v161
    %3430 = vmatmul.mubr.bf16.gmra.mrb[0].mxu0 %v160
    %v3431 = vpop.f32.mrb[0].mxu0
    %v3432 = vadd.f32 %v3391, %v3431
    %v3433 = vpop.f32.mrb[0].mxu0
    %v3434 = vadd.f32 %v3393, %v3433
    %v3435 = vpop.f32.mrb[0].mxu0
    %v3436 = vpop.f32.mrb[0].mxu0
    %3437 = vdwg.mxu0
    %3438 = vmatprep.subr.bf16.mxu0 %v2573
    %3439 = vmatpush1.bf16.msra.mxu0 %v2572
    %3440 = vmatprep.subr.bf16.mxu0 %v2577
    %3441 = vmatpush1.bf16.msra.mxu0 %v2576
    %3442 = vmatprep.subr.bf16.mxu0 %v2581
    %3443 = vmatpush1.bf16.msra.mxu0 %v2580
    %3444 = vmatprep.subr.bf16.mxu0 %v2585
    %3445 = vmatpush1.bf16.msra.mxu0 %v2584
    %3446 = vmatprep.subr.bf16.mxu0 %v2589
    %3447 = vmatpush1.bf16.msra.mxu0 %v2588
    %3448 = vmatprep.subr.bf16.mxu0 %v2593
    %3449 = vmatpush1.bf16.msra.mxu0 %v2592
    %3450 = vmatprep.subr.bf16.mxu0 %v2597
    %3451 = vmatpush1.bf16.msra.mxu0 %v2596
    %3452 = vmatprep.subr.bf16.mxu0 %v2601
    %3453 = vmatpush1.bf16.msra.mxu0 %v2600
    %3454 = vmatprep.subr.bf16.mxu0 %v2605
    %3455 = vmatpush1.bf16.msra.mxu0 %v2604
    %3456 = vmatprep.subr.bf16.mxu0 %v2609
    %3457 = vmatpush1.bf16.msra.mxu0 %v2608
    %3458 = vmatprep.subr.bf16.mxu0 %v2613
    %3459 = vmatpush1.bf16.msra.mxu0 %v2612
    %3460 = vmatprep.subr.bf16.mxu0 %v2617
    %3461 = vmatpush1.bf16.msra.mxu0 %v2616
    %3462 = vmatprep.subr.bf16.mxu0 %v2621
    %3463 = vmatpush1.bf16.msra.mxu0 %v2620
    %3464 = vmatprep.subr.bf16.mxu0 %v2625
    %3465 = vmatpush1.bf16.msra.mxu0 %v2624
    %3466 = vmatprep.subr.bf16.mxu0 %v2629
    %3467 = vmatpush1.bf16.msra.mxu0 %v2628
    %3468 = vmatprep.subr.bf16.mxu0 %v2633
    %3469 = vmatpush1.bf16.msra.mxu0 %v2632
    %3470 = vmatprep.mubr.bf16.mxu0 %v163
    %3471 = vmatmul.mubr.bf16.gmra.mrb[0].mxu0 %v162
    %v3472 = vpop.f32.mrb[0].mxu0
    %v3473 = vadd.f32 %v3432, %v3472
    %v3474 = vpop.f32.mrb[0].mxu0
    %v3475 = vadd.f32 %v3434, %v3474
    %v3476 = vpop.f32.mrb[0].mxu0
    %v3477 = vpop.f32.mrb[0].mxu0
    %3478 = vdwg.mxu0
    %3479 = vmatprep.subr.bf16.mxu0 %v2637
    %3480 = vmatpush1.bf16.msra.mxu0 %v2636
    %3481 = vmatprep.subr.bf16.mxu0 %v2641
    %3482 = vmatpush1.bf16.msra.mxu0 %v2640
    %3483 = vmatprep.subr.bf16.mxu0 %v2645
    %3484 = vmatpush1.bf16.msra.mxu0 %v2644
    %3485 = vmatprep.subr.bf16.mxu0 %v2649
    %3486 = vmatpush1.bf16.msra.mxu0 %v2648
    %3487 = vmatprep.subr.bf16.mxu0 %v2653
    %3488 = vmatpush1.bf16.msra.mxu0 %v2652
    %3489 = vmatprep.subr.bf16.mxu0 %v2657
    %3490 = vmatpush1.bf16.msra.mxu0 %v2656
    %3491 = vmatprep.subr.bf16.mxu0 %v2661
    %3492 = vmatpush1.bf16.msra.mxu0 %v2660
    %3493 = vmatprep.subr.bf16.mxu0 %v2665
    %3494 = vmatpush1.bf16.msra.mxu0 %v2664
    %3495 = vmatprep.subr.bf16.mxu0 %v2669
    %3496 = vmatpush1.bf16.msra.mxu0 %v2668
    %3497 = vmatprep.subr.bf16.mxu0 %v2673
    %3498 = vmatpush1.bf16.msra.mxu0 %v2672
    %3499 = vmatprep.subr.bf16.mxu0 %v2677
    %3500 = vmatpush1.bf16.msra.mxu0 %v2676
    %3501 = vmatprep.subr.bf16.mxu0 %v2681
    %3502 = vmatpush1.bf16.msra.mxu0 %v2680
    %3503 = vmatprep.subr.bf16.mxu0 %v2685
    %3504 = vmatpush1.bf16.msra.mxu0 %v2684
    %3505 = vmatprep.subr.bf16.mxu0 0
    %3506 = vmatpush1.bf16.msra.mxu0 0
    %3507 = vmatprep.subr.bf16.mxu0 0
    %3508 = vmatpush1.bf16.msra.mxu0 0
    %3509 = vmatprep.subr.bf16.mxu0 0
    %3510 = vmatpush1.bf16.msra.mxu0 0
    %3511 = vmatprep.mubr.bf16.mxu0 %v3190
    %3512 = vmatmul.mubr.bf16.gmra.mrb[0].mxu0 %v164
    %v3513 = vpop.f32.mrb[0].mxu0
    %v3514 = vadd.f32 %v3473, %v3513
    %v3515 = vpop.f32.mrb[0].mxu0
    %v3516 = vadd.f32 %v3475, %v3515
    %v3517 = vpop.f32.mrb[0].mxu0
    %v3518 = vpop.f32.mrb[0].mxu0
    %3519 = vdwg.mxu0
    %3520 = vmatprep.subr.bf16.mxu0 %v2191
    %3521 = vmatpush1.bf16.msra.mxu0 %v2190
    %3522 = vmatprep.subr.bf16.mxu0 %v2195
    %3523 = vmatpush1.bf16.msra.mxu0 %v2194
    %3524 = vmatprep.subr.bf16.mxu0 %v2199
    %3525 = vmatpush1.bf16.msra.mxu0 %v2198
    %3526 = vmatprep.subr.bf16.mxu0 %v2203
    %3527 = vmatpush1.bf16.msra.mxu0 %v2202
    %3528 = vmatprep.subr.bf16.mxu0 %v2207
    %3529 = vmatpush1.bf16.msra.mxu0 %v2206
    %3530 = vmatprep.subr.bf16.mxu0 %v2211
    %3531 = vmatpush1.bf16.msra.mxu0 %v2210
    %3532 = vmatprep.subr.bf16.mxu0 %v2215
    %3533 = vmatpush1.bf16.msra.mxu0 %v2214
    %3534 = vmatprep.subr.bf16.mxu0 %v2219
    %3535 = vmatpush1.bf16.msra.mxu0 %v2218
    %3536 = vmatprep.subr.bf16.mxu0 %v2223
    %3537 = vmatpush1.bf16.msra.mxu0 %v2222
    %3538 = vmatprep.subr.bf16.mxu0 %v2227
    %3539 = vmatpush1.bf16.msra.mxu0 %v2226
    %3540 = vmatprep.subr.bf16.mxu0 %v2231
    %3541 = vmatpush1.bf16.msra.mxu0 %v2230
    %3542 = vmatprep.subr.bf16.mxu0 %v2235
    %3543 = vmatpush1.bf16.msra.mxu0 %v2234
    %3544 = vmatprep.subr.bf16.mxu0 %v2239
    %3545 = vmatpush1.bf16.msra.mxu0 %v2238
    %3546 = vmatprep.subr.bf16.mxu0 %v2243
    %3547 = vmatpush1.bf16.msra.mxu0 %v2242
    %3548 = vmatprep.subr.bf16.mxu0 %v2247
    %3549 = vmatpush1.bf16.msra.mxu0 %v2246
    %3550 = vmatprep.subr.bf16.mxu0 %v2251
    %3551 = vmatpush1.bf16.msra.mxu0 %v2250
    %3552 = vmatprep.mubr.bf16.mxu0 %v151
    %3553 = vmatmul.mubr.bf16.gmra.mrb[0].mxu0 %v150
    %v3554 = vpop.f32.mrb[0].mxu0
    %v3555 = vadd.f32 %v679, %v3554
    %v3556 = vpop.f32.mrb[0].mxu0
    %v3557 = vadd.f32 %v683, %v3556
    %v3558 = vpop.f32.mrb[0].mxu0
    %v3559 = vpop.f32.mrb[0].mxu0
    %3560 = vdwg.mxu0
    %3561 = vmatprep.subr.bf16.mxu0 %v2255
    %3562 = vmatpush1.bf16.msra.mxu0 %v2254
    %3563 = vmatprep.subr.bf16.mxu0 %v2259
    %3564 = vmatpush1.bf16.msra.mxu0 %v2258
    %3565 = vmatprep.subr.bf16.mxu0 %v2263
    %3566 = vmatpush1.bf16.msra.mxu0 %v2262
    %3567 = vmatprep.subr.bf16.mxu0 %v2267
    %3568 = vmatpush1.bf16.msra.mxu0 %v2266
    %3569 = vmatprep.subr.bf16.mxu0 %v2271
    %3570 = vmatpush1.bf16.msra.mxu0 %v2270
    %3571 = vmatprep.subr.bf16.mxu0 %v2275
    %3572 = vmatpush1.bf16.msra.mxu0 %v2274
    %3573 = vmatprep.subr.bf16.mxu0 %v2279
    %3574 = vmatpush1.bf16.msra.mxu0 %v2278
    %3575 = vmatprep.subr.bf16.mxu0 %v2283
    %3576 = vmatpush1.bf16.msra.mxu0 %v2282
    %3577 = vmatprep.subr.bf16.mxu0 %v2287
    %3578 = vmatpush1.bf16.msra.mxu0 %v2286
    %3579 = vmatprep.subr.bf16.mxu0 %v2291
    %3580 = vmatpush1.bf16.msra.mxu0 %v2290
    %3581 = vmatprep.subr.bf16.mxu0 %v2295
    %3582 = vmatpush1.bf16.msra.mxu0 %v2294
    %3583 = vmatprep.subr.bf16.mxu0 %v2299
    %3584 = vmatpush1.bf16.msra.mxu0 %v2298
    %3585 = vmatprep.subr.bf16.mxu0 %v2303
    %3586 = vmatpush1.bf16.msra.mxu0 %v2302
    %3587 = vmatprep.subr.bf16.mxu0 %v2307
    %3588 = vmatpush1.bf16.msra.mxu0 %v2306
    %3589 = vmatprep.subr.bf16.mxu0 %v2311
    %3590 = vmatpush1.bf16.msra.mxu0 %v2310
    %3591 = vmatprep.subr.bf16.mxu0 %v2315
    %3592 = vmatpush1.bf16.msra.mxu0 %v2314
    %3593 = vmatprep.mubr.bf16.mxu0 %v153
    %3594 = vmatmul.mubr.bf16.gmra.mrb[0].mxu0 %v152
    %v3595 = vpop.f32.mrb[0].mxu0
    %v3596 = vadd.f32 %v3555, %v3595
    %v3597 = vpop.f32.mrb[0].mxu0
    %v3598 = vadd.f32 %v3557, %v3597
    %v3599 = vpop.f32.mrb[0].mxu0
    %v3600 = vpop.f32.mrb[0].mxu0
    %3601 = vdwg.mxu0
    %3602 = vmatprep.subr.bf16.mxu0 %v2319
    %3603 = vmatpush1.bf16.msra.mxu0 %v2318
    %3604 = vmatprep.subr.bf16.mxu0 %v2323
    %3605 = vmatpush1.bf16.msra.mxu0 %v2322
    %3606 = vmatprep.subr.bf16.mxu0 %v2327
    %3607 = vmatpush1.bf16.msra.mxu0 %v2326
    %3608 = vmatprep.subr.bf16.mxu0 %v2331
    %3609 = vmatpush1.bf16.msra.mxu0 %v2330
    %3610 = vmatprep.subr.bf16.mxu0 %v2335
    %3611 = vmatpush1.bf16.msra.mxu0 %v2334
    %3612 = vmatprep.subr.bf16.mxu0 %v2339
    %3613 = vmatpush1.bf16.msra.mxu0 %v2338
    %3614 = vmatprep.subr.bf16.mxu0 %v2343
    %3615 = vmatpush1.bf16.msra.mxu0 %v2342
    %3616 = vmatprep.subr.bf16.mxu0 %v2347
    %3617 = vmatpush1.bf16.msra.mxu0 %v2346
    %3618 = vmatprep.subr.bf16.mxu0 %v2351
    %3619 = vmatpush1.bf16.msra.mxu0 %v2350
    %3620 = vmatprep.subr.bf16.mxu0 %v2355
    %3621 = vmatpush1.bf16.msra.mxu0 %v2354
    %3622 = vmatprep.subr.bf16.mxu0 %v2359
    %3623 = vmatpush1.bf16.msra.mxu0 %v2358
    %3624 = vmatprep.subr.bf16.mxu0 %v2363
    %3625 = vmatpush1.bf16.msra.mxu0 %v2362
    %3626 = vmatprep.subr.bf16.mxu0 %v2367
    %3627 = vmatpush1.bf16.msra.mxu0 %v2366
    %3628 = vmatprep.subr.bf16.mxu0 %v2371
    %3629 = vmatpush1.bf16.msra.mxu0 %v2370
    %3630 = vmatprep.subr.bf16.mxu0 %v2375
    %3631 = vmatpush1.bf16.msra.mxu0 %v2374
    %3632 = vmatprep.subr.bf16.mxu0 %v2379
    %3633 = vmatpush1.bf16.msra.mxu0 %v2378
    %3634 = vmatprep.mubr.bf16.mxu0 %v155
    %3635 = vmatmul.mubr.bf16.gmra.mrb[0].mxu0 %v154
    %v3636 = vpop.f32.mrb[0].mxu0
    %v3637 = vadd.f32 %v3596, %v3636
    %v3638 = vpop.f32.mrb[0].mxu0
    %v3639 = vadd.f32 %v3598, %v3638
    %v3640 = vpop.f32.mrb[0].mxu0
    %v3641 = vpop.f32.mrb[0].mxu0
    %3642 = vdwg.mxu0
    %3643 = vmatprep.subr.bf16.mxu0 %v2383
    %3644 = vmatpush1.bf16.msra.mxu0 %v2382
    %3645 = vmatprep.subr.bf16.mxu0 %v2387
    %3646 = vmatpush1.bf16.msra.mxu0 %v2386
    %3647 = vmatprep.subr.bf16.mxu0 %v2391
    %3648 = vmatpush1.bf16.msra.mxu0 %v2390
    %3649 = vmatprep.subr.bf16.mxu0 %v2395
    %3650 = vmatpush1.bf16.msra.mxu0 %v2394
    %3651 = vmatprep.subr.bf16.mxu0 %v2399
    %3652 = vmatpush1.bf16.msra.mxu0 %v2398
    %3653 = vmatprep.subr.bf16.mxu0 %v2403
    %3654 = vmatpush1.bf16.msra.mxu0 %v2402
    %3655 = vmatprep.subr.bf16.mxu0 %v2407
    %3656 = vmatpush1.bf16.msra.mxu0 %v2406
    %3657 = vmatprep.subr.bf16.mxu0 %v2411
    %3658 = vmatpush1.bf16.msra.mxu0 %v2410
    %3659 = vmatprep.subr.bf16.mxu0 %v2415
    %3660 = vmatpush1.bf16.msra.mxu0 %v2414
    %3661 = vmatprep.subr.bf16.mxu0 %v2419
    %3662 = vmatpush1.bf16.msra.mxu0 %v2418
    %3663 = vmatprep.subr.bf16.mxu0 %v2423
    %3664 = vmatpush1.bf16.msra.mxu0 %v2422
    %3665 = vmatprep.subr.bf16.mxu0 %v2427
    %3666 = vmatpush1.bf16.msra.mxu0 %v2426
    %3667 = vmatprep.subr.bf16.mxu0 %v2431
    %3668 = vmatpush1.bf16.msra.mxu0 %v2430
    %3669 = vmatprep.subr.bf16.mxu0 %v2435
    %3670 = vmatpush1.bf16.msra.mxu0 %v2434
    %3671 = vmatprep.subr.bf16.mxu0 %v2439
    %3672 = vmatpush1.bf16.msra.mxu0 %v2438
    %3673 = vmatprep.subr.bf16.mxu0 %v2443
    %3674 = vmatpush1.bf16.msra.mxu0 %v2442
    %3675 = vmatprep.mubr.bf16.mxu0 %v157
    %3676 = vmatmul.mubr.bf16.gmra.mrb[0].mxu0 %v156
    %v3677 = vpop.f32.mrb[0].mxu0
    %v3678 = vadd.f32 %v3637, %v3677
    %v3679 = vpop.f32.mrb[0].mxu0
    %v3680 = vadd.f32 %v3639, %v3679
    %v3681 = vpop.f32.mrb[0].mxu0
    %v3682 = vpop.f32.mrb[0].mxu0
    %3683 = vdwg.mxu0
    %3684 = vmatprep.subr.bf16.mxu0 %v2447
    %3685 = vmatpush1.bf16.msra.mxu0 %v2446
    %3686 = vmatprep.subr.bf16.mxu0 %v2451
    %3687 = vmatpush1.bf16.msra.mxu0 %v2450
    %3688 = vmatprep.subr.bf16.mxu0 %v2455
    %3689 = vmatpush1.bf16.msra.mxu0 %v2454
    %3690 = vmatprep.subr.bf16.mxu0 %v2459
    %3691 = vmatpush1.bf16.msra.mxu0 %v2458
    %3692 = vmatprep.subr.bf16.mxu0 %v2463
    %3693 = vmatpush1.bf16.msra.mxu0 %v2462
    %3694 = vmatprep.subr.bf16.mxu0 %v2467
    %3695 = vmatpush1.bf16.msra.mxu0 %v2466
    %3696 = vmatprep.subr.bf16.mxu0 %v2471
    %3697 = vmatpush1.bf16.msra.mxu0 %v2470
    %3698 = vmatprep.subr.bf16.mxu0 %v2475
    %3699 = vmatpush1.bf16.msra.mxu0 %v2474
    %3700 = vmatprep.subr.bf16.mxu0 %v2479
    %3701 = vmatpush1.bf16.msra.mxu0 %v2478
    %3702 = vmatprep.subr.bf16.mxu0 %v2483
    %3703 = vmatpush1.bf16.msra.mxu0 %v2482
    %3704 = vmatprep.subr.bf16.mxu0 %v2487
    %3705 = vmatpush1.bf16.msra.mxu0 %v2486
    %3706 = vmatprep.subr.bf16.mxu0 %v2491
    %3707 = vmatpush1.bf16.msra.mxu0 %v2490
    %3708 = vmatprep.subr.bf16.mxu0 %v2495
    %3709 = vmatpush1.bf16.msra.mxu0 %v2494
    %3710 = vmatprep.subr.bf16.mxu0 %v2499
    %3711 = vmatpush1.bf16.msra.mxu0 %v2498
    %3712 = vmatprep.subr.bf16.mxu0 %v2503
    %3713 = vmatpush1.bf16.msra.mxu0 %v2502
    %3714 = vmatprep.subr.bf16.mxu0 %v2507
    %3715 = vmatpush1.bf16.msra.mxu0 %v2506
    %3716 = vmatprep.mubr.bf16.mxu0 %v159
    %3717 = vmatmul.mubr.bf16.gmra.mrb[0].mxu0 %v158
    %v3718 = vpop.f32.mrb[0].mxu0
    %v3719 = vadd.f32 %v3678, %v3718
    %v3720 = vpop.f32.mrb[0].mxu0
    %v3721 = vadd.f32 %v3680, %v3720
    %v3722 = vpop.f32.mrb[0].mxu0
    %v3723 = vpop.f32.mrb[0].mxu0
    %3724 = vdwg.mxu0
    %3725 = vmatprep.subr.bf16.mxu0 %v2511
    %3726 = vmatpush1.bf16.msra.mxu0 %v2510
    %3727 = vmatprep.subr.bf16.mxu0 %v2515
    %3728 = vmatpush1.bf16.msra.mxu0 %v2514
    %3729 = vmatprep.subr.bf16.mxu0 %v2519
    %3730 = vmatpush1.bf16.msra.mxu0 %v2518
    %3731 = vmatprep.subr.bf16.mxu0 %v2523
    %3732 = vmatpush1.bf16.msra.mxu0 %v2522
    %3733 = vmatprep.subr.bf16.mxu0 %v2527
    %3734 = vmatpush1.bf16.msra.mxu0 %v2526
    %3735 = vmatprep.subr.bf16.mxu0 %v2531
    %3736 = vmatpush1.bf16.msra.mxu0 %v2530
    %3737 = vmatprep.subr.bf16.mxu0 %v2535
    %3738 = vmatpush1.bf16.msra.mxu0 %v2534
    %3739 = vmatprep.subr.bf16.mxu0 %v2539
    %3740 = vmatpush1.bf16.msra.mxu0 %v2538
    %3741 = vmatprep.subr.bf16.mxu0 %v2543
    %3742 = vmatpush1.bf16.msra.mxu0 %v2542
    %3743 = vmatprep.subr.bf16.mxu0 %v2547
    %3744 = vmatpush1.bf16.msra.mxu0 %v2546
    %3745 = vmatprep.subr.bf16.mxu0 %v2551
    %3746 = vmatpush1.bf16.msra.mxu0 %v2550
    %3747 = vmatprep.subr.bf16.mxu0 %v2555
    %3748 = vmatpush1.bf16.msra.mxu0 %v2554
    %3749 = vmatprep.subr.bf16.mxu0 %v2559
    %3750 = vmatpush1.bf16.msra.mxu0 %v2558
    %3751 = vmatprep.subr.bf16.mxu0 %v2563
    %3752 = vmatpush1.bf16.msra.mxu0 %v2562
    %3753 = vmatprep.subr.bf16.mxu0 %v2567
    %3754 = vmatpush1.bf16.msra.mxu0 %v2566
    %3755 = vmatprep.subr.bf16.mxu0 %v2571
    %3756 = vmatpush1.bf16.msra.mxu0 %v2570
    %3757 = vmatprep.mubr.bf16.mxu0 %v161
    %3758 = vmatmul.mubr.bf16.gmra.mrb[0].mxu0 %v160
    %v3759 = vpop.f32.mrb[0].mxu0
    %v3760 = vadd.f32 %v3719, %v3759
    %v3761 = vpop.f32.mrb[0].mxu0
    %v3762 = vadd.f32 %v3721, %v3761
    %v3763 = vpop.f32.mrb[0].mxu0
    %v3764 = vpop.f32.mrb[0].mxu0
    %3765 = vdwg.mxu0
    %3766 = vmatprep.subr.bf16.mxu0 %v2575
    %3767 = vmatpush1.bf16.msra.mxu0 %v2574
    %3768 = vmatprep.subr.bf16.mxu0 %v2579
    %3769 = vmatpush1.bf16.msra.mxu0 %v2578
    %3770 = vmatprep.subr.bf16.mxu0 %v2583
    %3771 = vmatpush1.bf16.msra.mxu0 %v2582
    %3772 = vmatprep.subr.bf16.mxu0 %v2587
    %3773 = vmatpush1.bf16.msra.mxu0 %v2586
    %3774 = vmatprep.subr.bf16.mxu0 %v2591
    %3775 = vmatpush1.bf16.msra.mxu0 %v2590
    %3776 = vmatprep.subr.bf16.mxu0 %v2595
    %3777 = vmatpush1.bf16.msra.mxu0 %v2594
    %3778 = vmatprep.subr.bf16.mxu0 %v2599
    %3779 = vmatpush1.bf16.msra.mxu0 %v2598
    %3780 = vmatprep.subr.bf16.mxu0 %v2603
    %3781 = vmatpush1.bf16.msra.mxu0 %v2602
    %3782 = vmatprep.subr.bf16.mxu0 %v2607
    %3783 = vmatpush1.bf16.msra.mxu0 %v2606
    %3784 = vmatprep.subr.bf16.mxu0 %v2611
    %3785 = vmatpush1.bf16.msra.mxu0 %v2610
    %3786 = vmatprep.subr.bf16.mxu0 %v2615
    %3787 = vmatpush1.bf16.msra.mxu0 %v2614
    %3788 = vmatprep.subr.bf16.mxu0 %v2619
    %3789 = vmatpush1.bf16.msra.mxu0 %v2618
    %3790 = vmatprep.subr.bf16.mxu0 %v2623
    %3791 = vmatpush1.bf16.msra.mxu0 %v2622
    %3792 = vmatprep.subr.bf16.mxu0 %v2627
    %3793 = vmatpush1.bf16.msra.mxu0 %v2626
    %3794 = vmatprep.subr.bf16.mxu0 %v2631
    %3795 = vmatpush1.bf16.msra.mxu0 %v2630
    %3796 = vmatprep.subr.bf16.mxu0 %v2635
    %3797 = vmatpush1.bf16.msra.mxu0 %v2634
    %3798 = vmatprep.mubr.bf16.mxu0 %v163
    %3799 = vmatmul.mubr.bf16.gmra.mrb[0].mxu0 %v162
    %v3800 = vpop.f32.mrb[0].mxu0
    %v3801 = vadd.f32 %v3760, %v3800
    %v3802 = vpop.f32.mrb[0].mxu0
    %v3803 = vadd.f32 %v3762, %v3802
    %v3804 = vpop.f32.mrb[0].mxu0
    %v3805 = vpop.f32.mrb[0].mxu0
    %3806 = vdwg.mxu0
    %3807 = vmatprep.subr.bf16.mxu0 %v2639
    %3808 = vmatpush1.bf16.msra.mxu0 %v2638
    %3809 = vmatprep.subr.bf16.mxu0 %v2643
    %3810 = vmatpush1.bf16.msra.mxu0 %v2642
    %3811 = vmatprep.subr.bf16.mxu0 %v2647
    %3812 = vmatpush1.bf16.msra.mxu0 %v2646
    %3813 = vmatprep.subr.bf16.mxu0 %v2651
    %3814 = vmatpush1.bf16.msra.mxu0 %v2650
    %3815 = vmatprep.subr.bf16.mxu0 %v2655
    %3816 = vmatpush1.bf16.msra.mxu0 %v2654
    %3817 = vmatprep.subr.bf16.mxu0 %v2659
    %3818 = vmatpush1.bf16.msra.mxu0 %v2658
    %3819 = vmatprep.subr.bf16.mxu0 %v2663
    %3820 = vmatpush1.bf16.msra.mxu0 %v2662
    %3821 = vmatprep.subr.bf16.mxu0 %v2667
    %3822 = vmatpush1.bf16.msra.mxu0 %v2666
    %3823 = vmatprep.subr.bf16.mxu0 %v2671
    %3824 = vmatpush1.bf16.msra.mxu0 %v2670
    %3825 = vmatprep.subr.bf16.mxu0 %v2675
    %3826 = vmatpush1.bf16.msra.mxu0 %v2674
    %3827 = vmatprep.subr.bf16.mxu0 %v2679
    %3828 = vmatpush1.bf16.msra.mxu0 %v2678
    %3829 = vmatprep.subr.bf16.mxu0 %v2683
    %3830 = vmatpush1.bf16.msra.mxu0 %v2682
    %3831 = vmatprep.subr.bf16.mxu0 %v2687
    %3832 = vmatpush1.bf16.msra.mxu0 %v2686
    %3833 = vmatprep.subr.bf16.mxu0 0
    %3834 = vmatpush1.bf16.msra.mxu0 0
    %3835 = vmatprep.subr.bf16.mxu0 0
    %3836 = vmatpush1.bf16.msra.mxu0 0
    %3837 = vmatprep.subr.bf16.mxu0 0
    %3838 = vmatpush1.bf16.msra.mxu0 0
    %3839 = vmatprep.mubr.bf16.mxu0 %v3190
    %3840 = vmatmul.mubr.bf16.gmra.mrb[0].mxu0 %v164
    %v3841 = vpop.f32.mrb[0].mxu0
    %v3842 = vadd.f32 %v3801, %v3841
    %v3843 = vpop.f32.mrb[0].mxu0
    %v3844 = vadd.f32 %v3803, %v3843
    %v3845 = vpop.f32.mrb[0].mxu0
    %v3846 = vpop.f32.mrb[0].mxu0
    %3847 = vdwg.mxu0
    %v3848 = vmax.f32 %v3514, 0.0
    %v3849 = vmax.f32 %v3516, 0.0
    %v3850 = vmax.f32 %v3842, 0.0
    %v3851 = vmax.f32 %v3844, 0.0
    %v3852 = vpack.c.bf16 %v3848, %v3848
    %v3853 = vpack.c.bf16 %v3849, %v3849
    %v3854 = vpack.c.bf16 %v3850, %v3850
    %v3855 = vpack.c.bf16 %v3851, %v3851
    %v3856 = vld [vmem:[#allocation6] sm:$0xff]
    %v3857 = vld [vmem:[#allocation6 + $0x8] sm:$0xff]
    %v3858 = vld [vmem:[#allocation6 + $0x10] sm:$0xff]
    %v3859 = vld [vmem:[#allocation6 + $0x18] sm:$0xff]
    %v3860 = vld [vmem:[#allocation6 + $0x20] sm:$0xff]
    %v3861 = vld [vmem:[#allocation6 + $0x28] sm:$0xff]
    %v3862 = vld [vmem:[#allocation6 + $0x30] sm:$0xff]
    %v3863 = vld [vmem:[#allocation6 + $0x38] sm:$0xff]
    %v3864 = vld [vmem:[#allocation6 + $0x40] sm:$0xff]
    %v3865 = vld [vmem:[#allocation6 + $0x48] sm:$0xff]
    %v3866 = vld [vmem:[#allocation6 + $0x50] sm:$0xff]
    %v3867 = vld [vmem:[#allocation6 + $0x58] sm:$0xff]
    %v3868 = vld [vmem:[#allocation6 + $0x60] sm:$0xff]
    %v3869 = vld [vmem:[#allocation6 + $0x68] sm:$0xff]
    %v3870 = vld [vmem:[#allocation6 + $0x70] sm:$0xff]
    %v3871 = vld [vmem:[#allocation6 + $0x78] sm:$0xff]
    %v3872 = vld [vmem:[#allocation6 + $0x80] sm:$0xff]
    %v3873 = vld [vmem:[#allocation6 + $0x88] sm:$0xff]
    %v3874 = vld [vmem:[#allocation6 + $0x90] sm:$0xff]
    %v3875 = vld [vmem:[#allocation6 + $0x98] sm:$0xff]
    %v3876 = vld [vmem:[#allocation6 + $0xa0] sm:$0xff]
    %v3877 = vld [vmem:[#allocation6 + $0xa8] sm:$0xff]
    %v3878 = vld [vmem:[#allocation6 + $0xb0] sm:$0xff]
    %v3879 = vld [vmem:[#allocation6 + $0xb8] sm:$0xff]
    %v3880 = vld [vmem:[#allocation6 + $0xc0] sm:$0xff]
    %v3881 = vld [vmem:[#allocation6 + $0xc8] sm:$0xff]
    %v3882 = vld [vmem:[#allocation6 + $0xd0] sm:$0xff]
    %v3883 = vld [vmem:[#allocation6 + $0xd8] sm:$0xff]
    %v3884 = vld [vmem:[#allocation6 + $0xe0] sm:$0xff]
    %v3885 = vld [vmem:[#allocation6 + $0xe8] sm:$0xff]
    %v3886 = vld [vmem:[#allocation6 + $0xf0] sm:$0xff]
    %v3887 = vld [vmem:[#allocation6 + $0xf8] sm:$0xff]
    %v3888 = vld [vmem:[#allocation6 + $0x100] sm:$0xff]
    %v3889 = vld [vmem:[#allocation6 + $0x108] sm:$0xff]
    %v3890 = vld [vmem:[#allocation6 + $0x110] sm:$0xff]
    %v3891 = vld [vmem:[#allocation6 + $0x118] sm:$0xff]
    %v3892 = vld [vmem:[#allocation6 + $0x120] sm:$0xff]
    %v3893 = vld [vmem:[#allocation6 + $0x128] sm:$0xff]
    %v3894 = vld [vmem:[#allocation6 + $0x130] sm:$0xff]
    %v3895 = vld [vmem:[#allocation6 + $0x138] sm:$0xff]
    %v3896 = vld [vmem:[#allocation6 + $0x140] sm:$0xff]
    %v3897 = vld [vmem:[#allocation6 + $0x148] sm:$0xff]
    %v3898 = vld [vmem:[#allocation6 + $0x150] sm:$0xff]
    %v3899 = vld [vmem:[#allocation6 + $0x158] sm:$0xff]
    %v3900 = vld [vmem:[#allocation6 + $0x160] sm:$0xff]
    %v3901 = vld [vmem:[#allocation6 + $0x168] sm:$0xff]
    %v3902 = vld [vmem:[#allocation6 + $0x170] sm:$0xff]
    %v3903 = vld [vmem:[#allocation6 + $0x178] sm:$0xff]
    %v3904 = vld [vmem:[#allocation6 + $0x180] sm:$0xff]
    %v3905 = vld [vmem:[#allocation6 + $0x188] sm:$0xff]
    %v3906 = vld [vmem:[#allocation6 + $0x190] sm:$0xff]
    %v3907 = vld [vmem:[#allocation6 + $0x198] sm:$0xff]
    %v3908 = vld [vmem:[#allocation6 + $0x1a0] sm:$0xff]
    %v3909 = vld [vmem:[#allocation6 + $0x1a8] sm:$0xff]
    %v3910 = vld [vmem:[#allocation6 + $0x1b0] sm:$0xff]
    %v3911 = vld [vmem:[#allocation6 + $0x1b8] sm:$0xff]
    %v3912 = vld [vmem:[#allocation6 + $0x1c0] sm:$0xff]
    %v3913 = vld [vmem:[#allocation6 + $0x1c8] sm:$0xff]
    %v3914 = vld [vmem:[#allocation6 + $0x1d0] sm:$0xff]
    %v3915 = vld [vmem:[#allocation6 + $0x1d8] sm:$0xff]
    %v3916 = vld [vmem:[#allocation6 + $0x1e0] sm:$0xff]
    %v3917 = vld [vmem:[#allocation6 + $0x1e8] sm:$0xff]
    %v3918 = vld [vmem:[#allocation6 + $0x1f0] sm:$0xff]
    %v3919 = vld [vmem:[#allocation6 + $0x1f8] sm:$0xff]
    %v3920 = vld [vmem:[#allocation6 + $0x200] sm:$0xff]
    %v3921 = vld [vmem:[#allocation6 + $0x208] sm:$0xff]
    %v3922 = vld [vmem:[#allocation6 + $0x210] sm:$0xff]
    %v3923 = vld [vmem:[#allocation6 + $0x218] sm:$0xff]
    %v3924 = vld [vmem:[#allocation6 + $0x220] sm:$0xff]
    %v3925 = vld [vmem:[#allocation6 + $0x228] sm:$0xff]
    %v3926 = vld [vmem:[#allocation6 + $0x230] sm:$0xff]
    %v3927 = vld [vmem:[#allocation6 + $0x238] sm:$0xff]
    %v3928 = vld [vmem:[#allocation6 + $0x240] sm:$0xff]
    %v3929 = vld [vmem:[#allocation6 + $0x248] sm:$0xff]
    %v3930 = vld [vmem:[#allocation6 + $0x250] sm:$0xff]
    %v3931 = vld [vmem:[#allocation6 + $0x258] sm:$0xff]
    %v3932 = vld [vmem:[#allocation6 + $0x260] sm:$0xff]
    %v3933 = vld [vmem:[#allocation6 + $0x268] sm:$0xff]
    %v3934 = vld [vmem:[#allocation6 + $0x270] sm:$0xff]
    %v3935 = vld [vmem:[#allocation6 + $0x278] sm:$0xff]
    %v3936 = vld [vmem:[#allocation6 + $0x280] sm:$0xff]
    %v3937 = vld [vmem:[#allocation6 + $0x288] sm:$0xff]
    %v3938 = vld [vmem:[#allocation6 + $0x290] sm:$0xff]
    %v3939 = vld [vmem:[#allocation6 + $0x298] sm:$0xff]
    %v3940 = vld [vmem:[#allocation6 + $0x2a0] sm:$0xff]
    %v3941 = vld [vmem:[#allocation6 + $0x2a8] sm:$0xff]
    %v3942 = vld [vmem:[#allocation6 + $0x2b0] sm:$0xff]
    %v3943 = vld [vmem:[#allocation6 + $0x2b8] sm:$0xff]
    %v3944 = vld [vmem:[#allocation6 + $0x2c0] sm:$0xff]
    %v3945 = vld [vmem:[#allocation6 + $0x2c8] sm:$0xff]
    %v3946 = vld [vmem:[#allocation6 + $0x2d0] sm:$0xff]
    %v3947 = vld [vmem:[#allocation6 + $0x2d8] sm:$0xff]
    %v3948 = vld [vmem:[#allocation6 + $0x2e0] sm:$0xff]
    %v3949 = vld [vmem:[#allocation6 + $0x2e8] sm:$0xff]
    %v3950 = vld [vmem:[#allocation6 + $0x2f0] sm:$0xff]
    %v3951 = vld [vmem:[#allocation6 + $0x2f8] sm:$0xff]
    %v3952 = vld [vmem:[#allocation6 + $0x300] sm:$0xff]
    %v3953 = vld [vmem:[#allocation6 + $0x308] sm:$0xff]
    %v3954 = vld [vmem:[#allocation6 + $0x310] sm:$0xff]
    %v3955 = vld [vmem:[#allocation6 + $0x318] sm:$0xff]
    %v3956 = vld [vmem:[#allocation6 + $0x320] sm:$0xff]
    %v3957 = vld [vmem:[#allocation6 + $0x328] sm:$0xff]
    %v3958 = vld [vmem:[#allocation6 + $0x330] sm:$0xff]
    %v3959 = vld [vmem:[#allocation6 + $0x338] sm:$0xff]
    %v3960 = vld [vmem:[#allocation6 + $0x340] sm:$0xff]
    %v3961 = vld [vmem:[#allocation6 + $0x348] sm:$0xff]
    %v3962 = vld [vmem:[#allocation6 + $0x350] sm:$0xff]
    %v3963 = vld [vmem:[#allocation6 + $0x358] sm:$0xff]
    %v3964 = vld [vmem:[#allocation6 + $0x360] sm:$0xff]
    %v3965 = vld [vmem:[#allocation6 + $0x368] sm:$0xff]
    %v3966 = vld [vmem:[#allocation6 + $0x370] sm:$0xff]
    %v3967 = vld [vmem:[#allocation6 + $0x378] sm:$0xff]
    %v3968 = vld [vmem:[#allocation6 + $0x380] sm:$0xff]
    %v3969 = vld [vmem:[#allocation6 + $0x388] sm:$0xff]
    %v3970 = vld [vmem:[#allocation6 + $0x390] sm:$0xff]
    %v3971 = vld [vmem:[#allocation6 + $0x398] sm:$0xff]
    %v3972 = vld [vmem:[#allocation6 + $0x3a0] sm:$0xff]
    %v3973 = vld [vmem:[#allocation6 + $0x3a8] sm:$0xff]
    %v3974 = vld [vmem:[#allocation6 + $0x3b0] sm:$0xff]
    %v3975 = vld [vmem:[#allocation6 + $0x3b8] sm:$0xff]
    %v3976 = vld [vmem:[#allocation6 + $0x3c0] sm:$0xff]
    %v3977 = vld [vmem:[#allocation6 + $0x3c8] sm:$0xff]
    %v3978 = vld [vmem:[#allocation6 + $0x3d0] sm:$0xff]
    %v3979 = vld [vmem:[#allocation6 + $0x3d8] sm:$0xff]
    %v3980 = vld [vmem:[#allocation6 + $0x3e0] sm:$0xff]
    %v3981 = vld [vmem:[#allocation6 + $0x3e8] sm:$0xff]
    %v3982 = vld [vmem:[#allocation6 + $0x3f0] sm:$0xff]
    %v3983 = vld [vmem:[#allocation6 + $0x3f8] sm:$0xff]
    %v3984 = vld [vmem:[#allocation7] sm:$0xf]
    %v3986 = vlaneseq
    %v3987 = vshrl.u32 %v3986, 7
    %v3988 = vsub.s32 0, %v3987
    %v3989 = vrot.slane %v3984, %v3988
    %v3990 = vlaneseq
    %v3991 = vshrl.u32 %v3990, 7
    %v3992 = vsub.s32 1, %v3991
    %v3993 = vrot.slane %v3984, %v3992
    %v3994 = vlaneseq
    %v3995 = vshrl.u32 %v3994, 7
    %v3996 = vsub.s32 2, %v3995
    %v3997 = vrot.slane %v3984, %v3996
    %v3998 = vlaneseq
    %v3999 = vshrl.u32 %v3998, 7
    %v4000 = vsub.s32 3, %v3999
    %v4001 = vrot.slane %v3984, %v4000
    %v4134 = vunpack.c.l.b16 %v3856
    %v4135 = vunpack.c.h.b16 %v3856
    %v4136 = vunpack.c.l.b16 %v3857
    %v4137 = vunpack.c.h.b16 %v3857
    %v4138 = vunpack.c.l.b16 %v3858
    %v4139 = vunpack.c.h.b16 %v3858
    %v4140 = vunpack.c.l.b16 %v3859
    %v4141 = vunpack.c.h.b16 %v3859
    %v4142 = vunpack.c.l.b16 %v3860
    %v4143 = vunpack.c.h.b16 %v3860
    %v4144 = vunpack.c.l.b16 %v3861
    %v4145 = vunpack.c.h.b16 %v3861
    %v4146 = vunpack.c.l.b16 %v3862
    %v4147 = vunpack.c.h.b16 %v3862
    %v4148 = vunpack.c.l.b16 %v3863
    %v4149 = vunpack.c.h.b16 %v3863
    %v4150 = vunpack.c.l.b16 %v3864
    %v4151 = vunpack.c.h.b16 %v3864
    %v4152 = vunpack.c.l.b16 %v3865
    %v4153 = vunpack.c.h.b16 %v3865
    %v4154 = vunpack.c.l.b16 %v3866
    %v4155 = vunpack.c.h.b16 %v3866
    %v4156 = vunpack.c.l.b16 %v3867
    %v4157 = vunpack.c.h.b16 %v3867
    %v4158 = vunpack.c.l.b16 %v3868
    %v4159 = vunpack.c.h.b16 %v3868
    %v4160 = vunpack.c.l.b16 %v3869
    %v4161 = vunpack.c.h.b16 %v3869
    %v4162 = vunpack.c.l.b16 %v3870
    %v4163 = vunpack.c.h.b16 %v3870
    %v4164 = vunpack.c.l.b16 %v3871
    %v4165 = vunpack.c.h.b16 %v3871
    %v4166 = vunpack.c.l.b16 %v3872
    %v4167 = vunpack.c.h.b16 %v3872
    %v4168 = vunpack.c.l.b16 %v3873
    %v4169 = vunpack.c.h.b16 %v3873
    %v4170 = vunpack.c.l.b16 %v3874
    %v4171 = vunpack.c.h.b16 %v3874
    %v4172 = vunpack.c.l.b16 %v3875
    %v4173 = vunpack.c.h.b16 %v3875
    %v4174 = vunpack.c.l.b16 %v3876
    %v4175 = vunpack.c.h.b16 %v3876
    %v4176 = vunpack.c.l.b16 %v3877
    %v4177 = vunpack.c.h.b16 %v3877
    %v4178 = vunpack.c.l.b16 %v3878
    %v4179 = vunpack.c.h.b16 %v3878
    %v4180 = vunpack.c.l.b16 %v3879
    %v4181 = vunpack.c.h.b16 %v3879
    %v4182 = vunpack.c.l.b16 %v3880
    %v4183 = vunpack.c.h.b16 %v3880
    %v4184 = vunpack.c.l.b16 %v3881
    %v4185 = vunpack.c.h.b16 %v3881
    %v4186 = vunpack.c.l.b16 %v3882
    %v4187 = vunpack.c.h.b16 %v3882
    %v4188 = vunpack.c.l.b16 %v3883
    %v4189 = vunpack.c.h.b16 %v3883
    %v4190 = vunpack.c.l.b16 %v3884
    %v4191 = vunpack.c.h.b16 %v3884
    %v4192 = vunpack.c.l.b16 %v3885
    %v4193 = vunpack.c.h.b16 %v3885
    %v4194 = vunpack.c.l.b16 %v3886
    %v4195 = vunpack.c.h.b16 %v3886
    %v4196 = vunpack.c.l.b16 %v3887
    %v4197 = vunpack.c.h.b16 %v3887
    %v4198 = vunpack.c.l.b16 %v3888
    %v4199 = vunpack.c.h.b16 %v3888
    %v4200 = vunpack.c.l.b16 %v3889
    %v4201 = vunpack.c.h.b16 %v3889
    %v4202 = vunpack.c.l.b16 %v3890
    %v4203 = vunpack.c.h.b16 %v3890
    %v4204 = vunpack.c.l.b16 %v3891
    %v4205 = vunpack.c.h.b16 %v3891
    %v4206 = vunpack.c.l.b16 %v3892
    %v4207 = vunpack.c.h.b16 %v3892
    %v4208 = vunpack.c.l.b16 %v3893
    %v4209 = vunpack.c.h.b16 %v3893
    %v4210 = vunpack.c.l.b16 %v3894
    %v4211 = vunpack.c.h.b16 %v3894
    %v4212 = vunpack.c.l.b16 %v3895
    %v4213 = vunpack.c.h.b16 %v3895
    %v4214 = vunpack.c.l.b16 %v3896
    %v4215 = vunpack.c.h.b16 %v3896
    %v4216 = vunpack.c.l.b16 %v3897
    %v4217 = vunpack.c.h.b16 %v3897
    %v4218 = vunpack.c.l.b16 %v3898
    %v4219 = vunpack.c.h.b16 %v3898
    %v4220 = vunpack.c.l.b16 %v3899
    %v4221 = vunpack.c.h.b16 %v3899
    %v4222 = vunpack.c.l.b16 %v3900
    %v4223 = vunpack.c.h.b16 %v3900
    %v4224 = vunpack.c.l.b16 %v3901
    %v4225 = vunpack.c.h.b16 %v3901
    %v4226 = vunpack.c.l.b16 %v3902
    %v4227 = vunpack.c.h.b16 %v3902
    %v4228 = vunpack.c.l.b16 %v3903
    %v4229 = vunpack.c.h.b16 %v3903
    %v4230 = vunpack.c.l.b16 %v3904
    %v4231 = vunpack.c.h.b16 %v3904
    %v4232 = vunpack.c.l.b16 %v3905
    %v4233 = vunpack.c.h.b16 %v3905
    %v4234 = vunpack.c.l.b16 %v3906
    %v4235 = vunpack.c.h.b16 %v3906
    %v4236 = vunpack.c.l.b16 %v3907
    %v4237 = vunpack.c.h.b16 %v3907
    %v4238 = vunpack.c.l.b16 %v3908
    %v4239 = vunpack.c.h.b16 %v3908
    %v4240 = vunpack.c.l.b16 %v3909
    %v4241 = vunpack.c.h.b16 %v3909
    %v4242 = vunpack.c.l.b16 %v3910
    %v4243 = vunpack.c.h.b16 %v3910
    %v4244 = vunpack.c.l.b16 %v3911
    %v4245 = vunpack.c.h.b16 %v3911
    %v4246 = vunpack.c.l.b16 %v3912
    %v4247 = vunpack.c.h.b16 %v3912
    %v4248 = vunpack.c.l.b16 %v3913
    %v4249 = vunpack.c.h.b16 %v3913
    %v4250 = vunpack.c.l.b16 %v3914
    %v4251 = vunpack.c.h.b16 %v3914
    %v4252 = vunpack.c.l.b16 %v3915
    %v4253 = vunpack.c.h.b16 %v3915
    %v4254 = vunpack.c.l.b16 %v3916
    %v4255 = vunpack.c.h.b16 %v3916
    %v4256 = vunpack.c.l.b16 %v3917
    %v4257 = vunpack.c.h.b16 %v3917
    %v4258 = vunpack.c.l.b16 %v3918
    %v4259 = vunpack.c.h.b16 %v3918
    %v4260 = vunpack.c.l.b16 %v3919
    %v4261 = vunpack.c.h.b16 %v3919
    %v4262 = vunpack.c.l.b16 %v3920
    %v4263 = vunpack.c.h.b16 %v3920
    %v4264 = vunpack.c.l.b16 %v3921
    %v4265 = vunpack.c.h.b16 %v3921
    %v4266 = vunpack.c.l.b16 %v3922
    %v4267 = vunpack.c.h.b16 %v3922
    %v4268 = vunpack.c.l.b16 %v3923
    %v4269 = vunpack.c.h.b16 %v3923
    %v4270 = vunpack.c.l.b16 %v3924
    %v4271 = vunpack.c.h.b16 %v3924
    %v4272 = vunpack.c.l.b16 %v3925
    %v4273 = vunpack.c.h.b16 %v3925
    %v4274 = vunpack.c.l.b16 %v3926
    %v4275 = vunpack.c.h.b16 %v3926
    %v4276 = vunpack.c.l.b16 %v3927
    %v4277 = vunpack.c.h.b16 %v3927
    %v4278 = vunpack.c.l.b16 %v3928
    %v4279 = vunpack.c.h.b16 %v3928
    %v4280 = vunpack.c.l.b16 %v3929
    %v4281 = vunpack.c.h.b16 %v3929
    %v4282 = vunpack.c.l.b16 %v3930
    %v4283 = vunpack.c.h.b16 %v3930
    %v4284 = vunpack.c.l.b16 %v3931
    %v4285 = vunpack.c.h.b16 %v3931
    %v4286 = vunpack.c.l.b16 %v3932
    %v4287 = vunpack.c.h.b16 %v3932
    %v4288 = vunpack.c.l.b16 %v3933
    %v4289 = vunpack.c.h.b16 %v3933
    %v4290 = vunpack.c.l.b16 %v3934
    %v4291 = vunpack.c.h.b16 %v3934
    %v4292 = vunpack.c.l.b16 %v3935
    %v4293 = vunpack.c.h.b16 %v3935
    %v4294 = vunpack.c.l.b16 %v3936
    %v4295 = vunpack.c.h.b16 %v3936
    %v4296 = vunpack.c.l.b16 %v3937
    %v4297 = vunpack.c.h.b16 %v3937
    %v4298 = vunpack.c.l.b16 %v3938
    %v4299 = vunpack.c.h.b16 %v3938
    %v4300 = vunpack.c.l.b16 %v3939
    %v4301 = vunpack.c.h.b16 %v3939
    %v4302 = vunpack.c.l.b16 %v3940
    %v4303 = vunpack.c.h.b16 %v3940
    %v4304 = vunpack.c.l.b16 %v3941
    %v4305 = vunpack.c.h.b16 %v3941
    %v4306 = vunpack.c.l.b16 %v3942
    %v4307 = vunpack.c.h.b16 %v3942
    %v4308 = vunpack.c.l.b16 %v3943
    %v4309 = vunpack.c.h.b16 %v3943
    %v4310 = vunpack.c.l.b16 %v3944
    %v4311 = vunpack.c.h.b16 %v3944
    %v4312 = vunpack.c.l.b16 %v3945
    %v4313 = vunpack.c.h.b16 %v3945
    %v4314 = vunpack.c.l.b16 %v3946
    %v4315 = vunpack.c.h.b16 %v3946
    %v4316 = vunpack.c.l.b16 %v3947
    %v4317 = vunpack.c.h.b16 %v3947
    %v4318 = vunpack.c.l.b16 %v3948
    %v4319 = vunpack.c.h.b16 %v3948
    %v4320 = vunpack.c.l.b16 %v3949
    %v4321 = vunpack.c.h.b16 %v3949
    %v4322 = vunpack.c.l.b16 %v3950
    %v4323 = vunpack.c.h.b16 %v3950
    %v4324 = vunpack.c.l.b16 %v3951
    %v4325 = vunpack.c.h.b16 %v3951
    %v4326 = vunpack.c.l.b16 %v3952
    %v4327 = vunpack.c.h.b16 %v3952
    %v4328 = vunpack.c.l.b16 %v3953
    %v4329 = vunpack.c.h.b16 %v3953
    %v4330 = vunpack.c.l.b16 %v3954
    %v4331 = vunpack.c.h.b16 %v3954
    %v4332 = vunpack.c.l.b16 %v3955
    %v4333 = vunpack.c.h.b16 %v3955
    %v4334 = vunpack.c.l.b16 %v3956
    %v4335 = vunpack.c.h.b16 %v3956
    %v4336 = vunpack.c.l.b16 %v3957
    %v4337 = vunpack.c.h.b16 %v3957
    %v4338 = vunpack.c.l.b16 %v3958
    %v4339 = vunpack.c.h.b16 %v3958
    %v4340 = vunpack.c.l.b16 %v3959
    %v4341 = vunpack.c.h.b16 %v3959
    %v4342 = vunpack.c.l.b16 %v3960
    %v4343 = vunpack.c.h.b16 %v3960
    %v4344 = vunpack.c.l.b16 %v3961
    %v4345 = vunpack.c.h.b16 %v3961
    %v4346 = vunpack.c.l.b16 %v3962
    %v4347 = vunpack.c.h.b16 %v3962
    %v4348 = vunpack.c.l.b16 %v3963
    %v4349 = vunpack.c.h.b16 %v3963
    %v4350 = vunpack.c.l.b16 %v3964
    %v4351 = vunpack.c.h.b16 %v3964
    %v4352 = vunpack.c.l.b16 %v3965
    %v4353 = vunpack.c.h.b16 %v3965
    %v4354 = vunpack.c.l.b16 %v3966
    %v4355 = vunpack.c.h.b16 %v3966
    %v4356 = vunpack.c.l.b16 %v3967
    %v4357 = vunpack.c.h.b16 %v3967
    %v4358 = vunpack.c.l.b16 %v3968
    %v4359 = vunpack.c.h.b16 %v3968
    %v4360 = vunpack.c.l.b16 %v3969
    %v4361 = vunpack.c.h.b16 %v3969
    %v4362 = vunpack.c.l.b16 %v3970
    %v4363 = vunpack.c.h.b16 %v3970
    %v4364 = vunpack.c.l.b16 %v3971
    %v4365 = vunpack.c.h.b16 %v3971
    %v4366 = vunpack.c.l.b16 %v3972
    %v4367 = vunpack.c.h.b16 %v3972
    %v4368 = vunpack.c.l.b16 %v3973
    %v4369 = vunpack.c.h.b16 %v3973
    %v4370 = vunpack.c.l.b16 %v3974
    %v4371 = vunpack.c.h.b16 %v3974
    %v4372 = vunpack.c.l.b16 %v3975
    %v4373 = vunpack.c.h.b16 %v3975
    %v4374 = vunpack.c.l.b16 %v3976
    %v4375 = vunpack.c.h.b16 %v3976
    %v4376 = vunpack.c.l.b16 %v3977
    %v4377 = vunpack.c.h.b16 %v3977
    %v4378 = vunpack.c.l.b16 %v3978
    %v4379 = vunpack.c.h.b16 %v3978
    %v4380 = vunpack.c.l.b16 %v3979
    %v4381 = vunpack.c.h.b16 %v3979
    %v4382 = vunpack.c.l.b16 %v3980
    %v4383 = vunpack.c.h.b16 %v3980
    %v4384 = vunpack.c.l.b16 %v3981
    %v4385 = vunpack.c.h.b16 %v3981
    %v4386 = vunpack.c.l.b16 %v3982
    %v4387 = vunpack.c.h.b16 %v3982
    %v4388 = vunpack.c.l.b16 %v3983
    %v4389 = vunpack.c.h.b16 %v3983
    %v4390 = vpack.c.b16 %v4138, %v4134
    %v4391 = vpack.c.b16 %v4139, %v4135
    %v4392 = vpack.c.b16 %v4140, %v4136
    %v4393 = vpack.c.b16 %v4141, %v4137
    %v4394 = vpack.c.b16 %v4146, %v4142
    %v4395 = vpack.c.b16 %v4147, %v4143
    %v4396 = vpack.c.b16 %v4148, %v4144
    %v4397 = vpack.c.b16 %v4149, %v4145
    %v4398 = vpack.c.b16 %v4154, %v4150
    %v4399 = vpack.c.b16 %v4155, %v4151
    %v4400 = vpack.c.b16 %v4156, %v4152
    %v4401 = vpack.c.b16 %v4157, %v4153
    %v4402 = vpack.c.b16 %v4162, %v4158
    %v4403 = vpack.c.b16 %v4163, %v4159
    %v4404 = vpack.c.b16 %v4164, %v4160
    %v4405 = vpack.c.b16 %v4165, %v4161
    %v4406 = vpack.c.b16 %v4170, %v4166
    %v4407 = vpack.c.b16 %v4171, %v4167
    %v4408 = vpack.c.b16 %v4172, %v4168
    %v4409 = vpack.c.b16 %v4173, %v4169
    %v4410 = vpack.c.b16 %v4178, %v4174
    %v4411 = vpack.c.b16 %v4179, %v4175
    %v4412 = vpack.c.b16 %v4180, %v4176
    %v4413 = vpack.c.b16 %v4181, %v4177
    %v4414 = vpack.c.b16 %v4186, %v4182
    %v4415 = vpack.c.b16 %v4187, %v4183
    %v4416 = vpack.c.b16 %v4188, %v4184
    %v4417 = vpack.c.b16 %v4189, %v4185
    %v4418 = vpack.c.b16 %v4194, %v4190
    %v4419 = vpack.c.b16 %v4195, %v4191
    %v4420 = vpack.c.b16 %v4196, %v4192
    %v4421 = vpack.c.b16 %v4197, %v4193
    %v4422 = vpack.c.b16 %v4202, %v4198
    %v4423 = vpack.c.b16 %v4203, %v4199
    %v4424 = vpack.c.b16 %v4204, %v4200
    %v4425 = vpack.c.b16 %v4205, %v4201
    %v4426 = vpack.c.b16 %v4210, %v4206
    %v4427 = vpack.c.b16 %v4211, %v4207
    %v4428 = vpack.c.b16 %v4212, %v4208
    %v4429 = vpack.c.b16 %v4213, %v4209
    %v4430 = vpack.c.b16 %v4218, %v4214
    %v4431 = vpack.c.b16 %v4219, %v4215
    %v4432 = vpack.c.b16 %v4220, %v4216
    %v4433 = vpack.c.b16 %v4221, %v4217
    %v4434 = vpack.c.b16 %v4226, %v4222
    %v4435 = vpack.c.b16 %v4227, %v4223
    %v4436 = vpack.c.b16 %v4228, %v4224
    %v4437 = vpack.c.b16 %v4229, %v4225
    %v4438 = vpack.c.b16 %v4234, %v4230
    %v4439 = vpack.c.b16 %v4235, %v4231
    %v4440 = vpack.c.b16 %v4236, %v4232
    %v4441 = vpack.c.b16 %v4237, %v4233
    %v4442 = vpack.c.b16 %v4242, %v4238
    %v4443 = vpack.c.b16 %v4243, %v4239
    %v4444 = vpack.c.b16 %v4244, %v4240
    %v4445 = vpack.c.b16 %v4245, %v4241
    %v4446 = vpack.c.b16 %v4250, %v4246
    %v4447 = vpack.c.b16 %v4251, %v4247
    %v4448 = vpack.c.b16 %v4252, %v4248
    %v4449 = vpack.c.b16 %v4253, %v4249
    %v4450 = vpack.c.b16 %v4258, %v4254
    %v4451 = vpack.c.b16 %v4259, %v4255
    %v4452 = vpack.c.b16 %v4260, %v4256
    %v4453 = vpack.c.b16 %v4261, %v4257
    %v4454 = vpack.c.b16 %v4266, %v4262
    %v4455 = vpack.c.b16 %v4267, %v4263
    %v4456 = vpack.c.b16 %v4268, %v4264
    %v4457 = vpack.c.b16 %v4269, %v4265
    %v4458 = vpack.c.b16 %v4274, %v4270
    %v4459 = vpack.c.b16 %v4275, %v4271
    %v4460 = vpack.c.b16 %v4276, %v4272
    %v4461 = vpack.c.b16 %v4277, %v4273
    %v4462 = vpack.c.b16 %v4282, %v4278
    %v4463 = vpack.c.b16 %v4283, %v4279
    %v4464 = vpack.c.b16 %v4284, %v4280
    %v4465 = vpack.c.b16 %v4285, %v4281
    %v4466 = vpack.c.b16 %v4290, %v4286
    %v4467 = vpack.c.b16 %v4291, %v4287
    %v4468 = vpack.c.b16 %v4292, %v4288
    %v4469 = vpack.c.b16 %v4293, %v4289
    %v4470 = vpack.c.b16 %v4298, %v4294
    %v4471 = vpack.c.b16 %v4299, %v4295
    %v4472 = vpack.c.b16 %v4300, %v4296
    %v4473 = vpack.c.b16 %v4301, %v4297
    %v4474 = vpack.c.b16 %v4306, %v4302
    %v4475 = vpack.c.b16 %v4307, %v4303
    %v4476 = vpack.c.b16 %v4308, %v4304
    %v4477 = vpack.c.b16 %v4309, %v4305
    %v4478 = vpack.c.b16 %v4314, %v4310
    %v4479 = vpack.c.b16 %v4315, %v4311
    %v4480 = vpack.c.b16 %v4316, %v4312
    %v4481 = vpack.c.b16 %v4317, %v4313
    %v4482 = vpack.c.b16 %v4322, %v4318
    %v4483 = vpack.c.b16 %v4323, %v4319
    %v4484 = vpack.c.b16 %v4324, %v4320
    %v4485 = vpack.c.b16 %v4325, %v4321
    %v4486 = vpack.c.b16 %v4330, %v4326
    %v4487 = vpack.c.b16 %v4331, %v4327
    %v4488 = vpack.c.b16 %v4332, %v4328
    %v4489 = vpack.c.b16 %v4333, %v4329
    %v4490 = vpack.c.b16 %v4338, %v4334
    %v4491 = vpack.c.b16 %v4339, %v4335
    %v4492 = vpack.c.b16 %v4340, %v4336
    %v4493 = vpack.c.b16 %v4341, %v4337
    %v4494 = vpack.c.b16 %v4346, %v4342
    %v4495 = vpack.c.b16 %v4347, %v4343
    %v4496 = vpack.c.b16 %v4348, %v4344
    %v4497 = vpack.c.b16 %v4349, %v4345
    %v4498 = vpack.c.b16 %v4354, %v4350
    %v4499 = vpack.c.b16 %v4355, %v4351
    %v4500 = vpack.c.b16 %v4356, %v4352
    %v4501 = vpack.c.b16 %v4357, %v4353
    %v4502 = vpack.c.b16 %v4362, %v4358
    %v4503 = vpack.c.b16 %v4363, %v4359
    %v4504 = vpack.c.b16 %v4364, %v4360
    %v4505 = vpack.c.b16 %v4365, %v4361
    %v4506 = vpack.c.b16 %v4370, %v4366
    %v4507 = vpack.c.b16 %v4371, %v4367
    %v4508 = vpack.c.b16 %v4372, %v4368
    %v4509 = vpack.c.b16 %v4373, %v4369
    %v4510 = vpack.c.b16 %v4378, %v4374
    %v4511 = vpack.c.b16 %v4379, %v4375
    %v4512 = vpack.c.b16 %v4380, %v4376
    %v4513 = vpack.c.b16 %v4381, %v4377
    %v4514 = vpack.c.b16 %v4386, %v4382
    %v4515 = vpack.c.b16 %v4387, %v4383
    %v4516 = vpack.c.b16 %v4388, %v4384
    %v4517 = vpack.c.b16 %v4389, %v4385
    %4646 = vmatprep.subr.bf16.mxu0 %v4391
    %4647 = vmatpush1.bf16.msra.mxu0 %v4390
    %4648 = vmatprep.subr.bf16.mxu0 %v4395
    %4649 = vmatpush1.bf16.msra.mxu0 %v4394
    %4650 = vmatprep.subr.bf16.mxu0 %v4399
    %4651 = vmatpush1.bf16.msra.mxu0 %v4398
    %4652 = vmatprep.subr.bf16.mxu0 %v4403
    %4653 = vmatpush1.bf16.msra.mxu0 %v4402
    %4654 = vmatprep.subr.bf16.mxu0 %v4407
    %4655 = vmatpush1.bf16.msra.mxu0 %v4406
    %4656 = vmatprep.subr.bf16.mxu0 %v4411
    %4657 = vmatpush1.bf16.msra.mxu0 %v4410
    %4658 = vmatprep.subr.bf16.mxu0 %v4415
    %4659 = vmatpush1.bf16.msra.mxu0 %v4414
    %4660 = vmatprep.subr.bf16.mxu0 %v4419
    %4661 = vmatpush1.bf16.msra.mxu0 %v4418
    %4662 = vmatprep.subr.bf16.mxu0 %v4423
    %4663 = vmatpush1.bf16.msra.mxu0 %v4422
    %4664 = vmatprep.subr.bf16.mxu0 %v4427
    %4665 = vmatpush1.bf16.msra.mxu0 %v4426
    %4666 = vmatprep.subr.bf16.mxu0 %v4431
    %4667 = vmatpush1.bf16.msra.mxu0 %v4430
    %4668 = vmatprep.subr.bf16.mxu0 %v4435
    %4669 = vmatpush1.bf16.msra.mxu0 %v4434
    %4670 = vmatprep.subr.bf16.mxu0 %v4439
    %4671 = vmatpush1.bf16.msra.mxu0 %v4438
    %4672 = vmatprep.subr.bf16.mxu0 %v4443
    %4673 = vmatpush1.bf16.msra.mxu0 %v4442
    %4674 = vmatprep.subr.bf16.mxu0 %v4447
    %4675 = vmatpush1.bf16.msra.mxu0 %v4446
    %4676 = vmatprep.subr.bf16.mxu0 %v4451
    %4677 = vmatpush1.bf16.msra.mxu0 %v4450
    %4678 = vmatprep.mubr.bf16.mxu0 %v3853
    %4679 = vmatmul.mubr.bf16.gmra.mrb[0].mxu0 %v3852
    %v4680 = vpop.f32.mrb[0].mxu0
    %v4681 = vadd.f32 %v3989, %v4680
    %v4682 = vpop.f32.mrb[0].mxu0
    %v4683 = vadd.f32 %v3993, %v4682
    %v4684 = vpop.f32.mrb[0].mxu0
    %v4685 = vpop.f32.mrb[0].mxu0
    %4686 = vdwg.mxu0
    %4687 = vmatprep.subr.bf16.mxu0 %v4455
    %4688 = vmatpush1.bf16.msra.mxu0 %v4454
    %4689 = vmatprep.subr.bf16.mxu0 %v4459
    %4690 = vmatpush1.bf16.msra.mxu0 %v4458
    %4691 = vmatprep.subr.bf16.mxu0 %v4463
    %4692 = vmatpush1.bf16.msra.mxu0 %v4462
    %4693 = vmatprep.subr.bf16.mxu0 %v4467
    %4694 = vmatpush1.bf16.msra.mxu0 %v4466
    %4695 = vmatprep.subr.bf16.mxu0 %v4471
    %4696 = vmatpush1.bf16.msra.mxu0 %v4470
    %4697 = vmatprep.subr.bf16.mxu0 %v4475
    %4698 = vmatpush1.bf16.msra.mxu0 %v4474
    %4699 = vmatprep.subr.bf16.mxu0 %v4479
    %4700 = vmatpush1.bf16.msra.mxu0 %v4478
    %4701 = vmatprep.subr.bf16.mxu0 %v4483
    %4702 = vmatpush1.bf16.msra.mxu0 %v4482
    %4703 = vmatprep.subr.bf16.mxu0 %v4487
    %4704 = vmatpush1.bf16.msra.mxu0 %v4486
    %4705 = vmatprep.subr.bf16.mxu0 %v4491
    %4706 = vmatpush1.bf16.msra.mxu0 %v4490
    %4707 = vmatprep.subr.bf16.mxu0 %v4495
    %4708 = vmatpush1.bf16.msra.mxu0 %v4494
    %4709 = vmatprep.subr.bf16.mxu0 %v4499
    %4710 = vmatpush1.bf16.msra.mxu0 %v4498
    %4711 = vmatprep.subr.bf16.mxu0 %v4503
    %4712 = vmatpush1.bf16.msra.mxu0 %v4502
    %4713 = vmatprep.subr.bf16.mxu0 %v4507
    %4714 = vmatpush1.bf16.msra.mxu0 %v4506
    %4715 = vmatprep.subr.bf16.mxu0 %v4511
    %4716 = vmatpush1.bf16.msra.mxu0 %v4510
    %4717 = vmatprep.subr.bf16.mxu0 %v4515
    %4718 = vmatpush1.bf16.msra.mxu0 %v4514
    %4719 = vmatprep.mubr.bf16.mxu0 %v3855
    %4720 = vmatmul.mubr.bf16.gmra.mrb[0].mxu0 %v3854
    %v4721 = vpop.f32.mrb[0].mxu0
    %v4722 = vadd.f32 %v4681, %v4721
    %v4723 = vpop.f32.mrb[0].mxu0
    %v4724 = vadd.f32 %v4683, %v4723
    %v4725 = vpop.f32.mrb[0].mxu0
    %v4726 = vpop.f32.mrb[0].mxu0
    %4727 = vdwg.mxu0
    %4728 = vmatprep.subr.bf16.mxu0 %v4393
    %4729 = vmatpush1.bf16.msra.mxu0 %v4392
    %4730 = vmatprep.subr.bf16.mxu0 %v4397
    %4731 = vmatpush1.bf16.msra.mxu0 %v4396
    %4732 = vmatprep.subr.bf16.mxu0 %v4401
    %4733 = vmatpush1.bf16.msra.mxu0 %v4400
    %4734 = vmatprep.subr.bf16.mxu0 %v4405
    %4735 = vmatpush1.bf16.msra.mxu0 %v4404
    %4736 = vmatprep.subr.bf16.mxu0 %v4409
    %4737 = vmatpush1.bf16.msra.mxu0 %v4408
    %4738 = vmatprep.subr.bf16.mxu0 %v4413
    %4739 = vmatpush1.bf16.msra.mxu0 %v4412
    %4740 = vmatprep.subr.bf16.mxu0 %v4417
    %4741 = vmatpush1.bf16.msra.mxu0 %v4416
    %4742 = vmatprep.subr.bf16.mxu0 %v4421
    %4743 = vmatpush1.bf16.msra.mxu0 %v4420
    %4744 = vmatprep.subr.bf16.mxu0 %v4425
    %4745 = vmatpush1.bf16.msra.mxu0 %v4424
    %4746 = vmatprep.subr.bf16.mxu0 %v4429
    %4747 = vmatpush1.bf16.msra.mxu0 %v4428
    %4748 = vmatprep.subr.bf16.mxu0 %v4433
    %4749 = vmatpush1.bf16.msra.mxu0 %v4432
    %4750 = vmatprep.subr.bf16.mxu0 %v4437
    %4751 = vmatpush1.bf16.msra.mxu0 %v4436
    %4752 = vmatprep.subr.bf16.mxu0 %v4441
    %4753 = vmatpush1.bf16.msra.mxu0 %v4440
    %4754 = vmatprep.subr.bf16.mxu0 %v4445
    %4755 = vmatpush1.bf16.msra.mxu0 %v4444
    %4756 = vmatprep.subr.bf16.mxu0 %v4449
    %4757 = vmatpush1.bf16.msra.mxu0 %v4448
    %4758 = vmatprep.subr.bf16.mxu0 %v4453
    %4759 = vmatpush1.bf16.msra.mxu0 %v4452
    %4760 = vmatprep.mubr.bf16.mxu0 %v3853
    %4761 = vmatmul.mubr.bf16.gmra.mrb[0].mxu0 %v3852
    %v4762 = vpop.f32.mrb[0].mxu0
    %v4763 = vadd.f32 %v3997, %v4762
    %v4764 = vpop.f32.mrb[0].mxu0
    %v4765 = vadd.f32 %v4001, %v4764
    %v4766 = vpop.f32.mrb[0].mxu0
    %v4767 = vpop.f32.mrb[0].mxu0
    %4768 = vdwg.mxu0
    %4769 = vmatprep.subr.bf16.mxu0 %v4457
    %4770 = vmatpush1.bf16.msra.mxu0 %v4456
    %4771 = vmatprep.subr.bf16.mxu0 %v4461
    %4772 = vmatpush1.bf16.msra.mxu0 %v4460
    %4773 = vmatprep.subr.bf16.mxu0 %v4465
    %4774 = vmatpush1.bf16.msra.mxu0 %v4464
    %4775 = vmatprep.subr.bf16.mxu0 %v4469
    %4776 = vmatpush1.bf16.msra.mxu0 %v4468
    %4777 = vmatprep.subr.bf16.mxu0 %v4473
    %4778 = vmatpush1.bf16.msra.mxu0 %v4472
    %4779 = vmatprep.subr.bf16.mxu0 %v4477
    %4780 = vmatpush1.bf16.msra.mxu0 %v4476
    %4781 = vmatprep.subr.bf16.mxu0 %v4481
    %4782 = vmatpush1.bf16.msra.mxu0 %v4480
    %4783 = vmatprep.subr.bf16.mxu0 %v4485
    %4784 = vmatpush1.bf16.msra.mxu0 %v4484
    %4785 = vmatprep.subr.bf16.mxu0 %v4489
    %4786 = vmatpush1.bf16.msra.mxu0 %v4488
    %4787 = vmatprep.subr.bf16.mxu0 %v4493
    %4788 = vmatpush1.bf16.msra.mxu0 %v4492
    %4789 = vmatprep.subr.bf16.mxu0 %v4497
    %4790 = vmatpush1.bf16.msra.mxu0 %v4496
    %4791 = vmatprep.subr.bf16.mxu0 %v4501
    %4792 = vmatpush1.bf16.msra.mxu0 %v4500
    %4793 = vmatprep.subr.bf16.mxu0 %v4505
    %4794 = vmatpush1.bf16.msra.mxu0 %v4504
    %4795 = vmatprep.subr.bf16.mxu0 %v4509
    %4796 = vmatpush1.bf16.msra.mxu0 %v4508
    %4797 = vmatprep.subr.bf16.mxu0 %v4513
    %4798 = vmatpush1.bf16.msra.mxu0 %v4512
    %4799 = vmatprep.subr.bf16.mxu0 %v4517
    %4800 = vmatpush1.bf16.msra.mxu0 %v4516
    %4801 = vmatprep.mubr.bf16.mxu0 %v3855
    %4802 = vmatmul.mubr.bf16.gmra.mrb[0].mxu0 %v3854
    %v4803 = vpop.f32.mrb[0].mxu0
    %v4804 = vadd.f32 %v4763, %v4803
    %v4805 = vpop.f32.mrb[0].mxu0
    %v4806 = vadd.f32 %v4765, %v4805
    %v4807 = vpop.f32.mrb[0].mxu0
    %v4808 = vpop.f32.mrb[0].mxu0
    %4809 = vdwg.mxu0
    %v4810 = vmax.f32 %v4722, 0.0
    %v4811 = vmax.f32 %v4724, 0.0
    %v4812 = vmax.f32 %v4804, 0.0
    %v4813 = vmax.f32 %v4806, 0.0
    %v4814 = vpack.c.bf16 %v4810, %v4810
    %v4815 = vpack.c.bf16 %v4811, %v4811
    %v4816 = vpack.c.bf16 %v4812, %v4812
    %v4817 = vpack.c.bf16 %v4813, %v4813
    %v4818 = vld [vmem:[#allocation9] sm:$0xff]
    %v4819 = vld [vmem:[#allocation9 + $0x8] sm:$0xff]
    %v4820 = vld [vmem:[#allocation9 + $0x10] sm:$0xff]
    %v4821 = vld [vmem:[#allocation9 + $0x18] sm:$0xff]
    %v4822 = vld [vmem:[#allocation9 + $0x20] sm:$0xff]
    %v4823 = vld [vmem:[#allocation9 + $0x28] sm:$0xff]
    %v4824 = vld [vmem:[#allocation9 + $0x30] sm:$0xff]
    %v4825 = vld [vmem:[#allocation9 + $0x38] sm:$0xff]
    %v4826 = vld [vmem:[#allocation9 + $0x40] sm:$0xff]
    %v4827 = vld [vmem:[#allocation9 + $0x48] sm:$0xff]
    %v4828 = vld [vmem:[#allocation9 + $0x50] sm:$0xff]
    %v4829 = vld [vmem:[#allocation9 + $0x58] sm:$0xff]
    %v4830 = vld [vmem:[#allocation9 + $0x60] sm:$0xff]
    %v4831 = vld [vmem:[#allocation9 + $0x68] sm:$0xff]
    %v4832 = vld [vmem:[#allocation9 + $0x70] sm:$0xff]
    %v4833 = vld [vmem:[#allocation9 + $0x78] sm:$0xff]
    %v4834 = vld [vmem:[#allocation9 + $0x80] sm:$0xff]
    %v4835 = vld [vmem:[#allocation9 + $0x88] sm:$0xff]
    %v4836 = vld [vmem:[#allocation9 + $0x90] sm:$0xff]
    %v4837 = vld [vmem:[#allocation9 + $0x98] sm:$0xff]
    %v4838 = vld [vmem:[#allocation9 + $0xa0] sm:$0xff]
    %v4839 = vld [vmem:[#allocation9 + $0xa8] sm:$0xff]
    %v4840 = vld [vmem:[#allocation9 + $0xb0] sm:$0xff]
    %v4841 = vld [vmem:[#allocation9 + $0xb8] sm:$0xff]
    %v4842 = vld [vmem:[#allocation9 + $0xc0] sm:$0xff]
    %v4843 = vld [vmem:[#allocation9 + $0xc8] sm:$0xff]
    %v4844 = vld [vmem:[#allocation9 + $0xd0] sm:$0xff]
    %v4845 = vld [vmem:[#allocation9 + $0xd8] sm:$0xff]
    %v4846 = vld [vmem:[#allocation9 + $0xe0] sm:$0xff]
    %v4847 = vld [vmem:[#allocation9 + $0xe8] sm:$0xff]
    %v4848 = vld [vmem:[#allocation9 + $0xf0] sm:$0xff]
    %v4849 = vld [vmem:[#allocation9 + $0xf8] sm:$0xff]
    %v4850 = vld [vmem:[#allocation9 + $0x100] sm:$0xff]
    %v4851 = vld [vmem:[#allocation9 + $0x108] sm:$0xff]
    %v4852 = vld [vmem:[#allocation9 + $0x110] sm:$0xff]
    %v4853 = vld [vmem:[#allocation9 + $0x118] sm:$0xff]
    %v4854 = vld [vmem:[#allocation9 + $0x120] sm:$0xff]
    %v4855 = vld [vmem:[#allocation9 + $0x128] sm:$0xff]
    %v4856 = vld [vmem:[#allocation9 + $0x130] sm:$0xff]
    %v4857 = vld [vmem:[#allocation9 + $0x138] sm:$0xff]
    %v4858 = vld [vmem:[#allocation9 + $0x140] sm:$0xff]
    %v4859 = vld [vmem:[#allocation9 + $0x148] sm:$0xff]
    %v4860 = vld [vmem:[#allocation9 + $0x150] sm:$0xff]
    %v4861 = vld [vmem:[#allocation9 + $0x158] sm:$0xff]
    %v4862 = vld [vmem:[#allocation9 + $0x160] sm:$0xff]
    %v4863 = vld [vmem:[#allocation9 + $0x168] sm:$0xff]
    %v4864 = vld [vmem:[#allocation9 + $0x170] sm:$0xff]
    %v4865 = vld [vmem:[#allocation9 + $0x178] sm:$0xff]
    %v4866 = vld [vmem:[#allocation9 + $0x180] sm:$0xff]
    %v4867 = vld [vmem:[#allocation9 + $0x188] sm:$0xff]
    %v4868 = vld [vmem:[#allocation9 + $0x190] sm:$0xff]
    %v4869 = vld [vmem:[#allocation9 + $0x198] sm:$0xff]
    %v4870 = vld [vmem:[#allocation9 + $0x1a0] sm:$0xff]
    %v4871 = vld [vmem:[#allocation9 + $0x1a8] sm:$0xff]
    %v4872 = vld [vmem:[#allocation9 + $0x1b0] sm:$0xff]
    %v4873 = vld [vmem:[#allocation9 + $0x1b8] sm:$0xff]
    %v4874 = vld [vmem:[#allocation9 + $0x1c0] sm:$0xff]
    %v4875 = vld [vmem:[#allocation9 + $0x1c8] sm:$0xff]
    %v4876 = vld [vmem:[#allocation9 + $0x1d0] sm:$0xff]
    %v4877 = vld [vmem:[#allocation9 + $0x1d8] sm:$0xff]
    %v4878 = vld [vmem:[#allocation9 + $0x1e0] sm:$0xff]
    %v4879 = vld [vmem:[#allocation9 + $0x1e8] sm:$0xff]
    %v4880 = vld [vmem:[#allocation9 + $0x1f0] sm:$0xff]
    %v4881 = vld [vmem:[#allocation9 + $0x1f8] sm:$0xff]
    %v4882 = vld [vmem:[#allocation9 + $0x200] sm:$0xff]
    %v4883 = vld [vmem:[#allocation9 + $0x208] sm:$0xff]
    %v4884 = vld [vmem:[#allocation9 + $0x210] sm:$0xff]
    %v4885 = vld [vmem:[#allocation9 + $0x218] sm:$0xff]
    %v4886 = vld [vmem:[#allocation9 + $0x220] sm:$0xff]
    %v4887 = vld [vmem:[#allocation9 + $0x228] sm:$0xff]
    %v4888 = vld [vmem:[#allocation9 + $0x230] sm:$0xff]
    %v4889 = vld [vmem:[#allocation9 + $0x238] sm:$0xff]
    %v4890 = vld [vmem:[#allocation9 + $0x240] sm:$0xff]
    %v4891 = vld [vmem:[#allocation9 + $0x248] sm:$0xff]
    %v4892 = vld [vmem:[#allocation9 + $0x250] sm:$0xff]
    %v4893 = vld [vmem:[#allocation9 + $0x258] sm:$0xff]
    %v4894 = vld [vmem:[#allocation9 + $0x260] sm:$0xff]
    %v4895 = vld [vmem:[#allocation9 + $0x268] sm:$0xff]
    %v4896 = vld [vmem:[#allocation9 + $0x270] sm:$0xff]
    %v4897 = vld [vmem:[#allocation9 + $0x278] sm:$0xff]
    %v4898 = vld [vmem:[#allocation9 + $0x280] sm:$0xff]
    %v4899 = vld [vmem:[#allocation9 + $0x288] sm:$0xff]
    %v4900 = vld [vmem:[#allocation9 + $0x290] sm:$0xff]
    %v4901 = vld [vmem:[#allocation9 + $0x298] sm:$0xff]
    %v4902 = vld [vmem:[#allocation9 + $0x2a0] sm:$0xff]
    %v4903 = vld [vmem:[#allocation9 + $0x2a8] sm:$0xff]
    %v4904 = vld [vmem:[#allocation9 + $0x2b0] sm:$0xff]
    %v4905 = vld [vmem:[#allocation9 + $0x2b8] sm:$0xff]
    %v4906 = vld [vmem:[#allocation9 + $0x2c0] sm:$0xff]
    %v4907 = vld [vmem:[#allocation9 + $0x2c8] sm:$0xff]
    %v4908 = vld [vmem:[#allocation9 + $0x2d0] sm:$0xff]
    %v4909 = vld [vmem:[#allocation9 + $0x2d8] sm:$0xff]
    %v4910 = vld [vmem:[#allocation9 + $0x2e0] sm:$0xff]
    %v4911 = vld [vmem:[#allocation9 + $0x2e8] sm:$0xff]
    %v4912 = vld [vmem:[#allocation9 + $0x2f0] sm:$0xff]
    %v4913 = vld [vmem:[#allocation9 + $0x2f8] sm:$0xff]
    %v4914 = vld [vmem:[#allocation9 + $0x300] sm:$0xff]
    %v4915 = vld [vmem:[#allocation9 + $0x308] sm:$0xff]
    %v4916 = vld [vmem:[#allocation9 + $0x310] sm:$0xff]
    %v4917 = vld [vmem:[#allocation9 + $0x318] sm:$0xff]
    %v4918 = vld [vmem:[#allocation9 + $0x320] sm:$0xff]
    %v4919 = vld [vmem:[#allocation9 + $0x328] sm:$0xff]
    %v4920 = vld [vmem:[#allocation9 + $0x330] sm:$0xff]
    %v4921 = vld [vmem:[#allocation9 + $0x338] sm:$0xff]
    %v4922 = vld [vmem:[#allocation9 + $0x340] sm:$0xff]
    %v4923 = vld [vmem:[#allocation9 + $0x348] sm:$0xff]
    %v4924 = vld [vmem:[#allocation9 + $0x350] sm:$0xff]
    %v4925 = vld [vmem:[#allocation9 + $0x358] sm:$0xff]
    %v4926 = vld [vmem:[#allocation9 + $0x360] sm:$0xff]
    %v4927 = vld [vmem:[#allocation9 + $0x368] sm:$0xff]
    %v4928 = vld [vmem:[#allocation9 + $0x370] sm:$0xff]
    %v4929 = vld [vmem:[#allocation9 + $0x378] sm:$0xff]
    %v4930 = vld [vmem:[#allocation9 + $0x380] sm:$0xff]
    %v4931 = vld [vmem:[#allocation9 + $0x388] sm:$0xff]
    %v4932 = vld [vmem:[#allocation9 + $0x390] sm:$0xff]
    %v4933 = vld [vmem:[#allocation9 + $0x398] sm:$0xff]
    %v4934 = vld [vmem:[#allocation9 + $0x3a0] sm:$0xff]
    %v4935 = vld [vmem:[#allocation9 + $0x3a8] sm:$0xff]
    %v4936 = vld [vmem:[#allocation9 + $0x3b0] sm:$0xff]
    %v4937 = vld [vmem:[#allocation9 + $0x3b8] sm:$0xff]
    %v4938 = vld [vmem:[#allocation9 + $0x3c0] sm:$0xff]
    %v4939 = vld [vmem:[#allocation9 + $0x3c8] sm:$0xff]
    %v4940 = vld [vmem:[#allocation9 + $0x3d0] sm:$0xff]
    %v4941 = vld [vmem:[#allocation9 + $0x3d8] sm:$0xff]
    %v4942 = vld [vmem:[#allocation9 + $0x3e0] sm:$0xff]
    %v4943 = vld [vmem:[#allocation9 + $0x3e8] sm:$0xff]
    %v4944 = vld [vmem:[#allocation9 + $0x3f0] sm:$0xff]
    %v4945 = vld [vmem:[#allocation9 + $0x3f8] sm:$0xff]
    %v4946 = vld [vmem:[#allocation9 + $0x400] sm:$0xff]
    %v4947 = vld [vmem:[#allocation9 + $0x408] sm:$0xff]
    %v4948 = vld [vmem:[#allocation9 + $0x410] sm:$0xff]
    %v4949 = vld [vmem:[#allocation9 + $0x418] sm:$0xff]
    %v4950 = vld [vmem:[#allocation9 + $0x420] sm:$0xff]
    %v4951 = vld [vmem:[#allocation9 + $0x428] sm:$0xff]
    %v4952 = vld [vmem:[#allocation9 + $0x430] sm:$0xff]
    %v4953 = vld [vmem:[#allocation9 + $0x438] sm:$0xff]
    %v4954 = vld [vmem:[#allocation9 + $0x440] sm:$0xff]
    %v4955 = vld [vmem:[#allocation9 + $0x448] sm:$0xff]
    %v4956 = vld [vmem:[#allocation9 + $0x450] sm:$0xff]
    %v4957 = vld [vmem:[#allocation9 + $0x458] sm:$0xff]
    %v4958 = vld [vmem:[#allocation9 + $0x460] sm:$0xff]
    %v4959 = vld [vmem:[#allocation9 + $0x468] sm:$0xff]
    %v4960 = vld [vmem:[#allocation9 + $0x470] sm:$0xff]
    %v4961 = vld [vmem:[#allocation9 + $0x478] sm:$0xff]
    %v4962 = vld [vmem:[#allocation9 + $0x480] sm:$0xff]
    %v4963 = vld [vmem:[#allocation9 + $0x488] sm:$0xff]
    %v4964 = vld [vmem:[#allocation9 + $0x490] sm:$0xff]
    %v4965 = vld [vmem:[#allocation9 + $0x498] sm:$0xff]
    %v4966 = vld [vmem:[#allocation9 + $0x4a0] sm:$0xff]
    %v4967 = vld [vmem:[#allocation9 + $0x4a8] sm:$0xff]
    %v4968 = vld [vmem:[#allocation9 + $0x4b0] sm:$0xff]
    %v4969 = vld [vmem:[#allocation9 + $0x4b8] sm:$0xff]
    %v4970 = vld [vmem:[#allocation9 + $0x4c0] sm:$0xff]
    %v4971 = vld [vmem:[#allocation9 + $0x4c8] sm:$0xff]
    %v4972 = vld [vmem:[#allocation9 + $0x4d0] sm:$0xff]
    %v4973 = vld [vmem:[#allocation9 + $0x4d8] sm:$0xff]
    %v4974 = vld [vmem:[#allocation9 + $0x4e0] sm:$0xff]
    %v4975 = vld [vmem:[#allocation9 + $0x4e8] sm:$0xff]
    %v4976 = vld [vmem:[#allocation9 + $0x4f0] sm:$0xff]
    %v4977 = vld [vmem:[#allocation9 + $0x4f8] sm:$0xff]
    %v4978 = vld [vmem:[#allocation9 + $0x500] sm:$0xff]
    %v4979 = vld [vmem:[#allocation9 + $0x508] sm:$0xff]
    %v4980 = vld [vmem:[#allocation9 + $0x510] sm:$0xff]
    %v4981 = vld [vmem:[#allocation9 + $0x518] sm:$0xff]
    %v4982 = vld [vmem:[#allocation9 + $0x520] sm:$0xff]
    %v4983 = vld [vmem:[#allocation9 + $0x528] sm:$0xff]
    %v4984 = vld [vmem:[#allocation9 + $0x530] sm:$0xff]
    %v4985 = vld [vmem:[#allocation9 + $0x538] sm:$0xff]
    %v4986 = vld [vmem:[#allocation9 + $0x540] sm:$0xff]
    %v4987 = vld [vmem:[#allocation9 + $0x548] sm:$0xff]
    %v4988 = vld [vmem:[#allocation9 + $0x550] sm:$0xff]
    %v4989 = vld [vmem:[#allocation9 + $0x558] sm:$0xff]
    %v4990 = vld [vmem:[#allocation9 + $0x560] sm:$0xff]
    %v4991 = vld [vmem:[#allocation9 + $0x568] sm:$0xff]
    %v4992 = vld [vmem:[#allocation9 + $0x570] sm:$0xff]
    %v4993 = vld [vmem:[#allocation9 + $0x578] sm:$0xff]
    %v4994 = vld [vmem:[#allocation9 + $0x580] sm:$0xff]
    %v4995 = vld [vmem:[#allocation9 + $0x588] sm:$0xff]
    %v4996 = vld [vmem:[#allocation9 + $0x590] sm:$0xff]
    %v4997 = vld [vmem:[#allocation9 + $0x598] sm:$0xff]
    %v4998 = vld [vmem:[#allocation9 + $0x5a0] sm:$0xff]
    %v4999 = vld [vmem:[#allocation9 + $0x5a8] sm:$0xff]
    %v5000 = vld [vmem:[#allocation9 + $0x5b0] sm:$0xff]
    %v5001 = vld [vmem:[#allocation9 + $0x5b8] sm:$0xff]
    %v5002 = vld [vmem:[#allocation9 + $0x5c0] sm:$0xff]
    %v5003 = vld [vmem:[#allocation9 + $0x5c8] sm:$0xff]
    %v5004 = vld [vmem:[#allocation9 + $0x5d0] sm:$0xff]
    %v5005 = vld [vmem:[#allocation9 + $0x5d8] sm:$0xff]
    %v5006 = vld [vmem:[#allocation9 + $0x5e0] sm:$0xff]
    %v5007 = vld [vmem:[#allocation9 + $0x5e8] sm:$0xff]
    %v5008 = vld [vmem:[#allocation9 + $0x5f0] sm:$0xff]
    %v5009 = vld [vmem:[#allocation9 + $0x5f8] sm:$0xff]
    %v5010 = vld [vmem:[#allocation9 + $0x600] sm:$0xff]
    %v5011 = vld [vmem:[#allocation9 + $0x608] sm:$0xff]
    %v5012 = vld [vmem:[#allocation9 + $0x610] sm:$0xff]
    %v5013 = vld [vmem:[#allocation9 + $0x618] sm:$0xff]
    %v5014 = vld [vmem:[#allocation9 + $0x620] sm:$0xff]
    %v5015 = vld [vmem:[#allocation9 + $0x628] sm:$0xff]
    %v5016 = vld [vmem:[#allocation9 + $0x630] sm:$0xff]
    %v5017 = vld [vmem:[#allocation9 + $0x638] sm:$0xff]
    %v5018 = vld [vmem:[#allocation9 + $0x640] sm:$0xff]
    %v5019 = vld [vmem:[#allocation9 + $0x648] sm:$0xff]
    %v5020 = vld [vmem:[#allocation9 + $0x650] sm:$0xff]
    %v5021 = vld [vmem:[#allocation9 + $0x658] sm:$0xff]
    %v5022 = vld [vmem:[#allocation9 + $0x660] sm:$0xff]
    %v5023 = vld [vmem:[#allocation9 + $0x668] sm:$0xff]
    %v5024 = vld [vmem:[#allocation9 + $0x670] sm:$0xff]
    %v5025 = vld [vmem:[#allocation9 + $0x678] sm:$0xff]
    %v5026 = vld [vmem:[#allocation9 + $0x680] sm:$0xff]
    %v5027 = vld [vmem:[#allocation9 + $0x688] sm:$0xff]
    %v5028 = vld [vmem:[#allocation9 + $0x690] sm:$0xff]
    %v5029 = vld [vmem:[#allocation9 + $0x698] sm:$0xff]
    %v5030 = vld [vmem:[#allocation9 + $0x6a0] sm:$0xff]
    %v5031 = vld [vmem:[#allocation9 + $0x6a8] sm:$0xff]
    %v5032 = vld [vmem:[#allocation9 + $0x6b0] sm:$0xff]
    %v5033 = vld [vmem:[#allocation9 + $0x6b8] sm:$0xff]
    %v5034 = vld [vmem:[#allocation9 + $0x6c0] sm:$0xff]
    %v5035 = vld [vmem:[#allocation9 + $0x6c8] sm:$0xff]
    %v5036 = vld [vmem:[#allocation9 + $0x6d0] sm:$0xff]
    %v5037 = vld [vmem:[#allocation9 + $0x6d8] sm:$0xff]
    %v5038 = vld [vmem:[#allocation9 + $0x6e0] sm:$0xff]
    %v5039 = vld [vmem:[#allocation9 + $0x6e8] sm:$0xff]
    %v5040 = vld [vmem:[#allocation9 + $0x6f0] sm:$0xff]
    %v5041 = vld [vmem:[#allocation9 + $0x6f8] sm:$0xff]
    %v5042 = vld [vmem:[#allocation9 + $0x700] sm:$0xff]
    %v5043 = vld [vmem:[#allocation9 + $0x708] sm:$0xff]
    %v5044 = vld [vmem:[#allocation9 + $0x710] sm:$0xff]
    %v5045 = vld [vmem:[#allocation9 + $0x718] sm:$0xff]
    %v5046 = vld [vmem:[#allocation9 + $0x720] sm:$0xff]
    %v5047 = vld [vmem:[#allocation9 + $0x728] sm:$0xff]
    %v5048 = vld [vmem:[#allocation9 + $0x730] sm:$0xff]
    %v5049 = vld [vmem:[#allocation9 + $0x738] sm:$0xff]
    %v5050 = vld [vmem:[#allocation9 + $0x740] sm:$0xff]
    %v5051 = vld [vmem:[#allocation9 + $0x748] sm:$0xff]
    %v5052 = vld [vmem:[#allocation9 + $0x750] sm:$0xff]
    %v5053 = vld [vmem:[#allocation9 + $0x758] sm:$0xff]
    %v5054 = vld [vmem:[#allocation9 + $0x760] sm:$0xff]
    %v5055 = vld [vmem:[#allocation9 + $0x768] sm:$0xff]
    %v5056 = vld [vmem:[#allocation9 + $0x770] sm:$0xff]
    %v5057 = vld [vmem:[#allocation9 + $0x778] sm:$0xff]
    %v5058 = vld [vmem:[#allocation9 + $0x780] sm:$0xff]
    %v5059 = vld [vmem:[#allocation9 + $0x788] sm:$0xff]
    %v5060 = vld [vmem:[#allocation9 + $0x790] sm:$0xff]
    %v5061 = vld [vmem:[#allocation9 + $0x798] sm:$0xff]
    %v5062 = vld [vmem:[#allocation9 + $0x7a0] sm:$0xff]
    %v5063 = vld [vmem:[#allocation9 + $0x7a8] sm:$0xff]
    %v5064 = vld [vmem:[#allocation9 + $0x7b0] sm:$0xff]
    %v5065 = vld [vmem:[#allocation9 + $0x7b8] sm:$0xff]
    %v5066 = vld [vmem:[#allocation9 + $0x7c0] sm:$0xff]
    %v5067 = vld [vmem:[#allocation9 + $0x7c8] sm:$0xff]
    %v5068 = vld [vmem:[#allocation9 + $0x7d0] sm:$0xff]
    %v5069 = vld [vmem:[#allocation9 + $0x7d8] sm:$0xff]
    %v5070 = vld [vmem:[#allocation9 + $0x7e0] sm:$0xff]
    %v5071 = vld [vmem:[#allocation9 + $0x7e8] sm:$0xff]
    %v5072 = vld [vmem:[#allocation9 + $0x7f0] sm:$0xff]
    %v5073 = vld [vmem:[#allocation9 + $0x7f8] sm:$0xff]
    %v5074 = vld [vmem:[#allocation9 + $0x800] sm:$0xff]
    %v5075 = vld [vmem:[#allocation9 + $0x808] sm:$0xff]
    %v5076 = vld [vmem:[#allocation9 + $0x810] sm:$0xff]
    %v5077 = vld [vmem:[#allocation9 + $0x818] sm:$0xff]
    %v5078 = vld [vmem:[#allocation9 + $0x820] sm:$0xff]
    %v5079 = vld [vmem:[#allocation9 + $0x828] sm:$0xff]
    %v5080 = vld [vmem:[#allocation9 + $0x830] sm:$0xff]
    %v5081 = vld [vmem:[#allocation9 + $0x838] sm:$0xff]
    %v5082 = vld [vmem:[#allocation9 + $0x840] sm:$0xff]
    %v5083 = vld [vmem:[#allocation9 + $0x848] sm:$0xff]
    %v5084 = vld [vmem:[#allocation9 + $0x850] sm:$0xff]
    %v5085 = vld [vmem:[#allocation9 + $0x858] sm:$0xff]
    %v5086 = vld [vmem:[#allocation9 + $0x860] sm:$0xff]
    %v5087 = vld [vmem:[#allocation9 + $0x868] sm:$0xff]
    %v5088 = vld [vmem:[#allocation9 + $0x870] sm:$0xff]
    %v5089 = vld [vmem:[#allocation9 + $0x878] sm:$0xff]
    %v5090 = vld [vmem:[#allocation9 + $0x880] sm:$0xff]
    %v5091 = vld [vmem:[#allocation9 + $0x888] sm:$0xff]
    %v5092 = vld [vmem:[#allocation9 + $0x890] sm:$0xff]
    %v5093 = vld [vmem:[#allocation9 + $0x898] sm:$0xff]
    %v5094 = vld [vmem:[#allocation9 + $0x8a0] sm:$0xff]
    %v5095 = vld [vmem:[#allocation9 + $0x8a8] sm:$0xff]
    %v5096 = vld [vmem:[#allocation9 + $0x8b0] sm:$0xff]
    %v5097 = vld [vmem:[#allocation9 + $0x8b8] sm:$0xff]
    %v5098 = vld [vmem:[#allocation9 + $0x8c0] sm:$0xff]
    %v5099 = vld [vmem:[#allocation9 + $0x8c8] sm:$0xff]
    %v5100 = vld [vmem:[#allocation9 + $0x8d0] sm:$0xff]
    %v5101 = vld [vmem:[#allocation9 + $0x8d8] sm:$0xff]
    %v5102 = vld [vmem:[#allocation9 + $0x8e0] sm:$0xff]
    %v5103 = vld [vmem:[#allocation9 + $0x8e8] sm:$0xff]
    %v5104 = vld [vmem:[#allocation9 + $0x8f0] sm:$0xff]
    %v5105 = vld [vmem:[#allocation9 + $0x8f8] sm:$0xff]
    %v5106 = vld [vmem:[#allocation9 + $0x900] sm:$0xff]
    %v5107 = vld [vmem:[#allocation9 + $0x908] sm:$0xff]
    %v5108 = vld [vmem:[#allocation9 + $0x910] sm:$0xff]
    %v5109 = vld [vmem:[#allocation9 + $0x918] sm:$0xff]
    %v5110 = vld [vmem:[#allocation9 + $0x920] sm:$0xff]
    %v5111 = vld [vmem:[#allocation9 + $0x928] sm:$0xff]
    %v5112 = vld [vmem:[#allocation9 + $0x930] sm:$0xff]
    %v5113 = vld [vmem:[#allocation9 + $0x938] sm:$0xff]
    %v5114 = vld [vmem:[#allocation9 + $0x940] sm:$0xff]
    %v5115 = vld [vmem:[#allocation9 + $0x948] sm:$0xff]
    %v5116 = vld [vmem:[#allocation9 + $0x950] sm:$0xff]
    %v5117 = vld [vmem:[#allocation9 + $0x958] sm:$0xff]
    %v5118 = vld [vmem:[#allocation9 + $0x960] sm:$0xff]
    %v5119 = vld [vmem:[#allocation9 + $0x968] sm:$0xff]
    %v5120 = vld [vmem:[#allocation9 + $0x970] sm:$0xff]
    %v5121 = vld [vmem:[#allocation9 + $0x978] sm:$0xff]
    %v5122 = vld [vmem:[#allocation9 + $0x980] sm:$0xff]
    %v5123 = vld [vmem:[#allocation9 + $0x988] sm:$0xff]
    %v5124 = vld [vmem:[#allocation9 + $0x990] sm:$0xff]
    %v5125 = vld [vmem:[#allocation9 + $0x998] sm:$0xff]
    %v5126 = vld [vmem:[#allocation9 + $0x9a0] sm:$0xff]
    %v5127 = vld [vmem:[#allocation9 + $0x9a8] sm:$0xff]
    %v5128 = vld [vmem:[#allocation9 + $0x9b0] sm:$0xff]
    %v5129 = vld [vmem:[#allocation9 + $0x9b8] sm:$0xff]
    %v5130 = vld [vmem:[#allocation9 + $0x9c0] sm:$0xff]
    %v5131 = vld [vmem:[#allocation9 + $0x9c8] sm:$0xff]
    %v5132 = vld [vmem:[#allocation9 + $0x9d0] sm:$0xff]
    %v5133 = vld [vmem:[#allocation9 + $0x9d8] sm:$0xff]
    %v5134 = vld [vmem:[#allocation9 + $0x9e0] sm:$0xff]
    %v5135 = vld [vmem:[#allocation9 + $0x9e8] sm:$0xff]
    %v5136 = vld [vmem:[#allocation9 + $0x9f0] sm:$0xff]
    %v5137 = vld [vmem:[#allocation9 + $0x9f8] sm:$0xff]
    %v5138 = vld [vmem:[#allocation9 + $0xa00] sm:$0xff]
    %v5139 = vld [vmem:[#allocation9 + $0xa08] sm:$0xff]
    %v5140 = vld [vmem:[#allocation9 + $0xa10] sm:$0xff]
    %v5141 = vld [vmem:[#allocation9 + $0xa18] sm:$0xff]
    %v5142 = vld [vmem:[#allocation9 + $0xa20] sm:$0xff]
    %v5143 = vld [vmem:[#allocation9 + $0xa28] sm:$0xff]
    %v5144 = vld [vmem:[#allocation9 + $0xa30] sm:$0xff]
    %v5145 = vld [vmem:[#allocation9 + $0xa38] sm:$0xff]
    %v5146 = vld [vmem:[#allocation9 + $0xa40] sm:$0xff]
    %v5147 = vld [vmem:[#allocation9 + $0xa48] sm:$0xff]
    %v5148 = vld [vmem:[#allocation9 + $0xa50] sm:$0xff]
    %v5149 = vld [vmem:[#allocation9 + $0xa58] sm:$0xff]
    %v5150 = vld [vmem:[#allocation9 + $0xa60] sm:$0xff]
    %v5151 = vld [vmem:[#allocation9 + $0xa68] sm:$0xff]
    %v5152 = vld [vmem:[#allocation9 + $0xa70] sm:$0xff]
    %v5153 = vld [vmem:[#allocation9 + $0xa78] sm:$0xff]
    %v5154 = vld [vmem:[#allocation9 + $0xa80] sm:$0xff]
    %v5155 = vld [vmem:[#allocation9 + $0xa88] sm:$0xff]
    %v5156 = vld [vmem:[#allocation9 + $0xa90] sm:$0xff]
    %v5157 = vld [vmem:[#allocation9 + $0xa98] sm:$0xff]
    %v5158 = vld [vmem:[#allocation9 + $0xaa0] sm:$0xff]
    %v5159 = vld [vmem:[#allocation9 + $0xaa8] sm:$0xff]
    %v5160 = vld [vmem:[#allocation9 + $0xab0] sm:$0xff]
    %v5161 = vld [vmem:[#allocation9 + $0xab8] sm:$0xff]
    %v5162 = vld [vmem:[#allocation9 + $0xac0] sm:$0xff]
    %v5163 = vld [vmem:[#allocation9 + $0xac8] sm:$0xff]
    %v5164 = vld [vmem:[#allocation9 + $0xad0] sm:$0xff]
    %v5165 = vld [vmem:[#allocation9 + $0xad8] sm:$0xff]
    %v5166 = vld [vmem:[#allocation9 + $0xae0] sm:$0xff]
    %v5167 = vld [vmem:[#allocation9 + $0xae8] sm:$0xff]
    %v5168 = vld [vmem:[#allocation9 + $0xaf0] sm:$0xff]
    %v5169 = vld [vmem:[#allocation9 + $0xaf8] sm:$0xff]
    %v5170 = vld [vmem:[#allocation9 + $0xb00] sm:$0xff]
    %v5171 = vld [vmem:[#allocation9 + $0xb08] sm:$0xff]
    %v5172 = vld [vmem:[#allocation9 + $0xb10] sm:$0xff]
    %v5173 = vld [vmem:[#allocation9 + $0xb18] sm:$0xff]
    %v5174 = vld [vmem:[#allocation9 + $0xb20] sm:$0xff]
    %v5175 = vld [vmem:[#allocation9 + $0xb28] sm:$0xff]
    %v5176 = vld [vmem:[#allocation9 + $0xb30] sm:$0xff]
    %v5177 = vld [vmem:[#allocation9 + $0xb38] sm:$0xff]
    %v5178 = vld [vmem:[#allocation9 + $0xb40] sm:$0xff]
    %v5179 = vld [vmem:[#allocation9 + $0xb48] sm:$0xff]
    %v5180 = vld [vmem:[#allocation9 + $0xb50] sm:$0xff]
    %v5181 = vld [vmem:[#allocation9 + $0xb58] sm:$0xff]
    %v5182 = vld [vmem:[#allocation9 + $0xb60] sm:$0xff]
    %v5183 = vld [vmem:[#allocation9 + $0xb68] sm:$0xff]
    %v5184 = vld [vmem:[#allocation9 + $0xb70] sm:$0xff]
    %v5185 = vld [vmem:[#allocation9 + $0xb78] sm:$0xff]
    %v5186 = vld [vmem:[#allocation9 + $0xb80] sm:$0xff]
    %v5187 = vld [vmem:[#allocation9 + $0xb88] sm:$0xff]
    %v5188 = vld [vmem:[#allocation9 + $0xb90] sm:$0xff]
    %v5189 = vld [vmem:[#allocation9 + $0xb98] sm:$0xff]
    %v5190 = vld [vmem:[#allocation9 + $0xba0] sm:$0xff]
    %v5191 = vld [vmem:[#allocation9 + $0xba8] sm:$0xff]
    %v5192 = vld [vmem:[#allocation9 + $0xbb0] sm:$0xff]
    %v5193 = vld [vmem:[#allocation9 + $0xbb8] sm:$0xff]
    %v5194 = vld [vmem:[#allocation9 + $0xbc0] sm:$0xff]
    %v5195 = vld [vmem:[#allocation9 + $0xbc8] sm:$0xff]
    %v5196 = vld [vmem:[#allocation9 + $0xbd0] sm:$0xff]
    %v5197 = vld [vmem:[#allocation9 + $0xbd8] sm:$0xff]
    %v5198 = vld [vmem:[#allocation9 + $0xbe0] sm:$0xff]
    %v5199 = vld [vmem:[#allocation9 + $0xbe8] sm:$0xff]
    %v5200 = vld [vmem:[#allocation9 + $0xbf0] sm:$0xff]
    %v5201 = vld [vmem:[#allocation9 + $0xbf8] sm:$0xff]
    %v5202 = vld [vmem:[#allocation9 + $0xc00] sm:$0xff]
    %v5203 = vld [vmem:[#allocation9 + $0xc08] sm:$0xff]
    %v5204 = vld [vmem:[#allocation9 + $0xc10] sm:$0xff]
    %v5205 = vld [vmem:[#allocation9 + $0xc18] sm:$0xff]
    %v5206 = vld [vmem:[#allocation9 + $0xc20] sm:$0xff]
    %v5207 = vld [vmem:[#allocation9 + $0xc28] sm:$0xff]
    %v5208 = vld [vmem:[#allocation9 + $0xc30] sm:$0xff]
    %v5209 = vld [vmem:[#allocation9 + $0xc38] sm:$0xff]
    %v5210 = vld [vmem:[#allocation9 + $0xc40] sm:$0xff]
    %v5211 = vld [vmem:[#allocation9 + $0xc48] sm:$0xff]
    %v5212 = vld [vmem:[#allocation9 + $0xc50] sm:$0xff]
    %v5213 = vld [vmem:[#allocation9 + $0xc58] sm:$0xff]
    %v5214 = vld [vmem:[#allocation9 + $0xc60] sm:$0xff]
    %v5215 = vld [vmem:[#allocation9 + $0xc68] sm:$0xff]
    %v5216 = vld [vmem:[#allocation9 + $0xc70] sm:$0xff]
    %v5217 = vld [vmem:[#allocation9 + $0xc78] sm:$0xff]
    %v5218 = vld [vmem:[#allocation9 + $0xc80] sm:$0xff]
    %v5219 = vld [vmem:[#allocation9 + $0xc88] sm:$0xff]
    %v5220 = vld [vmem:[#allocation9 + $0xc90] sm:$0xff]
    %v5221 = vld [vmem:[#allocation9 + $0xc98] sm:$0xff]
    %v5222 = vld [vmem:[#allocation9 + $0xca0] sm:$0xff]
    %v5223 = vld [vmem:[#allocation9 + $0xca8] sm:$0xff]
    %v5224 = vld [vmem:[#allocation9 + $0xcb0] sm:$0xff]
    %v5225 = vld [vmem:[#allocation9 + $0xcb8] sm:$0xff]
    %v5226 = vld [vmem:[#allocation9 + $0xcc0] sm:$0xff]
    %v5227 = vld [vmem:[#allocation9 + $0xcc8] sm:$0xff]
    %v5228 = vld [vmem:[#allocation9 + $0xcd0] sm:$0xff]
    %v5229 = vld [vmem:[#allocation9 + $0xcd8] sm:$0xff]
    %v5230 = vld [vmem:[#allocation9 + $0xce0] sm:$0xff]
    %v5231 = vld [vmem:[#allocation9 + $0xce8] sm:$0xff]
    %v5232 = vld [vmem:[#allocation9 + $0xcf0] sm:$0xff]
    %v5233 = vld [vmem:[#allocation9 + $0xcf8] sm:$0xff]
    %v5234 = vld [vmem:[#allocation9 + $0xd00] sm:$0xff]
    %v5235 = vld [vmem:[#allocation9 + $0xd08] sm:$0xff]
    %v5236 = vld [vmem:[#allocation9 + $0xd10] sm:$0xff]
    %v5237 = vld [vmem:[#allocation9 + $0xd18] sm:$0xff]
    %v5238 = vld [vmem:[#allocation9 + $0xd20] sm:$0xff]
    %v5239 = vld [vmem:[#allocation9 + $0xd28] sm:$0xff]
    %v5240 = vld [vmem:[#allocation9 + $0xd30] sm:$0xff]
    %v5241 = vld [vmem:[#allocation9 + $0xd38] sm:$0xff]
    %v5242 = vld [vmem:[#allocation9 + $0xd40] sm:$0xff]
    %v5243 = vld [vmem:[#allocation9 + $0xd48] sm:$0xff]
    %v5244 = vld [vmem:[#allocation9 + $0xd50] sm:$0xff]
    %v5245 = vld [vmem:[#allocation9 + $0xd58] sm:$0xff]
    %v5246 = vld [vmem:[#allocation9 + $0xd60] sm:$0xff]
    %v5247 = vld [vmem:[#allocation9 + $0xd68] sm:$0xff]
    %v5248 = vld [vmem:[#allocation9 + $0xd70] sm:$0xff]
    %v5249 = vld [vmem:[#allocation9 + $0xd78] sm:$0xff]
    %v5250 = vld [vmem:[#allocation9 + $0xd80] sm:$0xff]
    %v5251 = vld [vmem:[#allocation9 + $0xd88] sm:$0xff]
    %v5252 = vld [vmem:[#allocation9 + $0xd90] sm:$0xff]
    %v5253 = vld [vmem:[#allocation9 + $0xd98] sm:$0xff]
    %v5254 = vld [vmem:[#allocation9 + $0xda0] sm:$0xff]
    %v5255 = vld [vmem:[#allocation9 + $0xda8] sm:$0xff]
    %v5256 = vld [vmem:[#allocation9 + $0xdb0] sm:$0xff]
    %v5257 = vld [vmem:[#allocation9 + $0xdb8] sm:$0xff]
    %v5258 = vld [vmem:[#allocation9 + $0xdc0] sm:$0xff]
    %v5259 = vld [vmem:[#allocation9 + $0xdc8] sm:$0xff]
    %v5260 = vld [vmem:[#allocation9 + $0xdd0] sm:$0xff]
    %v5261 = vld [vmem:[#allocation9 + $0xdd8] sm:$0xff]
    %v5262 = vld [vmem:[#allocation9 + $0xde0] sm:$0xff]
    %v5263 = vld [vmem:[#allocation9 + $0xde8] sm:$0xff]
    %v5264 = vld [vmem:[#allocation9 + $0xdf0] sm:$0xff]
    %v5265 = vld [vmem:[#allocation9 + $0xdf8] sm:$0xff]
    %v5266 = vld [vmem:[#allocation9 + $0xe00] sm:$0xff]
    %v5267 = vld [vmem:[#allocation9 + $0xe08] sm:$0xff]
    %v5268 = vld [vmem:[#allocation9 + $0xe10] sm:$0xff]
    %v5269 = vld [vmem:[#allocation9 + $0xe18] sm:$0xff]
    %v5270 = vld [vmem:[#allocation9 + $0xe20] sm:$0xff]
    %v5271 = vld [vmem:[#allocation9 + $0xe28] sm:$0xff]
    %v5272 = vld [vmem:[#allocation9 + $0xe30] sm:$0xff]
    %v5273 = vld [vmem:[#allocation9 + $0xe38] sm:$0xff]
    %v5274 = vld [vmem:[#allocation9 + $0xe40] sm:$0xff]
    %v5275 = vld [vmem:[#allocation9 + $0xe48] sm:$0xff]
    %v5276 = vld [vmem:[#allocation9 + $0xe50] sm:$0xff]
    %v5277 = vld [vmem:[#allocation9 + $0xe58] sm:$0xff]
    %v5278 = vld [vmem:[#allocation9 + $0xe60] sm:$0xff]
    %v5279 = vld [vmem:[#allocation9 + $0xe68] sm:$0xff]
    %v5280 = vld [vmem:[#allocation9 + $0xe70] sm:$0xff]
    %v5281 = vld [vmem:[#allocation9 + $0xe78] sm:$0xff]
    %v5282 = vld [vmem:[#allocation9 + $0xe80] sm:$0xff]
    %v5283 = vld [vmem:[#allocation9 + $0xe88] sm:$0xff]
    %v5284 = vld [vmem:[#allocation9 + $0xe90] sm:$0xff]
    %v5285 = vld [vmem:[#allocation9 + $0xe98] sm:$0xff]
    %v5286 = vld [vmem:[#allocation9 + $0xea0] sm:$0xff]
    %v5287 = vld [vmem:[#allocation9 + $0xea8] sm:$0xff]
    %v5288 = vld [vmem:[#allocation9 + $0xeb0] sm:$0xff]
    %v5289 = vld [vmem:[#allocation9 + $0xeb8] sm:$0xff]
    %v5290 = vld [vmem:[#allocation9 + $0xec0] sm:$0xff]
    %v5291 = vld [vmem:[#allocation9 + $0xec8] sm:$0xff]
    %v5292 = vld [vmem:[#allocation9 + $0xed0] sm:$0xff]
    %v5293 = vld [vmem:[#allocation9 + $0xed8] sm:$0xff]
    %v5294 = vld [vmem:[#allocation9 + $0xee0] sm:$0xff]
    %v5295 = vld [vmem:[#allocation9 + $0xee8] sm:$0xff]
    %v5296 = vld [vmem:[#allocation9 + $0xef0] sm:$0xff]
    %v5297 = vld [vmem:[#allocation9 + $0xef8] sm:$0xff]
    %v5298 = vld [vmem:[#allocation9 + $0xf00] sm:$0xff]
    %v5299 = vld [vmem:[#allocation9 + $0xf08] sm:$0xff]
    %v5300 = vld [vmem:[#allocation9 + $0xf10] sm:$0xff]
    %v5301 = vld [vmem:[#allocation9 + $0xf18] sm:$0xff]
    %v5302 = vld [vmem:[#allocation9 + $0xf20] sm:$0xff]
    %v5303 = vld [vmem:[#allocation9 + $0xf28] sm:$0xff]
    %v5304 = vld [vmem:[#allocation9 + $0xf30] sm:$0xff]
    %v5305 = vld [vmem:[#allocation9 + $0xf38] sm:$0xff]
    %v5306 = vld [vmem:[#allocation9 + $0xf40] sm:$0xff]
    %v5307 = vld [vmem:[#allocation9 + $0xf48] sm:$0xff]
    %v5308 = vld [vmem:[#allocation9 + $0xf50] sm:$0xff]
    %v5309 = vld [vmem:[#allocation9 + $0xf58] sm:$0xff]
    %v5310 = vld [vmem:[#allocation9 + $0xf60] sm:$0xff]
    %v5311 = vld [vmem:[#allocation9 + $0xf68] sm:$0xff]
    %v5312 = vld [vmem:[#allocation9 + $0xf70] sm:$0xff]
    %v5313 = vld [vmem:[#allocation9 + $0xf78] sm:$0xff]
    %v5314 = vld [vmem:[#allocation9 + $0xf80] sm:$0xff]
    %v5315 = vld [vmem:[#allocation9 + $0xf88] sm:$0xff]
    %v5316 = vld [vmem:[#allocation9 + $0xf90] sm:$0xff]
    %v5317 = vld [vmem:[#allocation9 + $0xf98] sm:$0xff]
    %v5318 = vld [vmem:[#allocation9 + $0xfa0] sm:$0xff]
    %v5319 = vld [vmem:[#allocation9 + $0xfa8] sm:$0xff]
    %v5320 = vld [vmem:[#allocation9 + $0xfb0] sm:$0xff]
    %v5321 = vld [vmem:[#allocation9 + $0xfb8] sm:$0xff]
    %v5322 = vld [vmem:[#allocation9 + $0xfc0] sm:$0xff]
    %v5323 = vld [vmem:[#allocation9 + $0xfc8] sm:$0xff]
    %v5324 = vld [vmem:[#allocation9 + $0xfd0] sm:$0xff]
    %v5325 = vld [vmem:[#allocation9 + $0xfd8] sm:$0xff]
    %v5326 = vld [vmem:[#allocation9 + $0xfe0] sm:$0xff]
    %v5327 = vld [vmem:[#allocation9 + $0xfe8] sm:$0xff]
    %v5328 = vld [vmem:[#allocation9 + $0xff0] sm:$0xff]
    %v5329 = vld [vmem:[#allocation9 + $0xff8] sm:$0xff]
    %v5330 = vld [vmem:[#allocation10] sm:$0xff]
    %v5331 = vld [vmem:[#allocation10 + $0x8] sm:$0xff]
    %v5334 = vlaneseq
    %v5335 = vshrl.u32 %v5334, 7
    %v5336 = vsub.s32 0, %v5335
    %v5337 = vrot.slane %v5330, %v5336
    %v5338 = vlaneseq
    %v5339 = vshrl.u32 %v5338, 7
    %v5340 = vsub.s32 1, %v5339
    %v5341 = vrot.slane %v5330, %v5340
    %v5342 = vlaneseq
    %v5343 = vshrl.u32 %v5342, 7
    %v5344 = vsub.s32 2, %v5343
    %v5345 = vrot.slane %v5330, %v5344
    %v5346 = vlaneseq
    %v5347 = vshrl.u32 %v5346, 7
    %v5348 = vsub.s32 3, %v5347
    %v5349 = vrot.slane %v5330, %v5348
    %v5350 = vlaneseq
    %v5351 = vshrl.u32 %v5350, 7
    %v5352 = vsub.s32 4, %v5351
    %v5353 = vrot.slane %v5330, %v5352
    %v5354 = vlaneseq
    %v5355 = vshrl.u32 %v5354, 7
    %v5356 = vsub.s32 5, %v5355
    %v5357 = vrot.slane %v5330, %v5356
    %v5358 = vlaneseq
    %v5359 = vshrl.u32 %v5358, 7
    %v5360 = vsub.s32 6, %v5359
    %v5361 = vrot.slane %v5330, %v5360
    %v5362 = vlaneseq
    %v5363 = vshrl.u32 %v5362, 7
    %v5364 = vsub.s32 7, %v5363
    %v5365 = vrot.slane %v5330, %v5364
    %v5366 = vlaneseq
    %v5367 = vshrl.u32 %v5366, 7
    %v5368 = vsub.s32 0, %v5367
    %v5369 = vrot.slane %v5331, %v5368
    %v5370 = vlaneseq
    %v5371 = vshrl.u32 %v5370, 7
    %v5372 = vsub.s32 1, %v5371
    %v5373 = vrot.slane %v5331, %v5372
    %v5374 = vlaneseq
    %v5375 = vshrl.u32 %v5374, 7
    %v5376 = vsub.s32 2, %v5375
    %v5377 = vrot.slane %v5331, %v5376
    %v5378 = vlaneseq
    %v5379 = vshrl.u32 %v5378, 7
    %v5380 = vsub.s32 3, %v5379
    %v5381 = vrot.slane %v5331, %v5380
    %v5382 = vlaneseq
    %v5383 = vshrl.u32 %v5382, 7
    %v5384 = vsub.s32 4, %v5383
    %v5385 = vrot.slane %v5331, %v5384
    %v5386 = vlaneseq
    %v5387 = vshrl.u32 %v5386, 7
    %v5388 = vsub.s32 5, %v5387
    %v5389 = vrot.slane %v5331, %v5388
    %v5390 = vlaneseq
    %v5391 = vshrl.u32 %v5390, 7
    %v5392 = vsub.s32 6, %v5391
    %v5393 = vrot.slane %v5331, %v5392
    %v5394 = vlaneseq
    %v5395 = vshrl.u32 %v5394, 7
    %v5396 = vsub.s32 7, %v5395
    %v5397 = vrot.slane %v5331, %v5396
    %v5926 = vunpack.c.l.b16 %v4818
    %v5927 = vunpack.c.h.b16 %v4818
    %v5928 = vunpack.c.l.b16 %v4819
    %v5929 = vunpack.c.h.b16 %v4819
    %v5930 = vunpack.c.l.b16 %v4820
    %v5931 = vunpack.c.h.b16 %v4820
    %v5932 = vunpack.c.l.b16 %v4821
    %v5933 = vunpack.c.h.b16 %v4821
    %v5934 = vunpack.c.l.b16 %v4822
    %v5935 = vunpack.c.h.b16 %v4822
    %v5936 = vunpack.c.l.b16 %v4823
    %v5937 = vunpack.c.h.b16 %v4823
    %v5938 = vunpack.c.l.b16 %v4824
    %v5939 = vunpack.c.h.b16 %v4824
    %v5940 = vunpack.c.l.b16 %v4825
    %v5941 = vunpack.c.h.b16 %v4825
    %v5942 = vunpack.c.l.b16 %v4826
    %v5943 = vunpack.c.h.b16 %v4826
    %v5944 = vunpack.c.l.b16 %v4827
    %v5945 = vunpack.c.h.b16 %v4827
    %v5946 = vunpack.c.l.b16 %v4828
    %v5947 = vunpack.c.h.b16 %v4828
    %v5948 = vunpack.c.l.b16 %v4829
    %v5949 = vunpack.c.h.b16 %v4829
    %v5950 = vunpack.c.l.b16 %v4830
    %v5951 = vunpack.c.h.b16 %v4830
    %v5952 = vunpack.c.l.b16 %v4831
    %v5953 = vunpack.c.h.b16 %v4831
    %v5954 = vunpack.c.l.b16 %v4832
    %v5955 = vunpack.c.h.b16 %v4832
    %v5956 = vunpack.c.l.b16 %v4833
    %v5957 = vunpack.c.h.b16 %v4833
    %v5958 = vunpack.c.l.b16 %v4834
    %v5959 = vunpack.c.h.b16 %v4834
    %v5960 = vunpack.c.l.b16 %v4835
    %v5961 = vunpack.c.h.b16 %v4835
    %v5962 = vunpack.c.l.b16 %v4836
    %v5963 = vunpack.c.h.b16 %v4836
    %v5964 = vunpack.c.l.b16 %v4837
    %v5965 = vunpack.c.h.b16 %v4837
    %v5966 = vunpack.c.l.b16 %v4838
    %v5967 = vunpack.c.h.b16 %v4838
    %v5968 = vunpack.c.l.b16 %v4839
    %v5969 = vunpack.c.h.b16 %v4839
    %v5970 = vunpack.c.l.b16 %v4840
    %v5971 = vunpack.c.h.b16 %v4840
    %v5972 = vunpack.c.l.b16 %v4841
    %v5973 = vunpack.c.h.b16 %v4841
    %v5974 = vunpack.c.l.b16 %v4842
    %v5975 = vunpack.c.h.b16 %v4842
    %v5976 = vunpack.c.l.b16 %v4843
    %v5977 = vunpack.c.h.b16 %v4843
    %v5978 = vunpack.c.l.b16 %v4844
    %v5979 = vunpack.c.h.b16 %v4844
    %v5980 = vunpack.c.l.b16 %v4845
    %v5981 = vunpack.c.h.b16 %v4845
    %v5982 = vunpack.c.l.b16 %v4846
    %v5983 = vunpack.c.h.b16 %v4846
    %v5984 = vunpack.c.l.b16 %v4847
    %v5985 = vunpack.c.h.b16 %v4847
    %v5986 = vunpack.c.l.b16 %v4848
    %v5987 = vunpack.c.h.b16 %v4848
    %v5988 = vunpack.c.l.b16 %v4849
    %v5989 = vunpack.c.h.b16 %v4849
    %v5990 = vunpack.c.l.b16 %v4850
    %v5991 = vunpack.c.h.b16 %v4850
    %v5992 = vunpack.c.l.b16 %v4851
    %v5993 = vunpack.c.h.b16 %v4851
    %v5994 = vunpack.c.l.b16 %v4852
    %v5995 = vunpack.c.h.b16 %v4852
    %v5996 = vunpack.c.l.b16 %v4853
    %v5997 = vunpack.c.h.b16 %v4853
    %v5998 = vunpack.c.l.b16 %v4854
    %v5999 = vunpack.c.h.b16 %v4854
    %v6000 = vunpack.c.l.b16 %v4855
    %v6001 = vunpack.c.h.b16 %v4855
    %v6002 = vunpack.c.l.b16 %v4856
    %v6003 = vunpack.c.h.b16 %v4856
    %v6004 = vunpack.c.l.b16 %v4857
    %v6005 = vunpack.c.h.b16 %v4857
    %v6006 = vunpack.c.l.b16 %v4858
    %v6007 = vunpack.c.h.b16 %v4858
    %v6008 = vunpack.c.l.b16 %v4859
    %v6009 = vunpack.c.h.b16 %v4859
    %v6010 = vunpack.c.l.b16 %v4860
    %v6011 = vunpack.c.h.b16 %v4860
    %v6012 = vunpack.c.l.b16 %v4861
    %v6013 = vunpack.c.h.b16 %v4861
    %v6014 = vunpack.c.l.b16 %v4862
    %v6015 = vunpack.c.h.b16 %v4862
    %v6016 = vunpack.c.l.b16 %v4863
    %v6017 = vunpack.c.h.b16 %v4863
    %v6018 = vunpack.c.l.b16 %v4864
    %v6019 = vunpack.c.h.b16 %v4864
    %v6020 = vunpack.c.l.b16 %v4865
    %v6021 = vunpack.c.h.b16 %v4865
    %v6022 = vunpack.c.l.b16 %v4866
    %v6023 = vunpack.c.h.b16 %v4866
    %v6024 = vunpack.c.l.b16 %v4867
    %v6025 = vunpack.c.h.b16 %v4867
    %v6026 = vunpack.c.l.b16 %v4868
    %v6027 = vunpack.c.h.b16 %v4868
    %v6028 = vunpack.c.l.b16 %v4869
    %v6029 = vunpack.c.h.b16 %v4869
    %v6030 = vunpack.c.l.b16 %v4870
    %v6031 = vunpack.c.h.b16 %v4870
    %v6032 = vunpack.c.l.b16 %v4871
    %v6033 = vunpack.c.h.b16 %v4871
    %v6034 = vunpack.c.l.b16 %v4872
    %v6035 = vunpack.c.h.b16 %v4872
    %v6036 = vunpack.c.l.b16 %v4873
    %v6037 = vunpack.c.h.b16 %v4873
    %v6038 = vunpack.c.l.b16 %v4874
    %v6039 = vunpack.c.h.b16 %v4874
    %v6040 = vunpack.c.l.b16 %v4875
    %v6041 = vunpack.c.h.b16 %v4875
    %v6042 = vunpack.c.l.b16 %v4876
    %v6043 = vunpack.c.h.b16 %v4876
    %v6044 = vunpack.c.l.b16 %v4877
    %v6045 = vunpack.c.h.b16 %v4877
    %v6046 = vunpack.c.l.b16 %v4878
    %v6047 = vunpack.c.h.b16 %v4878
    %v6048 = vunpack.c.l.b16 %v4879
    %v6049 = vunpack.c.h.b16 %v4879
    %v6050 = vunpack.c.l.b16 %v4880
    %v6051 = vunpack.c.h.b16 %v4880
    %v6052 = vunpack.c.l.b16 %v4881
    %v6053 = vunpack.c.h.b16 %v4881
    %v6054 = vunpack.c.l.b16 %v4882
    %v6055 = vunpack.c.h.b16 %v4882
    %v6056 = vunpack.c.l.b16 %v4883
    %v6057 = vunpack.c.h.b16 %v4883
    %v6058 = vunpack.c.l.b16 %v4884
    %v6059 = vunpack.c.h.b16 %v4884
    %v6060 = vunpack.c.l.b16 %v4885
    %v6061 = vunpack.c.h.b16 %v4885
    %v6062 = vunpack.c.l.b16 %v4886
    %v6063 = vunpack.c.h.b16 %v4886
    %v6064 = vunpack.c.l.b16 %v4887
    %v6065 = vunpack.c.h.b16 %v4887
    %v6066 = vunpack.c.l.b16 %v4888
    %v6067 = vunpack.c.h.b16 %v4888
    %v6068 = vunpack.c.l.b16 %v4889
    %v6069 = vunpack.c.h.b16 %v4889
    %v6070 = vunpack.c.l.b16 %v4890
    %v6071 = vunpack.c.h.b16 %v4890
    %v6072 = vunpack.c.l.b16 %v4891
    %v6073 = vunpack.c.h.b16 %v4891
    %v6074 = vunpack.c.l.b16 %v4892
    %v6075 = vunpack.c.h.b16 %v4892
    %v6076 = vunpack.c.l.b16 %v4893
    %v6077 = vunpack.c.h.b16 %v4893
    %v6078 = vunpack.c.l.b16 %v4894
    %v6079 = vunpack.c.h.b16 %v4894
    %v6080 = vunpack.c.l.b16 %v4895
    %v6081 = vunpack.c.h.b16 %v4895
    %v6082 = vunpack.c.l.b16 %v4896
    %v6083 = vunpack.c.h.b16 %v4896
    %v6084 = vunpack.c.l.b16 %v4897
    %v6085 = vunpack.c.h.b16 %v4897
    %v6086 = vunpack.c.l.b16 %v4898
    %v6087 = vunpack.c.h.b16 %v4898
    %v6088 = vunpack.c.l.b16 %v4899
    %v6089 = vunpack.c.h.b16 %v4899
    %v6090 = vunpack.c.l.b16 %v4900
    %v6091 = vunpack.c.h.b16 %v4900
    %v6092 = vunpack.c.l.b16 %v4901
    %v6093 = vunpack.c.h.b16 %v4901
    %v6094 = vunpack.c.l.b16 %v4902
    %v6095 = vunpack.c.h.b16 %v4902
    %v6096 = vunpack.c.l.b16 %v4903
    %v6097 = vunpack.c.h.b16 %v4903
    %v6098 = vunpack.c.l.b16 %v4904
    %v6099 = vunpack.c.h.b16 %v4904
    %v6100 = vunpack.c.l.b16 %v4905
    %v6101 = vunpack.c.h.b16 %v4905
    %v6102 = vunpack.c.l.b16 %v4906
    %v6103 = vunpack.c.h.b16 %v4906
    %v6104 = vunpack.c.l.b16 %v4907
    %v6105 = vunpack.c.h.b16 %v4907
    %v6106 = vunpack.c.l.b16 %v4908
    %v6107 = vunpack.c.h.b16 %v4908
    %v6108 = vunpack.c.l.b16 %v4909
    %v6109 = vunpack.c.h.b16 %v4909
    %v6110 = vunpack.c.l.b16 %v4910
    %v6111 = vunpack.c.h.b16 %v4910
    %v6112 = vunpack.c.l.b16 %v4911
    %v6113 = vunpack.c.h.b16 %v4911
    %v6114 = vunpack.c.l.b16 %v4912
    %v6115 = vunpack.c.h.b16 %v4912
    %v6116 = vunpack.c.l.b16 %v4913
    %v6117 = vunpack.c.h.b16 %v4913
    %v6118 = vunpack.c.l.b16 %v4914
    %v6119 = vunpack.c.h.b16 %v4914
    %v6120 = vunpack.c.l.b16 %v4915
    %v6121 = vunpack.c.h.b16 %v4915
    %v6122 = vunpack.c.l.b16 %v4916
    %v6123 = vunpack.c.h.b16 %v4916
    %v6124 = vunpack.c.l.b16 %v4917
    %v6125 = vunpack.c.h.b16 %v4917
    %v6126 = vunpack.c.l.b16 %v4918
    %v6127 = vunpack.c.h.b16 %v4918
    %v6128 = vunpack.c.l.b16 %v4919
    %v6129 = vunpack.c.h.b16 %v4919
    %v6130 = vunpack.c.l.b16 %v4920
    %v6131 = vunpack.c.h.b16 %v4920
    %v6132 = vunpack.c.l.b16 %v4921
    %v6133 = vunpack.c.h.b16 %v4921
    %v6134 = vunpack.c.l.b16 %v4922
    %v6135 = vunpack.c.h.b16 %v4922
    %v6136 = vunpack.c.l.b16 %v4923
    %v6137 = vunpack.c.h.b16 %v4923
    %v6138 = vunpack.c.l.b16 %v4924
    %v6139 = vunpack.c.h.b16 %v4924
    %v6140 = vunpack.c.l.b16 %v4925
    %v6141 = vunpack.c.h.b16 %v4925
    %v6142 = vunpack.c.l.b16 %v4926
    %v6143 = vunpack.c.h.b16 %v4926
    %v6144 = vunpack.c.l.b16 %v4927
    %v6145 = vunpack.c.h.b16 %v4927
    %v6146 = vunpack.c.l.b16 %v4928
    %v6147 = vunpack.c.h.b16 %v4928
    %v6148 = vunpack.c.l.b16 %v4929
    %v6149 = vunpack.c.h.b16 %v4929
    %v6150 = vunpack.c.l.b16 %v4930
    %v6151 = vunpack.c.h.b16 %v4930
    %v6152 = vunpack.c.l.b16 %v4931
    %v6153 = vunpack.c.h.b16 %v4931
    %v6154 = vunpack.c.l.b16 %v4932
    %v6155 = vunpack.c.h.b16 %v4932
    %v6156 = vunpack.c.l.b16 %v4933
    %v6157 = vunpack.c.h.b16 %v4933
    %v6158 = vunpack.c.l.b16 %v4934
    %v6159 = vunpack.c.h.b16 %v4934
    %v6160 = vunpack.c.l.b16 %v4935
    %v6161 = vunpack.c.h.b16 %v4935
    %v6162 = vunpack.c.l.b16 %v4936
    %v6163 = vunpack.c.h.b16 %v4936
    %v6164 = vunpack.c.l.b16 %v4937
    %v6165 = vunpack.c.h.b16 %v4937
    %v6166 = vunpack.c.l.b16 %v4938
    %v6167 = vunpack.c.h.b16 %v4938
    %v6168 = vunpack.c.l.b16 %v4939
    %v6169 = vunpack.c.h.b16 %v4939
    %v6170 = vunpack.c.l.b16 %v4940
    %v6171 = vunpack.c.h.b16 %v4940
    %v6172 = vunpack.c.l.b16 %v4941
    %v6173 = vunpack.c.h.b16 %v4941
    %v6174 = vunpack.c.l.b16 %v4942
    %v6175 = vunpack.c.h.b16 %v4942
    %v6176 = vunpack.c.l.b16 %v4943
    %v6177 = vunpack.c.h.b16 %v4943
    %v6178 = vunpack.c.l.b16 %v4944
    %v6179 = vunpack.c.h.b16 %v4944
    %v6180 = vunpack.c.l.b16 %v4945
    %v6181 = vunpack.c.h.b16 %v4945
    %v6182 = vunpack.c.l.b16 %v4946
    %v6183 = vunpack.c.h.b16 %v4946
    %v6184 = vunpack.c.l.b16 %v4947
    %v6185 = vunpack.c.h.b16 %v4947
    %v6186 = vunpack.c.l.b16 %v4948
    %v6187 = vunpack.c.h.b16 %v4948
    %v6188 = vunpack.c.l.b16 %v4949
    %v6189 = vunpack.c.h.b16 %v4949
    %v6190 = vunpack.c.l.b16 %v4950
    %v6191 = vunpack.c.h.b16 %v4950
    %v6192 = vunpack.c.l.b16 %v4951
    %v6193 = vunpack.c.h.b16 %v4951
    %v6194 = vunpack.c.l.b16 %v4952
    %v6195 = vunpack.c.h.b16 %v4952
    %v6196 = vunpack.c.l.b16 %v4953
    %v6197 = vunpack.c.h.b16 %v4953
    %v6198 = vunpack.c.l.b16 %v4954
    %v6199 = vunpack.c.h.b16 %v4954
    %v6200 = vunpack.c.l.b16 %v4955
    %v6201 = vunpack.c.h.b16 %v4955
    %v6202 = vunpack.c.l.b16 %v4956
    %v6203 = vunpack.c.h.b16 %v4956
    %v6204 = vunpack.c.l.b16 %v4957
    %v6205 = vunpack.c.h.b16 %v4957
    %v6206 = vunpack.c.l.b16 %v4958
    %v6207 = vunpack.c.h.b16 %v4958
    %v6208 = vunpack.c.l.b16 %v4959
    %v6209 = vunpack.c.h.b16 %v4959
    %v6210 = vunpack.c.l.b16 %v4960
    %v6211 = vunpack.c.h.b16 %v4960
    %v6212 = vunpack.c.l.b16 %v4961
    %v6213 = vunpack.c.h.b16 %v4961
    %v6214 = vunpack.c.l.b16 %v4962
    %v6215 = vunpack.c.h.b16 %v4962
    %v6216 = vunpack.c.l.b16 %v4963
    %v6217 = vunpack.c.h.b16 %v4963
    %v6218 = vunpack.c.l.b16 %v4964
    %v6219 = vunpack.c.h.b16 %v4964
    %v6220 = vunpack.c.l.b16 %v4965
    %v6221 = vunpack.c.h.b16 %v4965
    %v6222 = vunpack.c.l.b16 %v4966
    %v6223 = vunpack.c.h.b16 %v4966
    %v6224 = vunpack.c.l.b16 %v4967
    %v6225 = vunpack.c.h.b16 %v4967
    %v6226 = vunpack.c.l.b16 %v4968
    %v6227 = vunpack.c.h.b16 %v4968
    %v6228 = vunpack.c.l.b16 %v4969
    %v6229 = vunpack.c.h.b16 %v4969
    %v6230 = vunpack.c.l.b16 %v4970
    %v6231 = vunpack.c.h.b16 %v4970
    %v6232 = vunpack.c.l.b16 %v4971
    %v6233 = vunpack.c.h.b16 %v4971
    %v6234 = vunpack.c.l.b16 %v4972
    %v6235 = vunpack.c.h.b16 %v4972
    %v6236 = vunpack.c.l.b16 %v4973
    %v6237 = vunpack.c.h.b16 %v4973
    %v6238 = vunpack.c.l.b16 %v4974
    %v6239 = vunpack.c.h.b16 %v4974
    %v6240 = vunpack.c.l.b16 %v4975
    %v6241 = vunpack.c.h.b16 %v4975
    %v6242 = vunpack.c.l.b16 %v4976
    %v6243 = vunpack.c.h.b16 %v4976
    %v6244 = vunpack.c.l.b16 %v4977
    %v6245 = vunpack.c.h.b16 %v4977
    %v6246 = vunpack.c.l.b16 %v4978
    %v6247 = vunpack.c.h.b16 %v4978
    %v6248 = vunpack.c.l.b16 %v4979
    %v6249 = vunpack.c.h.b16 %v4979
    %v6250 = vunpack.c.l.b16 %v4980
    %v6251 = vunpack.c.h.b16 %v4980
    %v6252 = vunpack.c.l.b16 %v4981
    %v6253 = vunpack.c.h.b16 %v4981
    %v6254 = vunpack.c.l.b16 %v4982
    %v6255 = vunpack.c.h.b16 %v4982
    %v6256 = vunpack.c.l.b16 %v4983
    %v6257 = vunpack.c.h.b16 %v4983
    %v6258 = vunpack.c.l.b16 %v4984
    %v6259 = vunpack.c.h.b16 %v4984
    %v6260 = vunpack.c.l.b16 %v4985
    %v6261 = vunpack.c.h.b16 %v4985
    %v6262 = vunpack.c.l.b16 %v4986
    %v6263 = vunpack.c.h.b16 %v4986
    %v6264 = vunpack.c.l.b16 %v4987
    %v6265 = vunpack.c.h.b16 %v4987
    %v6266 = vunpack.c.l.b16 %v4988
    %v6267 = vunpack.c.h.b16 %v4988
    %v6268 = vunpack.c.l.b16 %v4989
    %v6269 = vunpack.c.h.b16 %v4989
    %v6270 = vunpack.c.l.b16 %v4990
    %v6271 = vunpack.c.h.b16 %v4990
    %v6272 = vunpack.c.l.b16 %v4991
    %v6273 = vunpack.c.h.b16 %v4991
    %v6274 = vunpack.c.l.b16 %v4992
    %v6275 = vunpack.c.h.b16 %v4992
    %v6276 = vunpack.c.l.b16 %v4993
    %v6277 = vunpack.c.h.b16 %v4993
    %v6278 = vunpack.c.l.b16 %v4994
    %v6279 = vunpack.c.h.b16 %v4994
    %v6280 = vunpack.c.l.b16 %v4995
    %v6281 = vunpack.c.h.b16 %v4995
    %v6282 = vunpack.c.l.b16 %v4996
    %v6283 = vunpack.c.h.b16 %v4996
    %v6284 = vunpack.c.l.b16 %v4997
    %v6285 = vunpack.c.h.b16 %v4997
    %v6286 = vunpack.c.l.b16 %v4998
    %v6287 = vunpack.c.h.b16 %v4998
    %v6288 = vunpack.c.l.b16 %v4999
    %v6289 = vunpack.c.h.b16 %v4999
    %v6290 = vunpack.c.l.b16 %v5000
    %v6291 = vunpack.c.h.b16 %v5000
    %v6292 = vunpack.c.l.b16 %v5001
    %v6293 = vunpack.c.h.b16 %v5001
    %v6294 = vunpack.c.l.b16 %v5002
    %v6295 = vunpack.c.h.b16 %v5002
    %v6296 = vunpack.c.l.b16 %v5003
    %v6297 = vunpack.c.h.b16 %v5003
    %v6298 = vunpack.c.l.b16 %v5004
    %v6299 = vunpack.c.h.b16 %v5004
    %v6300 = vunpack.c.l.b16 %v5005
    %v6301 = vunpack.c.h.b16 %v5005
    %v6302 = vunpack.c.l.b16 %v5006
    %v6303 = vunpack.c.h.b16 %v5006
    %v6304 = vunpack.c.l.b16 %v5007
    %v6305 = vunpack.c.h.b16 %v5007
    %v6306 = vunpack.c.l.b16 %v5008
    %v6307 = vunpack.c.h.b16 %v5008
    %v6308 = vunpack.c.l.b16 %v5009
    %v6309 = vunpack.c.h.b16 %v5009
    %v6310 = vunpack.c.l.b16 %v5010
    %v6311 = vunpack.c.h.b16 %v5010
    %v6312 = vunpack.c.l.b16 %v5011
    %v6313 = vunpack.c.h.b16 %v5011
    %v6314 = vunpack.c.l.b16 %v5012
    %v6315 = vunpack.c.h.b16 %v5012
    %v6316 = vunpack.c.l.b16 %v5013
    %v6317 = vunpack.c.h.b16 %v5013
    %v6318 = vunpack.c.l.b16 %v5014
    %v6319 = vunpack.c.h.b16 %v5014
    %v6320 = vunpack.c.l.b16 %v5015
    %v6321 = vunpack.c.h.b16 %v5015
    %v6322 = vunpack.c.l.b16 %v5016
    %v6323 = vunpack.c.h.b16 %v5016
    %v6324 = vunpack.c.l.b16 %v5017
    %v6325 = vunpack.c.h.b16 %v5017
    %v6326 = vunpack.c.l.b16 %v5018
    %v6327 = vunpack.c.h.b16 %v5018
    %v6328 = vunpack.c.l.b16 %v5019
    %v6329 = vunpack.c.h.b16 %v5019
    %v6330 = vunpack.c.l.b16 %v5020
    %v6331 = vunpack.c.h.b16 %v5020
    %v6332 = vunpack.c.l.b16 %v5021
    %v6333 = vunpack.c.h.b16 %v5021
    %v6334 = vunpack.c.l.b16 %v5022
    %v6335 = vunpack.c.h.b16 %v5022
    %v6336 = vunpack.c.l.b16 %v5023
    %v6337 = vunpack.c.h.b16 %v5023
    %v6338 = vunpack.c.l.b16 %v5024
    %v6339 = vunpack.c.h.b16 %v5024
    %v6340 = vunpack.c.l.b16 %v5025
    %v6341 = vunpack.c.h.b16 %v5025
    %v6342 = vunpack.c.l.b16 %v5026
    %v6343 = vunpack.c.h.b16 %v5026
    %v6344 = vunpack.c.l.b16 %v5027
    %v6345 = vunpack.c.h.b16 %v5027
    %v6346 = vunpack.c.l.b16 %v5028
    %v6347 = vunpack.c.h.b16 %v5028
    %v6348 = vunpack.c.l.b16 %v5029
    %v6349 = vunpack.c.h.b16 %v5029
    %v6350 = vunpack.c.l.b16 %v5030
    %v6351 = vunpack.c.h.b16 %v5030
    %v6352 = vunpack.c.l.b16 %v5031
    %v6353 = vunpack.c.h.b16 %v5031
    %v6354 = vunpack.c.l.b16 %v5032
    %v6355 = vunpack.c.h.b16 %v5032
    %v6356 = vunpack.c.l.b16 %v5033
    %v6357 = vunpack.c.h.b16 %v5033
    %v6358 = vunpack.c.l.b16 %v5034
    %v6359 = vunpack.c.h.b16 %v5034
    %v6360 = vunpack.c.l.b16 %v5035
    %v6361 = vunpack.c.h.b16 %v5035
    %v6362 = vunpack.c.l.b16 %v5036
    %v6363 = vunpack.c.h.b16 %v5036
    %v6364 = vunpack.c.l.b16 %v5037
    %v6365 = vunpack.c.h.b16 %v5037
    %v6366 = vunpack.c.l.b16 %v5038
    %v6367 = vunpack.c.h.b16 %v5038
    %v6368 = vunpack.c.l.b16 %v5039
    %v6369 = vunpack.c.h.b16 %v5039
    %v6370 = vunpack.c.l.b16 %v5040
    %v6371 = vunpack.c.h.b16 %v5040
    %v6372 = vunpack.c.l.b16 %v5041
    %v6373 = vunpack.c.h.b16 %v5041
    %v6374 = vunpack.c.l.b16 %v5042
    %v6375 = vunpack.c.h.b16 %v5042
    %v6376 = vunpack.c.l.b16 %v5043
    %v6377 = vunpack.c.h.b16 %v5043
    %v6378 = vunpack.c.l.b16 %v5044
    %v6379 = vunpack.c.h.b16 %v5044
    %v6380 = vunpack.c.l.b16 %v5045
    %v6381 = vunpack.c.h.b16 %v5045
    %v6382 = vunpack.c.l.b16 %v5046
    %v6383 = vunpack.c.h.b16 %v5046
    %v6384 = vunpack.c.l.b16 %v5047
    %v6385 = vunpack.c.h.b16 %v5047
    %v6386 = vunpack.c.l.b16 %v5048
    %v6387 = vunpack.c.h.b16 %v5048
    %v6388 = vunpack.c.l.b16 %v5049
    %v6389 = vunpack.c.h.b16 %v5049
    %v6390 = vunpack.c.l.b16 %v5050
    %v6391 = vunpack.c.h.b16 %v5050
    %v6392 = vunpack.c.l.b16 %v5051
    %v6393 = vunpack.c.h.b16 %v5051
    %v6394 = vunpack.c.l.b16 %v5052
    %v6395 = vunpack.c.h.b16 %v5052
    %v6396 = vunpack.c.l.b16 %v5053
    %v6397 = vunpack.c.h.b16 %v5053
    %v6398 = vunpack.c.l.b16 %v5054
    %v6399 = vunpack.c.h.b16 %v5054
    %v6400 = vunpack.c.l.b16 %v5055
    %v6401 = vunpack.c.h.b16 %v5055
    %v6402 = vunpack.c.l.b16 %v5056
    %v6403 = vunpack.c.h.b16 %v5056
    %v6404 = vunpack.c.l.b16 %v5057
    %v6405 = vunpack.c.h.b16 %v5057
    %v6406 = vunpack.c.l.b16 %v5058
    %v6407 = vunpack.c.h.b16 %v5058
    %v6408 = vunpack.c.l.b16 %v5059
    %v6409 = vunpack.c.h.b16 %v5059
    %v6410 = vunpack.c.l.b16 %v5060
    %v6411 = vunpack.c.h.b16 %v5060
    %v6412 = vunpack.c.l.b16 %v5061
    %v6413 = vunpack.c.h.b16 %v5061
    %v6414 = vunpack.c.l.b16 %v5062
    %v6415 = vunpack.c.h.b16 %v5062
    %v6416 = vunpack.c.l.b16 %v5063
    %v6417 = vunpack.c.h.b16 %v5063
    %v6418 = vunpack.c.l.b16 %v5064
    %v6419 = vunpack.c.h.b16 %v5064
    %v6420 = vunpack.c.l.b16 %v5065
    %v6421 = vunpack.c.h.b16 %v5065
    %v6422 = vunpack.c.l.b16 %v5066
    %v6423 = vunpack.c.h.b16 %v5066
    %v6424 = vunpack.c.l.b16 %v5067
    %v6425 = vunpack.c.h.b16 %v5067
    %v6426 = vunpack.c.l.b16 %v5068
    %v6427 = vunpack.c.h.b16 %v5068
    %v6428 = vunpack.c.l.b16 %v5069
    %v6429 = vunpack.c.h.b16 %v5069
    %v6430 = vunpack.c.l.b16 %v5070
    %v6431 = vunpack.c.h.b16 %v5070
    %v6432 = vunpack.c.l.b16 %v5071
    %v6433 = vunpack.c.h.b16 %v5071
    %v6434 = vunpack.c.l.b16 %v5072
    %v6435 = vunpack.c.h.b16 %v5072
    %v6436 = vunpack.c.l.b16 %v5073
    %v6437 = vunpack.c.h.b16 %v5073
    %v6438 = vunpack.c.l.b16 %v5074
    %v6439 = vunpack.c.h.b16 %v5074
    %v6440 = vunpack.c.l.b16 %v5075
    %v6441 = vunpack.c.h.b16 %v5075
    %v6442 = vunpack.c.l.b16 %v5076
    %v6443 = vunpack.c.h.b16 %v5076
    %v6444 = vunpack.c.l.b16 %v5077
    %v6445 = vunpack.c.h.b16 %v5077
    %v6446 = vunpack.c.l.b16 %v5078
    %v6447 = vunpack.c.h.b16 %v5078
    %v6448 = vunpack.c.l.b16 %v5079
    %v6449 = vunpack.c.h.b16 %v5079
    %v6450 = vunpack.c.l.b16 %v5080
    %v6451 = vunpack.c.h.b16 %v5080
    %v6452 = vunpack.c.l.b16 %v5081
    %v6453 = vunpack.c.h.b16 %v5081
    %v6454 = vunpack.c.l.b16 %v5082
    %v6455 = vunpack.c.h.b16 %v5082
    %v6456 = vunpack.c.l.b16 %v5083
    %v6457 = vunpack.c.h.b16 %v5083
    %v6458 = vunpack.c.l.b16 %v5084
    %v6459 = vunpack.c.h.b16 %v5084
    %v6460 = vunpack.c.l.b16 %v5085
    %v6461 = vunpack.c.h.b16 %v5085
    %v6462 = vunpack.c.l.b16 %v5086
    %v6463 = vunpack.c.h.b16 %v5086
    %v6464 = vunpack.c.l.b16 %v5087
    %v6465 = vunpack.c.h.b16 %v5087
    %v6466 = vunpack.c.l.b16 %v5088
    %v6467 = vunpack.c.h.b16 %v5088
    %v6468 = vunpack.c.l.b16 %v5089
    %v6469 = vunpack.c.h.b16 %v5089
    %v6470 = vunpack.c.l.b16 %v5090
    %v6471 = vunpack.c.h.b16 %v5090
    %v6472 = vunpack.c.l.b16 %v5091
    %v6473 = vunpack.c.h.b16 %v5091
    %v6474 = vunpack.c.l.b16 %v5092
    %v6475 = vunpack.c.h.b16 %v5092
    %v6476 = vunpack.c.l.b16 %v5093
    %v6477 = vunpack.c.h.b16 %v5093
    %v6478 = vunpack.c.l.b16 %v5094
    %v6479 = vunpack.c.h.b16 %v5094
    %v6480 = vunpack.c.l.b16 %v5095
    %v6481 = vunpack.c.h.b16 %v5095
    %v6482 = vunpack.c.l.b16 %v5096
    %v6483 = vunpack.c.h.b16 %v5096
    %v6484 = vunpack.c.l.b16 %v5097
    %v6485 = vunpack.c.h.b16 %v5097
    %v6486 = vunpack.c.l.b16 %v5098
    %v6487 = vunpack.c.h.b16 %v5098
    %v6488 = vunpack.c.l.b16 %v5099
    %v6489 = vunpack.c.h.b16 %v5099
    %v6490 = vunpack.c.l.b16 %v5100
    %v6491 = vunpack.c.h.b16 %v5100
    %v6492 = vunpack.c.l.b16 %v5101
    %v6493 = vunpack.c.h.b16 %v5101
    %v6494 = vunpack.c.l.b16 %v5102
    %v6495 = vunpack.c.h.b16 %v5102
    %v6496 = vunpack.c.l.b16 %v5103
    %v6497 = vunpack.c.h.b16 %v5103
    %v6498 = vunpack.c.l.b16 %v5104
    %v6499 = vunpack.c.h.b16 %v5104
    %v6500 = vunpack.c.l.b16 %v5105
    %v6501 = vunpack.c.h.b16 %v5105
    %v6502 = vunpack.c.l.b16 %v5106
    %v6503 = vunpack.c.h.b16 %v5106
    %v6504 = vunpack.c.l.b16 %v5107
    %v6505 = vunpack.c.h.b16 %v5107
    %v6506 = vunpack.c.l.b16 %v5108
    %v6507 = vunpack.c.h.b16 %v5108
    %v6508 = vunpack.c.l.b16 %v5109
    %v6509 = vunpack.c.h.b16 %v5109
    %v6510 = vunpack.c.l.b16 %v5110
    %v6511 = vunpack.c.h.b16 %v5110
    %v6512 = vunpack.c.l.b16 %v5111
    %v6513 = vunpack.c.h.b16 %v5111
    %v6514 = vunpack.c.l.b16 %v5112
    %v6515 = vunpack.c.h.b16 %v5112
    %v6516 = vunpack.c.l.b16 %v5113
    %v6517 = vunpack.c.h.b16 %v5113
    %v6518 = vunpack.c.l.b16 %v5114
    %v6519 = vunpack.c.h.b16 %v5114
    %v6520 = vunpack.c.l.b16 %v5115
    %v6521 = vunpack.c.h.b16 %v5115
    %v6522 = vunpack.c.l.b16 %v5116
    %v6523 = vunpack.c.h.b16 %v5116
    %v6524 = vunpack.c.l.b16 %v5117
    %v6525 = vunpack.c.h.b16 %v5117
    %v6526 = vunpack.c.l.b16 %v5118
    %v6527 = vunpack.c.h.b16 %v5118
    %v6528 = vunpack.c.l.b16 %v5119
    %v6529 = vunpack.c.h.b16 %v5119
    %v6530 = vunpack.c.l.b16 %v5120
    %v6531 = vunpack.c.h.b16 %v5120
    %v6532 = vunpack.c.l.b16 %v5121
    %v6533 = vunpack.c.h.b16 %v5121
    %v6534 = vunpack.c.l.b16 %v5122
    %v6535 = vunpack.c.h.b16 %v5122
    %v6536 = vunpack.c.l.b16 %v5123
    %v6537 = vunpack.c.h.b16 %v5123
    %v6538 = vunpack.c.l.b16 %v5124
    %v6539 = vunpack.c.h.b16 %v5124
    %v6540 = vunpack.c.l.b16 %v5125
    %v6541 = vunpack.c.h.b16 %v5125
    %v6542 = vunpack.c.l.b16 %v5126
    %v6543 = vunpack.c.h.b16 %v5126
    %v6544 = vunpack.c.l.b16 %v5127
    %v6545 = vunpack.c.h.b16 %v5127
    %v6546 = vunpack.c.l.b16 %v5128
    %v6547 = vunpack.c.h.b16 %v5128
    %v6548 = vunpack.c.l.b16 %v5129
    %v6549 = vunpack.c.h.b16 %v5129
    %v6550 = vunpack.c.l.b16 %v5130
    %v6551 = vunpack.c.h.b16 %v5130
    %v6552 = vunpack.c.l.b16 %v5131
    %v6553 = vunpack.c.h.b16 %v5131
    %v6554 = vunpack.c.l.b16 %v5132
    %v6555 = vunpack.c.h.b16 %v5132
    %v6556 = vunpack.c.l.b16 %v5133
    %v6557 = vunpack.c.h.b16 %v5133
    %v6558 = vunpack.c.l.b16 %v5134
    %v6559 = vunpack.c.h.b16 %v5134
    %v6560 = vunpack.c.l.b16 %v5135
    %v6561 = vunpack.c.h.b16 %v5135
    %v6562 = vunpack.c.l.b16 %v5136
    %v6563 = vunpack.c.h.b16 %v5136
    %v6564 = vunpack.c.l.b16 %v5137
    %v6565 = vunpack.c.h.b16 %v5137
    %v6566 = vunpack.c.l.b16 %v5138
    %v6567 = vunpack.c.h.b16 %v5138
    %v6568 = vunpack.c.l.b16 %v5139
    %v6569 = vunpack.c.h.b16 %v5139
    %v6570 = vunpack.c.l.b16 %v5140
    %v6571 = vunpack.c.h.b16 %v5140
    %v6572 = vunpack.c.l.b16 %v5141
    %v6573 = vunpack.c.h.b16 %v5141
    %v6574 = vunpack.c.l.b16 %v5142
    %v6575 = vunpack.c.h.b16 %v5142
    %v6576 = vunpack.c.l.b16 %v5143
    %v6577 = vunpack.c.h.b16 %v5143
    %v6578 = vunpack.c.l.b16 %v5144
    %v6579 = vunpack.c.h.b16 %v5144
    %v6580 = vunpack.c.l.b16 %v5145
    %v6581 = vunpack.c.h.b16 %v5145
    %v6582 = vunpack.c.l.b16 %v5146
    %v6583 = vunpack.c.h.b16 %v5146
    %v6584 = vunpack.c.l.b16 %v5147
    %v6585 = vunpack.c.h.b16 %v5147
    %v6586 = vunpack.c.l.b16 %v5148
    %v6587 = vunpack.c.h.b16 %v5148
    %v6588 = vunpack.c.l.b16 %v5149
    %v6589 = vunpack.c.h.b16 %v5149
    %v6590 = vunpack.c.l.b16 %v5150
    %v6591 = vunpack.c.h.b16 %v5150
    %v6592 = vunpack.c.l.b16 %v5151
    %v6593 = vunpack.c.h.b16 %v5151
    %v6594 = vunpack.c.l.b16 %v5152
    %v6595 = vunpack.c.h.b16 %v5152
    %v6596 = vunpack.c.l.b16 %v5153
    %v6597 = vunpack.c.h.b16 %v5153
    %v6598 = vunpack.c.l.b16 %v5154
    %v6599 = vunpack.c.h.b16 %v5154
    %v6600 = vunpack.c.l.b16 %v5155
    %v6601 = vunpack.c.h.b16 %v5155
    %v6602 = vunpack.c.l.b16 %v5156
    %v6603 = vunpack.c.h.b16 %v5156
    %v6604 = vunpack.c.l.b16 %v5157
    %v6605 = vunpack.c.h.b16 %v5157
    %v6606 = vunpack.c.l.b16 %v5158
    %v6607 = vunpack.c.h.b16 %v5158
    %v6608 = vunpack.c.l.b16 %v5159
    %v6609 = vunpack.c.h.b16 %v5159
    %v6610 = vunpack.c.l.b16 %v5160
    %v6611 = vunpack.c.h.b16 %v5160
    %v6612 = vunpack.c.l.b16 %v5161
    %v6613 = vunpack.c.h.b16 %v5161
    %v6614 = vunpack.c.l.b16 %v5162
    %v6615 = vunpack.c.h.b16 %v5162
    %v6616 = vunpack.c.l.b16 %v5163
    %v6617 = vunpack.c.h.b16 %v5163
    %v6618 = vunpack.c.l.b16 %v5164
    %v6619 = vunpack.c.h.b16 %v5164
    %v6620 = vunpack.c.l.b16 %v5165
    %v6621 = vunpack.c.h.b16 %v5165
    %v6622 = vunpack.c.l.b16 %v5166
    %v6623 = vunpack.c.h.b16 %v5166
    %v6624 = vunpack.c.l.b16 %v5167
    %v6625 = vunpack.c.h.b16 %v5167
    %v6626 = vunpack.c.l.b16 %v5168
    %v6627 = vunpack.c.h.b16 %v5168
    %v6628 = vunpack.c.l.b16 %v5169
    %v6629 = vunpack.c.h.b16 %v5169
    %v6630 = vunpack.c.l.b16 %v5170
    %v6631 = vunpack.c.h.b16 %v5170
    %v6632 = vunpack.c.l.b16 %v5171
    %v6633 = vunpack.c.h.b16 %v5171
    %v6634 = vunpack.c.l.b16 %v5172
    %v6635 = vunpack.c.h.b16 %v5172
    %v6636 = vunpack.c.l.b16 %v5173
    %v6637 = vunpack.c.h.b16 %v5173
    %v6638 = vunpack.c.l.b16 %v5174
    %v6639 = vunpack.c.h.b16 %v5174
    %v6640 = vunpack.c.l.b16 %v5175
    %v6641 = vunpack.c.h.b16 %v5175
    %v6642 = vunpack.c.l.b16 %v5176
    %v6643 = vunpack.c.h.b16 %v5176
    %v6644 = vunpack.c.l.b16 %v5177
    %v6645 = vunpack.c.h.b16 %v5177
    %v6646 = vunpack.c.l.b16 %v5178
    %v6647 = vunpack.c.h.b16 %v5178
    %v6648 = vunpack.c.l.b16 %v5179
    %v6649 = vunpack.c.h.b16 %v5179
    %v6650 = vunpack.c.l.b16 %v5180
    %v6651 = vunpack.c.h.b16 %v5180
    %v6652 = vunpack.c.l.b16 %v5181
    %v6653 = vunpack.c.h.b16 %v5181
    %v6654 = vunpack.c.l.b16 %v5182
    %v6655 = vunpack.c.h.b16 %v5182
    %v6656 = vunpack.c.l.b16 %v5183
    %v6657 = vunpack.c.h.b16 %v5183
    %v6658 = vunpack.c.l.b16 %v5184
    %v6659 = vunpack.c.h.b16 %v5184
    %v6660 = vunpack.c.l.b16 %v5185
    %v6661 = vunpack.c.h.b16 %v5185
    %v6662 = vunpack.c.l.b16 %v5186
    %v6663 = vunpack.c.h.b16 %v5186
    %v6664 = vunpack.c.l.b16 %v5187
    %v6665 = vunpack.c.h.b16 %v5187
    %v6666 = vunpack.c.l.b16 %v5188
    %v6667 = vunpack.c.h.b16 %v5188
    %v6668 = vunpack.c.l.b16 %v5189
    %v6669 = vunpack.c.h.b16 %v5189
    %v6670 = vunpack.c.l.b16 %v5190
    %v6671 = vunpack.c.h.b16 %v5190
    %v6672 = vunpack.c.l.b16 %v5191
    %v6673 = vunpack.c.h.b16 %v5191
    %v6674 = vunpack.c.l.b16 %v5192
    %v6675 = vunpack.c.h.b16 %v5192
    %v6676 = vunpack.c.l.b16 %v5193
    %v6677 = vunpack.c.h.b16 %v5193
    %v6678 = vunpack.c.l.b16 %v5194
    %v6679 = vunpack.c.h.b16 %v5194
    %v6680 = vunpack.c.l.b16 %v5195
    %v6681 = vunpack.c.h.b16 %v5195
    %v6682 = vunpack.c.l.b16 %v5196
    %v6683 = vunpack.c.h.b16 %v5196
    %v6684 = vunpack.c.l.b16 %v5197
    %v6685 = vunpack.c.h.b16 %v5197
    %v6686 = vunpack.c.l.b16 %v5198
    %v6687 = vunpack.c.h.b16 %v5198
    %v6688 = vunpack.c.l.b16 %v5199
    %v6689 = vunpack.c.h.b16 %v5199
    %v6690 = vunpack.c.l.b16 %v5200
    %v6691 = vunpack.c.h.b16 %v5200
    %v6692 = vunpack.c.l.b16 %v5201
    %v6693 = vunpack.c.h.b16 %v5201
    %v6694 = vunpack.c.l.b16 %v5202
    %v6695 = vunpack.c.h.b16 %v5202
    %v6696 = vunpack.c.l.b16 %v5203
    %v6697 = vunpack.c.h.b16 %v5203
    %v6698 = vunpack.c.l.b16 %v5204
    %v6699 = vunpack.c.h.b16 %v5204
    %v6700 = vunpack.c.l.b16 %v5205
    %v6701 = vunpack.c.h.b16 %v5205
    %v6702 = vunpack.c.l.b16 %v5206
    %v6703 = vunpack.c.h.b16 %v5206
    %v6704 = vunpack.c.l.b16 %v5207
    %v6705 = vunpack.c.h.b16 %v5207
    %v6706 = vunpack.c.l.b16 %v5208
    %v6707 = vunpack.c.h.b16 %v5208
    %v6708 = vunpack.c.l.b16 %v5209
    %v6709 = vunpack.c.h.b16 %v5209
    %v6710 = vunpack.c.l.b16 %v5210
    %v6711 = vunpack.c.h.b16 %v5210
    %v6712 = vunpack.c.l.b16 %v5211
    %v6713 = vunpack.c.h.b16 %v5211
    %v6714 = vunpack.c.l.b16 %v5212
    %v6715 = vunpack.c.h.b16 %v5212
    %v6716 = vunpack.c.l.b16 %v5213
    %v6717 = vunpack.c.h.b16 %v5213
    %v6718 = vunpack.c.l.b16 %v5214
    %v6719 = vunpack.c.h.b16 %v5214
    %v6720 = vunpack.c.l.b16 %v5215
    %v6721 = vunpack.c.h.b16 %v5215
    %v6722 = vunpack.c.l.b16 %v5216
    %v6723 = vunpack.c.h.b16 %v5216
    %v6724 = vunpack.c.l.b16 %v5217
    %v6725 = vunpack.c.h.b16 %v5217
    %v6726 = vunpack.c.l.b16 %v5218
    %v6727 = vunpack.c.h.b16 %v5218
    %v6728 = vunpack.c.l.b16 %v5219
    %v6729 = vunpack.c.h.b16 %v5219
    %v6730 = vunpack.c.l.b16 %v5220
    %v6731 = vunpack.c.h.b16 %v5220
    %v6732 = vunpack.c.l.b16 %v5221
    %v6733 = vunpack.c.h.b16 %v5221
    %v6734 = vunpack.c.l.b16 %v5222
    %v6735 = vunpack.c.h.b16 %v5222
    %v6736 = vunpack.c.l.b16 %v5223
    %v6737 = vunpack.c.h.b16 %v5223
    %v6738 = vunpack.c.l.b16 %v5224
    %v6739 = vunpack.c.h.b16 %v5224
    %v6740 = vunpack.c.l.b16 %v5225
    %v6741 = vunpack.c.h.b16 %v5225
    %v6742 = vunpack.c.l.b16 %v5226
    %v6743 = vunpack.c.h.b16 %v5226
    %v6744 = vunpack.c.l.b16 %v5227
    %v6745 = vunpack.c.h.b16 %v5227
    %v6746 = vunpack.c.l.b16 %v5228
    %v6747 = vunpack.c.h.b16 %v5228
    %v6748 = vunpack.c.l.b16 %v5229
    %v6749 = vunpack.c.h.b16 %v5229
    %v6750 = vunpack.c.l.b16 %v5230
    %v6751 = vunpack.c.h.b16 %v5230
    %v6752 = vunpack.c.l.b16 %v5231
    %v6753 = vunpack.c.h.b16 %v5231
    %v6754 = vunpack.c.l.b16 %v5232
    %v6755 = vunpack.c.h.b16 %v5232
    %v6756 = vunpack.c.l.b16 %v5233
    %v6757 = vunpack.c.h.b16 %v5233
    %v6758 = vunpack.c.l.b16 %v5234
    %v6759 = vunpack.c.h.b16 %v5234
    %v6760 = vunpack.c.l.b16 %v5235
    %v6761 = vunpack.c.h.b16 %v5235
    %v6762 = vunpack.c.l.b16 %v5236
    %v6763 = vunpack.c.h.b16 %v5236
    %v6764 = vunpack.c.l.b16 %v5237
    %v6765 = vunpack.c.h.b16 %v5237
    %v6766 = vunpack.c.l.b16 %v5238
    %v6767 = vunpack.c.h.b16 %v5238
    %v6768 = vunpack.c.l.b16 %v5239
    %v6769 = vunpack.c.h.b16 %v5239
    %v6770 = vunpack.c.l.b16 %v5240
    %v6771 = vunpack.c.h.b16 %v5240
    %v6772 = vunpack.c.l.b16 %v5241
    %v6773 = vunpack.c.h.b16 %v5241
    %v6774 = vunpack.c.l.b16 %v5242
    %v6775 = vunpack.c.h.b16 %v5242
    %v6776 = vunpack.c.l.b16 %v5243
    %v6777 = vunpack.c.h.b16 %v5243
    %v6778 = vunpack.c.l.b16 %v5244
    %v6779 = vunpack.c.h.b16 %v5244
    %v6780 = vunpack.c.l.b16 %v5245
    %v6781 = vunpack.c.h.b16 %v5245
    %v6782 = vunpack.c.l.b16 %v5246
    %v6783 = vunpack.c.h.b16 %v5246
    %v6784 = vunpack.c.l.b16 %v5247
    %v6785 = vunpack.c.h.b16 %v5247
    %v6786 = vunpack.c.l.b16 %v5248
    %v6787 = vunpack.c.h.b16 %v5248
    %v6788 = vunpack.c.l.b16 %v5249
    %v6789 = vunpack.c.h.b16 %v5249
    %v6790 = vunpack.c.l.b16 %v5250
    %v6791 = vunpack.c.h.b16 %v5250
    %v6792 = vunpack.c.l.b16 %v5251
    %v6793 = vunpack.c.h.b16 %v5251
    %v6794 = vunpack.c.l.b16 %v5252
    %v6795 = vunpack.c.h.b16 %v5252
    %v6796 = vunpack.c.l.b16 %v5253
    %v6797 = vunpack.c.h.b16 %v5253
    %v6798 = vunpack.c.l.b16 %v5254
    %v6799 = vunpack.c.h.b16 %v5254
    %v6800 = vunpack.c.l.b16 %v5255
    %v6801 = vunpack.c.h.b16 %v5255
    %v6802 = vunpack.c.l.b16 %v5256
    %v6803 = vunpack.c.h.b16 %v5256
    %v6804 = vunpack.c.l.b16 %v5257
    %v6805 = vunpack.c.h.b16 %v5257
    %v6806 = vunpack.c.l.b16 %v5258
    %v6807 = vunpack.c.h.b16 %v5258
    %v6808 = vunpack.c.l.b16 %v5259
    %v6809 = vunpack.c.h.b16 %v5259
    %v6810 = vunpack.c.l.b16 %v5260
    %v6811 = vunpack.c.h.b16 %v5260
    %v6812 = vunpack.c.l.b16 %v5261
    %v6813 = vunpack.c.h.b16 %v5261
    %v6814 = vunpack.c.l.b16 %v5262
    %v6815 = vunpack.c.h.b16 %v5262
    %v6816 = vunpack.c.l.b16 %v5263
    %v6817 = vunpack.c.h.b16 %v5263
    %v6818 = vunpack.c.l.b16 %v5264
    %v6819 = vunpack.c.h.b16 %v5264
    %v6820 = vunpack.c.l.b16 %v5265
    %v6821 = vunpack.c.h.b16 %v5265
    %v6822 = vunpack.c.l.b16 %v5266
    %v6823 = vunpack.c.h.b16 %v5266
    %v6824 = vunpack.c.l.b16 %v5267
    %v6825 = vunpack.c.h.b16 %v5267
    %v6826 = vunpack.c.l.b16 %v5268
    %v6827 = vunpack.c.h.b16 %v5268
    %v6828 = vunpack.c.l.b16 %v5269
    %v6829 = vunpack.c.h.b16 %v5269
    %v6830 = vunpack.c.l.b16 %v5270
    %v6831 = vunpack.c.h.b16 %v5270
    %v6832 = vunpack.c.l.b16 %v5271
    %v6833 = vunpack.c.h.b16 %v5271
    %v6834 = vunpack.c.l.b16 %v5272
    %v6835 = vunpack.c.h.b16 %v5272
    %v6836 = vunpack.c.l.b16 %v5273
    %v6837 = vunpack.c.h.b16 %v5273
    %v6838 = vunpack.c.l.b16 %v5274
    %v6839 = vunpack.c.h.b16 %v5274
    %v6840 = vunpack.c.l.b16 %v5275
    %v6841 = vunpack.c.h.b16 %v5275
    %v6842 = vunpack.c.l.b16 %v5276
    %v6843 = vunpack.c.h.b16 %v5276
    %v6844 = vunpack.c.l.b16 %v5277
    %v6845 = vunpack.c.h.b16 %v5277
    %v6846 = vunpack.c.l.b16 %v5278
    %v6847 = vunpack.c.h.b16 %v5278
    %v6848 = vunpack.c.l.b16 %v5279
    %v6849 = vunpack.c.h.b16 %v5279
    %v6850 = vunpack.c.l.b16 %v5280
    %v6851 = vunpack.c.h.b16 %v5280
    %v6852 = vunpack.c.l.b16 %v5281
    %v6853 = vunpack.c.h.b16 %v5281
    %v6854 = vunpack.c.l.b16 %v5282
    %v6855 = vunpack.c.h.b16 %v5282
    %v6856 = vunpack.c.l.b16 %v5283
    %v6857 = vunpack.c.h.b16 %v5283
    %v6858 = vunpack.c.l.b16 %v5284
    %v6859 = vunpack.c.h.b16 %v5284
    %v6860 = vunpack.c.l.b16 %v5285
    %v6861 = vunpack.c.h.b16 %v5285
    %v6862 = vunpack.c.l.b16 %v5286
    %v6863 = vunpack.c.h.b16 %v5286
    %v6864 = vunpack.c.l.b16 %v5287
    %v6865 = vunpack.c.h.b16 %v5287
    %v6866 = vunpack.c.l.b16 %v5288
    %v6867 = vunpack.c.h.b16 %v5288
    %v6868 = vunpack.c.l.b16 %v5289
    %v6869 = vunpack.c.h.b16 %v5289
    %v6870 = vunpack.c.l.b16 %v5290
    %v6871 = vunpack.c.h.b16 %v5290
    %v6872 = vunpack.c.l.b16 %v5291
    %v6873 = vunpack.c.h.b16 %v5291
    %v6874 = vunpack.c.l.b16 %v5292
    %v6875 = vunpack.c.h.b16 %v5292
    %v6876 = vunpack.c.l.b16 %v5293
    %v6877 = vunpack.c.h.b16 %v5293
    %v6878 = vunpack.c.l.b16 %v5294
    %v6879 = vunpack.c.h.b16 %v5294
    %v6880 = vunpack.c.l.b16 %v5295
    %v6881 = vunpack.c.h.b16 %v5295
    %v6882 = vunpack.c.l.b16 %v5296
    %v6883 = vunpack.c.h.b16 %v5296
    %v6884 = vunpack.c.l.b16 %v5297
    %v6885 = vunpack.c.h.b16 %v5297
    %v6886 = vunpack.c.l.b16 %v5298
    %v6887 = vunpack.c.h.b16 %v5298
    %v6888 = vunpack.c.l.b16 %v5299
    %v6889 = vunpack.c.h.b16 %v5299
    %v6890 = vunpack.c.l.b16 %v5300
    %v6891 = vunpack.c.h.b16 %v5300
    %v6892 = vunpack.c.l.b16 %v5301
    %v6893 = vunpack.c.h.b16 %v5301
    %v6894 = vunpack.c.l.b16 %v5302
    %v6895 = vunpack.c.h.b16 %v5302
    %v6896 = vunpack.c.l.b16 %v5303
    %v6897 = vunpack.c.h.b16 %v5303
    %v6898 = vunpack.c.l.b16 %v5304
    %v6899 = vunpack.c.h.b16 %v5304
    %v6900 = vunpack.c.l.b16 %v5305
    %v6901 = vunpack.c.h.b16 %v5305
    %v6902 = vunpack.c.l.b16 %v5306
    %v6903 = vunpack.c.h.b16 %v5306
    %v6904 = vunpack.c.l.b16 %v5307
    %v6905 = vunpack.c.h.b16 %v5307
    %v6906 = vunpack.c.l.b16 %v5308
    %v6907 = vunpack.c.h.b16 %v5308
    %v6908 = vunpack.c.l.b16 %v5309
    %v6909 = vunpack.c.h.b16 %v5309
    %v6910 = vunpack.c.l.b16 %v5310
    %v6911 = vunpack.c.h.b16 %v5310
    %v6912 = vunpack.c.l.b16 %v5311
    %v6913 = vunpack.c.h.b16 %v5311
    %v6914 = vunpack.c.l.b16 %v5312
    %v6915 = vunpack.c.h.b16 %v5312
    %v6916 = vunpack.c.l.b16 %v5313
    %v6917 = vunpack.c.h.b16 %v5313
    %v6918 = vunpack.c.l.b16 %v5314
    %v6919 = vunpack.c.h.b16 %v5314
    %v6920 = vunpack.c.l.b16 %v5315
    %v6921 = vunpack.c.h.b16 %v5315
    %v6922 = vunpack.c.l.b16 %v5316
    %v6923 = vunpack.c.h.b16 %v5316
    %v6924 = vunpack.c.l.b16 %v5317
    %v6925 = vunpack.c.h.b16 %v5317
    %v6926 = vunpack.c.l.b16 %v5318
    %v6927 = vunpack.c.h.b16 %v5318
    %v6928 = vunpack.c.l.b16 %v5319
    %v6929 = vunpack.c.h.b16 %v5319
    %v6930 = vunpack.c.l.b16 %v5320
    %v6931 = vunpack.c.h.b16 %v5320
    %v6932 = vunpack.c.l.b16 %v5321
    %v6933 = vunpack.c.h.b16 %v5321
    %v6934 = vunpack.c.l.b16 %v5322
    %v6935 = vunpack.c.h.b16 %v5322
    %v6936 = vunpack.c.l.b16 %v5323
    %v6937 = vunpack.c.h.b16 %v5323
    %v6938 = vunpack.c.l.b16 %v5324
    %v6939 = vunpack.c.h.b16 %v5324
    %v6940 = vunpack.c.l.b16 %v5325
    %v6941 = vunpack.c.h.b16 %v5325
    %v6942 = vunpack.c.l.b16 %v5326
    %v6943 = vunpack.c.h.b16 %v5326
    %v6944 = vunpack.c.l.b16 %v5327
    %v6945 = vunpack.c.h.b16 %v5327
    %v6946 = vunpack.c.l.b16 %v5328
    %v6947 = vunpack.c.h.b16 %v5328
    %v6948 = vunpack.c.l.b16 %v5329
    %v6949 = vunpack.c.h.b16 %v5329
    %v6950 = vpack.c.b16 %v5942, %v5926
    %v6951 = vpack.c.b16 %v5943, %v5927
    %v6952 = vpack.c.b16 %v5944, %v5928
    %v6953 = vpack.c.b16 %v5945, %v5929
    %v6954 = vpack.c.b16 %v5946, %v5930
    %v6955 = vpack.c.b16 %v5947, %v5931
    %v6956 = vpack.c.b16 %v5948, %v5932
    %v6957 = vpack.c.b16 %v5949, %v5933
    %v6958 = vpack.c.b16 %v5950, %v5934
    %v6959 = vpack.c.b16 %v5951, %v5935
    %v6960 = vpack.c.b16 %v5952, %v5936
    %v6961 = vpack.c.b16 %v5953, %v5937
    %v6962 = vpack.c.b16 %v5954, %v5938
    %v6963 = vpack.c.b16 %v5955, %v5939
    %v6964 = vpack.c.b16 %v5956, %v5940
    %v6965 = vpack.c.b16 %v5957, %v5941
    %v6966 = vpack.c.b16 %v5974, %v5958
    %v6967 = vpack.c.b16 %v5975, %v5959
    %v6968 = vpack.c.b16 %v5976, %v5960
    %v6969 = vpack.c.b16 %v5977, %v5961
    %v6970 = vpack.c.b16 %v5978, %v5962
    %v6971 = vpack.c.b16 %v5979, %v5963
    %v6972 = vpack.c.b16 %v5980, %v5964
    %v6973 = vpack.c.b16 %v5981, %v5965
    %v6974 = vpack.c.b16 %v5982, %v5966
    %v6975 = vpack.c.b16 %v5983, %v5967
    %v6976 = vpack.c.b16 %v5984, %v5968
    %v6977 = vpack.c.b16 %v5985, %v5969
    %v6978 = vpack.c.b16 %v5986, %v5970
    %v6979 = vpack.c.b16 %v5987, %v5971
    %v6980 = vpack.c.b16 %v5988, %v5972
    %v6981 = vpack.c.b16 %v5989, %v5973
    %v6982 = vpack.c.b16 %v6006, %v5990
    %v6983 = vpack.c.b16 %v6007, %v5991
    %v6984 = vpack.c.b16 %v6008, %v5992
    %v6985 = vpack.c.b16 %v6009, %v5993
    %v6986 = vpack.c.b16 %v6010, %v5994
    %v6987 = vpack.c.b16 %v6011, %v5995
    %v6988 = vpack.c.b16 %v6012, %v5996
    %v6989 = vpack.c.b16 %v6013, %v5997
    %v6990 = vpack.c.b16 %v6014, %v5998
    %v6991 = vpack.c.b16 %v6015, %v5999
    %v6992 = vpack.c.b16 %v6016, %v6000
    %v6993 = vpack.c.b16 %v6017, %v6001
    %v6994 = vpack.c.b16 %v6018, %v6002
    %v6995 = vpack.c.b16 %v6019, %v6003
    %v6996 = vpack.c.b16 %v6020, %v6004
    %v6997 = vpack.c.b16 %v6021, %v6005
    %v6998 = vpack.c.b16 %v6038, %v6022
    %v6999 = vpack.c.b16 %v6039, %v6023
    %v7000 = vpack.c.b16 %v6040, %v6024
    %v7001 = vpack.c.b16 %v6041, %v6025
    %v7002 = vpack.c.b16 %v6042, %v6026
    %v7003 = vpack.c.b16 %v6043, %v6027
    %v7004 = vpack.c.b16 %v6044, %v6028
    %v7005 = vpack.c.b16 %v6045, %v6029
    %v7006 = vpack.c.b16 %v6046, %v6030
    %v7007 = vpack.c.b16 %v6047, %v6031
    %v7008 = vpack.c.b16 %v6048, %v6032
    %v7009 = vpack.c.b16 %v6049, %v6033
    %v7010 = vpack.c.b16 %v6050, %v6034
    %v7011 = vpack.c.b16 %v6051, %v6035
    %v7012 = vpack.c.b16 %v6052, %v6036
    %v7013 = vpack.c.b16 %v6053, %v6037
    %v7014 = vpack.c.b16 %v6070, %v6054
    %v7015 = vpack.c.b16 %v6071, %v6055
    %v7016 = vpack.c.b16 %v6072, %v6056
    %v7017 = vpack.c.b16 %v6073, %v6057
    %v7018 = vpack.c.b16 %v6074, %v6058
    %v7019 = vpack.c.b16 %v6075, %v6059
    %v7020 = vpack.c.b16 %v6076, %v6060
    %v7021 = vpack.c.b16 %v6077, %v6061
    %v7022 = vpack.c.b16 %v6078, %v6062
    %v7023 = vpack.c.b16 %v6079, %v6063
    %v7024 = vpack.c.b16 %v6080, %v6064
    %v7025 = vpack.c.b16 %v6081, %v6065
    %v7026 = vpack.c.b16 %v6082, %v6066
    %v7027 = vpack.c.b16 %v6083, %v6067
    %v7028 = vpack.c.b16 %v6084, %v6068
    %v7029 = vpack.c.b16 %v6085, %v6069
    %v7030 = vpack.c.b16 %v6102, %v6086
    %v7031 = vpack.c.b16 %v6103, %v6087
    %v7032 = vpack.c.b16 %v6104, %v6088
    %v7033 = vpack.c.b16 %v6105, %v6089
    %v7034 = vpack.c.b16 %v6106, %v6090
    %v7035 = vpack.c.b16 %v6107, %v6091
    %v7036 = vpack.c.b16 %v6108, %v6092
    %v7037 = vpack.c.b16 %v6109, %v6093
    %v7038 = vpack.c.b16 %v6110, %v6094
    %v7039 = vpack.c.b16 %v6111, %v6095
    %v7040 = vpack.c.b16 %v6112, %v6096
    %v7041 = vpack.c.b16 %v6113, %v6097
    %v7042 = vpack.c.b16 %v6114, %v6098
    %v7043 = vpack.c.b16 %v6115, %v6099
    %v7044 = vpack.c.b16 %v6116, %v6100
    %v7045 = vpack.c.b16 %v6117, %v6101
    %v7046 = vpack.c.b16 %v6134, %v6118
    %v7047 = vpack.c.b16 %v6135, %v6119
    %v7048 = vpack.c.b16 %v6136, %v6120
    %v7049 = vpack.c.b16 %v6137, %v6121
    %v7050 = vpack.c.b16 %v6138, %v6122
    %v7051 = vpack.c.b16 %v6139, %v6123
    %v7052 = vpack.c.b16 %v6140, %v6124
    %v7053 = vpack.c.b16 %v6141, %v6125
    %v7054 = vpack.c.b16 %v6142, %v6126
    %v7055 = vpack.c.b16 %v6143, %v6127
    %v7056 = vpack.c.b16 %v6144, %v6128
    %v7057 = vpack.c.b16 %v6145, %v6129
    %v7058 = vpack.c.b16 %v6146, %v6130
    %v7059 = vpack.c.b16 %v6147, %v6131
    %v7060 = vpack.c.b16 %v6148, %v6132
    %v7061 = vpack.c.b16 %v6149, %v6133
    %v7062 = vpack.c.b16 %v6166, %v6150
    %v7063 = vpack.c.b16 %v6167, %v6151
    %v7064 = vpack.c.b16 %v6168, %v6152
    %v7065 = vpack.c.b16 %v6169, %v6153
    %v7066 = vpack.c.b16 %v6170, %v6154
    %v7067 = vpack.c.b16 %v6171, %v6155
    %v7068 = vpack.c.b16 %v6172, %v6156
    %v7069 = vpack.c.b16 %v6173, %v6157
    %v7070 = vpack.c.b16 %v6174, %v6158
    %v7071 = vpack.c.b16 %v6175, %v6159
    %v7072 = vpack.c.b16 %v6176, %v6160
    %v7073 = vpack.c.b16 %v6177, %v6161
    %v7074 = vpack.c.b16 %v6178, %v6162
    %v7075 = vpack.c.b16 %v6179, %v6163
    %v7076 = vpack.c.b16 %v6180, %v6164
    %v7077 = vpack.c.b16 %v6181, %v6165
    %v7078 = vpack.c.b16 %v6198, %v6182
    %v7079 = vpack.c.b16 %v6199, %v6183
    %v7080 = vpack.c.b16 %v6200, %v6184
    %v7081 = vpack.c.b16 %v6201, %v6185
    %v7082 = vpack.c.b16 %v6202, %v6186
    %v7083 = vpack.c.b16 %v6203, %v6187
    %v7084 = vpack.c.b16 %v6204, %v6188
    %v7085 = vpack.c.b16 %v6205, %v6189
    %v7086 = vpack.c.b16 %v6206, %v6190
    %v7087 = vpack.c.b16 %v6207, %v6191
    %v7088 = vpack.c.b16 %v6208, %v6192
    %v7089 = vpack.c.b16 %v6209, %v6193
    %v7090 = vpack.c.b16 %v6210, %v6194
    %v7091 = vpack.c.b16 %v6211, %v6195
    %v7092 = vpack.c.b16 %v6212, %v6196
    %v7093 = vpack.c.b16 %v6213, %v6197
    %v7094 = vpack.c.b16 %v6230, %v6214
    %v7095 = vpack.c.b16 %v6231, %v6215
    %v7096 = vpack.c.b16 %v6232, %v6216
    %v7097 = vpack.c.b16 %v6233, %v6217
    %v7098 = vpack.c.b16 %v6234, %v6218
    %v7099 = vpack.c.b16 %v6235, %v6219
    %v7100 = vpack.c.b16 %v6236, %v6220
    %v7101 = vpack.c.b16 %v6237, %v6221
    %v7102 = vpack.c.b16 %v6238, %v6222
    %v7103 = vpack.c.b16 %v6239, %v6223
    %v7104 = vpack.c.b16 %v6240, %v6224
    %v7105 = vpack.c.b16 %v6241, %v6225
    %v7106 = vpack.c.b16 %v6242, %v6226
    %v7107 = vpack.c.b16 %v6243, %v6227
    %v7108 = vpack.c.b16 %v6244, %v6228
    %v7109 = vpack.c.b16 %v6245, %v6229
    %v7110 = vpack.c.b16 %v6262, %v6246
    %v7111 = vpack.c.b16 %v6263, %v6247
    %v7112 = vpack.c.b16 %v6264, %v6248
    %v7113 = vpack.c.b16 %v6265, %v6249
    %v7114 = vpack.c.b16 %v6266, %v6250
    %v7115 = vpack.c.b16 %v6267, %v6251
    %v7116 = vpack.c.b16 %v6268, %v6252
    %v7117 = vpack.c.b16 %v6269, %v6253
    %v7118 = vpack.c.b16 %v6270, %v6254
    %v7119 = vpack.c.b16 %v6271, %v6255
    %v7120 = vpack.c.b16 %v6272, %v6256
    %v7121 = vpack.c.b16 %v6273, %v6257
    %v7122 = vpack.c.b16 %v6274, %v6258
    %v7123 = vpack.c.b16 %v6275, %v6259
    %v7124 = vpack.c.b16 %v6276, %v6260
    %v7125 = vpack.c.b16 %v6277, %v6261
    %v7126 = vpack.c.b16 %v6294, %v6278
    %v7127 = vpack.c.b16 %v6295, %v6279
    %v7128 = vpack.c.b16 %v6296, %v6280
    %v7129 = vpack.c.b16 %v6297, %v6281
    %v7130 = vpack.c.b16 %v6298, %v6282
    %v7131 = vpack.c.b16 %v6299, %v6283
    %v7132 = vpack.c.b16 %v6300, %v6284
    %v7133 = vpack.c.b16 %v6301, %v6285
    %v7134 = vpack.c.b16 %v6302, %v6286
    %v7135 = vpack.c.b16 %v6303, %v6287
    %v7136 = vpack.c.b16 %v6304, %v6288
    %v7137 = vpack.c.b16 %v6305, %v6289
    %v7138 = vpack.c.b16 %v6306, %v6290
    %v7139 = vpack.c.b16 %v6307, %v6291
    %v7140 = vpack.c.b16 %v6308, %v6292
    %v7141 = vpack.c.b16 %v6309, %v6293
    %v7142 = vpack.c.b16 %v6326, %v6310
    %v7143 = vpack.c.b16 %v6327, %v6311
    %v7144 = vpack.c.b16 %v6328, %v6312
    %v7145 = vpack.c.b16 %v6329, %v6313
    %v7146 = vpack.c.b16 %v6330, %v6314
    %v7147 = vpack.c.b16 %v6331, %v6315
    %v7148 = vpack.c.b16 %v6332, %v6316
    %v7149 = vpack.c.b16 %v6333, %v6317
    %v7150 = vpack.c.b16 %v6334, %v6318
    %v7151 = vpack.c.b16 %v6335, %v6319
    %v7152 = vpack.c.b16 %v6336, %v6320
    %v7153 = vpack.c.b16 %v6337, %v6321
    %v7154 = vpack.c.b16 %v6338, %v6322
    %v7155 = vpack.c.b16 %v6339, %v6323
    %v7156 = vpack.c.b16 %v6340, %v6324
    %v7157 = vpack.c.b16 %v6341, %v6325
    %v7158 = vpack.c.b16 %v6358, %v6342
    %v7159 = vpack.c.b16 %v6359, %v6343
    %v7160 = vpack.c.b16 %v6360, %v6344
    %v7161 = vpack.c.b16 %v6361, %v6345
    %v7162 = vpack.c.b16 %v6362, %v6346
    %v7163 = vpack.c.b16 %v6363, %v6347
    %v7164 = vpack.c.b16 %v6364, %v6348
    %v7165 = vpack.c.b16 %v6365, %v6349
    %v7166 = vpack.c.b16 %v6366, %v6350
    %v7167 = vpack.c.b16 %v6367, %v6351
    %v7168 = vpack.c.b16 %v6368, %v6352
    %v7169 = vpack.c.b16 %v6369, %v6353
    %v7170 = vpack.c.b16 %v6370, %v6354
    %v7171 = vpack.c.b16 %v6371, %v6355
    %v7172 = vpack.c.b16 %v6372, %v6356
    %v7173 = vpack.c.b16 %v6373, %v6357
    %v7174 = vpack.c.b16 %v6390, %v6374
    %v7175 = vpack.c.b16 %v6391, %v6375
    %v7176 = vpack.c.b16 %v6392, %v6376
    %v7177 = vpack.c.b16 %v6393, %v6377
    %v7178 = vpack.c.b16 %v6394, %v6378
    %v7179 = vpack.c.b16 %v6395, %v6379
    %v7180 = vpack.c.b16 %v6396, %v6380
    %v7181 = vpack.c.b16 %v6397, %v6381
    %v7182 = vpack.c.b16 %v6398, %v6382
    %v7183 = vpack.c.b16 %v6399, %v6383
    %v7184 = vpack.c.b16 %v6400, %v6384
    %v7185 = vpack.c.b16 %v6401, %v6385
    %v7186 = vpack.c.b16 %v6402, %v6386
    %v7187 = vpack.c.b16 %v6403, %v6387
    %v7188 = vpack.c.b16 %v6404, %v6388
    %v7189 = vpack.c.b16 %v6405, %v6389
    %v7190 = vpack.c.b16 %v6422, %v6406
    %v7191 = vpack.c.b16 %v6423, %v6407
    %v7192 = vpack.c.b16 %v6424, %v6408
    %v7193 = vpack.c.b16 %v6425, %v6409
    %v7194 = vpack.c.b16 %v6426, %v6410
    %v7195 = vpack.c.b16 %v6427, %v6411
    %v7196 = vpack.c.b16 %v6428, %v6412
    %v7197 = vpack.c.b16 %v6429, %v6413
    %v7198 = vpack.c.b16 %v6430, %v6414
    %v7199 = vpack.c.b16 %v6431, %v6415
    %v7200 = vpack.c.b16 %v6432, %v6416
    %v7201 = vpack.c.b16 %v6433, %v6417
    %v7202 = vpack.c.b16 %v6434, %v6418
    %v7203 = vpack.c.b16 %v6435, %v6419
    %v7204 = vpack.c.b16 %v6436, %v6420
    %v7205 = vpack.c.b16 %v6437, %v6421
    %v7206 = vpack.c.b16 %v6454, %v6438
    %v7207 = vpack.c.b16 %v6455, %v6439
    %v7208 = vpack.c.b16 %v6456, %v6440
    %v7209 = vpack.c.b16 %v6457, %v6441
    %v7210 = vpack.c.b16 %v6458, %v6442
    %v7211 = vpack.c.b16 %v6459, %v6443
    %v7212 = vpack.c.b16 %v6460, %v6444
    %v7213 = vpack.c.b16 %v6461, %v6445
    %v7214 = vpack.c.b16 %v6462, %v6446
    %v7215 = vpack.c.b16 %v6463, %v6447
    %v7216 = vpack.c.b16 %v6464, %v6448
    %v7217 = vpack.c.b16 %v6465, %v6449
    %v7218 = vpack.c.b16 %v6466, %v6450
    %v7219 = vpack.c.b16 %v6467, %v6451
    %v7220 = vpack.c.b16 %v6468, %v6452
    %v7221 = vpack.c.b16 %v6469, %v6453
    %v7222 = vpack.c.b16 %v6486, %v6470
    %v7223 = vpack.c.b16 %v6487, %v6471
    %v7224 = vpack.c.b16 %v6488, %v6472
    %v7225 = vpack.c.b16 %v6489, %v6473
    %v7226 = vpack.c.b16 %v6490, %v6474
    %v7227 = vpack.c.b16 %v6491, %v6475
    %v7228 = vpack.c.b16 %v6492, %v6476
    %v7229 = vpack.c.b16 %v6493, %v6477
    %v7230 = vpack.c.b16 %v6494, %v6478
    %v7231 = vpack.c.b16 %v6495, %v6479
    %v7232 = vpack.c.b16 %v6496, %v6480
    %v7233 = vpack.c.b16 %v6497, %v6481
    %v7234 = vpack.c.b16 %v6498, %v6482
    %v7235 = vpack.c.b16 %v6499, %v6483
    %v7236 = vpack.c.b16 %v6500, %v6484
    %v7237 = vpack.c.b16 %v6501, %v6485
    %v7238 = vpack.c.b16 %v6518, %v6502
    %v7239 = vpack.c.b16 %v6519, %v6503
    %v7240 = vpack.c.b16 %v6520, %v6504
    %v7241 = vpack.c.b16 %v6521, %v6505
    %v7242 = vpack.c.b16 %v6522, %v6506
    %v7243 = vpack.c.b16 %v6523, %v6507
    %v7244 = vpack.c.b16 %v6524, %v6508
    %v7245 = vpack.c.b16 %v6525, %v6509
    %v7246 = vpack.c.b16 %v6526, %v6510
    %v7247 = vpack.c.b16 %v6527, %v6511
    %v7248 = vpack.c.b16 %v6528, %v6512
    %v7249 = vpack.c.b16 %v6529, %v6513
    %v7250 = vpack.c.b16 %v6530, %v6514
    %v7251 = vpack.c.b16 %v6531, %v6515
    %v7252 = vpack.c.b16 %v6532, %v6516
    %v7253 = vpack.c.b16 %v6533, %v6517
    %v7254 = vpack.c.b16 %v6550, %v6534
    %v7255 = vpack.c.b16 %v6551, %v6535
    %v7256 = vpack.c.b16 %v6552, %v6536
    %v7257 = vpack.c.b16 %v6553, %v6537
    %v7258 = vpack.c.b16 %v6554, %v6538
    %v7259 = vpack.c.b16 %v6555, %v6539
    %v7260 = vpack.c.b16 %v6556, %v6540
    %v7261 = vpack.c.b16 %v6557, %v6541
    %v7262 = vpack.c.b16 %v6558, %v6542
    %v7263 = vpack.c.b16 %v6559, %v6543
    %v7264 = vpack.c.b16 %v6560, %v6544
    %v7265 = vpack.c.b16 %v6561, %v6545
    %v7266 = vpack.c.b16 %v6562, %v6546
    %v7267 = vpack.c.b16 %v6563, %v6547
    %v7268 = vpack.c.b16 %v6564, %v6548
    %v7269 = vpack.c.b16 %v6565, %v6549
    %v7270 = vpack.c.b16 %v6582, %v6566
    %v7271 = vpack.c.b16 %v6583, %v6567
    %v7272 = vpack.c.b16 %v6584, %v6568
    %v7273 = vpack.c.b16 %v6585, %v6569
    %v7274 = vpack.c.b16 %v6586, %v6570
    %v7275 = vpack.c.b16 %v6587, %v6571
    %v7276 = vpack.c.b16 %v6588, %v6572
    %v7277 = vpack.c.b16 %v6589, %v6573
    %v7278 = vpack.c.b16 %v6590, %v6574
    %v7279 = vpack.c.b16 %v6591, %v6575
    %v7280 = vpack.c.b16 %v6592, %v6576
    %v7281 = vpack.c.b16 %v6593, %v6577
    %v7282 = vpack.c.b16 %v6594, %v6578
    %v7283 = vpack.c.b16 %v6595, %v6579
    %v7284 = vpack.c.b16 %v6596, %v6580
    %v7285 = vpack.c.b16 %v6597, %v6581
    %v7286 = vpack.c.b16 %v6614, %v6598
    %v7287 = vpack.c.b16 %v6615, %v6599
    %v7288 = vpack.c.b16 %v6616, %v6600
    %v7289 = vpack.c.b16 %v6617, %v6601
    %v7290 = vpack.c.b16 %v6618, %v6602
    %v7291 = vpack.c.b16 %v6619, %v6603
    %v7292 = vpack.c.b16 %v6620, %v6604
    %v7293 = vpack.c.b16 %v6621, %v6605
    %v7294 = vpack.c.b16 %v6622, %v6606
    %v7295 = vpack.c.b16 %v6623, %v6607
    %v7296 = vpack.c.b16 %v6624, %v6608
    %v7297 = vpack.c.b16 %v6625, %v6609
    %v7298 = vpack.c.b16 %v6626, %v6610
    %v7299 = vpack.c.b16 %v6627, %v6611
    %v7300 = vpack.c.b16 %v6628, %v6612
    %v7301 = vpack.c.b16 %v6629, %v6613
    %v7302 = vpack.c.b16 %v6646, %v6630
    %v7303 = vpack.c.b16 %v6647, %v6631
    %v7304 = vpack.c.b16 %v6648, %v6632
    %v7305 = vpack.c.b16 %v6649, %v6633
    %v7306 = vpack.c.b16 %v6650, %v6634
    %v7307 = vpack.c.b16 %v6651, %v6635
    %v7308 = vpack.c.b16 %v6652, %v6636
    %v7309 = vpack.c.b16 %v6653, %v6637
    %v7310 = vpack.c.b16 %v6654, %v6638
    %v7311 = vpack.c.b16 %v6655, %v6639
    %v7312 = vpack.c.b16 %v6656, %v6640
    %v7313 = vpack.c.b16 %v6657, %v6641
    %v7314 = vpack.c.b16 %v6658, %v6642
    %v7315 = vpack.c.b16 %v6659, %v6643
    %v7316 = vpack.c.b16 %v6660, %v6644
    %v7317 = vpack.c.b16 %v6661, %v6645
    %v7318 = vpack.c.b16 %v6678, %v6662
    %v7319 = vpack.c.b16 %v6679, %v6663
    %v7320 = vpack.c.b16 %v6680, %v6664
    %v7321 = vpack.c.b16 %v6681, %v6665
    %v7322 = vpack.c.b16 %v6682, %v6666
    %v7323 = vpack.c.b16 %v6683, %v6667
    %v7324 = vpack.c.b16 %v6684, %v6668
    %v7325 = vpack.c.b16 %v6685, %v6669
    %v7326 = vpack.c.b16 %v6686, %v6670
    %v7327 = vpack.c.b16 %v6687, %v6671
    %v7328 = vpack.c.b16 %v6688, %v6672
    %v7329 = vpack.c.b16 %v6689, %v6673
    %v7330 = vpack.c.b16 %v6690, %v6674
    %v7331 = vpack.c.b16 %v6691, %v6675
    %v7332 = vpack.c.b16 %v6692, %v6676
    %v7333 = vpack.c.b16 %v6693, %v6677
    %v7334 = vpack.c.b16 %v6710, %v6694
    %v7335 = vpack.c.b16 %v6711, %v6695
    %v7336 = vpack.c.b16 %v6712, %v6696
    %v7337 = vpack.c.b16 %v6713, %v6697
    %v7338 = vpack.c.b16 %v6714, %v6698
    %v7339 = vpack.c.b16 %v6715, %v6699
    %v7340 = vpack.c.b16 %v6716, %v6700
    %v7341 = vpack.c.b16 %v6717, %v6701
    %v7342 = vpack.c.b16 %v6718, %v6702
    %v7343 = vpack.c.b16 %v6719, %v6703
    %v7344 = vpack.c.b16 %v6720, %v6704
    %v7345 = vpack.c.b16 %v6721, %v6705
    %v7346 = vpack.c.b16 %v6722, %v6706
    %v7347 = vpack.c.b16 %v6723, %v6707
    %v7348 = vpack.c.b16 %v6724, %v6708
    %v7349 = vpack.c.b16 %v6725, %v6709
    %v7350 = vpack.c.b16 %v6742, %v6726
    %v7351 = vpack.c.b16 %v6743, %v6727
    %v7352 = vpack.c.b16 %v6744, %v6728
    %v7353 = vpack.c.b16 %v6745, %v6729
    %v7354 = vpack.c.b16 %v6746, %v6730
    %v7355 = vpack.c.b16 %v6747, %v6731
    %v7356 = vpack.c.b16 %v6748, %v6732
    %v7357 = vpack.c.b16 %v6749, %v6733
    %v7358 = vpack.c.b16 %v6750, %v6734
    %v7359 = vpack.c.b16 %v6751, %v6735
    %v7360 = vpack.c.b16 %v6752, %v6736
    %v7361 = vpack.c.b16 %v6753, %v6737
    %v7362 = vpack.c.b16 %v6754, %v6738
    %v7363 = vpack.c.b16 %v6755, %v6739
    %v7364 = vpack.c.b16 %v6756, %v6740
    %v7365 = vpack.c.b16 %v6757, %v6741
    %v7366 = vpack.c.b16 %v6774, %v6758
    %v7367 = vpack.c.b16 %v6775, %v6759
    %v7368 = vpack.c.b16 %v6776, %v6760
    %v7369 = vpack.c.b16 %v6777, %v6761
    %v7370 = vpack.c.b16 %v6778, %v6762
    %v7371 = vpack.c.b16 %v6779, %v6763
    %v7372 = vpack.c.b16 %v6780, %v6764
    %v7373 = vpack.c.b16 %v6781, %v6765
    %v7374 = vpack.c.b16 %v6782, %v6766
    %v7375 = vpack.c.b16 %v6783, %v6767
    %v7376 = vpack.c.b16 %v6784, %v6768
    %v7377 = vpack.c.b16 %v6785, %v6769
    %v7378 = vpack.c.b16 %v6786, %v6770
    %v7379 = vpack.c.b16 %v6787, %v6771
    %v7380 = vpack.c.b16 %v6788, %v6772
    %v7381 = vpack.c.b16 %v6789, %v6773
    %v7382 = vpack.c.b16 %v6806, %v6790
    %v7383 = vpack.c.b16 %v6807, %v6791
    %v7384 = vpack.c.b16 %v6808, %v6792
    %v7385 = vpack.c.b16 %v6809, %v6793
    %v7386 = vpack.c.b16 %v6810, %v6794
    %v7387 = vpack.c.b16 %v6811, %v6795
    %v7388 = vpack.c.b16 %v6812, %v6796
    %v7389 = vpack.c.b16 %v6813, %v6797
    %v7390 = vpack.c.b16 %v6814, %v6798
    %v7391 = vpack.c.b16 %v6815, %v6799
    %v7392 = vpack.c.b16 %v6816, %v6800
    %v7393 = vpack.c.b16 %v6817, %v6801
    %v7394 = vpack.c.b16 %v6818, %v6802
    %v7395 = vpack.c.b16 %v6819, %v6803
    %v7396 = vpack.c.b16 %v6820, %v6804
    %v7397 = vpack.c.b16 %v6821, %v6805
    %v7398 = vpack.c.b16 %v6838, %v6822
    %v7399 = vpack.c.b16 %v6839, %v6823
    %v7400 = vpack.c.b16 %v6840, %v6824
    %v7401 = vpack.c.b16 %v6841, %v6825
    %v7402 = vpack.c.b16 %v6842, %v6826
    %v7403 = vpack.c.b16 %v6843, %v6827
    %v7404 = vpack.c.b16 %v6844, %v6828
    %v7405 = vpack.c.b16 %v6845, %v6829
    %v7406 = vpack.c.b16 %v6846, %v6830
    %v7407 = vpack.c.b16 %v6847, %v6831
    %v7408 = vpack.c.b16 %v6848, %v6832
    %v7409 = vpack.c.b16 %v6849, %v6833
    %v7410 = vpack.c.b16 %v6850, %v6834
    %v7411 = vpack.c.b16 %v6851, %v6835
    %v7412 = vpack.c.b16 %v6852, %v6836
    %v7413 = vpack.c.b16 %v6853, %v6837
    %v7414 = vpack.c.b16 %v6870, %v6854
    %v7415 = vpack.c.b16 %v6871, %v6855
    %v7416 = vpack.c.b16 %v6872, %v6856
    %v7417 = vpack.c.b16 %v6873, %v6857
    %v7418 = vpack.c.b16 %v6874, %v6858
    %v7419 = vpack.c.b16 %v6875, %v6859
    %v7420 = vpack.c.b16 %v6876, %v6860
    %v7421 = vpack.c.b16 %v6877, %v6861
    %v7422 = vpack.c.b16 %v6878, %v6862
    %v7423 = vpack.c.b16 %v6879, %v6863
    %v7424 = vpack.c.b16 %v6880, %v6864
    %v7425 = vpack.c.b16 %v6881, %v6865
    %v7426 = vpack.c.b16 %v6882, %v6866
    %v7427 = vpack.c.b16 %v6883, %v6867
    %v7428 = vpack.c.b16 %v6884, %v6868
    %v7429 = vpack.c.b16 %v6885, %v6869
    %v7430 = vpack.c.b16 %v6902, %v6886
    %v7431 = vpack.c.b16 %v6903, %v6887
    %v7432 = vpack.c.b16 %v6904, %v6888
    %v7433 = vpack.c.b16 %v6905, %v6889
    %v7434 = vpack.c.b16 %v6906, %v6890
    %v7435 = vpack.c.b16 %v6907, %v6891
    %v7436 = vpack.c.b16 %v6908, %v6892
    %v7437 = vpack.c.b16 %v6909, %v6893
    %v7438 = vpack.c.b16 %v6910, %v6894
    %v7439 = vpack.c.b16 %v6911, %v6895
    %v7440 = vpack.c.b16 %v6912, %v6896
    %v7441 = vpack.c.b16 %v6913, %v6897
    %v7442 = vpack.c.b16 %v6914, %v6898
    %v7443 = vpack.c.b16 %v6915, %v6899
    %v7444 = vpack.c.b16 %v6916, %v6900
    %v7445 = vpack.c.b16 %v6917, %v6901
    %v7446 = vpack.c.b16 %v6934, %v6918
    %v7447 = vpack.c.b16 %v6935, %v6919
    %v7448 = vpack.c.b16 %v6936, %v6920
    %v7449 = vpack.c.b16 %v6937, %v6921
    %v7450 = vpack.c.b16 %v6938, %v6922
    %v7451 = vpack.c.b16 %v6939, %v6923
    %v7452 = vpack.c.b16 %v6940, %v6924
    %v7453 = vpack.c.b16 %v6941, %v6925
    %v7454 = vpack.c.b16 %v6942, %v6926
    %v7455 = vpack.c.b16 %v6943, %v6927
    %v7456 = vpack.c.b16 %v6944, %v6928
    %v7457 = vpack.c.b16 %v6945, %v6929
    %v7458 = vpack.c.b16 %v6946, %v6930
    %v7459 = vpack.c.b16 %v6947, %v6931
    %v7460 = vpack.c.b16 %v6948, %v6932
    %v7461 = vpack.c.b16 %v6949, %v6933
    %7974 = vmatprep.subr.bf16.mxu0 %v6951
    %7975 = vmatpush1.bf16.msra.mxu0 %v6950
    %7976 = vmatprep.subr.bf16.mxu0 %v6967
    %7977 = vmatpush1.bf16.msra.mxu0 %v6966
    %7978 = vmatprep.subr.bf16.mxu0 %v6983
    %7979 = vmatpush1.bf16.msra.mxu0 %v6982
    %7980 = vmatprep.subr.bf16.mxu0 %v6999
    %7981 = vmatpush1.bf16.msra.mxu0 %v6998
    %7982 = vmatprep.subr.bf16.mxu0 %v7015
    %7983 = vmatpush1.bf16.msra.mxu0 %v7014
    %7984 = vmatprep.subr.bf16.mxu0 %v7031
    %7985 = vmatpush1.bf16.msra.mxu0 %v7030
    %7986 = vmatprep.subr.bf16.mxu0 %v7047
    %7987 = vmatpush1.bf16.msra.mxu0 %v7046
    %7988 = vmatprep.subr.bf16.mxu0 %v7063
    %7989 = vmatpush1.bf16.msra.mxu0 %v7062
    %7990 = vmatprep.subr.bf16.mxu0 %v7079
    %7991 = vmatpush1.bf16.msra.mxu0 %v7078
    %7992 = vmatprep.subr.bf16.mxu0 %v7095
    %7993 = vmatpush1.bf16.msra.mxu0 %v7094
    %7994 = vmatprep.subr.bf16.mxu0 %v7111
    %7995 = vmatpush1.bf16.msra.mxu0 %v7110
    %7996 = vmatprep.subr.bf16.mxu0 %v7127
    %7997 = vmatpush1.bf16.msra.mxu0 %v7126
    %7998 = vmatprep.subr.bf16.mxu0 %v7143
    %7999 = vmatpush1.bf16.msra.mxu0 %v7142
    %8000 = vmatprep.subr.bf16.mxu0 %v7159
    %8001 = vmatpush1.bf16.msra.mxu0 %v7158
    %8002 = vmatprep.subr.bf16.mxu0 %v7175
    %8003 = vmatpush1.bf16.msra.mxu0 %v7174
    %8004 = vmatprep.subr.bf16.mxu0 %v7191
    %8005 = vmatpush1.bf16.msra.mxu0 %v7190
    %8006 = vmatprep.mubr.bf16.mxu0 %v4815
    %8007 = vmatmul.mubr.bf16.gmra.mrb[0].mxu0 %v4814
    %v8008 = vpop.f32.mrb[0].mxu0
    %v8009 = vadd.f32 %v5337, %v8008
    %v8010 = vpop.f32.mrb[0].mxu0
    %v8011 = vadd.f32 %v5341, %v8010
    %v8012 = vpop.f32.mrb[0].mxu0
    %v8013 = vpop.f32.mrb[0].mxu0
    %8014 = vdwg.mxu0
    %8015 = vmatprep.subr.bf16.mxu0 %v7207
    %8016 = vmatpush1.bf16.msra.mxu0 %v7206
    %8017 = vmatprep.subr.bf16.mxu0 %v7223
    %8018 = vmatpush1.bf16.msra.mxu0 %v7222
    %8019 = vmatprep.subr.bf16.mxu0 %v7239
    %8020 = vmatpush1.bf16.msra.mxu0 %v7238
    %8021 = vmatprep.subr.bf16.mxu0 %v7255
    %8022 = vmatpush1.bf16.msra.mxu0 %v7254
    %8023 = vmatprep.subr.bf16.mxu0 %v7271
    %8024 = vmatpush1.bf16.msra.mxu0 %v7270
    %8025 = vmatprep.subr.bf16.mxu0 %v7287
    %8026 = vmatpush1.bf16.msra.mxu0 %v7286
    %8027 = vmatprep.subr.bf16.mxu0 %v7303
    %8028 = vmatpush1.bf16.msra.mxu0 %v7302
    %8029 = vmatprep.subr.bf16.mxu0 %v7319
    %8030 = vmatpush1.bf16.msra.mxu0 %v7318
    %8031 = vmatprep.subr.bf16.mxu0 %v7335
    %8032 = vmatpush1.bf16.msra.mxu0 %v7334
    %8033 = vmatprep.subr.bf16.mxu0 %v7351
    %8034 = vmatpush1.bf16.msra.mxu0 %v7350
    %8035 = vmatprep.subr.bf16.mxu0 %v7367
    %8036 = vmatpush1.bf16.msra.mxu0 %v7366
    %8037 = vmatprep.subr.bf16.mxu0 %v7383
    %8038 = vmatpush1.bf16.msra.mxu0 %v7382
    %8039 = vmatprep.subr.bf16.mxu0 %v7399
    %8040 = vmatpush1.bf16.msra.mxu0 %v7398
    %8041 = vmatprep.subr.bf16.mxu0 %v7415
    %8042 = vmatpush1.bf16.msra.mxu0 %v7414
    %8043 = vmatprep.subr.bf16.mxu0 %v7431
    %8044 = vmatpush1.bf16.msra.mxu0 %v7430
    %8045 = vmatprep.subr.bf16.mxu0 %v7447
    %8046 = vmatpush1.bf16.msra.mxu0 %v7446
    %8047 = vmatprep.mubr.bf16.mxu0 %v4817
    %8048 = vmatmul.mubr.bf16.gmra.mrb[0].mxu0 %v4816
    %v8049 = vpop.f32.mrb[0].mxu0
    %v8050 = vadd.f32 %v8009, %v8049
    %v8051 = vpop.f32.mrb[0].mxu0
    %v8052 = vadd.f32 %v8011, %v8051
    %v8053 = vpop.f32.mrb[0].mxu0
    %v8054 = vpop.f32.mrb[0].mxu0
    %8055 = vdwg.mxu0
    %8056 = vmatprep.subr.bf16.mxu0 %v6953
    %8057 = vmatpush1.bf16.msra.mxu0 %v6952
    %8058 = vmatprep.subr.bf16.mxu0 %v6969
    %8059 = vmatpush1.bf16.msra.mxu0 %v6968
    %8060 = vmatprep.subr.bf16.mxu0 %v6985
    %8061 = vmatpush1.bf16.msra.mxu0 %v6984
    %8062 = vmatprep.subr.bf16.mxu0 %v7001
    %8063 = vmatpush1.bf16.msra.mxu0 %v7000
    %8064 = vmatprep.subr.bf16.mxu0 %v7017
    %8065 = vmatpush1.bf16.msra.mxu0 %v7016
    %8066 = vmatprep.subr.bf16.mxu0 %v7033
    %8067 = vmatpush1.bf16.msra.mxu0 %v7032
    %8068 = vmatprep.subr.bf16.mxu0 %v7049
    %8069 = vmatpush1.bf16.msra.mxu0 %v7048
    %8070 = vmatprep.subr.bf16.mxu0 %v7065
    %8071 = vmatpush1.bf16.msra.mxu0 %v7064
    %8072 = vmatprep.subr.bf16.mxu0 %v7081
    %8073 = vmatpush1.bf16.msra.mxu0 %v7080
    %8074 = vmatprep.subr.bf16.mxu0 %v7097
    %8075 = vmatpush1.bf16.msra.mxu0 %v7096
    %8076 = vmatprep.subr.bf16.mxu0 %v7113
    %8077 = vmatpush1.bf16.msra.mxu0 %v7112
    %8078 = vmatprep.subr.bf16.mxu0 %v7129
    %8079 = vmatpush1.bf16.msra.mxu0 %v7128
    %8080 = vmatprep.subr.bf16.mxu0 %v7145
    %8081 = vmatpush1.bf16.msra.mxu0 %v7144
    %8082 = vmatprep.subr.bf16.mxu0 %v7161
    %8083 = vmatpush1.bf16.msra.mxu0 %v7160
    %8084 = vmatprep.subr.bf16.mxu0 %v7177
    %8085 = vmatpush1.bf16.msra.mxu0 %v7176
    %8086 = vmatprep.subr.bf16.mxu0 %v7193
    %8087 = vmatpush1.bf16.msra.mxu0 %v7192
    %8088 = vmatprep.mubr.bf16.mxu0 %v4815
    %8089 = vmatmul.mubr.bf16.gmra.mrb[0].mxu0 %v4814
    %v8090 = vpop.f32.mrb[0].mxu0
    %v8091 = vadd.f32 %v5345, %v8090
    %v8092 = vpop.f32.mrb[0].mxu0
    %v8093 = vadd.f32 %v5349, %v8092
    %v8094 = vpop.f32.mrb[0].mxu0
    %v8095 = vpop.f32.mrb[0].mxu0
    %8096 = vdwg.mxu0
    %8097 = vmatprep.subr.bf16.mxu0 %v7209
    %8098 = vmatpush1.bf16.msra.mxu0 %v7208
    %8099 = vmatprep.subr.bf16.mxu0 %v7225
    %8100 = vmatpush1.bf16.msra.mxu0 %v7224
    %8101 = vmatprep.subr.bf16.mxu0 %v7241
    %8102 = vmatpush1.bf16.msra.mxu0 %v7240
    %8103 = vmatprep.subr.bf16.mxu0 %v7257
    %8104 = vmatpush1.bf16.msra.mxu0 %v7256
    %8105 = vmatprep.subr.bf16.mxu0 %v7273
    %8106 = vmatpush1.bf16.msra.mxu0 %v7272
    %8107 = vmatprep.subr.bf16.mxu0 %v7289
    %8108 = vmatpush1.bf16.msra.mxu0 %v7288
    %8109 = vmatprep.subr.bf16.mxu0 %v7305
    %8110 = vmatpush1.bf16.msra.mxu0 %v7304
    %8111 = vmatprep.subr.bf16.mxu0 %v7321
    %8112 = vmatpush1.bf16.msra.mxu0 %v7320
    %8113 = vmatprep.subr.bf16.mxu0 %v7337
    %8114 = vmatpush1.bf16.msra.mxu0 %v7336
    %8115 = vmatprep.subr.bf16.mxu0 %v7353
    %8116 = vmatpush1.bf16.msra.mxu0 %v7352
    %8117 = vmatprep.subr.bf16.mxu0 %v7369
    %8118 = vmatpush1.bf16.msra.mxu0 %v7368
    %8119 = vmatprep.subr.bf16.mxu0 %v7385
    %8120 = vmatpush1.bf16.msra.mxu0 %v7384
    %8121 = vmatprep.subr.bf16.mxu0 %v7401
    %8122 = vmatpush1.bf16.msra.mxu0 %v7400
    %8123 = vmatprep.subr.bf16.mxu0 %v7417
    %8124 = vmatpush1.bf16.msra.mxu0 %v7416
    %8125 = vmatprep.subr.bf16.mxu0 %v7433
    %8126 = vmatpush1.bf16.msra.mxu0 %v7432
    %8127 = vmatprep.subr.bf16.mxu0 %v7449
    %8128 = vmatpush1.bf16.msra.mxu0 %v7448
    %8129 = vmatprep.mubr.bf16.mxu0 %v4817
    %8130 = vmatmul.mubr.bf16.gmra.mrb[0].mxu0 %v4816
    %v8131 = vpop.f32.mrb[0].mxu0
    %v8132 = vadd.f32 %v8091, %v8131
    %v8133 = vpop.f32.mrb[0].mxu0
    %v8134 = vadd.f32 %v8093, %v8133
    %v8135 = vpop.f32.mrb[0].mxu0
    %v8136 = vpop.f32.mrb[0].mxu0
    %8137 = vdwg.mxu0
    %8138 = vmatprep.subr.bf16.mxu0 %v6955
    %8139 = vmatpush1.bf16.msra.mxu0 %v6954
    %8140 = vmatprep.subr.bf16.mxu0 %v6971
    %8141 = vmatpush1.bf16.msra.mxu0 %v6970
    %8142 = vmatprep.subr.bf16.mxu0 %v6987
    %8143 = vmatpush1.bf16.msra.mxu0 %v6986
    %8144 = vmatprep.subr.bf16.mxu0 %v7003
    %8145 = vmatpush1.bf16.msra.mxu0 %v7002
    %8146 = vmatprep.subr.bf16.mxu0 %v7019
    %8147 = vmatpush1.bf16.msra.mxu0 %v7018
    %8148 = vmatprep.subr.bf16.mxu0 %v7035
    %8149 = vmatpush1.bf16.msra.mxu0 %v7034
    %8150 = vmatprep.subr.bf16.mxu0 %v7051
    %8151 = vmatpush1.bf16.msra.mxu0 %v7050
    %8152 = vmatprep.subr.bf16.mxu0 %v7067
    %8153 = vmatpush1.bf16.msra.mxu0 %v7066
    %8154 = vmatprep.subr.bf16.mxu0 %v7083
    %8155 = vmatpush1.bf16.msra.mxu0 %v7082
    %8156 = vmatprep.subr.bf16.mxu0 %v7099
    %8157 = vmatpush1.bf16.msra.mxu0 %v7098
    %8158 = vmatprep.subr.bf16.mxu0 %v7115
    %8159 = vmatpush1.bf16.msra.mxu0 %v7114
    %8160 = vmatprep.subr.bf16.mxu0 %v7131
    %8161 = vmatpush1.bf16.msra.mxu0 %v7130
    %8162 = vmatprep.subr.bf16.mxu0 %v7147
    %8163 = vmatpush1.bf16.msra.mxu0 %v7146
    %8164 = vmatprep.subr.bf16.mxu0 %v7163
    %8165 = vmatpush1.bf16.msra.mxu0 %v7162
    %8166 = vmatprep.subr.bf16.mxu0 %v7179
    %8167 = vmatpush1.bf16.msra.mxu0 %v7178
    %8168 = vmatprep.subr.bf16.mxu0 %v7195
    %8169 = vmatpush1.bf16.msra.mxu0 %v7194
    %8170 = vmatprep.mubr.bf16.mxu0 %v4815
    %8171 = vmatmul.mubr.bf16.gmra.mrb[0].mxu0 %v4814
    %v8172 = vpop.f32.mrb[0].mxu0
    %v8173 = vadd.f32 %v5353, %v8172
    %v8174 = vpop.f32.mrb[0].mxu0
    %v8175 = vadd.f32 %v5357, %v8174
    %v8176 = vpop.f32.mrb[0].mxu0
    %v8177 = vpop.f32.mrb[0].mxu0
    %8178 = vdwg.mxu0
    %8179 = vmatprep.subr.bf16.mxu0 %v7211
    %8180 = vmatpush1.bf16.msra.mxu0 %v7210
    %8181 = vmatprep.subr.bf16.mxu0 %v7227
    %8182 = vmatpush1.bf16.msra.mxu0 %v7226
    %8183 = vmatprep.subr.bf16.mxu0 %v7243
    %8184 = vmatpush1.bf16.msra.mxu0 %v7242
    %8185 = vmatprep.subr.bf16.mxu0 %v7259
    %8186 = vmatpush1.bf16.msra.mxu0 %v7258
    %8187 = vmatprep.subr.bf16.mxu0 %v7275
    %8188 = vmatpush1.bf16.msra.mxu0 %v7274
    %8189 = vmatprep.subr.bf16.mxu0 %v7291
    %8190 = vmatpush1.bf16.msra.mxu0 %v7290
    %8191 = vmatprep.subr.bf16.mxu0 %v7307
    %8192 = vmatpush1.bf16.msra.mxu0 %v7306
    %8193 = vmatprep.subr.bf16.mxu0 %v7323
    %8194 = vmatpush1.bf16.msra.mxu0 %v7322
    %8195 = vmatprep.subr.bf16.mxu0 %v7339
    %8196 = vmatpush1.bf16.msra.mxu0 %v7338
    %8197 = vmatprep.subr.bf16.mxu0 %v7355
    %8198 = vmatpush1.bf16.msra.mxu0 %v7354
    %8199 = vmatprep.subr.bf16.mxu0 %v7371
    %8200 = vmatpush1.bf16.msra.mxu0 %v7370
    %8201 = vmatprep.subr.bf16.mxu0 %v7387
    %8202 = vmatpush1.bf16.msra.mxu0 %v7386
    %8203 = vmatprep.subr.bf16.mxu0 %v7403
    %8204 = vmatpush1.bf16.msra.mxu0 %v7402
    %8205 = vmatprep.subr.bf16.mxu0 %v7419
    %8206 = vmatpush1.bf16.msra.mxu0 %v7418
    %8207 = vmatprep.subr.bf16.mxu0 %v7435
    %8208 = vmatpush1.bf16.msra.mxu0 %v7434
    %8209 = vmatprep.subr.bf16.mxu0 %v7451
    %8210 = vmatpush1.bf16.msra.mxu0 %v7450
    %8211 = vmatprep.mubr.bf16.mxu0 %v4817
    %8212 = vmatmul.mubr.bf16.gmra.mrb[0].mxu0 %v4816
    %v8213 = vpop.f32.mrb[0].mxu0
    %v8214 = vadd.f32 %v8173, %v8213
    %v8215 = vpop.f32.mrb[0].mxu0
    %v8216 = vadd.f32 %v8175, %v8215
    %v8217 = vpop.f32.mrb[0].mxu0
    %v8218 = vpop.f32.mrb[0].mxu0
    %8219 = vdwg.mxu0
    %8220 = vmatprep.subr.bf16.mxu0 %v6957
    %8221 = vmatpush1.bf16.msra.mxu0 %v6956
    %8222 = vmatprep.subr.bf16.mxu0 %v6973
    %8223 = vmatpush1.bf16.msra.mxu0 %v6972
    %8224 = vmatprep.subr.bf16.mxu0 %v6989
    %8225 = vmatpush1.bf16.msra.mxu0 %v6988
    %8226 = vmatprep.subr.bf16.mxu0 %v7005
    %8227 = vmatpush1.bf16.msra.mxu0 %v7004
    %8228 = vmatprep.subr.bf16.mxu0 %v7021
    %8229 = vmatpush1.bf16.msra.mxu0 %v7020
    %8230 = vmatprep.subr.bf16.mxu0 %v7037
    %8231 = vmatpush1.bf16.msra.mxu0 %v7036
    %8232 = vmatprep.subr.bf16.mxu0 %v7053
    %8233 = vmatpush1.bf16.msra.mxu0 %v7052
    %8234 = vmatprep.subr.bf16.mxu0 %v7069
    %8235 = vmatpush1.bf16.msra.mxu0 %v7068
    %8236 = vmatprep.subr.bf16.mxu0 %v7085
    %8237 = vmatpush1.bf16.msra.mxu0 %v7084
    %8238 = vmatprep.subr.bf16.mxu0 %v7101
    %8239 = vmatpush1.bf16.msra.mxu0 %v7100
    %8240 = vmatprep.subr.bf16.mxu0 %v7117
    %8241 = vmatpush1.bf16.msra.mxu0 %v7116
    %8242 = vmatprep.subr.bf16.mxu0 %v7133
    %8243 = vmatpush1.bf16.msra.mxu0 %v7132
    %8244 = vmatprep.subr.bf16.mxu0 %v7149
    %8245 = vmatpush1.bf16.msra.mxu0 %v7148
    %8246 = vmatprep.subr.bf16.mxu0 %v7165
    %8247 = vmatpush1.bf16.msra.mxu0 %v7164
    %8248 = vmatprep.subr.bf16.mxu0 %v7181
    %8249 = vmatpush1.bf16.msra.mxu0 %v7180
    %8250 = vmatprep.subr.bf16.mxu0 %v7197
    %8251 = vmatpush1.bf16.msra.mxu0 %v7196
    %8252 = vmatprep.mubr.bf16.mxu0 %v4815
    %8253 = vmatmul.mubr.bf16.gmra.mrb[0].mxu0 %v4814
    %v8254 = vpop.f32.mrb[0].mxu0
    %v8255 = vadd.f32 %v5361, %v8254
    %v8256 = vpop.f32.mrb[0].mxu0
    %v8257 = vadd.f32 %v5365, %v8256
    %v8258 = vpop.f32.mrb[0].mxu0
    %v8259 = vpop.f32.mrb[0].mxu0
    %8260 = vdwg.mxu0
    %8261 = vmatprep.subr.bf16.mxu0 %v7213
    %8262 = vmatpush1.bf16.msra.mxu0 %v7212
    %8263 = vmatprep.subr.bf16.mxu0 %v7229
    %8264 = vmatpush1.bf16.msra.mxu0 %v7228
    %8265 = vmatprep.subr.bf16.mxu0 %v7245
    %8266 = vmatpush1.bf16.msra.mxu0 %v7244
    %8267 = vmatprep.subr.bf16.mxu0 %v7261
    %8268 = vmatpush1.bf16.msra.mxu0 %v7260
    %8269 = vmatprep.subr.bf16.mxu0 %v7277
    %8270 = vmatpush1.bf16.msra.mxu0 %v7276
    %8271 = vmatprep.subr.bf16.mxu0 %v7293
    %8272 = vmatpush1.bf16.msra.mxu0 %v7292
    %8273 = vmatprep.subr.bf16.mxu0 %v7309
    %8274 = vmatpush1.bf16.msra.mxu0 %v7308
    %8275 = vmatprep.subr.bf16.mxu0 %v7325
    %8276 = vmatpush1.bf16.msra.mxu0 %v7324
    %8277 = vmatprep.subr.bf16.mxu0 %v7341
    %8278 = vmatpush1.bf16.msra.mxu0 %v7340
    %8279 = vmatprep.subr.bf16.mxu0 %v7357
    %8280 = vmatpush1.bf16.msra.mxu0 %v7356
    %8281 = vmatprep.subr.bf16.mxu0 %v7373
    %8282 = vmatpush1.bf16.msra.mxu0 %v7372
    %8283 = vmatprep.subr.bf16.mxu0 %v7389
    %8284 = vmatpush1.bf16.msra.mxu0 %v7388
    %8285 = vmatprep.subr.bf16.mxu0 %v7405
    %8286 = vmatpush1.bf16.msra.mxu0 %v7404
    %8287 = vmatprep.subr.bf16.mxu0 %v7421
    %8288 = vmatpush1.bf16.msra.mxu0 %v7420
    %8289 = vmatprep.subr.bf16.mxu0 %v7437
    %8290 = vmatpush1.bf16.msra.mxu0 %v7436
    %8291 = vmatprep.subr.bf16.mxu0 %v7453
    %8292 = vmatpush1.bf16.msra.mxu0 %v7452
    %8293 = vmatprep.mubr.bf16.mxu0 %v4817
    %8294 = vmatmul.mubr.bf16.gmra.mrb[0].mxu0 %v4816
    %v8295 = vpop.f32.mrb[0].mxu0
    %v8296 = vadd.f32 %v8255, %v8295
    %v8297 = vpop.f32.mrb[0].mxu0
    %v8298 = vadd.f32 %v8257, %v8297
    %v8299 = vpop.f32.mrb[0].mxu0
    %v8300 = vpop.f32.mrb[0].mxu0
    %8301 = vdwg.mxu0
    %8302 = vmatprep.subr.bf16.mxu0 %v6959
    %8303 = vmatpush1.bf16.msra.mxu0 %v6958
    %8304 = vmatprep.subr.bf16.mxu0 %v6975
    %8305 = vmatpush1.bf16.msra.mxu0 %v6974
    %8306 = vmatprep.subr.bf16.mxu0 %v6991
    %8307 = vmatpush1.bf16.msra.mxu0 %v6990
    %8308 = vmatprep.subr.bf16.mxu0 %v7007
    %8309 = vmatpush1.bf16.msra.mxu0 %v7006
    %8310 = vmatprep.subr.bf16.mxu0 %v7023
    %8311 = vmatpush1.bf16.msra.mxu0 %v7022
    %8312 = vmatprep.subr.bf16.mxu0 %v7039
    %8313 = vmatpush1.bf16.msra.mxu0 %v7038
    %8314 = vmatprep.subr.bf16.mxu0 %v7055
    %8315 = vmatpush1.bf16.msra.mxu0 %v7054
    %8316 = vmatprep.subr.bf16.mxu0 %v7071
    %8317 = vmatpush1.bf16.msra.mxu0 %v7070
    %8318 = vmatprep.subr.bf16.mxu0 %v7087
    %8319 = vmatpush1.bf16.msra.mxu0 %v7086
    %8320 = vmatprep.subr.bf16.mxu0 %v7103
    %8321 = vmatpush1.bf16.msra.mxu0 %v7102
    %8322 = vmatprep.subr.bf16.mxu0 %v7119
    %8323 = vmatpush1.bf16.msra.mxu0 %v7118
    %8324 = vmatprep.subr.bf16.mxu0 %v7135
    %8325 = vmatpush1.bf16.msra.mxu0 %v7134
    %8326 = vmatprep.subr.bf16.mxu0 %v7151
    %8327 = vmatpush1.bf16.msra.mxu0 %v7150
    %8328 = vmatprep.subr.bf16.mxu0 %v7167
    %8329 = vmatpush1.bf16.msra.mxu0 %v7166
    %8330 = vmatprep.subr.bf16.mxu0 %v7183
    %8331 = vmatpush1.bf16.msra.mxu0 %v7182
    %8332 = vmatprep.subr.bf16.mxu0 %v7199
    %8333 = vmatpush1.bf16.msra.mxu0 %v7198
    %8334 = vmatprep.mubr.bf16.mxu0 %v4815
    %8335 = vmatmul.mubr.bf16.gmra.mrb[0].mxu0 %v4814
    %v8336 = vpop.f32.mrb[0].mxu0
    %v8337 = vadd.f32 %v5369, %v8336
    %v8338 = vpop.f32.mrb[0].mxu0
    %v8339 = vadd.f32 %v5373, %v8338
    %v8340 = vpop.f32.mrb[0].mxu0
    %v8341 = vpop.f32.mrb[0].mxu0
    %8342 = vdwg.mxu0
    %8343 = vmatprep.subr.bf16.mxu0 %v7215
    %8344 = vmatpush1.bf16.msra.mxu0 %v7214
    %8345 = vmatprep.subr.bf16.mxu0 %v7231
    %8346 = vmatpush1.bf16.msra.mxu0 %v7230
    %8347 = vmatprep.subr.bf16.mxu0 %v7247
    %8348 = vmatpush1.bf16.msra.mxu0 %v7246
    %8349 = vmatprep.subr.bf16.mxu0 %v7263
    %8350 = vmatpush1.bf16.msra.mxu0 %v7262
    %8351 = vmatprep.subr.bf16.mxu0 %v7279
    %8352 = vmatpush1.bf16.msra.mxu0 %v7278
    %8353 = vmatprep.subr.bf16.mxu0 %v7295
    %8354 = vmatpush1.bf16.msra.mxu0 %v7294
    %8355 = vmatprep.subr.bf16.mxu0 %v7311
    %8356 = vmatpush1.bf16.msra.mxu0 %v7310
    %8357 = vmatprep.subr.bf16.mxu0 %v7327
    %8358 = vmatpush1.bf16.msra.mxu0 %v7326
    %8359 = vmatprep.subr.bf16.mxu0 %v7343
    %8360 = vmatpush1.bf16.msra.mxu0 %v7342
    %8361 = vmatprep.subr.bf16.mxu0 %v7359
    %8362 = vmatpush1.bf16.msra.mxu0 %v7358
    %8363 = vmatprep.subr.bf16.mxu0 %v7375
    %8364 = vmatpush1.bf16.msra.mxu0 %v7374
    %8365 = vmatprep.subr.bf16.mxu0 %v7391
    %8366 = vmatpush1.bf16.msra.mxu0 %v7390
    %8367 = vmatprep.subr.bf16.mxu0 %v7407
    %8368 = vmatpush1.bf16.msra.mxu0 %v7406
    %8369 = vmatprep.subr.bf16.mxu0 %v7423
    %8370 = vmatpush1.bf16.msra.mxu0 %v7422
    %8371 = vmatprep.subr.bf16.mxu0 %v7439
    %8372 = vmatpush1.bf16.msra.mxu0 %v7438
    %8373 = vmatprep.subr.bf16.mxu0 %v7455
    %8374 = vmatpush1.bf16.msra.mxu0 %v7454
    %8375 = vmatprep.mubr.bf16.mxu0 %v4817
    %8376 = vmatmul.mubr.bf16.gmra.mrb[0].mxu0 %v4816
    %v8377 = vpop.f32.mrb[0].mxu0
    %v8378 = vadd.f32 %v8337, %v8377
    %v8379 = vpop.f32.mrb[0].mxu0
    %v8380 = vadd.f32 %v8339, %v8379
    %v8381 = vpop.f32.mrb[0].mxu0
    %v8382 = vpop.f32.mrb[0].mxu0
    %8383 = vdwg.mxu0
    %8384 = vmatprep.subr.bf16.mxu0 %v6961
    %8385 = vmatpush1.bf16.msra.mxu0 %v6960
    %8386 = vmatprep.subr.bf16.mxu0 %v6977
    %8387 = vmatpush1.bf16.msra.mxu0 %v6976
    %8388 = vmatprep.subr.bf16.mxu0 %v6993
    %8389 = vmatpush1.bf16.msra.mxu0 %v6992
    %8390 = vmatprep.subr.bf16.mxu0 %v7009
    %8391 = vmatpush1.bf16.msra.mxu0 %v7008
    %8392 = vmatprep.subr.bf16.mxu0 %v7025
    %8393 = vmatpush1.bf16.msra.mxu0 %v7024
    %8394 = vmatprep.subr.bf16.mxu0 %v7041
    %8395 = vmatpush1.bf16.msra.mxu0 %v7040
    %8396 = vmatprep.subr.bf16.mxu0 %v7057
    %8397 = vmatpush1.bf16.msra.mxu0 %v7056
    %8398 = vmatprep.subr.bf16.mxu0 %v7073
    %8399 = vmatpush1.bf16.msra.mxu0 %v7072
    %8400 = vmatprep.subr.bf16.mxu0 %v7089
    %8401 = vmatpush1.bf16.msra.mxu0 %v7088
    %8402 = vmatprep.subr.bf16.mxu0 %v7105
    %8403 = vmatpush1.bf16.msra.mxu0 %v7104
    %8404 = vmatprep.subr.bf16.mxu0 %v7121
    %8405 = vmatpush1.bf16.msra.mxu0 %v7120
    %8406 = vmatprep.subr.bf16.mxu0 %v7137
    %8407 = vmatpush1.bf16.msra.mxu0 %v7136
    %8408 = vmatprep.subr.bf16.mxu0 %v7153
    %8409 = vmatpush1.bf16.msra.mxu0 %v7152
    %8410 = vmatprep.subr.bf16.mxu0 %v7169
    %8411 = vmatpush1.bf16.msra.mxu0 %v7168
    %8412 = vmatprep.subr.bf16.mxu0 %v7185
    %8413 = vmatpush1.bf16.msra.mxu0 %v7184
    %8414 = vmatprep.subr.bf16.mxu0 %v7201
    %8415 = vmatpush1.bf16.msra.mxu0 %v7200
    %8416 = vmatprep.mubr.bf16.mxu0 %v4815
    %8417 = vmatmul.mubr.bf16.gmra.mrb[0].mxu0 %v4814
    %v8418 = vpop.f32.mrb[0].mxu0
    %v8419 = vadd.f32 %v5377, %v8418
    %v8420 = vpop.f32.mrb[0].mxu0
    %v8421 = vadd.f32 %v5381, %v8420
    %v8422 = vpop.f32.mrb[0].mxu0
    %v8423 = vpop.f32.mrb[0].mxu0
    %8424 = vdwg.mxu0
    %8425 = vmatprep.subr.bf16.mxu0 %v7217
    %8426 = vmatpush1.bf16.msra.mxu0 %v7216
    %8427 = vmatprep.subr.bf16.mxu0 %v7233
    %8428 = vmatpush1.bf16.msra.mxu0 %v7232
    %8429 = vmatprep.subr.bf16.mxu0 %v7249
    %8430 = vmatpush1.bf16.msra.mxu0 %v7248
    %8431 = vmatprep.subr.bf16.mxu0 %v7265
    %8432 = vmatpush1.bf16.msra.mxu0 %v7264
    %8433 = vmatprep.subr.bf16.mxu0 %v7281
    %8434 = vmatpush1.bf16.msra.mxu0 %v7280
    %8435 = vmatprep.subr.bf16.mxu0 %v7297
    %8436 = vmatpush1.bf16.msra.mxu0 %v7296
    %8437 = vmatprep.subr.bf16.mxu0 %v7313
    %8438 = vmatpush1.bf16.msra.mxu0 %v7312
    %8439 = vmatprep.subr.bf16.mxu0 %v7329
    %8440 = vmatpush1.bf16.msra.mxu0 %v7328
    %8441 = vmatprep.subr.bf16.mxu0 %v7345
    %8442 = vmatpush1.bf16.msra.mxu0 %v7344
    %8443 = vmatprep.subr.bf16.mxu0 %v7361
    %8444 = vmatpush1.bf16.msra.mxu0 %v7360
    %8445 = vmatprep.subr.bf16.mxu0 %v7377
    %8446 = vmatpush1.bf16.msra.mxu0 %v7376
    %8447 = vmatprep.subr.bf16.mxu0 %v7393
    %8448 = vmatpush1.bf16.msra.mxu0 %v7392
    %8449 = vmatprep.subr.bf16.mxu0 %v7409
    %8450 = vmatpush1.bf16.msra.mxu0 %v7408
    %8451 = vmatprep.subr.bf16.mxu0 %v7425
    %8452 = vmatpush1.bf16.msra.mxu0 %v7424
    %8453 = vmatprep.subr.bf16.mxu0 %v7441
    %8454 = vmatpush1.bf16.msra.mxu0 %v7440
    %8455 = vmatprep.subr.bf16.mxu0 %v7457
    %8456 = vmatpush1.bf16.msra.mxu0 %v7456
    %8457 = vmatprep.mubr.bf16.mxu0 %v4817
    %8458 = vmatmul.mubr.bf16.gmra.mrb[0].mxu0 %v4816
    %v8459 = vpop.f32.mrb[0].mxu0
    %v8460 = vadd.f32 %v8419, %v8459
    %v8461 = vpop.f32.mrb[0].mxu0
    %v8462 = vadd.f32 %v8421, %v8461
    %v8463 = vpop.f32.mrb[0].mxu0
    %v8464 = vpop.f32.mrb[0].mxu0
    %8465 = vdwg.mxu0
    %8466 = vmatprep.subr.bf16.mxu0 %v6963
    %8467 = vmatpush1.bf16.msra.mxu0 %v6962
    %8468 = vmatprep.subr.bf16.mxu0 %v6979
    %8469 = vmatpush1.bf16.msra.mxu0 %v6978
    %8470 = vmatprep.subr.bf16.mxu0 %v6995
    %8471 = vmatpush1.bf16.msra.mxu0 %v6994
    %8472 = vmatprep.subr.bf16.mxu0 %v7011
    %8473 = vmatpush1.bf16.msra.mxu0 %v7010
    %8474 = vmatprep.subr.bf16.mxu0 %v7027
    %8475 = vmatpush1.bf16.msra.mxu0 %v7026
    %8476 = vmatprep.subr.bf16.mxu0 %v7043
    %8477 = vmatpush1.bf16.msra.mxu0 %v7042
    %8478 = vmatprep.subr.bf16.mxu0 %v7059
    %8479 = vmatpush1.bf16.msra.mxu0 %v7058
    %8480 = vmatprep.subr.bf16.mxu0 %v7075
    %8481 = vmatpush1.bf16.msra.mxu0 %v7074
    %8482 = vmatprep.subr.bf16.mxu0 %v7091
    %8483 = vmatpush1.bf16.msra.mxu0 %v7090
    %8484 = vmatprep.subr.bf16.mxu0 %v7107
    %8485 = vmatpush1.bf16.msra.mxu0 %v7106
    %8486 = vmatprep.subr.bf16.mxu0 %v7123
    %8487 = vmatpush1.bf16.msra.mxu0 %v7122
    %8488 = vmatprep.subr.bf16.mxu0 %v7139
    %8489 = vmatpush1.bf16.msra.mxu0 %v7138
    %8490 = vmatprep.subr.bf16.mxu0 %v7155
    %8491 = vmatpush1.bf16.msra.mxu0 %v7154
    %8492 = vmatprep.subr.bf16.mxu0 %v7171
    %8493 = vmatpush1.bf16.msra.mxu0 %v7170
    %8494 = vmatprep.subr.bf16.mxu0 %v7187
    %8495 = vmatpush1.bf16.msra.mxu0 %v7186
    %8496 = vmatprep.subr.bf16.mxu0 %v7203
    %8497 = vmatpush1.bf16.msra.mxu0 %v7202
    %8498 = vmatprep.mubr.bf16.mxu0 %v4815
    %8499 = vmatmul.mubr.bf16.gmra.mrb[0].mxu0 %v4814
    %v8500 = vpop.f32.mrb[0].mxu0
    %v8501 = vadd.f32 %v5385, %v8500
    %v8502 = vpop.f32.mrb[0].mxu0
    %v8503 = vadd.f32 %v5389, %v8502
    %v8504 = vpop.f32.mrb[0].mxu0
    %v8505 = vpop.f32.mrb[0].mxu0
    %8506 = vdwg.mxu0
    %8507 = vmatprep.subr.bf16.mxu0 %v7219
    %8508 = vmatpush1.bf16.msra.mxu0 %v7218
    %8509 = vmatprep.subr.bf16.mxu0 %v7235
    %8510 = vmatpush1.bf16.msra.mxu0 %v7234
    %8511 = vmatprep.subr.bf16.mxu0 %v7251
    %8512 = vmatpush1.bf16.msra.mxu0 %v7250
    %8513 = vmatprep.subr.bf16.mxu0 %v7267
    %8514 = vmatpush1.bf16.msra.mxu0 %v7266
    %8515 = vmatprep.subr.bf16.mxu0 %v7283
    %8516 = vmatpush1.bf16.msra.mxu0 %v7282
    %8517 = vmatprep.subr.bf16.mxu0 %v7299
    %8518 = vmatpush1.bf16.msra.mxu0 %v7298
    %8519 = vmatprep.subr.bf16.mxu0 %v7315
    %8520 = vmatpush1.bf16.msra.mxu0 %v7314
    %8521 = vmatprep.subr.bf16.mxu0 %v7331
    %8522 = vmatpush1.bf16.msra.mxu0 %v7330
    %8523 = vmatprep.subr.bf16.mxu0 %v7347
    %8524 = vmatpush1.bf16.msra.mxu0 %v7346
    %8525 = vmatprep.subr.bf16.mxu0 %v7363
    %8526 = vmatpush1.bf16.msra.mxu0 %v7362
    %8527 = vmatprep.subr.bf16.mxu0 %v7379
    %8528 = vmatpush1.bf16.msra.mxu0 %v7378
    %8529 = vmatprep.subr.bf16.mxu0 %v7395
    %8530 = vmatpush1.bf16.msra.mxu0 %v7394
    %8531 = vmatprep.subr.bf16.mxu0 %v7411
    %8532 = vmatpush1.bf16.msra.mxu0 %v7410
    %8533 = vmatprep.subr.bf16.mxu0 %v7427
    %8534 = vmatpush1.bf16.msra.mxu0 %v7426
    %8535 = vmatprep.subr.bf16.mxu0 %v7443
    %8536 = vmatpush1.bf16.msra.mxu0 %v7442
    %8537 = vmatprep.subr.bf16.mxu0 %v7459
    %8538 = vmatpush1.bf16.msra.mxu0 %v7458
    %8539 = vmatprep.mubr.bf16.mxu0 %v4817
    %8540 = vmatmul.mubr.bf16.gmra.mrb[0].mxu0 %v4816
    %v8541 = vpop.f32.mrb[0].mxu0
    %v8542 = vadd.f32 %v8501, %v8541
    %v8543 = vpop.f32.mrb[0].mxu0
    %v8544 = vadd.f32 %v8503, %v8543
    %v8545 = vpop.f32.mrb[0].mxu0
    %v8546 = vpop.f32.mrb[0].mxu0
    %8547 = vdwg.mxu0
    %8548 = vmatprep.subr.bf16.mxu0 %v6965
    %8549 = vmatpush1.bf16.msra.mxu0 %v6964
    %8550 = vmatprep.subr.bf16.mxu0 %v6981
    %8551 = vmatpush1.bf16.msra.mxu0 %v6980
    %8552 = vmatprep.subr.bf16.mxu0 %v6997
    %8553 = vmatpush1.bf16.msra.mxu0 %v6996
    %8554 = vmatprep.subr.bf16.mxu0 %v7013
    %8555 = vmatpush1.bf16.msra.mxu0 %v7012
    %8556 = vmatprep.subr.bf16.mxu0 %v7029
    %8557 = vmatpush1.bf16.msra.mxu0 %v7028
    %8558 = vmatprep.subr.bf16.mxu0 %v7045
    %8559 = vmatpush1.bf16.msra.mxu0 %v7044
    %8560 = vmatprep.subr.bf16.mxu0 %v7061
    %8561 = vmatpush1.bf16.msra.mxu0 %v7060
    %8562 = vmatprep.subr.bf16.mxu0 %v7077
    %8563 = vmatpush1.bf16.msra.mxu0 %v7076
    %8564 = vmatprep.subr.bf16.mxu0 %v7093
    %8565 = vmatpush1.bf16.msra.mxu0 %v7092
    %8566 = vmatprep.subr.bf16.mxu0 %v7109
    %8567 = vmatpush1.bf16.msra.mxu0 %v7108
    %8568 = vmatprep.subr.bf16.mxu0 %v7125
    %8569 = vmatpush1.bf16.msra.mxu0 %v7124
    %8570 = vmatprep.subr.bf16.mxu0 %v7141
    %8571 = vmatpush1.bf16.msra.mxu0 %v7140
    %8572 = vmatprep.subr.bf16.mxu0 %v7157
    %8573 = vmatpush1.bf16.msra.mxu0 %v7156
    %8574 = vmatprep.subr.bf16.mxu0 %v7173
    %8575 = vmatpush1.bf16.msra.mxu0 %v7172
    %8576 = vmatprep.subr.bf16.mxu0 %v7189
    %8577 = vmatpush1.bf16.msra.mxu0 %v7188
    %8578 = vmatprep.subr.bf16.mxu0 %v7205
    %8579 = vmatpush1.bf16.msra.mxu0 %v7204
    %8580 = vmatprep.mubr.bf16.mxu0 %v4815
    %8581 = vmatmul.mubr.bf16.gmra.mrb[0].mxu0 %v4814
    %v8582 = vpop.f32.mrb[0].mxu0
    %v8583 = vadd.f32 %v5393, %v8582
    %v8584 = vpop.f32.mrb[0].mxu0
    %v8585 = vadd.f32 %v5397, %v8584
    %v8586 = vpop.f32.mrb[0].mxu0
    %v8587 = vpop.f32.mrb[0].mxu0
    %8588 = vdwg.mxu0
    %8589 = vmatprep.subr.bf16.mxu0 %v7221
    %8590 = vmatpush1.bf16.msra.mxu0 %v7220
    %8591 = vmatprep.subr.bf16.mxu0 %v7237
    %8592 = vmatpush1.bf16.msra.mxu0 %v7236
    %8593 = vmatprep.subr.bf16.mxu0 %v7253
    %8594 = vmatpush1.bf16.msra.mxu0 %v7252
    %8595 = vmatprep.subr.bf16.mxu0 %v7269
    %8596 = vmatpush1.bf16.msra.mxu0 %v7268
    %8597 = vmatprep.subr.bf16.mxu0 %v7285
    %8598 = vmatpush1.bf16.msra.mxu0 %v7284
    %8599 = vmatprep.subr.bf16.mxu0 %v7301
    %8600 = vmatpush1.bf16.msra.mxu0 %v7300
    %8601 = vmatprep.subr.bf16.mxu0 %v7317
    %8602 = vmatpush1.bf16.msra.mxu0 %v7316
    %8603 = vmatprep.subr.bf16.mxu0 %v7333
    %8604 = vmatpush1.bf16.msra.mxu0 %v7332
    %8605 = vmatprep.subr.bf16.mxu0 %v7349
    %8606 = vmatpush1.bf16.msra.mxu0 %v7348
    %8607 = vmatprep.subr.bf16.mxu0 %v7365
    %8608 = vmatpush1.bf16.msra.mxu0 %v7364
    %8609 = vmatprep.subr.bf16.mxu0 %v7381
    %8610 = vmatpush1.bf16.msra.mxu0 %v7380
    %8611 = vmatprep.subr.bf16.mxu0 %v7397
    %8612 = vmatpush1.bf16.msra.mxu0 %v7396
    %8613 = vmatprep.subr.bf16.mxu0 %v7413
    %8614 = vmatpush1.bf16.msra.mxu0 %v7412
    %8615 = vmatprep.subr.bf16.mxu0 %v7429
    %8616 = vmatpush1.bf16.msra.mxu0 %v7428
    %8617 = vmatprep.subr.bf16.mxu0 %v7445
    %8618 = vmatpush1.bf16.msra.mxu0 %v7444
    %8619 = vmatprep.subr.bf16.mxu0 %v7461
    %8620 = vmatpush1.bf16.msra.mxu0 %v7460
    %8621 = vmatprep.mubr.bf16.mxu0 %v4817
    %8622 = vmatmul.mubr.bf16.gmra.mrb[0].mxu0 %v4816
    %v8623 = vpop.f32.mrb[0].mxu0
    %v8624 = vadd.f32 %v8583, %v8623
    %v8625 = vpop.f32.mrb[0].mxu0
    %v8626 = vadd.f32 %v8585, %v8625
    %v8627 = vpop.f32.mrb[0].mxu0
    %v8628 = vpop.f32.mrb[0].mxu0
    %8629 = vdwg.mxu0
    %v8630 = vmax.f32 %v8050, 0.0
    %v8631 = vmax.f32 %v8052, 0.0
    %v8632 = vmax.f32 %v8132, 0.0
    %v8633 = vmax.f32 %v8134, 0.0
    %v8634 = vmax.f32 %v8214, 0.0
    %v8635 = vmax.f32 %v8216, 0.0
    %v8636 = vmax.f32 %v8296, 0.0
    %v8637 = vmax.f32 %v8298, 0.0
    %v8638 = vmax.f32 %v8378, 0.0
    %v8639 = vmax.f32 %v8380, 0.0
    %v8640 = vmax.f32 %v8460, 0.0
    %v8641 = vmax.f32 %v8462, 0.0
    %v8642 = vmax.f32 %v8542, 0.0
    %v8643 = vmax.f32 %v8544, 0.0
    %v8644 = vmax.f32 %v8624, 0.0
    %v8645 = vmax.f32 %v8626, 0.0
    %v8646 = vpack.c.bf16 %v8630, %v8630
    %v8647 = vpack.c.bf16 %v8631, %v8631
    %v8648 = vpack.c.bf16 %v8632, %v8632
    %v8649 = vpack.c.bf16 %v8633, %v8633
    %v8650 = vpack.c.bf16 %v8634, %v8634
    %v8651 = vpack.c.bf16 %v8635, %v8635
    %v8652 = vpack.c.bf16 %v8636, %v8636
    %v8653 = vpack.c.bf16 %v8637, %v8637
    %v8654 = vpack.c.bf16 %v8638, %v8638
    %v8655 = vpack.c.bf16 %v8639, %v8639
    %v8656 = vpack.c.bf16 %v8640, %v8640
    %v8657 = vpack.c.bf16 %v8641, %v8641
    %v8658 = vpack.c.bf16 %v8642, %v8642
    %v8659 = vpack.c.bf16 %v8643, %v8643
    %v8660 = vpack.c.bf16 %v8644, %v8644
    %v8661 = vpack.c.bf16 %v8645, %v8645
    %v8662 = vld [vmem:[#allocation12] sm:$0xf]
    %v8663 = vld [vmem:[#allocation12 + $0x4] sm:$0xf]
    %v8664 = vld [vmem:[#allocation12 + $0x8] sm:$0xf]
    %v8665 = vld [vmem:[#allocation12 + $0xc] sm:$0xf]
    %v8666 = vld [vmem:[#allocation12 + $0x10] sm:$0xf]
    %v8667 = vld [vmem:[#allocation12 + $0x14] sm:$0xf]
    %v8668 = vld [vmem:[#allocation12 + $0x18] sm:$0xf]
    %v8669 = vld [vmem:[#allocation12 + $0x1c] sm:$0xf]
    %v8670 = vld [vmem:[#allocation12 + $0x20] sm:$0xf]
    %v8671 = vld [vmem:[#allocation12 + $0x24] sm:$0xf]
    %v8672 = vld [vmem:[#allocation12 + $0x28] sm:$0xf]
    %v8673 = vld [vmem:[#allocation12 + $0x2c] sm:$0xf]
    %v8674 = vld [vmem:[#allocation12 + $0x30] sm:$0xf]
    %v8675 = vld [vmem:[#allocation12 + $0x34] sm:$0xf]
    %v8676 = vld [vmem:[#allocation12 + $0x38] sm:$0xf]
    %v8677 = vld [vmem:[#allocation12 + $0x3c] sm:$0xf]
    %v8678 = vld [vmem:[#allocation12 + $0x40] sm:$0xf]
    %v8679 = vld [vmem:[#allocation12 + $0x44] sm:$0xf]
    %v8680 = vld [vmem:[#allocation12 + $0x48] sm:$0xf]
    %v8681 = vld [vmem:[#allocation12 + $0x4c] sm:$0xf]
    %v8682 = vld [vmem:[#allocation12 + $0x50] sm:$0xf]
    %v8683 = vld [vmem:[#allocation12 + $0x54] sm:$0xf]
    %v8684 = vld [vmem:[#allocation12 + $0x58] sm:$0xf]
    %v8685 = vld [vmem:[#allocation12 + $0x5c] sm:$0xf]
    %v8686 = vld [vmem:[#allocation12 + $0x60] sm:$0xf]
    %v8687 = vld [vmem:[#allocation12 + $0x64] sm:$0xf]
    %v8688 = vld [vmem:[#allocation12 + $0x68] sm:$0xf]
    %v8689 = vld [vmem:[#allocation12 + $0x6c] sm:$0xf]
    %v8690 = vld [vmem:[#allocation12 + $0x70] sm:$0xf]
    %v8691 = vld [vmem:[#allocation12 + $0x74] sm:$0xf]
    %v8692 = vld [vmem:[#allocation12 + $0x78] sm:$0xf]
    %v8693 = vld [vmem:[#allocation12 + $0x7c] sm:$0xf]
    %v8694 = vld [vmem:[#allocation12 + $0x80] sm:$0xf]
    %v8695 = vld [vmem:[#allocation12 + $0x84] sm:$0xf]
    %v8696 = vld [vmem:[#allocation12 + $0x88] sm:$0xf]
    %v8697 = vld [vmem:[#allocation12 + $0x8c] sm:$0xf]
    %v8698 = vld [vmem:[#allocation12 + $0x90] sm:$0xf]
    %v8699 = vld [vmem:[#allocation12 + $0x94] sm:$0xf]
    %v8700 = vld [vmem:[#allocation12 + $0x98] sm:$0xf]
    %v8701 = vld [vmem:[#allocation12 + $0x9c] sm:$0xf]
    %v8702 = vld [vmem:[#allocation12 + $0xa0] sm:$0xf]
    %v8703 = vld [vmem:[#allocation12 + $0xa4] sm:$0xf]
    %v8704 = vld [vmem:[#allocation12 + $0xa8] sm:$0xf]
    %v8705 = vld [vmem:[#allocation12 + $0xac] sm:$0xf]
    %v8706 = vld [vmem:[#allocation12 + $0xb0] sm:$0xf]
    %v8707 = vld [vmem:[#allocation12 + $0xb4] sm:$0xf]
    %v8708 = vld [vmem:[#allocation12 + $0xb8] sm:$0xf]
    %v8709 = vld [vmem:[#allocation12 + $0xbc] sm:$0xf]
    %v8710 = vld [vmem:[#allocation12 + $0xc0] sm:$0xf]
    %v8711 = vld [vmem:[#allocation12 + $0xc4] sm:$0xf]
    %v8712 = vld [vmem:[#allocation12 + $0xc8] sm:$0xf]
    %v8713 = vld [vmem:[#allocation12 + $0xcc] sm:$0xf]
    %v8714 = vld [vmem:[#allocation12 + $0xd0] sm:$0xf]
    %v8715 = vld [vmem:[#allocation12 + $0xd4] sm:$0xf]
    %v8716 = vld [vmem:[#allocation12 + $0xd8] sm:$0xf]
    %v8717 = vld [vmem:[#allocation12 + $0xdc] sm:$0xf]
    %v8718 = vld [vmem:[#allocation12 + $0xe0] sm:$0xf]
    %v8719 = vld [vmem:[#allocation12 + $0xe4] sm:$0xf]
    %v8720 = vld [vmem:[#allocation12 + $0xe8] sm:$0xf]
    %v8721 = vld [vmem:[#allocation12 + $0xec] sm:$0xf]
    %v8722 = vld [vmem:[#allocation12 + $0xf0] sm:$0xf]
    %v8723 = vld [vmem:[#allocation12 + $0xf4] sm:$0xf]
    %v8724 = vld [vmem:[#allocation12 + $0xf8] sm:$0xf]
    %v8725 = vld [vmem:[#allocation12 + $0xfc] sm:$0xf]
    %v8726 = vld [vmem:[#allocation12 + $0x100] sm:$0xf]
    %v8727 = vld [vmem:[#allocation12 + $0x104] sm:$0xf]
    %v8728 = vld [vmem:[#allocation12 + $0x108] sm:$0xf]
    %v8729 = vld [vmem:[#allocation12 + $0x10c] sm:$0xf]
    %v8730 = vld [vmem:[#allocation12 + $0x110] sm:$0xf]
    %v8731 = vld [vmem:[#allocation12 + $0x114] sm:$0xf]
    %v8732 = vld [vmem:[#allocation12 + $0x118] sm:$0xf]
    %v8733 = vld [vmem:[#allocation12 + $0x11c] sm:$0xf]
    %v8734 = vld [vmem:[#allocation12 + $0x120] sm:$0xf]
    %v8735 = vld [vmem:[#allocation12 + $0x124] sm:$0xf]
    %v8736 = vld [vmem:[#allocation12 + $0x128] sm:$0xf]
    %v8737 = vld [vmem:[#allocation12 + $0x12c] sm:$0xf]
    %v8738 = vld [vmem:[#allocation12 + $0x130] sm:$0xf]
    %v8739 = vld [vmem:[#allocation12 + $0x134] sm:$0xf]
    %v8740 = vld [vmem:[#allocation12 + $0x138] sm:$0xf]
    %v8741 = vld [vmem:[#allocation12 + $0x13c] sm:$0xf]
    %v8742 = vld [vmem:[#allocation12 + $0x140] sm:$0xf]
    %v8743 = vld [vmem:[#allocation12 + $0x144] sm:$0xf]
    %v8744 = vld [vmem:[#allocation12 + $0x148] sm:$0xf]
    %v8745 = vld [vmem:[#allocation12 + $0x14c] sm:$0xf]
    %v8746 = vld [vmem:[#allocation12 + $0x150] sm:$0xf]
    %v8747 = vld [vmem:[#allocation12 + $0x154] sm:$0xf]
    %v8748 = vld [vmem:[#allocation12 + $0x158] sm:$0xf]
    %v8749 = vld [vmem:[#allocation12 + $0x15c] sm:$0xf]
    %v8750 = vld [vmem:[#allocation12 + $0x160] sm:$0xf]
    %v8751 = vld [vmem:[#allocation12 + $0x164] sm:$0xf]
    %v8752 = vld [vmem:[#allocation12 + $0x168] sm:$0xf]
    %v8753 = vld [vmem:[#allocation12 + $0x16c] sm:$0xf]
    %v8754 = vld [vmem:[#allocation12 + $0x170] sm:$0xf]
    %v8755 = vld [vmem:[#allocation12 + $0x174] sm:$0xf]
    %v8756 = vld [vmem:[#allocation12 + $0x178] sm:$0xf]
    %v8757 = vld [vmem:[#allocation12 + $0x17c] sm:$0xf]
    %v8758 = vld [vmem:[#allocation12 + $0x180] sm:$0xf]
    %v8759 = vld [vmem:[#allocation12 + $0x184] sm:$0xf]
    %v8760 = vld [vmem:[#allocation12 + $0x188] sm:$0xf]
    %v8761 = vld [vmem:[#allocation12 + $0x18c] sm:$0xf]
    %v8762 = vld [vmem:[#allocation12 + $0x190] sm:$0xf]
    %v8763 = vld [vmem:[#allocation12 + $0x194] sm:$0xf]
    %v8764 = vld [vmem:[#allocation12 + $0x198] sm:$0xf]
    %v8765 = vld [vmem:[#allocation12 + $0x19c] sm:$0xf]
    %v8766 = vld [vmem:[#allocation12 + $0x1a0] sm:$0xf]
    %v8767 = vld [vmem:[#allocation12 + $0x1a4] sm:$0xf]
    %v8768 = vld [vmem:[#allocation12 + $0x1a8] sm:$0xf]
    %v8769 = vld [vmem:[#allocation12 + $0x1ac] sm:$0xf]
    %v8770 = vld [vmem:[#allocation12 + $0x1b0] sm:$0xf]
    %v8771 = vld [vmem:[#allocation12 + $0x1b4] sm:$0xf]
    %v8772 = vld [vmem:[#allocation12 + $0x1b8] sm:$0xf]
    %v8773 = vld [vmem:[#allocation12 + $0x1bc] sm:$0xf]
    %v8774 = vld [vmem:[#allocation12 + $0x1c0] sm:$0xf]
    %v8775 = vld [vmem:[#allocation12 + $0x1c4] sm:$0xf]
    %v8776 = vld [vmem:[#allocation12 + $0x1c8] sm:$0xf]
    %v8777 = vld [vmem:[#allocation12 + $0x1cc] sm:$0xf]
    %v8778 = vld [vmem:[#allocation12 + $0x1d0] sm:$0xf]
    %v8779 = vld [vmem:[#allocation12 + $0x1d4] sm:$0xf]
    %v8780 = vld [vmem:[#allocation12 + $0x1d8] sm:$0xf]
    %v8781 = vld [vmem:[#allocation12 + $0x1dc] sm:$0xf]
    %v8782 = vld [vmem:[#allocation12 + $0x1e0] sm:$0xf]
    %v8783 = vld [vmem:[#allocation12 + $0x1e4] sm:$0xf]
    %v8784 = vld [vmem:[#allocation12 + $0x1e8] sm:$0xf]
    %v8785 = vld [vmem:[#allocation12 + $0x1ec] sm:$0xf]
    %v8786 = vld [vmem:[#allocation12 + $0x1f0] sm:$0xf]
    %v8787 = vld [vmem:[#allocation12 + $0x1f4] sm:$0xf]
    %v8788 = vld [vmem:[#allocation12 + $0x1f8] sm:$0xf]
    %v8789 = vld [vmem:[#allocation12 + $0x1fc] sm:$0xf]
    %v8790 = vld [vmem:[#allocation12 + $0x200] sm:$0xf]
    %v8791 = vld [vmem:[#allocation12 + $0x204] sm:$0xf]
    %v8792 = vld [vmem:[#allocation12 + $0x208] sm:$0xf]
    %v8793 = vld [vmem:[#allocation12 + $0x20c] sm:$0xf]
    %v8794 = vld [vmem:[#allocation12 + $0x210] sm:$0xf]
    %v8795 = vld [vmem:[#allocation12 + $0x214] sm:$0xf]
    %v8796 = vld [vmem:[#allocation12 + $0x218] sm:$0xf]
    %v8797 = vld [vmem:[#allocation12 + $0x21c] sm:$0xf]
    %v8798 = vld [vmem:[#allocation12 + $0x220] sm:$0xf]
    %v8799 = vld [vmem:[#allocation12 + $0x224] sm:$0xf]
    %v8800 = vld [vmem:[#allocation12 + $0x228] sm:$0xf]
    %v8801 = vld [vmem:[#allocation12 + $0x22c] sm:$0xf]
    %v8802 = vld [vmem:[#allocation12 + $0x230] sm:$0xf]
    %v8803 = vld [vmem:[#allocation12 + $0x234] sm:$0xf]
    %v8804 = vld [vmem:[#allocation12 + $0x238] sm:$0xf]
    %v8805 = vld [vmem:[#allocation12 + $0x23c] sm:$0xf]
    %v8806 = vld [vmem:[#allocation12 + $0x240] sm:$0xf]
    %v8807 = vld [vmem:[#allocation12 + $0x244] sm:$0xf]
    %v8808 = vld [vmem:[#allocation12 + $0x248] sm:$0xf]
    %v8809 = vld [vmem:[#allocation12 + $0x24c] sm:$0xf]
    %v8810 = vld [vmem:[#allocation12 + $0x250] sm:$0xf]
    %v8811 = vld [vmem:[#allocation12 + $0x254] sm:$0xf]
    %v8812 = vld [vmem:[#allocation12 + $0x258] sm:$0xf]
    %v8813 = vld [vmem:[#allocation12 + $0x25c] sm:$0xf]
    %v8814 = vld [vmem:[#allocation12 + $0x260] sm:$0xf]
    %v8815 = vld [vmem:[#allocation12 + $0x264] sm:$0xf]
    %v8816 = vld [vmem:[#allocation12 + $0x268] sm:$0xf]
    %v8817 = vld [vmem:[#allocation12 + $0x26c] sm:$0xf]
    %v8818 = vld [vmem:[#allocation12 + $0x270] sm:$0xf]
    %v8819 = vld [vmem:[#allocation12 + $0x274] sm:$0xf]
    %v8820 = vld [vmem:[#allocation12 + $0x278] sm:$0xf]
    %v8821 = vld [vmem:[#allocation12 + $0x27c] sm:$0xf]
    %v8822 = vld [vmem:[#allocation12 + $0x280] sm:$0xf]
    %v8823 = vld [vmem:[#allocation12 + $0x284] sm:$0xf]
    %v8824 = vld [vmem:[#allocation12 + $0x288] sm:$0xf]
    %v8825 = vld [vmem:[#allocation12 + $0x28c] sm:$0xf]
    %v8826 = vld [vmem:[#allocation12 + $0x290] sm:$0xf]
    %v8827 = vld [vmem:[#allocation12 + $0x294] sm:$0xf]
    %v8828 = vld [vmem:[#allocation12 + $0x298] sm:$0xf]
    %v8829 = vld [vmem:[#allocation12 + $0x29c] sm:$0xf]
    %v8830 = vld [vmem:[#allocation12 + $0x2a0] sm:$0xf]
    %v8831 = vld [vmem:[#allocation12 + $0x2a4] sm:$0xf]
    %v8832 = vld [vmem:[#allocation12 + $0x2a8] sm:$0xf]
    %v8833 = vld [vmem:[#allocation12 + $0x2ac] sm:$0xf]
    %v8834 = vld [vmem:[#allocation12 + $0x2b0] sm:$0xf]
    %v8835 = vld [vmem:[#allocation12 + $0x2b4] sm:$0xf]
    %v8836 = vld [vmem:[#allocation12 + $0x2b8] sm:$0xf]
    %v8837 = vld [vmem:[#allocation12 + $0x2bc] sm:$0xf]
    %v8838 = vld [vmem:[#allocation12 + $0x2c0] sm:$0xf]
    %v8839 = vld [vmem:[#allocation12 + $0x2c4] sm:$0xf]
    %v8840 = vld [vmem:[#allocation12 + $0x2c8] sm:$0xf]
    %v8841 = vld [vmem:[#allocation12 + $0x2cc] sm:$0xf]
    %v8842 = vld [vmem:[#allocation12 + $0x2d0] sm:$0xf]
    %v8843 = vld [vmem:[#allocation12 + $0x2d4] sm:$0xf]
    %v8844 = vld [vmem:[#allocation12 + $0x2d8] sm:$0xf]
    %v8845 = vld [vmem:[#allocation12 + $0x2dc] sm:$0xf]
    %v8846 = vld [vmem:[#allocation12 + $0x2e0] sm:$0xf]
    %v8847 = vld [vmem:[#allocation12 + $0x2e4] sm:$0xf]
    %v8848 = vld [vmem:[#allocation12 + $0x2e8] sm:$0xf]
    %v8849 = vld [vmem:[#allocation12 + $0x2ec] sm:$0xf]
    %v8850 = vld [vmem:[#allocation12 + $0x2f0] sm:$0xf]
    %v8851 = vld [vmem:[#allocation12 + $0x2f4] sm:$0xf]
    %v8852 = vld [vmem:[#allocation12 + $0x2f8] sm:$0xf]
    %v8853 = vld [vmem:[#allocation12 + $0x2fc] sm:$0xf]
    %v8854 = vld [vmem:[#allocation12 + $0x300] sm:$0xf]
    %v8855 = vld [vmem:[#allocation12 + $0x304] sm:$0xf]
    %v8856 = vld [vmem:[#allocation12 + $0x308] sm:$0xf]
    %v8857 = vld [vmem:[#allocation12 + $0x30c] sm:$0xf]
    %v8858 = vld [vmem:[#allocation12 + $0x310] sm:$0xf]
    %v8859 = vld [vmem:[#allocation12 + $0x314] sm:$0xf]
    %v8860 = vld [vmem:[#allocation12 + $0x318] sm:$0xf]
    %v8861 = vld [vmem:[#allocation12 + $0x31c] sm:$0xf]
    %v8862 = vld [vmem:[#allocation12 + $0x320] sm:$0xf]
    %v8863 = vld [vmem:[#allocation12 + $0x324] sm:$0xf]
    %v8864 = vld [vmem:[#allocation12 + $0x328] sm:$0xf]
    %v8865 = vld [vmem:[#allocation12 + $0x32c] sm:$0xf]
    %v8866 = vld [vmem:[#allocation12 + $0x330] sm:$0xf]
    %v8867 = vld [vmem:[#allocation12 + $0x334] sm:$0xf]
    %v8868 = vld [vmem:[#allocation12 + $0x338] sm:$0xf]
    %v8869 = vld [vmem:[#allocation12 + $0x33c] sm:$0xf]
    %v8870 = vld [vmem:[#allocation12 + $0x340] sm:$0xf]
    %v8871 = vld [vmem:[#allocation12 + $0x344] sm:$0xf]
    %v8872 = vld [vmem:[#allocation12 + $0x348] sm:$0xf]
    %v8873 = vld [vmem:[#allocation12 + $0x34c] sm:$0xf]
    %v8874 = vld [vmem:[#allocation12 + $0x350] sm:$0xf]
    %v8875 = vld [vmem:[#allocation12 + $0x354] sm:$0xf]
    %v8876 = vld [vmem:[#allocation12 + $0x358] sm:$0xf]
    %v8877 = vld [vmem:[#allocation12 + $0x35c] sm:$0xf]
    %v8878 = vld [vmem:[#allocation12 + $0x360] sm:$0xf]
    %v8879 = vld [vmem:[#allocation12 + $0x364] sm:$0xf]
    %v8880 = vld [vmem:[#allocation12 + $0x368] sm:$0xf]
    %v8881 = vld [vmem:[#allocation12 + $0x36c] sm:$0xf]
    %v8882 = vld [vmem:[#allocation12 + $0x370] sm:$0xf]
    %v8883 = vld [vmem:[#allocation12 + $0x374] sm:$0xf]
    %v8884 = vld [vmem:[#allocation12 + $0x378] sm:$0xf]
    %v8885 = vld [vmem:[#allocation12 + $0x37c] sm:$0xf]
    %v8886 = vld [vmem:[#allocation12 + $0x380] sm:$0xf]
    %v8887 = vld [vmem:[#allocation12 + $0x384] sm:$0xf]
    %v8888 = vld [vmem:[#allocation12 + $0x388] sm:$0xf]
    %v8889 = vld [vmem:[#allocation12 + $0x38c] sm:$0xf]
    %v8890 = vld [vmem:[#allocation12 + $0x390] sm:$0xf]
    %v8891 = vld [vmem:[#allocation12 + $0x394] sm:$0xf]
    %v8892 = vld [vmem:[#allocation12 + $0x398] sm:$0xf]
    %v8893 = vld [vmem:[#allocation12 + $0x39c] sm:$0xf]
    %v8894 = vld [vmem:[#allocation12 + $0x3a0] sm:$0xf]
    %v8895 = vld [vmem:[#allocation12 + $0x3a4] sm:$0xf]
    %v8896 = vld [vmem:[#allocation12 + $0x3a8] sm:$0xf]
    %v8897 = vld [vmem:[#allocation12 + $0x3ac] sm:$0xf]
    %v8898 = vld [vmem:[#allocation12 + $0x3b0] sm:$0xf]
    %v8899 = vld [vmem:[#allocation12 + $0x3b4] sm:$0xf]
    %v8900 = vld [vmem:[#allocation12 + $0x3b8] sm:$0xf]
    %v8901 = vld [vmem:[#allocation12 + $0x3bc] sm:$0xf]
    %v8902 = vld [vmem:[#allocation12 + $0x3c0] sm:$0xf]
    %v8903 = vld [vmem:[#allocation12 + $0x3c4] sm:$0xf]
    %v8904 = vld [vmem:[#allocation12 + $0x3c8] sm:$0xf]
    %v8905 = vld [vmem:[#allocation12 + $0x3cc] sm:$0xf]
    %v8906 = vld [vmem:[#allocation12 + $0x3d0] sm:$0xf]
    %v8907 = vld [vmem:[#allocation12 + $0x3d4] sm:$0xf]
    %v8908 = vld [vmem:[#allocation12 + $0x3d8] sm:$0xf]
    %v8909 = vld [vmem:[#allocation12 + $0x3dc] sm:$0xf]
    %v8910 = vld [vmem:[#allocation12 + $0x3e0] sm:$0xf]
    %v8911 = vld [vmem:[#allocation12 + $0x3e4] sm:$0xf]
    %v8912 = vld [vmem:[#allocation12 + $0x3e8] sm:$0xf]
    %v8913 = vld [vmem:[#allocation12 + $0x3ec] sm:$0xf]
    %v8914 = vld [vmem:[#allocation12 + $0x3f0] sm:$0xf]
    %v8915 = vld [vmem:[#allocation12 + $0x3f4] sm:$0xf]
    %v8916 = vld [vmem:[#allocation12 + $0x3f8] sm:$0xf]
    %v8917 = vld [vmem:[#allocation12 + $0x3fc] sm:$0xf]
    %v8918 = vld [vmem:[#allocation13] sm:$0x1]
    %v8920 = vlaneseq
    %v8921 = vshrl.u32 %v8920, 7
    %v8922 = vsub.s32 0, %v8921
    %v8923 = vrot.slane %v8918, %v8922
    %v9181 = vunpack.c.l.b16 %v8662
    %v9182 = vunpack.c.l.b16 %v8663
    %v9183 = vunpack.c.l.b16 %v8664
    %v9184 = vunpack.c.l.b16 %v8665
    %v9185 = vunpack.c.l.b16 %v8666
    %v9186 = vunpack.c.l.b16 %v8667
    %v9187 = vunpack.c.l.b16 %v8668
    %v9188 = vunpack.c.l.b16 %v8669
    %v9189 = vunpack.c.l.b16 %v8670
    %v9190 = vunpack.c.l.b16 %v8671
    %v9191 = vunpack.c.l.b16 %v8672
    %v9192 = vunpack.c.l.b16 %v8673
    %v9193 = vunpack.c.l.b16 %v8674
    %v9194 = vunpack.c.l.b16 %v8675
    %v9195 = vunpack.c.l.b16 %v8676
    %v9196 = vunpack.c.l.b16 %v8677
    %v9197 = vunpack.c.l.b16 %v8678
    %v9198 = vunpack.c.l.b16 %v8679
    %v9199 = vunpack.c.l.b16 %v8680
    %v9200 = vunpack.c.l.b16 %v8681
    %v9201 = vunpack.c.l.b16 %v8682
    %v9202 = vunpack.c.l.b16 %v8683
    %v9203 = vunpack.c.l.b16 %v8684
    %v9204 = vunpack.c.l.b16 %v8685
    %v9205 = vunpack.c.l.b16 %v8686
    %v9206 = vunpack.c.l.b16 %v8687
    %v9207 = vunpack.c.l.b16 %v8688
    %v9208 = vunpack.c.l.b16 %v8689
    %v9209 = vunpack.c.l.b16 %v8690
    %v9210 = vunpack.c.l.b16 %v8691
    %v9211 = vunpack.c.l.b16 %v8692
    %v9212 = vunpack.c.l.b16 %v8693
    %v9213 = vunpack.c.l.b16 %v8694
    %v9214 = vunpack.c.l.b16 %v8695
    %v9215 = vunpack.c.l.b16 %v8696
    %v9216 = vunpack.c.l.b16 %v8697
    %v9217 = vunpack.c.l.b16 %v8698
    %v9218 = vunpack.c.l.b16 %v8699
    %v9219 = vunpack.c.l.b16 %v8700
    %v9220 = vunpack.c.l.b16 %v8701
    %v9221 = vunpack.c.l.b16 %v8702
    %v9222 = vunpack.c.l.b16 %v8703
    %v9223 = vunpack.c.l.b16 %v8704
    %v9224 = vunpack.c.l.b16 %v8705
    %v9225 = vunpack.c.l.b16 %v8706
    %v9226 = vunpack.c.l.b16 %v8707
    %v9227 = vunpack.c.l.b16 %v8708
    %v9228 = vunpack.c.l.b16 %v8709
    %v9229 = vunpack.c.l.b16 %v8710
    %v9230 = vunpack.c.l.b16 %v8711
    %v9231 = vunpack.c.l.b16 %v8712
    %v9232 = vunpack.c.l.b16 %v8713
    %v9233 = vunpack.c.l.b16 %v8714
    %v9234 = vunpack.c.l.b16 %v8715
    %v9235 = vunpack.c.l.b16 %v8716
    %v9236 = vunpack.c.l.b16 %v8717
    %v9237 = vunpack.c.l.b16 %v8718
    %v9238 = vunpack.c.l.b16 %v8719
    %v9239 = vunpack.c.l.b16 %v8720
    %v9240 = vunpack.c.l.b16 %v8721
    %v9241 = vunpack.c.l.b16 %v8722
    %v9242 = vunpack.c.l.b16 %v8723
    %v9243 = vunpack.c.l.b16 %v8724
    %v9244 = vunpack.c.l.b16 %v8725
    %v9245 = vunpack.c.l.b16 %v8726
    %v9246 = vunpack.c.l.b16 %v8727
    %v9247 = vunpack.c.l.b16 %v8728
    %v9248 = vunpack.c.l.b16 %v8729
    %v9249 = vunpack.c.l.b16 %v8730
    %v9250 = vunpack.c.l.b16 %v8731
    %v9251 = vunpack.c.l.b16 %v8732
    %v9252 = vunpack.c.l.b16 %v8733
    %v9253 = vunpack.c.l.b16 %v8734
    %v9254 = vunpack.c.l.b16 %v8735
    %v9255 = vunpack.c.l.b16 %v8736
    %v9256 = vunpack.c.l.b16 %v8737
    %v9257 = vunpack.c.l.b16 %v8738
    %v9258 = vunpack.c.l.b16 %v8739
    %v9259 = vunpack.c.l.b16 %v8740
    %v9260 = vunpack.c.l.b16 %v8741
    %v9261 = vunpack.c.l.b16 %v8742
    %v9262 = vunpack.c.l.b16 %v8743
    %v9263 = vunpack.c.l.b16 %v8744
    %v9264 = vunpack.c.l.b16 %v8745
    %v9265 = vunpack.c.l.b16 %v8746
    %v9266 = vunpack.c.l.b16 %v8747
    %v9267 = vunpack.c.l.b16 %v8748
    %v9268 = vunpack.c.l.b16 %v8749
    %v9269 = vunpack.c.l.b16 %v8750
    %v9270 = vunpack.c.l.b16 %v8751
    %v9271 = vunpack.c.l.b16 %v8752
    %v9272 = vunpack.c.l.b16 %v8753
    %v9273 = vunpack.c.l.b16 %v8754
    %v9274 = vunpack.c.l.b16 %v8755
    %v9275 = vunpack.c.l.b16 %v8756
    %v9276 = vunpack.c.l.b16 %v8757
    %v9277 = vunpack.c.l.b16 %v8758
    %v9278 = vunpack.c.l.b16 %v8759
    %v9279 = vunpack.c.l.b16 %v8760
    %v9280 = vunpack.c.l.b16 %v8761
    %v9281 = vunpack.c.l.b16 %v8762
    %v9282 = vunpack.c.l.b16 %v8763
    %v9283 = vunpack.c.l.b16 %v8764
    %v9284 = vunpack.c.l.b16 %v8765
    %v9285 = vunpack.c.l.b16 %v8766
    %v9286 = vunpack.c.l.b16 %v8767
    %v9287 = vunpack.c.l.b16 %v8768
    %v9288 = vunpack.c.l.b16 %v8769
    %v9289 = vunpack.c.l.b16 %v8770
    %v9290 = vunpack.c.l.b16 %v8771
    %v9291 = vunpack.c.l.b16 %v8772
    %v9292 = vunpack.c.l.b16 %v8773
    %v9293 = vunpack.c.l.b16 %v8774
    %v9294 = vunpack.c.l.b16 %v8775
    %v9295 = vunpack.c.l.b16 %v8776
    %v9296 = vunpack.c.l.b16 %v8777
    %v9297 = vunpack.c.l.b16 %v8778
    %v9298 = vunpack.c.l.b16 %v8779
    %v9299 = vunpack.c.l.b16 %v8780
    %v9300 = vunpack.c.l.b16 %v8781
    %v9301 = vunpack.c.l.b16 %v8782
    %v9302 = vunpack.c.l.b16 %v8783
    %v9303 = vunpack.c.l.b16 %v8784
    %v9304 = vunpack.c.l.b16 %v8785
    %v9305 = vunpack.c.l.b16 %v8786
    %v9306 = vunpack.c.l.b16 %v8787
    %v9307 = vunpack.c.l.b16 %v8788
    %v9308 = vunpack.c.l.b16 %v8789
    %v9309 = vunpack.c.l.b16 %v8790
    %v9310 = vunpack.c.l.b16 %v8791
    %v9311 = vunpack.c.l.b16 %v8792
    %v9312 = vunpack.c.l.b16 %v8793
    %v9313 = vunpack.c.l.b16 %v8794
    %v9314 = vunpack.c.l.b16 %v8795
    %v9315 = vunpack.c.l.b16 %v8796
    %v9316 = vunpack.c.l.b16 %v8797
    %v9317 = vunpack.c.l.b16 %v8798
    %v9318 = vunpack.c.l.b16 %v8799
    %v9319 = vunpack.c.l.b16 %v8800
    %v9320 = vunpack.c.l.b16 %v8801
    %v9321 = vunpack.c.l.b16 %v8802
    %v9322 = vunpack.c.l.b16 %v8803
    %v9323 = vunpack.c.l.b16 %v8804
    %v9324 = vunpack.c.l.b16 %v8805
    %v9325 = vunpack.c.l.b16 %v8806
    %v9326 = vunpack.c.l.b16 %v8807
    %v9327 = vunpack.c.l.b16 %v8808
    %v9328 = vunpack.c.l.b16 %v8809
    %v9329 = vunpack.c.l.b16 %v8810
    %v9330 = vunpack.c.l.b16 %v8811
    %v9331 = vunpack.c.l.b16 %v8812
    %v9332 = vunpack.c.l.b16 %v8813
    %v9333 = vunpack.c.l.b16 %v8814
    %v9334 = vunpack.c.l.b16 %v8815
    %v9335 = vunpack.c.l.b16 %v8816
    %v9336 = vunpack.c.l.b16 %v8817
    %v9337 = vunpack.c.l.b16 %v8818
    %v9338 = vunpack.c.l.b16 %v8819
    %v9339 = vunpack.c.l.b16 %v8820
    %v9340 = vunpack.c.l.b16 %v8821
    %v9341 = vunpack.c.l.b16 %v8822
    %v9342 = vunpack.c.l.b16 %v8823
    %v9343 = vunpack.c.l.b16 %v8824
    %v9344 = vunpack.c.l.b16 %v8825
    %v9345 = vunpack.c.l.b16 %v8826
    %v9346 = vunpack.c.l.b16 %v8827
    %v9347 = vunpack.c.l.b16 %v8828
    %v9348 = vunpack.c.l.b16 %v8829
    %v9349 = vunpack.c.l.b16 %v8830
    %v9350 = vunpack.c.l.b16 %v8831
    %v9351 = vunpack.c.l.b16 %v8832
    %v9352 = vunpack.c.l.b16 %v8833
    %v9353 = vunpack.c.l.b16 %v8834
    %v9354 = vunpack.c.l.b16 %v8835
    %v9355 = vunpack.c.l.b16 %v8836
    %v9356 = vunpack.c.l.b16 %v8837
    %v9357 = vunpack.c.l.b16 %v8838
    %v9358 = vunpack.c.l.b16 %v8839
    %v9359 = vunpack.c.l.b16 %v8840
    %v9360 = vunpack.c.l.b16 %v8841
    %v9361 = vunpack.c.l.b16 %v8842
    %v9362 = vunpack.c.l.b16 %v8843
    %v9363 = vunpack.c.l.b16 %v8844
    %v9364 = vunpack.c.l.b16 %v8845
    %v9365 = vunpack.c.l.b16 %v8846
    %v9366 = vunpack.c.l.b16 %v8847
    %v9367 = vunpack.c.l.b16 %v8848
    %v9368 = vunpack.c.l.b16 %v8849
    %v9369 = vunpack.c.l.b16 %v8850
    %v9370 = vunpack.c.l.b16 %v8851
    %v9371 = vunpack.c.l.b16 %v8852
    %v9372 = vunpack.c.l.b16 %v8853
    %v9373 = vunpack.c.l.b16 %v8854
    %v9374 = vunpack.c.l.b16 %v8855
    %v9375 = vunpack.c.l.b16 %v8856
    %v9376 = vunpack.c.l.b16 %v8857
    %v9377 = vunpack.c.l.b16 %v8858
    %v9378 = vunpack.c.l.b16 %v8859
    %v9379 = vunpack.c.l.b16 %v8860
    %v9380 = vunpack.c.l.b16 %v8861
    %v9381 = vunpack.c.l.b16 %v8862
    %v9382 = vunpack.c.l.b16 %v8863
    %v9383 = vunpack.c.l.b16 %v8864
    %v9384 = vunpack.c.l.b16 %v8865
    %v9385 = vunpack.c.l.b16 %v8866
    %v9386 = vunpack.c.l.b16 %v8867
    %v9387 = vunpack.c.l.b16 %v8868
    %v9388 = vunpack.c.l.b16 %v8869
    %v9389 = vunpack.c.l.b16 %v8870
    %v9390 = vunpack.c.l.b16 %v8871
    %v9391 = vunpack.c.l.b16 %v8872
    %v9392 = vunpack.c.l.b16 %v8873
    %v9393 = vunpack.c.l.b16 %v8874
    %v9394 = vunpack.c.l.b16 %v8875
    %v9395 = vunpack.c.l.b16 %v8876
    %v9396 = vunpack.c.l.b16 %v8877
    %v9397 = vunpack.c.l.b16 %v8878
    %v9398 = vunpack.c.l.b16 %v8879
    %v9399 = vunpack.c.l.b16 %v8880
    %v9400 = vunpack.c.l.b16 %v8881
    %v9401 = vunpack.c.l.b16 %v8882
    %v9402 = vunpack.c.l.b16 %v8883
    %v9403 = vunpack.c.l.b16 %v8884
    %v9404 = vunpack.c.l.b16 %v8885
    %v9405 = vunpack.c.l.b16 %v8886
    %v9406 = vunpack.c.l.b16 %v8887
    %v9407 = vunpack.c.l.b16 %v8888
    %v9408 = vunpack.c.l.b16 %v8889
    %v9409 = vunpack.c.l.b16 %v8890
    %v9410 = vunpack.c.l.b16 %v8891
    %v9411 = vunpack.c.l.b16 %v8892
    %v9412 = vunpack.c.l.b16 %v8893
    %v9413 = vunpack.c.l.b16 %v8894
    %v9414 = vunpack.c.l.b16 %v8895
    %v9415 = vunpack.c.l.b16 %v8896
    %v9416 = vunpack.c.l.b16 %v8897
    %v9417 = vunpack.c.l.b16 %v8898
    %v9418 = vunpack.c.l.b16 %v8899
    %v9419 = vunpack.c.l.b16 %v8900
    %v9420 = vunpack.c.l.b16 %v8901
    %v9421 = vunpack.c.l.b16 %v8902
    %v9422 = vunpack.c.l.b16 %v8903
    %v9423 = vunpack.c.l.b16 %v8904
    %v9424 = vunpack.c.l.b16 %v8905
    %v9425 = vunpack.c.l.b16 %v8906
    %v9426 = vunpack.c.l.b16 %v8907
    %v9427 = vunpack.c.l.b16 %v8908
    %v9428 = vunpack.c.l.b16 %v8909
    %v9429 = vunpack.c.l.b16 %v8910
    %v9430 = vunpack.c.l.b16 %v8911
    %v9431 = vunpack.c.l.b16 %v8912
    %v9432 = vunpack.c.l.b16 %v8913
    %v9433 = vunpack.c.l.b16 %v8914
    %v9434 = vunpack.c.l.b16 %v8915
    %v9435 = vunpack.c.l.b16 %v8916
    %v9436 = vunpack.c.l.b16 %v8917
    %v9437 = vpack.c.b16 %v9182, %v9181
    %v9438 = vpack.c.b16 %v9184, %v9183
    %v9439 = vpack.c.b16 %v9186, %v9185
    %v9440 = vpack.c.b16 %v9188, %v9187
    %v9441 = vpack.c.b16 %v9190, %v9189
    %v9442 = vpack.c.b16 %v9192, %v9191
    %v9443 = vpack.c.b16 %v9194, %v9193
    %v9444 = vpack.c.b16 %v9196, %v9195
    %v9445 = vpack.c.b16 %v9198, %v9197
    %v9446 = vpack.c.b16 %v9200, %v9199
    %v9447 = vpack.c.b16 %v9202, %v9201
    %v9448 = vpack.c.b16 %v9204, %v9203
    %v9449 = vpack.c.b16 %v9206, %v9205
    %v9450 = vpack.c.b16 %v9208, %v9207
    %v9451 = vpack.c.b16 %v9210, %v9209
    %v9452 = vpack.c.b16 %v9212, %v9211
    %v9453 = vpack.c.b16 %v9214, %v9213
    %v9454 = vpack.c.b16 %v9216, %v9215
    %v9455 = vpack.c.b16 %v9218, %v9217
    %v9456 = vpack.c.b16 %v9220, %v9219
    %v9457 = vpack.c.b16 %v9222, %v9221
    %v9458 = vpack.c.b16 %v9224, %v9223
    %v9459 = vpack.c.b16 %v9226, %v9225
    %v9460 = vpack.c.b16 %v9228, %v9227
    %v9461 = vpack.c.b16 %v9230, %v9229
    %v9462 = vpack.c.b16 %v9232, %v9231
    %v9463 = vpack.c.b16 %v9234, %v9233
    %v9464 = vpack.c.b16 %v9236, %v9235
    %v9465 = vpack.c.b16 %v9238, %v9237
    %v9466 = vpack.c.b16 %v9240, %v9239
    %v9467 = vpack.c.b16 %v9242, %v9241
    %v9468 = vpack.c.b16 %v9244, %v9243
    %v9469 = vpack.c.b16 %v9246, %v9245
    %v9470 = vpack.c.b16 %v9248, %v9247
    %v9471 = vpack.c.b16 %v9250, %v9249
    %v9472 = vpack.c.b16 %v9252, %v9251
    %v9473 = vpack.c.b16 %v9254, %v9253
    %v9474 = vpack.c.b16 %v9256, %v9255
    %v9475 = vpack.c.b16 %v9258, %v9257
    %v9476 = vpack.c.b16 %v9260, %v9259
    %v9477 = vpack.c.b16 %v9262, %v9261
    %v9478 = vpack.c.b16 %v9264, %v9263
    %v9479 = vpack.c.b16 %v9266, %v9265
    %v9480 = vpack.c.b16 %v9268, %v9267
    %v9481 = vpack.c.b16 %v9270, %v9269
    %v9482 = vpack.c.b16 %v9272, %v9271
    %v9483 = vpack.c.b16 %v9274, %v9273
    %v9484 = vpack.c.b16 %v9276, %v9275
    %v9485 = vpack.c.b16 %v9278, %v9277
    %v9486 = vpack.c.b16 %v9280, %v9279
    %v9487 = vpack.c.b16 %v9282, %v9281
    %v9488 = vpack.c.b16 %v9284, %v9283
    %v9489 = vpack.c.b16 %v9286, %v9285
    %v9490 = vpack.c.b16 %v9288, %v9287
    %v9491 = vpack.c.b16 %v9290, %v9289
    %v9492 = vpack.c.b16 %v9292, %v9291
    %v9493 = vpack.c.b16 %v9294, %v9293
    %v9494 = vpack.c.b16 %v9296, %v9295
    %v9495 = vpack.c.b16 %v9298, %v9297
    %v9496 = vpack.c.b16 %v9300, %v9299
    %v9497 = vpack.c.b16 %v9302, %v9301
    %v9498 = vpack.c.b16 %v9304, %v9303
    %v9499 = vpack.c.b16 %v9306, %v9305
    %v9500 = vpack.c.b16 %v9308, %v9307
    %v9501 = vpack.c.b16 %v9310, %v9309
    %v9502 = vpack.c.b16 %v9312, %v9311
    %v9503 = vpack.c.b16 %v9314, %v9313
    %v9504 = vpack.c.b16 %v9316, %v9315
    %v9505 = vpack.c.b16 %v9318, %v9317
    %v9506 = vpack.c.b16 %v9320, %v9319
    %v9507 = vpack.c.b16 %v9322, %v9321
    %v9508 = vpack.c.b16 %v9324, %v9323
    %v9509 = vpack.c.b16 %v9326, %v9325
    %v9510 = vpack.c.b16 %v9328, %v9327
    %v9511 = vpack.c.b16 %v9330, %v9329
    %v9512 = vpack.c.b16 %v9332, %v9331
    %v9513 = vpack.c.b16 %v9334, %v9333
    %v9514 = vpack.c.b16 %v9336, %v9335
    %v9515 = vpack.c.b16 %v9338, %v9337
    %v9516 = vpack.c.b16 %v9340, %v9339
    %v9517 = vpack.c.b16 %v9342, %v9341
    %v9518 = vpack.c.b16 %v9344, %v9343
    %v9519 = vpack.c.b16 %v9346, %v9345
    %v9520 = vpack.c.b16 %v9348, %v9347
    %v9521 = vpack.c.b16 %v9350, %v9349
    %v9522 = vpack.c.b16 %v9352, %v9351
    %v9523 = vpack.c.b16 %v9354, %v9353
    %v9524 = vpack.c.b16 %v9356, %v9355
    %v9525 = vpack.c.b16 %v9358, %v9357
    %v9526 = vpack.c.b16 %v9360, %v9359
    %v9527 = vpack.c.b16 %v9362, %v9361
    %v9528 = vpack.c.b16 %v9364, %v9363
    %v9529 = vpack.c.b16 %v9366, %v9365
    %v9530 = vpack.c.b16 %v9368, %v9367
    %v9531 = vpack.c.b16 %v9370, %v9369
    %v9532 = vpack.c.b16 %v9372, %v9371
    %v9533 = vpack.c.b16 %v9374, %v9373
    %v9534 = vpack.c.b16 %v9376, %v9375
    %v9535 = vpack.c.b16 %v9378, %v9377
    %v9536 = vpack.c.b16 %v9380, %v9379
    %v9537 = vpack.c.b16 %v9382, %v9381
    %v9538 = vpack.c.b16 %v9384, %v9383
    %v9539 = vpack.c.b16 %v9386, %v9385
    %v9540 = vpack.c.b16 %v9388, %v9387
    %v9541 = vpack.c.b16 %v9390, %v9389
    %v9542 = vpack.c.b16 %v9392, %v9391
    %v9543 = vpack.c.b16 %v9394, %v9393
    %v9544 = vpack.c.b16 %v9396, %v9395
    %v9545 = vpack.c.b16 %v9398, %v9397
    %v9546 = vpack.c.b16 %v9400, %v9399
    %v9547 = vpack.c.b16 %v9402, %v9401
    %v9548 = vpack.c.b16 %v9404, %v9403
    %v9549 = vpack.c.b16 %v9406, %v9405
    %v9550 = vpack.c.b16 %v9408, %v9407
    %v9551 = vpack.c.b16 %v9410, %v9409
    %v9552 = vpack.c.b16 %v9412, %v9411
    %v9553 = vpack.c.b16 %v9414, %v9413
    %v9554 = vpack.c.b16 %v9416, %v9415
    %v9555 = vpack.c.b16 %v9418, %v9417
    %v9556 = vpack.c.b16 %v9420, %v9419
    %v9557 = vpack.c.b16 %v9422, %v9421
    %v9558 = vpack.c.b16 %v9424, %v9423
    %v9559 = vpack.c.b16 %v9426, %v9425
    %v9560 = vpack.c.b16 %v9428, %v9427
    %v9561 = vpack.c.b16 %v9430, %v9429
    %v9562 = vpack.c.b16 %v9432, %v9431
    %v9563 = vpack.c.b16 %v9434, %v9433
    %v9564 = vpack.c.b16 %v9436, %v9435
    %9693 = vmatprep.subr.bf16.mxu0 0
    %9694 = vmatpush1.bf16.msra.mxu0 %v9437
    %9695 = vmatprep.subr.bf16.mxu0 0
    %9696 = vmatpush1.bf16.msra.mxu0 %v9438
    %9697 = vmatprep.subr.bf16.mxu0 0
    %9698 = vmatpush1.bf16.msra.mxu0 %v9439
    %9699 = vmatprep.subr.bf16.mxu0 0
    %9700 = vmatpush1.bf16.msra.mxu0 %v9440
    %9701 = vmatprep.subr.bf16.mxu0 0
    %9702 = vmatpush1.bf16.msra.mxu0 %v9441
    %9703 = vmatprep.subr.bf16.mxu0 0
    %9704 = vmatpush1.bf16.msra.mxu0 %v9442
    %9705 = vmatprep.subr.bf16.mxu0 0
    %9706 = vmatpush1.bf16.msra.mxu0 %v9443
    %9707 = vmatprep.subr.bf16.mxu0 0
    %9708 = vmatpush1.bf16.msra.mxu0 %v9444
    %9709 = vmatprep.subr.bf16.mxu0 0
    %9710 = vmatpush1.bf16.msra.mxu0 %v9445
    %9711 = vmatprep.subr.bf16.mxu0 0
    %9712 = vmatpush1.bf16.msra.mxu0 %v9446
    %9713 = vmatprep.subr.bf16.mxu0 0
    %9714 = vmatpush1.bf16.msra.mxu0 %v9447
    %9715 = vmatprep.subr.bf16.mxu0 0
    %9716 = vmatpush1.bf16.msra.mxu0 %v9448
    %9717 = vmatprep.subr.bf16.mxu0 0
    %9718 = vmatpush1.bf16.msra.mxu0 %v9449
    %9719 = vmatprep.subr.bf16.mxu0 0
    %9720 = vmatpush1.bf16.msra.mxu0 %v9450
    %9721 = vmatprep.subr.bf16.mxu0 0
    %9722 = vmatpush1.bf16.msra.mxu0 %v9451
    %9723 = vmatprep.subr.bf16.mxu0 0
    %9724 = vmatpush1.bf16.msra.mxu0 %v9452
    %9725 = vmatprep.mubr.bf16.mxu0 %v8647
    %9726 = vmatmul.mubr.bf16.gmra.mrb[0].mxu0 %v8646
    %v9727 = vpop.f32.mrb[0].mxu0
    %v9728 = vadd.f32 %v8923, %v9727
    %v9729 = vpop.f32.mrb[0].mxu0
    %v9730 = vpop.f32.mrb[0].mxu0
    %v9731 = vpop.f32.mrb[0].mxu0
    %9732 = vdwg.mxu0
    %9733 = vmatprep.subr.bf16.mxu0 0
    %9734 = vmatpush1.bf16.msra.mxu0 %v9453
    %9735 = vmatprep.subr.bf16.mxu0 0
    %9736 = vmatpush1.bf16.msra.mxu0 %v9454
    %9737 = vmatprep.subr.bf16.mxu0 0
    %9738 = vmatpush1.bf16.msra.mxu0 %v9455
    %9739 = vmatprep.subr.bf16.mxu0 0
    %9740 = vmatpush1.bf16.msra.mxu0 %v9456
    %9741 = vmatprep.subr.bf16.mxu0 0
    %9742 = vmatpush1.bf16.msra.mxu0 %v9457
    %9743 = vmatprep.subr.bf16.mxu0 0
    %9744 = vmatpush1.bf16.msra.mxu0 %v9458
    %9745 = vmatprep.subr.bf16.mxu0 0
    %9746 = vmatpush1.bf16.msra.mxu0 %v9459
    %9747 = vmatprep.subr.bf16.mxu0 0
    %9748 = vmatpush1.bf16.msra.mxu0 %v9460
    %9749 = vmatprep.subr.bf16.mxu0 0
    %9750 = vmatpush1.bf16.msra.mxu0 %v9461
    %9751 = vmatprep.subr.bf16.mxu0 0
    %9752 = vmatpush1.bf16.msra.mxu0 %v9462
    %9753 = vmatprep.subr.bf16.mxu0 0
    %9754 = vmatpush1.bf16.msra.mxu0 %v9463
    %9755 = vmatprep.subr.bf16.mxu0 0
    %9756 = vmatpush1.bf16.msra.mxu0 %v9464
    %9757 = vmatprep.subr.bf16.mxu0 0
    %9758 = vmatpush1.bf16.msra.mxu0 %v9465
    %9759 = vmatprep.subr.bf16.mxu0 0
    %9760 = vmatpush1.bf16.msra.mxu0 %v9466
    %9761 = vmatprep.subr.bf16.mxu0 0
    %9762 = vmatpush1.bf16.msra.mxu0 %v9467
    %9763 = vmatprep.subr.bf16.mxu0 0
    %9764 = vmatpush1.bf16.msra.mxu0 %v9468
    %9765 = vmatprep.mubr.bf16.mxu0 %v8649
    %9766 = vmatmul.mubr.bf16.gmra.mrb[0].mxu0 %v8648
    %v9767 = vpop.f32.mrb[0].mxu0
    %v9768 = vadd.f32 %v9728, %v9767
    %v9769 = vpop.f32.mrb[0].mxu0
    %v9770 = vpop.f32.mrb[0].mxu0
    %v9771 = vpop.f32.mrb[0].mxu0
    %9772 = vdwg.mxu0
    %9773 = vmatprep.subr.bf16.mxu0 0
    %9774 = vmatpush1.bf16.msra.mxu0 %v9469
    %9775 = vmatprep.subr.bf16.mxu0 0
    %9776 = vmatpush1.bf16.msra.mxu0 %v9470
    %9777 = vmatprep.subr.bf16.mxu0 0
    %9778 = vmatpush1.bf16.msra.mxu0 %v9471
    %9779 = vmatprep.subr.bf16.mxu0 0
    %9780 = vmatpush1.bf16.msra.mxu0 %v9472
    %9781 = vmatprep.subr.bf16.mxu0 0
    %9782 = vmatpush1.bf16.msra.mxu0 %v9473
    %9783 = vmatprep.subr.bf16.mxu0 0
    %9784 = vmatpush1.bf16.msra.mxu0 %v9474
    %9785 = vmatprep.subr.bf16.mxu0 0
    %9786 = vmatpush1.bf16.msra.mxu0 %v9475
    %9787 = vmatprep.subr.bf16.mxu0 0
    %9788 = vmatpush1.bf16.msra.mxu0 %v9476
    %9789 = vmatprep.subr.bf16.mxu0 0
    %9790 = vmatpush1.bf16.msra.mxu0 %v9477
    %9791 = vmatprep.subr.bf16.mxu0 0
    %9792 = vmatpush1.bf16.msra.mxu0 %v9478
    %9793 = vmatprep.subr.bf16.mxu0 0
    %9794 = vmatpush1.bf16.msra.mxu0 %v9479
    %9795 = vmatprep.subr.bf16.mxu0 0
    %9796 = vmatpush1.bf16.msra.mxu0 %v9480
    %9797 = vmatprep.subr.bf16.mxu0 0
    %9798 = vmatpush1.bf16.msra.mxu0 %v9481
    %9799 = vmatprep.subr.bf16.mxu0 0
    %9800 = vmatpush1.bf16.msra.mxu0 %v9482
    %9801 = vmatprep.subr.bf16.mxu0 0
    %9802 = vmatpush1.bf16.msra.mxu0 %v9483
    %9803 = vmatprep.subr.bf16.mxu0 0
    %9804 = vmatpush1.bf16.msra.mxu0 %v9484
    %9805 = vmatprep.mubr.bf16.mxu0 %v8651
    %9806 = vmatmul.mubr.bf16.gmra.mrb[0].mxu0 %v8650
    %v9807 = vpop.f32.mrb[0].mxu0
    %v9808 = vadd.f32 %v9768, %v9807
    %v9809 = vpop.f32.mrb[0].mxu0
    %v9810 = vpop.f32.mrb[0].mxu0
    %v9811 = vpop.f32.mrb[0].mxu0
    %9812 = vdwg.mxu0
    %9813 = vmatprep.subr.bf16.mxu0 0
    %9814 = vmatpush1.bf16.msra.mxu0 %v9485
    %9815 = vmatprep.subr.bf16.mxu0 0
    %9816 = vmatpush1.bf16.msra.mxu0 %v9486
    %9817 = vmatprep.subr.bf16.mxu0 0
    %9818 = vmatpush1.bf16.msra.mxu0 %v9487
    %9819 = vmatprep.subr.bf16.mxu0 0
    %9820 = vmatpush1.bf16.msra.mxu0 %v9488
    %9821 = vmatprep.subr.bf16.mxu0 0
    %9822 = vmatpush1.bf16.msra.mxu0 %v9489
    %9823 = vmatprep.subr.bf16.mxu0 0
    %9824 = vmatpush1.bf16.msra.mxu0 %v9490
    %9825 = vmatprep.subr.bf16.mxu0 0
    %9826 = vmatpush1.bf16.msra.mxu0 %v9491
    %9827 = vmatprep.subr.bf16.mxu0 0
    %9828 = vmatpush1.bf16.msra.mxu0 %v9492
    %9829 = vmatprep.subr.bf16.mxu0 0
    %9830 = vmatpush1.bf16.msra.mxu0 %v9493
    %9831 = vmatprep.subr.bf16.mxu0 0
    %9832 = vmatpush1.bf16.msra.mxu0 %v9494
    %9833 = vmatprep.subr.bf16.mxu0 0
    %9834 = vmatpush1.bf16.msra.mxu0 %v9495
    %9835 = vmatprep.subr.bf16.mxu0 0
    %9836 = vmatpush1.bf16.msra.mxu0 %v9496
    %9837 = vmatprep.subr.bf16.mxu0 0
    %9838 = vmatpush1.bf16.msra.mxu0 %v9497
    %9839 = vmatprep.subr.bf16.mxu0 0
    %9840 = vmatpush1.bf16.msra.mxu0 %v9498
    %9841 = vmatprep.subr.bf16.mxu0 0
    %9842 = vmatpush1.bf16.msra.mxu0 %v9499
    %9843 = vmatprep.subr.bf16.mxu0 0
    %9844 = vmatpush1.bf16.msra.mxu0 %v9500
    %9845 = vmatprep.mubr.bf16.mxu0 %v8653
    %9846 = vmatmul.mubr.bf16.gmra.mrb[0].mxu0 %v8652
    %v9847 = vpop.f32.mrb[0].mxu0
    %v9848 = vadd.f32 %v9808, %v9847
    %v9849 = vpop.f32.mrb[0].mxu0
    %v9850 = vpop.f32.mrb[0].mxu0
    %v9851 = vpop.f32.mrb[0].mxu0
    %9852 = vdwg.mxu0
    %9853 = vmatprep.subr.bf16.mxu0 0
    %9854 = vmatpush1.bf16.msra.mxu0 %v9501
    %9855 = vmatprep.subr.bf16.mxu0 0
    %9856 = vmatpush1.bf16.msra.mxu0 %v9502
    %9857 = vmatprep.subr.bf16.mxu0 0
    %9858 = vmatpush1.bf16.msra.mxu0 %v9503
    %9859 = vmatprep.subr.bf16.mxu0 0
    %9860 = vmatpush1.bf16.msra.mxu0 %v9504
    %9861 = vmatprep.subr.bf16.mxu0 0
    %9862 = vmatpush1.bf16.msra.mxu0 %v9505
    %9863 = vmatprep.subr.bf16.mxu0 0
    %9864 = vmatpush1.bf16.msra.mxu0 %v9506
    %9865 = vmatprep.subr.bf16.mxu0 0
    %9866 = vmatpush1.bf16.msra.mxu0 %v9507
    %9867 = vmatprep.subr.bf16.mxu0 0
    %9868 = vmatpush1.bf16.msra.mxu0 %v9508
    %9869 = vmatprep.subr.bf16.mxu0 0
    %9870 = vmatpush1.bf16.msra.mxu0 %v9509
    %9871 = vmatprep.subr.bf16.mxu0 0
    %9872 = vmatpush1.bf16.msra.mxu0 %v9510
    %9873 = vmatprep.subr.bf16.mxu0 0
    %9874 = vmatpush1.bf16.msra.mxu0 %v9511
    %9875 = vmatprep.subr.bf16.mxu0 0
    %9876 = vmatpush1.bf16.msra.mxu0 %v9512
    %9877 = vmatprep.subr.bf16.mxu0 0
    %9878 = vmatpush1.bf16.msra.mxu0 %v9513
    %9879 = vmatprep.subr.bf16.mxu0 0
    %9880 = vmatpush1.bf16.msra.mxu0 %v9514
    %9881 = vmatprep.subr.bf16.mxu0 0
    %9882 = vmatpush1.bf16.msra.mxu0 %v9515
    %9883 = vmatprep.subr.bf16.mxu0 0
    %9884 = vmatpush1.bf16.msra.mxu0 %v9516
    %9885 = vmatprep.mubr.bf16.mxu0 %v8655
    %9886 = vmatmul.mubr.bf16.gmra.mrb[0].mxu0 %v8654
    %v9887 = vpop.f32.mrb[0].mxu0
    %v9888 = vadd.f32 %v9848, %v9887
    %v9889 = vpop.f32.mrb[0].mxu0
    %v9890 = vpop.f32.mrb[0].mxu0
    %v9891 = vpop.f32.mrb[0].mxu0
    %9892 = vdwg.mxu0
    %9893 = vmatprep.subr.bf16.mxu0 0
    %9894 = vmatpush1.bf16.msra.mxu0 %v9517
    %9895 = vmatprep.subr.bf16.mxu0 0
    %9896 = vmatpush1.bf16.msra.mxu0 %v9518
    %9897 = vmatprep.subr.bf16.mxu0 0
    %9898 = vmatpush1.bf16.msra.mxu0 %v9519
    %9899 = vmatprep.subr.bf16.mxu0 0
    %9900 = vmatpush1.bf16.msra.mxu0 %v9520
    %9901 = vmatprep.subr.bf16.mxu0 0
    %9902 = vmatpush1.bf16.msra.mxu0 %v9521
    %9903 = vmatprep.subr.bf16.mxu0 0
    %9904 = vmatpush1.bf16.msra.mxu0 %v9522
    %9905 = vmatprep.subr.bf16.mxu0 0
    %9906 = vmatpush1.bf16.msra.mxu0 %v9523
    %9907 = vmatprep.subr.bf16.mxu0 0
    %9908 = vmatpush1.bf16.msra.mxu0 %v9524
    %9909 = vmatprep.subr.bf16.mxu0 0
    %9910 = vmatpush1.bf16.msra.mxu0 %v9525
    %9911 = vmatprep.subr.bf16.mxu0 0
    %9912 = vmatpush1.bf16.msra.mxu0 %v9526
    %9913 = vmatprep.subr.bf16.mxu0 0
    %9914 = vmatpush1.bf16.msra.mxu0 %v9527
    %9915 = vmatprep.subr.bf16.mxu0 0
    %9916 = vmatpush1.bf16.msra.mxu0 %v9528
    %9917 = vmatprep.subr.bf16.mxu0 0
    %9918 = vmatpush1.bf16.msra.mxu0 %v9529
    %9919 = vmatprep.subr.bf16.mxu0 0
    %9920 = vmatpush1.bf16.msra.mxu0 %v9530
    %9921 = vmatprep.subr.bf16.mxu0 0
    %9922 = vmatpush1.bf16.msra.mxu0 %v9531
    %9923 = vmatprep.subr.bf16.mxu0 0
    %9924 = vmatpush1.bf16.msra.mxu0 %v9532
    %9925 = vmatprep.mubr.bf16.mxu0 %v8657
    %9926 = vmatmul.mubr.bf16.gmra.mrb[0].mxu0 %v8656
    %v9927 = vpop.f32.mrb[0].mxu0
    %v9928 = vadd.f32 %v9888, %v9927
    %v9929 = vpop.f32.mrb[0].mxu0
    %v9930 = vpop.f32.mrb[0].mxu0
    %v9931 = vpop.f32.mrb[0].mxu0
    %9932 = vdwg.mxu0
    %9933 = vmatprep.subr.bf16.mxu0 0
    %9934 = vmatpush1.bf16.msra.mxu0 %v9533
    %9935 = vmatprep.subr.bf16.mxu0 0
    %9936 = vmatpush1.bf16.msra.mxu0 %v9534
    %9937 = vmatprep.subr.bf16.mxu0 0
    %9938 = vmatpush1.bf16.msra.mxu0 %v9535
    %9939 = vmatprep.subr.bf16.mxu0 0
    %9940 = vmatpush1.bf16.msra.mxu0 %v9536
    %9941 = vmatprep.subr.bf16.mxu0 0
    %9942 = vmatpush1.bf16.msra.mxu0 %v9537
    %9943 = vmatprep.subr.bf16.mxu0 0
    %9944 = vmatpush1.bf16.msra.mxu0 %v9538
    %9945 = vmatprep.subr.bf16.mxu0 0
    %9946 = vmatpush1.bf16.msra.mxu0 %v9539
    %9947 = vmatprep.subr.bf16.mxu0 0
    %9948 = vmatpush1.bf16.msra.mxu0 %v9540
    %9949 = vmatprep.subr.bf16.mxu0 0
    %9950 = vmatpush1.bf16.msra.mxu0 %v9541
    %9951 = vmatprep.subr.bf16.mxu0 0
    %9952 = vmatpush1.bf16.msra.mxu0 %v9542
    %9953 = vmatprep.subr.bf16.mxu0 0
    %9954 = vmatpush1.bf16.msra.mxu0 %v9543
    %9955 = vmatprep.subr.bf16.mxu0 0
    %9956 = vmatpush1.bf16.msra.mxu0 %v9544
    %9957 = vmatprep.subr.bf16.mxu0 0
    %9958 = vmatpush1.bf16.msra.mxu0 %v9545
    %9959 = vmatprep.subr.bf16.mxu0 0
    %9960 = vmatpush1.bf16.msra.mxu0 %v9546
    %9961 = vmatprep.subr.bf16.mxu0 0
    %9962 = vmatpush1.bf16.msra.mxu0 %v9547
    %9963 = vmatprep.subr.bf16.mxu0 0
    %9964 = vmatpush1.bf16.msra.mxu0 %v9548
    %9965 = vmatprep.mubr.bf16.mxu0 %v8659
    %9966 = vmatmul.mubr.bf16.gmra.mrb[0].mxu0 %v8658
    %v9967 = vpop.f32.mrb[0].mxu0
    %v9968 = vadd.f32 %v9928, %v9967
    %v9969 = vpop.f32.mrb[0].mxu0
    %v9970 = vpop.f32.mrb[0].mxu0
    %v9971 = vpop.f32.mrb[0].mxu0
    %9972 = vdwg.mxu0
    %9973 = vmatprep.subr.bf16.mxu0 0
    %9974 = vmatpush1.bf16.msra.mxu0 %v9549
    %9975 = vmatprep.subr.bf16.mxu0 0
    %9976 = vmatpush1.bf16.msra.mxu0 %v9550
    %9977 = vmatprep.subr.bf16.mxu0 0
    %9978 = vmatpush1.bf16.msra.mxu0 %v9551
    %9979 = vmatprep.subr.bf16.mxu0 0
    %9980 = vmatpush1.bf16.msra.mxu0 %v9552
    %9981 = vmatprep.subr.bf16.mxu0 0
    %9982 = vmatpush1.bf16.msra.mxu0 %v9553
    %9983 = vmatprep.subr.bf16.mxu0 0
    %9984 = vmatpush1.bf16.msra.mxu0 %v9554
    %9985 = vmatprep.subr.bf16.mxu0 0
    %9986 = vmatpush1.bf16.msra.mxu0 %v9555
    %9987 = vmatprep.subr.bf16.mxu0 0
    %9988 = vmatpush1.bf16.msra.mxu0 %v9556
    %9989 = vmatprep.subr.bf16.mxu0 0
    %9990 = vmatpush1.bf16.msra.mxu0 %v9557
    %9991 = vmatprep.subr.bf16.mxu0 0
    %9992 = vmatpush1.bf16.msra.mxu0 %v9558
    %9993 = vmatprep.subr.bf16.mxu0 0
    %9994 = vmatpush1.bf16.msra.mxu0 %v9559
    %9995 = vmatprep.subr.bf16.mxu0 0
    %9996 = vmatpush1.bf16.msra.mxu0 %v9560
    %9997 = vmatprep.subr.bf16.mxu0 0
    %9998 = vmatpush1.bf16.msra.mxu0 %v9561
    %9999 = vmatprep.subr.bf16.mxu0 0
    %10000 = vmatpush1.bf16.msra.mxu0 %v9562
    %10001 = vmatprep.subr.bf16.mxu0 0
    %10002 = vmatpush1.bf16.msra.mxu0 %v9563
    %10003 = vmatprep.subr.bf16.mxu0 0
    %10004 = vmatpush1.bf16.msra.mxu0 %v9564
    %10005 = vmatprep.mubr.bf16.mxu0 %v8661
    %10006 = vmatmul.mubr.bf16.gmra.mrb[0].mxu0 %v8660
    %v10007 = vpop.f32.mrb[0].mxu0
    %v10008 = vadd.f32 %v9968, %v10007
    %v10009 = vpop.f32.mrb[0].mxu0
    %v10010 = vpop.f32.mrb[0].mxu0
    %v10011 = vpop.f32.mrb[0].mxu0
    %10012 = vdwg.mxu0
    %10013 = vst [vmem:[%s9] sm:$0xff] %v10008
    // Predicated region
    $region70: #{encoder_forward.1} parent=1 // pred_check
      _
    $region71: #{encoder_forward.1} parent=1 // pred_check_branch
      %10015 = sbr.rel (0) target = $region73
    $region72: #{encoder_forward.1} parent=1 // pred_region
      _
    $region73: #{encoder_forward.1} parent=1 // pred_fallthru
      _
    // Predicated region
    $region74: #{encoder_forward.1} parent=1 // pred_check
      _
    $region75: #{encoder_forward.1} parent=1 // pred_check_branch
      %10017 = sbr.rel (0) target = $region77
    $region76: #{encoder_forward.1} parent=1 // pred_region
      _
    $region77: #{encoder_forward.1} parent=1 // pred_fallthru
      _
    %10018 = vsyncpa [#allocation3], 1
    %10019 = vsyncpa [#allocation5], 1
    %10020 = vsyncpa [#allocation8], 1
    %10021 = vsyncpa [#allocation11], 1
    %10022 = vsyncpa [#allocation14], 1

</llo_original>
